<compile_context>
chip_gen: v6e
topology: v6e:2x2x1
jax: 0.10.0
libtpu: 0.0.40
codegen_flags: <defaults>
</compile_context>

<pallas_src>
import functools
import math

import jax
import jax.numpy as jnp
from jax.experimental import pallas as pl
from jax.experimental.pallas import tpu as pltpu


def _round_up(x, m):
    return ((x + m - 1) // m) * m


_VMEM_LIMIT = 48 * 1024 * 1024  # <= v7x's 64 MiB physical VMEM per TensorCore


# ----------------------------------------------------------------------------
# Pallas kernels
# ----------------------------------------------------------------------------
def _matmul_kernel(a_ref, w_ref, o_ref):
    # bf16 x bf16 -> f32 accumulation on the MXU.
    o_ref[...] = jnp.dot(a_ref[...], w_ref[...],
                         preferred_element_type=jnp.float32)


def _bias_act_kernel(y_ref, b_ref, o_ref, *, act):
    z = y_ref[...] + b_ref[...]
    if act == "tanh":
        z = jnp.tanh(z)
    elif act == "relu":
        z = jnp.maximum(z, 0.0)
    o_ref[...] = z


def _bn_stats_kernel(y_ref, b_ref, s1_ref, s2_ref, *, m_valid, tile_m):
    # Pass 1: accumulate per-channel sum and sum-of-squares across M tiles.
    i = pl.program_id(0)

    @pl.when(i == 0)
    def _():
        s1_ref[...] = jnp.zeros_like(s1_ref)
        s2_ref[...] = jnp.zeros_like(s2_ref)

    z = y_ref[...] + b_ref[...]
    row = i * tile_m + jax.lax.broadcasted_iota(jnp.int32, z.shape, 0)
    z = jnp.where(row < m_valid, z, 0.0)          # mask padded rows
    s1 = jnp.sum(z, axis=0, keepdims=True)        # (1, Cp)
    s2 = jnp.sum(z * z, axis=0, keepdims=True)    # (1, Cp)  -> E[z^2] later
    s1_ref[...] = s1_ref[...] + jnp.broadcast_to(s1, s1_ref.shape)
    s2_ref[...] = s2_ref[...] + jnp.broadcast_to(s2, s2_ref.shape)


def _bn_act_kernel(y_ref, b_ref, g_ref, be_ref, s1_ref, s2_ref, o_ref,
                   *, count, act):
    # Pass 2: z = (y + bias - mean) * rsqrt(var + eps) * gamma + beta, then act.
    inv_count = 1.0 / count
    mean = s1_ref[0:1, :] * inv_count
    var = s2_ref[0:1, :] * inv_count - mean * mean     # E[z^2] - E[z]^2
    inv = jax.lax.rsqrt(var + 1e-5)
    z = (y_ref[...] + b_ref[...] - mean) * (inv * g_ref[...]) + be_ref[...]
    if act == "relu":
        z = jnp.maximum(z, 0.0)
    o_ref[...] = z


# ----------------------------------------------------------------------------
# Pallas wrappers
# ----------------------------------------------------------------------------
def _matmul(a, w):
    """(M, K) @ (K, N) -> (M, N) f32, bf16 MXU operands, tiled parallel grid."""
    m, kdim = a.shape
    _, ncol = w.shape
    mp = _round_up(m, 8)
    kp = _round_up(kdim, 128)
    np_ = _round_up(ncol, 128)
    tm = math.gcd(mp, 256)
    tn = math.gcd(np_, 512)

    a_p = jnp.pad(a, ((0, mp - m), (0, kp - kdim))).astype(jnp.bfloat16)
    w_p = jnp.pad(w, ((0, kp - kdim), (0, np_ - ncol))).astype(jnp.bfloat16)

    cost = pl.CostEstimate(flops=2 * mp * kp * np_, transcendentals=0,
                           bytes_accessed=(mp * kp + kp * np_) * 2 + mp * np_ * 4)

    out = pl.pallas_call(
        _matmul_kernel,
        out_shape=jax.ShapeDtypeStruct((mp, np_), jnp.float32),
        grid=(mp // tm, np_ // tn),
        in_specs=[pl.BlockSpec((tm, kp), lambda i, j: (i, 0)),
                  pl.BlockSpec((kp, tn), lambda i, j: (0, j))],
        out_specs=pl.BlockSpec((tm, tn), lambda i, j: (i, j)),
        compiler_params=pltpu.CompilerParams(
            dimension_semantics=("parallel", "parallel"),
            vmem_limit_bytes=_VMEM_LIMIT),
        cost_estimate=cost,
    )(a_p, w_p)
    return out[:m, :ncol]


def _epilogue(y, b, bn, act):
    """Fused bias (+ BatchNorm batch-stats) (+ ReLU / tanh) over (M, C)."""
    m, c = y.shape
    mp = _round_up(m, 8)
    cp = _round_up(c, 128)
    tm = math.gcd(mp, 512)
    grid = (mp // tm,)

    y_p = jnp.pad(y, ((0, mp - m), (0, cp - c)))
    b_p = jnp.pad(b, (0, cp - c)).reshape(1, cp)

    row_spec = pl.BlockSpec((tm, cp), lambda i: (i, 0))
    vec_spec = pl.BlockSpec((1, cp), lambda i: (0, 0))
    stats_spec = pl.BlockSpec((8, cp), lambda i: (0, 0))
    par_params = pltpu.CompilerParams(dimension_semantics=("parallel",),
                                      vmem_limit_bytes=_VMEM_LIMIT)

    if bn is None:
        out = pl.pallas_call(
            functools.partial(_bias_act_kernel, act=act),
            out_shape=jax.ShapeDtypeStruct((mp, cp), jnp.float32),
            grid=grid,
            in_specs=[row_spec, vec_spec],
            out_specs=row_spec,
            compiler_params=par_params,
        )(y_p, b_p)
    else:
        gamma, beta = bn
        g_p = jnp.pad(gamma, (0, cp - c)).reshape(1, cp)
        be_p = jnp.pad(beta, (0, cp - c)).reshape(1, cp)

        # Pass 1: per-channel sum / sum-of-squares (accumulator across M tiles).
        s1, s2 = pl.pallas_call(
            functools.partial(_bn_stats_kernel, m_valid=m, tile_m=tm),
            out_shape=(jax.ShapeDtypeStruct((8, cp), jnp.float32),
                       jax.ShapeDtypeStruct((8, cp), jnp.float32)),
            grid=grid,
            in_specs=[row_spec, vec_spec],
            out_specs=(stats_spec, stats_spec),
            compiler_params=pltpu.CompilerParams(
                dimension_semantics=("arbitrary",),
                vmem_limit_bytes=_VMEM_LIMIT),
        )(y_p, b_p)

        # Pass 2: normalize + affine + activation, row-parallel.
        out = pl.pallas_call(
            functools.partial(_bn_act_kernel, count=float(m), act=act),
            out_shape=jax.ShapeDtypeStruct((mp, cp), jnp.float32),
            grid=grid,
            in_specs=[row_spec, vec_spec, vec_spec, vec_spec,
                      stats_spec, stats_spec],
            out_specs=row_spec,
            compiler_params=par_params,
        )(y_p, b_p, g_p, be_p, s1, s2)

    return out[:m, :c]


# ----------------------------------------------------------------------------
# One ConvTranspose2d layer: Pallas GEMM + col2im overlap-add + Pallas epilogue.
# Activations are channels-last (NHWC) throughout.
# ----------------------------------------------------------------------------
def deconv_layer(x_nhwc, w, b, *, stride, pad, bn, act):
    n, ih, iw, cin = x_nhwc.shape
    _, cout, k, _ = w.shape            # ConvTranspose2d weight: (Cin, Cout, K, K)

    # GEMM: (N*IH*IW, Cin) @ (Cin, K*K*Cout)  -- no im2col needed.
    a = x_nhwc.reshape(n * ih * iw, cin)
    w_mat = w.transpose(0, 2, 3, 1).reshape(cin, k * k * cout)
    ycols = _matmul(a, w_mat).reshape(n, ih, iw, k, k, cout)

    # col2im overlap-add (plain JAX glue): oh = ih*stride - pad + kh.
    eh = (ih - 1) * stride + k
    ew = (iw - 1) * stride + k
    oh = (ih - 1) * stride - 2 * pad + k
    ow = (iw - 1) * stride - 2 * pad + k
    ext = jnp.zeros((n, eh, ew, cout), jnp.float32)
    for dh in range(k):
        for dw in range(k):
            ext = ext.at[:, dh:dh + (ih - 1) * stride + 1:stride,
                            dw:dw + (iw - 1) * stride + 1:stride, :].add(
                                ycols[:, :, :, dh, dw, :])
    y = ext[:, pad:pad + oh, pad:pad + ow, :]          # (N, OH, OW, Cout)

    # Fused bias (+ BN batch-stats) (+ activation) in Pallas.
    y = _epilogue(y.reshape(n * oh * ow, cout), b, bn, act)
    return y.reshape(n, oh, ow, cout)


# ----------------------------------------------------------------------------
# Generator forward.
# ----------------------------------------------------------------------------
def generator_forward(x, params):
    h = x.reshape(-1, 100, 1, 1).transpose(0, 2, 3, 1)     # NHWC (N,1,1,100)
    h = deconv_layer(h, params["w1"], params["b1"], stride=1, pad=0,
                     bn=(params["g1"], params["be1"]), act="relu")
    h = deconv_layer(h, params["w2"], params["b2"], stride=2, pad=1,
                     bn=(params["g2"], params["be2"]), act="relu")
    h = deconv_layer(h, params["w3"], params["b3"], stride=2, pad=1,
                     bn=(params["g3"], params["be3"]), act="relu")
    h = deconv_layer(h, params["w4"], params["b4"], stride=2, pad=1,
                     bn=(params["g4"], params["be4"]), act="relu")
    h = deconv_layer(h, params["w5"], params["b5"], stride=2, pad=1,
                     bn=None, act="tanh")
    return h.transpose(0, 3, 1, 2)                          # NCHW (N,3,64,64)


def init_params(key):
    convs = [
        ("1", (100, 512, 4, 4)),
        ("2", (512, 256, 4, 4)),
        ("3", (256, 128, 4, 4)),
        ("4", (128, 64, 4, 4)),
        ("5", (64, 3, 4, 4)),
    ]
    params = {}
    keys = jax.random.split(key, 2 * len(convs))
    for idx, (name, shape) in enumerate(convs):
        cin, cout, kh, kw = shape
        scale = 1.0 / math.sqrt(cin * kh * kw)
        params[f"w{name}"] = (scale * jax.random.normal(keys[2 * idx], shape)
                              ).astype(jnp.float32)
        params[f"b{name}"] = (scale * jax.random.normal(keys[2 * idx + 1], (cout,))
                              ).astype(jnp.float32)
    # BatchNorm affine params for bn1..bn4 (gamma=1, beta=0 at init).
    for name, c in (("1", 512), ("2", 256), ("3", 128), ("4", 64)):
        params[f"g{name}"] = jnp.ones((c,), jnp.float32)
        params[f"be{name}"] = jnp.zeros((c,), jnp.float32)
    return params


if __name__ == "__main__":
    key = jax.random.PRNGKey(0)
    k_x, k_p = jax.random.split(key)
    x = jax.random.normal(k_x, (2, 100, 1, 1), dtype=jnp.float32)
    params = init_params(k_p)

    fwd = jax.jit(generator_forward)
    out = fwd(x, params)
    jax.block_until_ready(out)

    assert out.shape == (2, 3, 64, 64), out.shape
    assert bool(jnp.all(jnp.isfinite(out)))
    # tanh output range sanity check
    assert bool(jnp.all(jnp.abs(out) <= 1.0 + 1e-5))
    print("KERNEL_OK")
</pallas_src>

<mosaic_0001>
module attributes {stable_mosaic.version = 11 : i64} {
  func.func @_matmul_kernel(%arg0: i32, %arg1: i32, %arg2: memref<8x128xbf16, #tpu.memory_space<vmem>>, %arg3: memref<128x512xbf16, #tpu.memory_space<vmem>>, %arg4: memref<8x512xf32, #tpu.memory_space<vmem>>) attributes {dimension_semantics = [#tpu.dimension_semantics<parallel>, #tpu.dimension_semantics<parallel>], iteration_bounds = array<i64: 1, 16>, scalar_prefetch = 0 : i64, scratch_operands = 0 : i64, tpu.core_type = #tpu.core_type<tc>, window_params = [{transform_indices = @transform_0, window_bounds = array<i64: 8, 128>}, {transform_indices = @transform_1, window_bounds = array<i64: 128, 512>}, {transform_indices = @transform_2, window_bounds = array<i64: 8, 512>}]} {
    %c0 = arith.constant 0 : index
    %c0_0 = arith.constant 0 : index
    %0 = vector.load %arg2[%c0, %c0_0] : memref<8x128xbf16, #tpu.memory_space<vmem>>, vector<8x128xbf16>
    %c0_1 = arith.constant 0 : index
    %c0_2 = arith.constant 0 : index
    %1 = vector.load %arg3[%c0_1, %c0_2] : memref<128x512xbf16, #tpu.memory_space<vmem>>, vector<128x512xbf16>
    %cst = arith.constant dense<0.000000e+00> : vector<8x512xf32>
    %2 = tpu.matmul %0, %1, %cst {dimension_numbers = #tpu.dot_dimension_numbers<[1], [0], [0], [1], [0, 0, 1, 1], [], []>} : vector<8x128xbf16>, vector<128x512xbf16>, vector<8x512xf32> -> vector<8x512xf32>
    %c0_3 = arith.constant 0 : index
    %c0_4 = arith.constant 0 : index
    %3 = vector.load %arg4[%c0_3, %c0_4] : memref<8x512xf32, #tpu.memory_space<vmem>>, vector<8x512xf32>
    tpu.vector_store %arg4[%c0_3, %c0_4], %2 {strides = array<i32>} : memref<8x512xf32, #tpu.memory_space<vmem>>, vector<8x512xf32>,
    return
  }
  func.func @transform_0(%arg0: i32, %arg1: i32) -> (i32, i32) {
    %c0_i32 = arith.constant 0 : i32
    %c0_i32_0 = arith.constant 0 : i32
    return %arg0, %c0_i32 : i32, i32
  }
  func.func @transform_1(%arg0: i32, %arg1: i32) -> (i32, i32) {
    %c0_i32 = arith.constant 0 : i32
    %c0_i32_0 = arith.constant 0 : i32
    return %c0_i32, %arg1 : i32, i32
  }
  func.func @transform_2(%arg0: i32, %arg1: i32) -> (i32, i32) {
    %c0_i32 = arith.constant 0 : i32
    return %arg0, %arg1 : i32, i32
  }
}

module attributes {stable_mosaic.version = 11 : i64} {
  func.func @_bn_stats_kernel(%arg0: i32, %arg1: memref<32x512xf32, #tpu.memory_space<vmem>>, %arg2: memref<1x512xf32, #tpu.memory_space<vmem>>, %arg3: memref<8x512xf32, #tpu.memory_space<vmem>>, %arg4: memref<8x512xf32, #tpu.memory_space<vmem>>) attributes {dimension_semantics = [#tpu.dimension_semantics<arbitrary>], iteration_bounds = array<i64: 1>, scalar_prefetch = 0 : i64, scratch_operands = 0 : i64, tpu.core_type = #tpu.core_type<tc>, window_params = [{transform_indices = @transform_0, window_bounds = array<i64: 32, 512>}, {pipeline_mode = #tpu.pipeline_mode<synchronous>, transform_indices = @transform_1, window_bounds = array<i64: 1, 512>}, {pipeline_mode = #tpu.pipeline_mode<synchronous>, transform_indices = @transform_2, window_bounds = array<i64: 8, 512>}, {pipeline_mode = #tpu.pipeline_mode<synchronous>, transform_indices = @transform_3, window_bounds = array<i64: 8, 512>}]} {
    %c0_i32 = arith.constant 0 : i32
    %0 = arith.cmpi eq, %arg0, %c0_i32 : i32
    %1 = arith.extui %0 : i1 to i32
    %c0_i32_0 = arith.constant 0 : i32
    %2 = arith.cmpi ne, %1, %c0_i32_0 : i32
    scf.if %2 {
      %cst_15 = arith.constant 0.000000e+00 : f32
      %30 = vector.broadcast %cst_15 : f32 to vector<8x512xf32>
      %c0_16 = arith.constant 0 : index
      %c0_17 = arith.constant 0 : index
      %31 = vector.load %arg3[%c0_16, %c0_17] : memref<8x512xf32, #tpu.memory_space<vmem>>, vector<8x512xf32>
      tpu.vector_store %arg3[%c0_16, %c0_17], %30 {strides = array<i32>} : memref<8x512xf32, #tpu.memory_space<vmem>>, vector<8x512xf32>,
      %cst_18 = arith.constant 0.000000e+00 : f32
      %32 = vector.broadcast %cst_18 : f32 to vector<8x512xf32>
      %c0_19 = arith.constant 0 : index
      %c0_20 = arith.constant 0 : index
      %33 = vector.load %arg4[%c0_19, %c0_20] : memref<8x512xf32, #tpu.memory_space<vmem>>, vector<8x512xf32>
      tpu.vector_store %arg4[%c0_19, %c0_20], %32 {strides = array<i32>} : memref<8x512xf32, #tpu.memory_space<vmem>>, vector<8x512xf32>,
    } else {
    }
    %c0 = arith.constant 0 : index
    %c0_1 = arith.constant 0 : index
    %3 = vector.load %arg1[%c0, %c0_1] : memref<32x512xf32, #tpu.memory_space<vmem>>, vector<32x512xf32>
    %c0_2 = arith.constant 0 : index
    %c0_3 = arith.constant 0 : index
    %4 = vector.load %arg2[%c0_2, %c0_3] : memref<1x512xf32, #tpu.memory_space<vmem>>, vector<1x512xf32>
    %5 = vector.broadcast %4 : vector<1x512xf32> to vector<32x512xf32>
    %6 = arith.addf %3, %5 : vector<32x512xf32>
    %c32_i32 = arith.constant 32 : i32
    %7 = arith.muli %arg0, %c32_i32 : i32
    %8 = tpu.iota {dimensions = array<i32: 0>} : vector<32x512xi32>
    %9 = vector.broadcast %7 : i32 to vector<32x512xi32>
    %10 = arith.addi %9, %8 : vector<32x512xi32>
    %c32_i32_4 = arith.constant 32 : i32
    %11 = vector.broadcast %c32_i32_4 : i32 to vector<32x512xi32>
    %12 = arith.cmpi slt, %10, %11 : vector<32x512xi32>
    %cst = arith.constant 0.000000e+00 : f32
    %13 = vector.broadcast %cst : f32 to vector<32x512xf32>
    %14 = arith.select %12, %6, %13 : vector<32x512xi1>, vector<32x512xf32>
    %cst_5 = arith.constant dense<0.000000e+00> : vector<512xf32>
    %15 = vector.multi_reduction <add>, %14, %cst_5 [0] : vector<32x512xf32> to vector<512xf32>
    %16 = vector.shape_cast %15 : vector<512xf32> to vector<1x512xf32>
    %17 = arith.mulf %14, %14 : vector<32x512xf32>
    %cst_6 = arith.constant dense<0.000000e+00> : vector<512xf32>
    %18 = vector.multi_reduction <add>, %17, %cst_6 [0] : vector<32x512xf32> to vector<512xf32>
    %19 = vector.shape_cast %18 : vector<512xf32> to vector<1x512xf32>
    %c0_7 = arith.constant 0 : index
    %c0_8 = arith.constant 0 : index
    %20 = vector.load %arg3[%c0_7, %c0_8] : memref<8x512xf32, #tpu.memory_space<vmem>>, vector<8x512xf32>
    %21 = vector.shape_cast %16 : vector<1x512xf32> to vector<1x512xf32>
    %22 = vector.broadcast %21 : vector<1x512xf32> to vector<8x512xf32>
    %23 = arith.addf %20, %22 : vector<8x512xf32>
    %c0_9 = arith.constant 0 : index
    %c0_10 = arith.constant 0 : index
    %24 = vector.load %arg3[%c0_9, %c0_10] : memref<8x512xf32, #tpu.memory_space<vmem>>, vector<8x512xf32>
    tpu.vector_store %arg3[%c0_9, %c0_10], %23 {strides = array<i32>} : memref<8x512xf32, #tpu.memory_space<vmem>>, vector<8x512xf32>,
    %c0_11 = arith.constant 0 : index
    %c0_12 = arith.constant 0 : index
    %25 = vector.load %arg4[%c0_11, %c0_12] : memref<8x512xf32, #tpu.memory_space<vmem>>, vector<8x512xf32>
    %26 = vector.shape_cast %19 : vector<1x512xf32> to vector<1x512xf32>
    %27 = vector.broadcast %26 : vector<1x512xf32> to vector<8x512xf32>
    %28 = arith.addf %25, %27 : vector<8x512xf32>
    %c0_13 = arith.constant 0 : index
    %c0_14 = arith.constant 0 : index
    %29 = vector.load %arg4[%c0_13, %c0_14] : memref<8x512xf32, #tpu.memory_space<vmem>>, vector<8x512xf32>
    tpu.vector_store %arg4[%c0_13, %c0_14], %28 {strides = array<i32>} : memref<8x512xf32, #tpu.memory_space<vmem>>, vector<8x512xf32>,
    return
  }
  func.func @transform_0(%arg0: i32) -> (i32, i32) {
    %c0_i32 = arith.constant 0 : i32
    %c0_i32_0 = arith.constant 0 : i32
    return %arg0, %c0_i32 : i32, i32
  }
  func.func @transform_1(%arg0: i32) -> (i32, i32) {
    %c0_i32 = arith.constant 0 : i32
    %c0_i32_0 = arith.constant 0 : i32
    %c0_i32_1 = arith.constant 0 : i32
    return %c0_i32, %c0_i32_0 : i32, i32
  }
  func.func @transform_2(%arg0: i32) -> (i32, i32) {
    %c0_i32 = arith.constant 0 : i32
    %c0_i32_0 = arith.constant 0 : i32
    %c0_i32_1 = arith.constant 0 : i32
    return %c0_i32, %c0_i32_0 : i32, i32
  }
  func.func @transform_3(%arg0: i32) -> (i32, i32) {
    %c0_i32 = arith.constant 0 : i32
    %c0_i32_0 = arith.constant 0 : i32
    %c0_i32_1 = arith.constant 0 : i32
    return %c0_i32, %c0_i32_0 : i32, i32
  }
}

module attributes {stable_mosaic.version = 11 : i64} {
  func.func @_bn_act_kernel(%arg0: i32, %arg1: memref<32x512xf32, #tpu.memory_space<vmem>>, %arg2: memref<1x512xf32, #tpu.memory_space<vmem>>, %arg3: memref<1x512xf32, #tpu.memory_space<vmem>>, %arg4: memref<1x512xf32, #tpu.memory_space<vmem>>, %arg5: memref<8x512xf32, #tpu.memory_space<vmem>>, %arg6: memref<8x512xf32, #tpu.memory_space<vmem>>, %arg7: memref<32x512xf32, #tpu.memory_space<vmem>>) attributes {dimension_semantics = [#tpu.dimension_semantics<parallel>], iteration_bounds = array<i64: 1>, scalar_prefetch = 0 : i64, scratch_operands = 0 : i64, tpu.core_type = #tpu.core_type<tc>, window_params = [{transform_indices = @transform_0, window_bounds = array<i64: 32, 512>}, {pipeline_mode = #tpu.pipeline_mode<synchronous>, transform_indices = @transform_1, window_bounds = array<i64: 1, 512>}, {pipeline_mode = #tpu.pipeline_mode<synchronous>, transform_indices = @transform_2, window_bounds = array<i64: 1, 512>}, {pipeline_mode = #tpu.pipeline_mode<synchronous>, transform_indices = @transform_3, window_bounds = array<i64: 1, 512>}, {pipeline_mode = #tpu.pipeline_mode<synchronous>, transform_indices = @transform_4, window_bounds = array<i64: 8, 512>}, {pipeline_mode = #tpu.pipeline_mode<synchronous>, transform_indices = @transform_5, window_bounds = array<i64: 8, 512>}, {transform_indices = @transform_6, window_bounds = array<i64: 32, 512>}]} {
    %c0 = arith.constant 0 : index
    %c0_0 = arith.constant 0 : index
    %0 = vector.load %arg5[%c0, %c0_0] : memref<8x512xf32, #tpu.memory_space<vmem>>, vector<1x512xf32>
    %cst = arith.constant 3.125000e-02 : f32
    %1 = vector.broadcast %cst : f32 to vector<1x512xf32>
    %2 = arith.mulf %0, %1 : vector<1x512xf32>
    %c0_1 = arith.constant 0 : index
    %c0_2 = arith.constant 0 : index
    %3 = vector.load %arg6[%c0_1, %c0_2] : memref<8x512xf32, #tpu.memory_space<vmem>>, vector<1x512xf32>
    %cst_3 = arith.constant 3.125000e-02 : f32
    %4 = vector.broadcast %cst_3 : f32 to vector<1x512xf32>
    %5 = arith.mulf %3, %4 : vector<1x512xf32>
    %6 = arith.mulf %2, %2 : vector<1x512xf32>
    %7 = arith.subf %5, %6 : vector<1x512xf32>
    %cst_4 = arith.constant 9.99999974E-6 : f32
    %8 = vector.broadcast %cst_4 : f32 to vector<1x512xf32>
    %9 = arith.addf %7, %8 : vector<1x512xf32>
    %10 = math.rsqrt %9 : vector<1x512xf32>
    %c0_5 = arith.constant 0 : index
    %c0_6 = arith.constant 0 : index
    %11 = vector.load %arg1[%c0_5, %c0_6] : memref<32x512xf32, #tpu.memory_space<vmem>>, vector<32x512xf32>
    %c0_7 = arith.constant 0 : index
    %c0_8 = arith.constant 0 : index
    %12 = vector.load %arg2[%c0_7, %c0_8] : memref<1x512xf32, #tpu.memory_space<vmem>>, vector<1x512xf32>
    %13 = vector.broadcast %12 : vector<1x512xf32> to vector<32x512xf32>
    %14 = arith.addf %11, %13 : vector<32x512xf32>
    %15 = vector.broadcast %2 : vector<1x512xf32> to vector<32x512xf32>
    %16 = arith.subf %14, %15 : vector<32x512xf32>
    %c0_9 = arith.constant 0 : index
    %c0_10 = arith.constant 0 : index
    %17 = vector.load %arg3[%c0_9, %c0_10] : memref<1x512xf32, #tpu.memory_space<vmem>>, vector<1x512xf32>
    %18 = arith.mulf %10, %17 : vector<1x512xf32>
    %19 = vector.broadcast %18 : vector<1x512xf32> to vector<32x512xf32>
    %20 = arith.mulf %16, %19 : vector<32x512xf32>
    %c0_11 = arith.constant 0 : index
    %c0_12 = arith.constant 0 : index
    %21 = vector.load %arg4[%c0_11, %c0_12] : memref<1x512xf32, #tpu.memory_space<vmem>>, vector<1x512xf32>
    %22 = vector.broadcast %21 : vector<1x512xf32> to vector<32x512xf32>
    %23 = arith.addf %20, %22 : vector<32x512xf32>
    %cst_13 = arith.constant 0.000000e+00 : f32
    %24 = vector.broadcast %cst_13 : f32 to vector<32x512xf32>
    %25 = arith.maximumf %23, %24 : vector<32x512xf32>
    %c0_14 = arith.constant 0 : index
    %c0_15 = arith.constant 0 : index
    %26 = vector.load %arg7[%c0_14, %c0_15] : memref<32x512xf32, #tpu.memory_space<vmem>>, vector<32x512xf32>
    tpu.vector_store %arg7[%c0_14, %c0_15], %25 {strides = array<i32>} : memref<32x512xf32, #tpu.memory_space<vmem>>, vector<32x512xf32>,
    return
  }
  func.func @transform_0(%arg0: i32) -> (i32, i32) {
    %c0_i32 = arith.constant 0 : i32
    %c0_i32_0 = arith.constant 0 : i32
    return %arg0, %c0_i32 : i32, i32
  }
  func.func @transform_1(%arg0: i32) -> (i32, i32) {
    %c0_i32 = arith.constant 0 : i32
    %c0_i32_0 = arith.constant 0 : i32
    %c0_i32_1 = arith.constant 0 : i32
    return %c0_i32, %c0_i32_0 : i32, i32
  }
  func.func @transform_2(%arg0: i32) -> (i32, i32) {
    %c0_i32 = arith.constant 0 : i32
    %c0_i32_0 = arith.constant 0 : i32
    %c0_i32_1 = arith.constant 0 : i32
    return %c0_i32, %c0_i32_0 : i32, i32
  }
  func.func @transform_3(%arg0: i32) -> (i32, i32) {
    %c0_i32 = arith.constant 0 : i32
    %c0_i32_0 = arith.constant 0 : i32
    %c0_i32_1 = arith.constant 0 : i32
    return %c0_i32, %c0_i32_0 : i32, i32
  }
  func.func @transform_4(%arg0: i32) -> (i32, i32) {
    %c0_i32 = arith.constant 0 : i32
    %c0_i32_0 = arith.constant 0 : i32
    %c0_i32_1 = arith.constant 0 : i32
    return %c0_i32, %c0_i32_0 : i32, i32
  }
  func.func @transform_5(%arg0: i32) -> (i32, i32) {
    %c0_i32 = arith.constant 0 : i32
    %c0_i32_0 = arith.constant 0 : i32
    %c0_i32_1 = arith.constant 0 : i32
    return %c0_i32, %c0_i32_0 : i32, i32
  }
  func.func @transform_6(%arg0: i32) -> (i32, i32) {
    %c0_i32 = arith.constant 0 : i32
    %c0_i32_0 = arith.constant 0 : i32
    return %arg0, %c0_i32 : i32, i32
  }
}

module attributes {stable_mosaic.version = 11 : i64} {
  func.func @_matmul_kernel(%arg0: i32, %arg1: i32, %arg2: memref<32x512xbf16, #tpu.memory_space<vmem>>, %arg3: memref<512x512xbf16, #tpu.memory_space<vmem>>, %arg4: memref<32x512xf32, #tpu.memory_space<vmem>>) attributes {dimension_semantics = [#tpu.dimension_semantics<parallel>, #tpu.dimension_semantics<parallel>], iteration_bounds = array<i64: 1, 8>, scalar_prefetch = 0 : i64, scratch_operands = 0 : i64, tpu.core_type = #tpu.core_type<tc>, window_params = [{transform_indices = @transform_0, window_bounds = array<i64: 32, 512>}, {transform_indices = @transform_1, window_bounds = array<i64: 512, 512>}, {transform_indices = @transform_2, window_bounds = array<i64: 32, 512>}]} {
    %c0 = arith.constant 0 : index
    %c0_0 = arith.constant 0 : index
    %0 = vector.load %arg2[%c0, %c0_0] : memref<32x512xbf16, #tpu.memory_space<vmem>>, vector<32x512xbf16>
    %c0_1 = arith.constant 0 : index
    %c0_2 = arith.constant 0 : index
    %1 = vector.load %arg3[%c0_1, %c0_2] : memref<512x512xbf16, #tpu.memory_space<vmem>>, vector<512x512xbf16>
    %cst = arith.constant dense<0.000000e+00> : vector<32x512xf32>
    %2 = tpu.matmul %0, %1, %cst {dimension_numbers = #tpu.dot_dimension_numbers<[1], [0], [0], [1], [0, 0, 1, 1], [], []>} : vector<32x512xbf16>, vector<512x512xbf16>, vector<32x512xf32> -> vector<32x512xf32>
    %c0_3 = arith.constant 0 : index
    %c0_4 = arith.constant 0 : index
    %3 = vector.load %arg4[%c0_3, %c0_4] : memref<32x512xf32, #tpu.memory_space<vmem>>, vector<32x512xf32>
    tpu.vector_store %arg4[%c0_3, %c0_4], %2 {strides = array<i32>} : memref<32x512xf32, #tpu.memory_space<vmem>>, vector<32x512xf32>,
    return
  }
  func.func @transform_0(%arg0: i32, %arg1: i32) -> (i32, i32) {
    %c0_i32 = arith.constant 0 : i32
    %c0_i32_0 = arith.constant 0 : i32
    return %arg0, %c0_i32 : i32, i32
  }
  func.func @transform_1(%arg0: i32, %arg1: i32) -> (i32, i32) {
    %c0_i32 = arith.constant 0 : i32
    %c0_i32_0 = arith.constant 0 : i32
    return %c0_i32, %arg1 : i32, i32
  }
  func.func @transform_2(%arg0: i32, %arg1: i32) -> (i32, i32) {
    %c0_i32 = arith.constant 0 : i32
    return %arg0, %arg1 : i32, i32
  }
}

module attributes {stable_mosaic.version = 11 : i64} {
  func.func @_bn_stats_kernel(%arg0: i32, %arg1: memref<128x256xf32, #tpu.memory_space<vmem>>, %arg2: memref<1x256xf32, #tpu.memory_space<vmem>>, %arg3: memref<8x256xf32, #tpu.memory_space<vmem>>, %arg4: memref<8x256xf32, #tpu.memory_space<vmem>>) attributes {dimension_semantics = [#tpu.dimension_semantics<arbitrary>], iteration_bounds = array<i64: 1>, scalar_prefetch = 0 : i64, scratch_operands = 0 : i64, tpu.core_type = #tpu.core_type<tc>, window_params = [{transform_indices = @transform_0, window_bounds = array<i64: 128, 256>}, {pipeline_mode = #tpu.pipeline_mode<synchronous>, transform_indices = @transform_1, window_bounds = array<i64: 1, 256>}, {pipeline_mode = #tpu.pipeline_mode<synchronous>, transform_indices = @transform_2, window_bounds = array<i64: 8, 256>}, {pipeline_mode = #tpu.pipeline_mode<synchronous>, transform_indices = @transform_3, window_bounds = array<i64: 8, 256>}]} {
    %c0_i32 = arith.constant 0 : i32
    %0 = arith.cmpi eq, %arg0, %c0_i32 : i32
    %1 = arith.extui %0 : i1 to i32
    %c0_i32_0 = arith.constant 0 : i32
    %2 = arith.cmpi ne, %1, %c0_i32_0 : i32
    scf.if %2 {
      %cst_15 = arith.constant 0.000000e+00 : f32
      %30 = vector.broadcast %cst_15 : f32 to vector<8x256xf32>
      %c0_16 = arith.constant 0 : index
      %c0_17 = arith.constant 0 : index
      %31 = vector.load %arg3[%c0_16, %c0_17] : memref<8x256xf32, #tpu.memory_space<vmem>>, vector<8x256xf32>
      tpu.vector_store %arg3[%c0_16, %c0_17], %30 {strides = array<i32>} : memref<8x256xf32, #tpu.memory_space<vmem>>, vector<8x256xf32>,
      %cst_18 = arith.constant 0.000000e+00 : f32
      %32 = vector.broadcast %cst_18 : f32 to vector<8x256xf32>
      %c0_19 = arith.constant 0 : index
      %c0_20 = arith.constant 0 : index
      %33 = vector.load %arg4[%c0_19, %c0_20] : memref<8x256xf32, #tpu.memory_space<vmem>>, vector<8x256xf32>
      tpu.vector_store %arg4[%c0_19, %c0_20], %32 {strides = array<i32>} : memref<8x256xf32, #tpu.memory_space<vmem>>, vector<8x256xf32>,
    } else {
    }
    %c0 = arith.constant 0 : index
    %c0_1 = arith.constant 0 : index
    %3 = vector.load %arg1[%c0, %c0_1] : memref<128x256xf32, #tpu.memory_space<vmem>>, vector<128x256xf32>
    %c0_2 = arith.constant 0 : index
    %c0_3 = arith.constant 0 : index
    %4 = vector.load %arg2[%c0_2, %c0_3] : memref<1x256xf32, #tpu.memory_space<vmem>>, vector<1x256xf32>
    %5 = vector.broadcast %4 : vector<1x256xf32> to vector<128x256xf32>
    %6 = arith.addf %3, %5 : vector<128x256xf32>
    %c128_i32 = arith.constant 128 : i32
    %7 = arith.muli %arg0, %c128_i32 : i32
    %8 = tpu.iota {dimensions = array<i32: 0>} : vector<128x256xi32>
    %9 = vector.broadcast %7 : i32 to vector<128x256xi32>
    %10 = arith.addi %9, %8 : vector<128x256xi32>
    %c128_i32_4 = arith.constant 128 : i32
    %11 = vector.broadcast %c128_i32_4 : i32 to vector<128x256xi32>
    %12 = arith.cmpi slt, %10, %11 : vector<128x256xi32>
    %cst = arith.constant 0.000000e+00 : f32
    %13 = vector.broadcast %cst : f32 to vector<128x256xf32>
    %14 = arith.select %12, %6, %13 : vector<128x256xi1>, vector<128x256xf32>
    %cst_5 = arith.constant dense<0.000000e+00> : vector<256xf32>
    %15 = vector.multi_reduction <add>, %14, %cst_5 [0] : vector<128x256xf32> to vector<256xf32>
    %16 = vector.shape_cast %15 : vector<256xf32> to vector<1x256xf32>
    %17 = arith.mulf %14, %14 : vector<128x256xf32>
    %cst_6 = arith.constant dense<0.000000e+00> : vector<256xf32>
    %18 = vector.multi_reduction <add>, %17, %cst_6 [0] : vector<128x256xf32> to vector<256xf32>
    %19 = vector.shape_cast %18 : vector<256xf32> to vector<1x256xf32>
    %c0_7 = arith.constant 0 : index
    %c0_8 = arith.constant 0 : index
    %20 = vector.load %arg3[%c0_7, %c0_8] : memref<8x256xf32, #tpu.memory_space<vmem>>, vector<8x256xf32>
    %21 = vector.shape_cast %16 : vector<1x256xf32> to vector<1x256xf32>
    %22 = vector.broadcast %21 : vector<1x256xf32> to vector<8x256xf32>
    %23 = arith.addf %20, %22 : vector<8x256xf32>
    %c0_9 = arith.constant 0 : index
    %c0_10 = arith.constant 0 : index
    %24 = vector.load %arg3[%c0_9, %c0_10] : memref<8x256xf32, #tpu.memory_space<vmem>>, vector<8x256xf32>
    tpu.vector_store %arg3[%c0_9, %c0_10], %23 {strides = array<i32>} : memref<8x256xf32, #tpu.memory_space<vmem>>, vector<8x256xf32>,
    %c0_11 = arith.constant 0 : index
    %c0_12 = arith.constant 0 : index
    %25 = vector.load %arg4[%c0_11, %c0_12] : memref<8x256xf32, #tpu.memory_space<vmem>>, vector<8x256xf32>
    %26 = vector.shape_cast %19 : vector<1x256xf32> to vector<1x256xf32>
    %27 = vector.broadcast %26 : vector<1x256xf32> to vector<8x256xf32>
    %28 = arith.addf %25, %27 : vector<8x256xf32>
    %c0_13 = arith.constant 0 : index
    %c0_14 = arith.constant 0 : index
    %29 = vector.load %arg4[%c0_13, %c0_14] : memref<8x256xf32, #tpu.memory_space<vmem>>, vector<8x256xf32>
    tpu.vector_store %arg4[%c0_13, %c0_14], %28 {strides = array<i32>} : memref<8x256xf32, #tpu.memory_space<vmem>>, vector<8x256xf32>,
    return
  }
  func.func @transform_0(%arg0: i32) -> (i32, i32) {
    %c0_i32 = arith.constant 0 : i32
    %c0_i32_0 = arith.constant 0 : i32
    return %arg0, %c0_i32 : i32, i32
  }
  func.func @transform_1(%arg0: i32) -> (i32, i32) {
    %c0_i32 = arith.constant 0 : i32
    %c0_i32_0 = arith.constant 0 : i32
    %c0_i32_1 = arith.constant 0 : i32
    return %c0_i32, %c0_i32_0 : i32, i32
  }
  func.func @transform_2(%arg0: i32) -> (i32, i32) {
    %c0_i32 = arith.constant 0 : i32
    %c0_i32_0 = arith.constant 0 : i32
    %c0_i32_1 = arith.constant 0 : i32
    return %c0_i32, %c0_i32_0 : i32, i32
  }
  func.func @transform_3(%arg0: i32) -> (i32, i32) {
    %c0_i32 = arith.constant 0 : i32
    %c0_i32_0 = arith.constant 0 : i32
    %c0_i32_1 = arith.constant 0 : i32
    return %c0_i32, %c0_i32_0 : i32, i32
  }
}

module attributes {stable_mosaic.version = 11 : i64} {
  func.func @_bn_act_kernel(%arg0: i32, %arg1: memref<128x256xf32, #tpu.memory_space<vmem>>, %arg2: memref<1x256xf32, #tpu.memory_space<vmem>>, %arg3: memref<1x256xf32, #tpu.memory_space<vmem>>, %arg4: memref<1x256xf32, #tpu.memory_space<vmem>>, %arg5: memref<8x256xf32, #tpu.memory_space<vmem>>, %arg6: memref<8x256xf32, #tpu.memory_space<vmem>>, %arg7: memref<128x256xf32, #tpu.memory_space<vmem>>) attributes {dimension_semantics = [#tpu.dimension_semantics<parallel>], iteration_bounds = array<i64: 1>, scalar_prefetch = 0 : i64, scratch_operands = 0 : i64, tpu.core_type = #tpu.core_type<tc>, window_params = [{transform_indices = @transform_0, window_bounds = array<i64: 128, 256>}, {pipeline_mode = #tpu.pipeline_mode<synchronous>, transform_indices = @transform_1, window_bounds = array<i64: 1, 256>}, {pipeline_mode = #tpu.pipeline_mode<synchronous>, transform_indices = @transform_2, window_bounds = array<i64: 1, 256>}, {pipeline_mode = #tpu.pipeline_mode<synchronous>, transform_indices = @transform_3, window_bounds = array<i64: 1, 256>}, {pipeline_mode = #tpu.pipeline_mode<synchronous>, transform_indices = @transform_4, window_bounds = array<i64: 8, 256>}, {pipeline_mode = #tpu.pipeline_mode<synchronous>, transform_indices = @transform_5, window_bounds = array<i64: 8, 256>}, {transform_indices = @transform_6, window_bounds = array<i64: 128, 256>}]} {
    %c0 = arith.constant 0 : index
    %c0_0 = arith.constant 0 : index
    %0 = vector.load %arg5[%c0, %c0_0] : memref<8x256xf32, #tpu.memory_space<vmem>>, vector<1x256xf32>
    %cst = arith.constant 7.812500e-03 : f32
    %1 = vector.broadcast %cst : f32 to vector<1x256xf32>
    %2 = arith.mulf %0, %1 : vector<1x256xf32>
    %c0_1 = arith.constant 0 : index
    %c0_2 = arith.constant 0 : index
    %3 = vector.load %arg6[%c0_1, %c0_2] : memref<8x256xf32, #tpu.memory_space<vmem>>, vector<1x256xf32>
    %cst_3 = arith.constant 7.812500e-03 : f32
    %4 = vector.broadcast %cst_3 : f32 to vector<1x256xf32>
    %5 = arith.mulf %3, %4 : vector<1x256xf32>
    %6 = arith.mulf %2, %2 : vector<1x256xf32>
    %7 = arith.subf %5, %6 : vector<1x256xf32>
    %cst_4 = arith.constant 9.99999974E-6 : f32
    %8 = vector.broadcast %cst_4 : f32 to vector<1x256xf32>
    %9 = arith.addf %7, %8 : vector<1x256xf32>
    %10 = math.rsqrt %9 : vector<1x256xf32>
    %c0_5 = arith.constant 0 : index
    %c0_6 = arith.constant 0 : index
    %11 = vector.load %arg1[%c0_5, %c0_6] : memref<128x256xf32, #tpu.memory_space<vmem>>, vector<128x256xf32>
    %c0_7 = arith.constant 0 : index
    %c0_8 = arith.constant 0 : index
    %12 = vector.load %arg2[%c0_7, %c0_8] : memref<1x256xf32, #tpu.memory_space<vmem>>, vector<1x256xf32>
    %13 = vector.broadcast %12 : vector<1x256xf32> to vector<128x256xf32>
    %14 = arith.addf %11, %13 : vector<128x256xf32>
    %15 = vector.broadcast %2 : vector<1x256xf32> to vector<128x256xf32>
    %16 = arith.subf %14, %15 : vector<128x256xf32>
    %c0_9 = arith.constant 0 : index
    %c0_10 = arith.constant 0 : index
    %17 = vector.load %arg3[%c0_9, %c0_10] : memref<1x256xf32, #tpu.memory_space<vmem>>, vector<1x256xf32>
    %18 = arith.mulf %10, %17 : vector<1x256xf32>
    %19 = vector.broadcast %18 : vector<1x256xf32> to vector<128x256xf32>
    %20 = arith.mulf %16, %19 : vector<128x256xf32>
    %c0_11 = arith.constant 0 : index
    %c0_12 = arith.constant 0 : index
    %21 = vector.load %arg4[%c0_11, %c0_12] : memref<1x256xf32, #tpu.memory_space<vmem>>, vector<1x256xf32>
    %22 = vector.broadcast %21 : vector<1x256xf32> to vector<128x256xf32>
    %23 = arith.addf %20, %22 : vector<128x256xf32>
    %cst_13 = arith.constant 0.000000e+00 : f32
    %24 = vector.broadcast %cst_13 : f32 to vector<128x256xf32>
    %25 = arith.maximumf %23, %24 : vector<128x256xf32>
    %c0_14 = arith.constant 0 : index
    %c0_15 = arith.constant 0 : index
    %26 = vector.load %arg7[%c0_14, %c0_15] : memref<128x256xf32, #tpu.memory_space<vmem>>, vector<128x256xf32>
    tpu.vector_store %arg7[%c0_14, %c0_15], %25 {strides = array<i32>} : memref<128x256xf32, #tpu.memory_space<vmem>>, vector<128x256xf32>,
    return
  }
  func.func @transform_0(%arg0: i32) -> (i32, i32) {
    %c0_i32 = arith.constant 0 : i32
    %c0_i32_0 = arith.constant 0 : i32
    return %arg0, %c0_i32 : i32, i32
  }
  func.func @transform_1(%arg0: i32) -> (i32, i32) {
    %c0_i32 = arith.constant 0 : i32
    %c0_i32_0 = arith.constant 0 : i32
    %c0_i32_1 = arith.constant 0 : i32
    return %c0_i32, %c0_i32_0 : i32, i32
  }
  func.func @transform_2(%arg0: i32) -> (i32, i32) {
    %c0_i32 = arith.constant 0 : i32
    %c0_i32_0 = arith.constant 0 : i32
    %c0_i32_1 = arith.constant 0 : i32
    return %c0_i32, %c0_i32_0 : i32, i32
  }
  func.func @transform_3(%arg0: i32) -> (i32, i32) {
    %c0_i32 = arith.constant 0 : i32
    %c0_i32_0 = arith.constant 0 : i32
    %c0_i32_1 = arith.constant 0 : i32
    return %c0_i32, %c0_i32_0 : i32, i32
  }
  func.func @transform_4(%arg0: i32) -> (i32, i32) {
    %c0_i32 = arith.constant 0 : i32
    %c0_i32_0 = arith.constant 0 : i32
    %c0_i32_1 = arith.constant 0 : i32
    return %c0_i32, %c0_i32_0 : i32, i32
  }
  func.func @transform_5(%arg0: i32) -> (i32, i32) {
    %c0_i32 = arith.constant 0 : i32
    %c0_i32_0 = arith.constant 0 : i32
    %c0_i32_1 = arith.constant 0 : i32
    return %c0_i32, %c0_i32_0 : i32, i32
  }
  func.func @transform_6(%arg0: i32) -> (i32, i32) {
    %c0_i32 = arith.constant 0 : i32
    %c0_i32_0 = arith.constant 0 : i32
    return %arg0, %c0_i32 : i32, i32
  }
}

module attributes {stable_mosaic.version = 11 : i64} {
  func.func @_matmul_kernel(%arg0: i32, %arg1: i32, %arg2: memref<128x256xbf16, #tpu.memory_space<vmem>>, %arg3: memref<256x512xbf16, #tpu.memory_space<vmem>>, %arg4: memref<128x512xf32, #tpu.memory_space<vmem>>) attributes {dimension_semantics = [#tpu.dimension_semantics<parallel>, #tpu.dimension_semantics<parallel>], iteration_bounds = array<i64: 1, 4>, scalar_prefetch = 0 : i64, scratch_operands = 0 : i64, tpu.core_type = #tpu.core_type<tc>, window_params = [{transform_indices = @transform_0, window_bounds = array<i64: 128, 256>}, {transform_indices = @transform_1, window_bounds = array<i64: 256, 512>}, {transform_indices = @transform_2, window_bounds = array<i64: 128, 512>}]} {
    %c0 = arith.constant 0 : index
    %c0_0 = arith.constant 0 : index
    %0 = vector.load %arg2[%c0, %c0_0] : memref<128x256xbf16, #tpu.memory_space<vmem>>, vector<128x256xbf16>
    %c0_1 = arith.constant 0 : index
    %c0_2 = arith.constant 0 : index
    %1 = vector.load %arg3[%c0_1, %c0_2] : memref<256x512xbf16, #tpu.memory_space<vmem>>, vector<256x512xbf16>
    %cst = arith.constant dense<0.000000e+00> : vector<128x512xf32>
    %2 = tpu.matmul %0, %1, %cst {dimension_numbers = #tpu.dot_dimension_numbers<[1], [0], [0], [1], [0, 0, 1, 1], [], []>} : vector<128x256xbf16>, vector<256x512xbf16>, vector<128x512xf32> -> vector<128x512xf32>
    %c0_3 = arith.constant 0 : index
    %c0_4 = arith.constant 0 : index
    %3 = vector.load %arg4[%c0_3, %c0_4] : memref<128x512xf32, #tpu.memory_space<vmem>>, vector<128x512xf32>
    tpu.vector_store %arg4[%c0_3, %c0_4], %2 {strides = array<i32>} : memref<128x512xf32, #tpu.memory_space<vmem>>, vector<128x512xf32>,
    return
  }
  func.func @transform_0(%arg0: i32, %arg1: i32) -> (i32, i32) {
    %c0_i32 = arith.constant 0 : i32
    %c0_i32_0 = arith.constant 0 : i32
    return %arg0, %c0_i32 : i32, i32
  }
  func.func @transform_1(%arg0: i32, %arg1: i32) -> (i32, i32) {
    %c0_i32 = arith.constant 0 : i32
    %c0_i32_0 = arith.constant 0 : i32
    return %c0_i32, %arg1 : i32, i32
  }
  func.func @transform_2(%arg0: i32, %arg1: i32) -> (i32, i32) {
    %c0_i32 = arith.constant 0 : i32
    return %arg0, %arg1 : i32, i32
  }
}

module attributes {stable_mosaic.version = 11 : i64} {
  func.func @_bn_act_kernel(%arg0: i32, %arg1: memref<512x128xf32, #tpu.memory_space<vmem>>, %arg2: memref<1x128xf32, #tpu.memory_space<vmem>>, %arg3: memref<1x128xf32, #tpu.memory_space<vmem>>, %arg4: memref<1x128xf32, #tpu.memory_space<vmem>>, %arg5: memref<8x128xf32, #tpu.memory_space<vmem>>, %arg6: memref<8x128xf32, #tpu.memory_space<vmem>>, %arg7: memref<512x128xf32, #tpu.memory_space<vmem>>) attributes {dimension_semantics = [#tpu.dimension_semantics<parallel>], iteration_bounds = array<i64: 1>, scalar_prefetch = 0 : i64, scratch_operands = 0 : i64, tpu.core_type = #tpu.core_type<tc>, window_params = [{transform_indices = @transform_0, window_bounds = array<i64: 512, 128>}, {pipeline_mode = #tpu.pipeline_mode<synchronous>, transform_indices = @transform_1, window_bounds = array<i64: 1, 128>}, {pipeline_mode = #tpu.pipeline_mode<synchronous>, transform_indices = @transform_2, window_bounds = array<i64: 1, 128>}, {pipeline_mode = #tpu.pipeline_mode<synchronous>, transform_indices = @transform_3, window_bounds = array<i64: 1, 128>}, {pipeline_mode = #tpu.pipeline_mode<synchronous>, transform_indices = @transform_4, window_bounds = array<i64: 8, 128>}, {pipeline_mode = #tpu.pipeline_mode<synchronous>, transform_indices = @transform_5, window_bounds = array<i64: 8, 128>}, {transform_indices = @transform_6, window_bounds = array<i64: 512, 128>}]} {
    %c0 = arith.constant 0 : index
    %c0_0 = arith.constant 0 : index
    %0 = vector.load %arg5[%c0, %c0_0] : memref<8x128xf32, #tpu.memory_space<vmem>>, vector<1x128xf32>
    %cst = arith.constant 0.001953125 : f32
    %1 = vector.broadcast %cst : f32 to vector<1x128xf32>
    %2 = arith.mulf %0, %1 : vector<1x128xf32>
    %c0_1 = arith.constant 0 : index
    %c0_2 = arith.constant 0 : index
    %3 = vector.load %arg6[%c0_1, %c0_2] : memref<8x128xf32, #tpu.memory_space<vmem>>, vector<1x128xf32>
    %cst_3 = arith.constant 0.001953125 : f32
    %4 = vector.broadcast %cst_3 : f32 to vector<1x128xf32>
    %5 = arith.mulf %3, %4 : vector<1x128xf32>
    %6 = arith.mulf %2, %2 : vector<1x128xf32>
    %7 = arith.subf %5, %6 : vector<1x128xf32>
    %cst_4 = arith.constant 9.99999974E-6 : f32
    %8 = vector.broadcast %cst_4 : f32 to vector<1x128xf32>
    %9 = arith.addf %7, %8 : vector<1x128xf32>
    %10 = math.rsqrt %9 : vector<1x128xf32>
    %c0_5 = arith.constant 0 : index
    %c0_6 = arith.constant 0 : index
    %11 = vector.load %arg1[%c0_5, %c0_6] : memref<512x128xf32, #tpu.memory_space<vmem>>, vector<512x128xf32>
    %c0_7 = arith.constant 0 : index
    %c0_8 = arith.constant 0 : index
    %12 = vector.load %arg2[%c0_7, %c0_8] : memref<1x128xf32, #tpu.memory_space<vmem>>, vector<1x128xf32>
    %13 = vector.broadcast %12 : vector<1x128xf32> to vector<512x128xf32>
    %14 = arith.addf %11, %13 : vector<512x128xf32>
    %15 = vector.broadcast %2 : vector<1x128xf32> to vector<512x128xf32>
    %16 = arith.subf %14, %15 : vector<512x128xf32>
    %c0_9 = arith.constant 0 : index
    %c0_10 = arith.constant 0 : index
    %17 = vector.load %arg3[%c0_9, %c0_10] : memref<1x128xf32, #tpu.memory_space<vmem>>, vector<1x128xf32>
    %18 = arith.mulf %10, %17 : vector<1x128xf32>
    %19 = vector.broadcast %18 : vector<1x128xf32> to vector<512x128xf32>
    %20 = arith.mulf %16, %19 : vector<512x128xf32>
    %c0_11 = arith.constant 0 : index
    %c0_12 = arith.constant 0 : index
    %21 = vector.load %arg4[%c0_11, %c0_12] : memref<1x128xf32, #tpu.memory_space<vmem>>, vector<1x128xf32>
    %22 = vector.broadcast %21 : vector<1x128xf32> to vector<512x128xf32>
    %23 = arith.addf %20, %22 : vector<512x128xf32>
    %cst_13 = arith.constant 0.000000e+00 : f32
    %24 = vector.broadcast %cst_13 : f32 to vector<512x128xf32>
    %25 = arith.maximumf %23, %24 : vector<512x128xf32>
    %c0_14 = arith.constant 0 : index
    %c0_15 = arith.constant 0 : index
    %26 = vector.load %arg7[%c0_14, %c0_15] : memref<512x128xf32, #tpu.memory_space<vmem>>, vector<512x128xf32>
    tpu.vector_store %arg7[%c0_14, %c0_15], %25 {strides = array<i32>} : memref<512x128xf32, #tpu.memory_space<vmem>>, vector<512x128xf32>,
    return
  }
  func.func @transform_0(%arg0: i32) -> (i32, i32) {
    %c0_i32 = arith.constant 0 : i32
    %c0_i32_0 = arith.constant 0 : i32
    return %arg0, %c0_i32 : i32, i32
  }
  func.func @transform_1(%arg0: i32) -> (i32, i32) {
    %c0_i32 = arith.constant 0 : i32
    %c0_i32_0 = arith.constant 0 : i32
    %c0_i32_1 = arith.constant 0 : i32
    return %c0_i32, %c0_i32_0 : i32, i32
  }
  func.func @transform_2(%arg0: i32) -> (i32, i32) {
    %c0_i32 = arith.constant 0 : i32
    %c0_i32_0 = arith.constant 0 : i32
    %c0_i32_1 = arith.constant 0 : i32
    return %c0_i32, %c0_i32_0 : i32, i32
  }
  func.func @transform_3(%arg0: i32) -> (i32, i32) {
    %c0_i32 = arith.constant 0 : i32
    %c0_i32_0 = arith.constant 0 : i32
    %c0_i32_1 = arith.constant 0 : i32
    return %c0_i32, %c0_i32_0 : i32, i32
  }
  func.func @transform_4(%arg0: i32) -> (i32, i32) {
    %c0_i32 = arith.constant 0 : i32
    %c0_i32_0 = arith.constant 0 : i32
    %c0_i32_1 = arith.constant 0 : i32
    return %c0_i32, %c0_i32_0 : i32, i32
  }
  func.func @transform_5(%arg0: i32) -> (i32, i32) {
    %c0_i32 = arith.constant 0 : i32
    %c0_i32_0 = arith.constant 0 : i32
    %c0_i32_1 = arith.constant 0 : i32
    return %c0_i32, %c0_i32_0 : i32, i32
  }
  func.func @transform_6(%arg0: i32) -> (i32, i32) {
    %c0_i32 = arith.constant 0 : i32
    %c0_i32_0 = arith.constant 0 : i32
    return %arg0, %c0_i32 : i32, i32
  }
}

module attributes {stable_mosaic.version = 11 : i64} {
  func.func @_bn_stats_kernel(%arg0: i32, %arg1: memref<512x128xf32, #tpu.memory_space<vmem>>, %arg2: memref<1x128xf32, #tpu.memory_space<vmem>>, %arg3: memref<8x128xf32, #tpu.memory_space<vmem>>, %arg4: memref<8x128xf32, #tpu.memory_space<vmem>>) attributes {dimension_semantics = [#tpu.dimension_semantics<arbitrary>], iteration_bounds = array<i64: 1>, scalar_prefetch = 0 : i64, scratch_operands = 0 : i64, tpu.core_type = #tpu.core_type<tc>, window_params = [{transform_indices = @transform_0, window_bounds = array<i64: 512, 128>}, {pipeline_mode = #tpu.pipeline_mode<synchronous>, transform_indices = @transform_1, window_bounds = array<i64: 1, 128>}, {pipeline_mode = #tpu.pipeline_mode<synchronous>, transform_indices = @transform_2, window_bounds = array<i64: 8, 128>}, {pipeline_mode = #tpu.pipeline_mode<synchronous>, transform_indices = @transform_3, window_bounds = array<i64: 8, 128>}]} {
    %c0_i32 = arith.constant 0 : i32
    %0 = arith.cmpi eq, %arg0, %c0_i32 : i32
    %1 = arith.extui %0 : i1 to i32
    %c0_i32_0 = arith.constant 0 : i32
    %2 = arith.cmpi ne, %1, %c0_i32_0 : i32
    scf.if %2 {
      %cst_15 = arith.constant 0.000000e+00 : f32
      %30 = vector.broadcast %cst_15 : f32 to vector<8x128xf32>
      %c0_16 = arith.constant 0 : index
      %c0_17 = arith.constant 0 : index
      %31 = vector.load %arg3[%c0_16, %c0_17] : memref<8x128xf32, #tpu.memory_space<vmem>>, vector<8x128xf32>
      tpu.vector_store %arg3[%c0_16, %c0_17], %30 {strides = array<i32>} : memref<8x128xf32, #tpu.memory_space<vmem>>, vector<8x128xf32>,
      %cst_18 = arith.constant 0.000000e+00 : f32
      %32 = vector.broadcast %cst_18 : f32 to vector<8x128xf32>
      %c0_19 = arith.constant 0 : index
      %c0_20 = arith.constant 0 : index
      %33 = vector.load %arg4[%c0_19, %c0_20] : memref<8x128xf32, #tpu.memory_space<vmem>>, vector<8x128xf32>
      tpu.vector_store %arg4[%c0_19, %c0_20], %32 {strides = array<i32>} : memref<8x128xf32, #tpu.memory_space<vmem>>, vector<8x128xf32>,
    } else {
    }
    %c0 = arith.constant 0 : index
    %c0_1 = arith.constant 0 : index
    %3 = vector.load %arg1[%c0, %c0_1] : memref<512x128xf32, #tpu.memory_space<vmem>>, vector<512x128xf32>
    %c0_2 = arith.constant 0 : index
    %c0_3 = arith.constant 0 : index
    %4 = vector.load %arg2[%c0_2, %c0_3] : memref<1x128xf32, #tpu.memory_space<vmem>>, vector<1x128xf32>
    %5 = vector.broadcast %4 : vector<1x128xf32> to vector<512x128xf32>
    %6 = arith.addf %3, %5 : vector<512x128xf32>
    %c512_i32 = arith.constant 512 : i32
    %7 = arith.muli %arg0, %c512_i32 : i32
    %8 = tpu.iota {dimensions = array<i32: 0>} : vector<512x128xi32>
    %9 = vector.broadcast %7 : i32 to vector<512x128xi32>
    %10 = arith.addi %9, %8 : vector<512x128xi32>
    %c512_i32_4 = arith.constant 512 : i32
    %11 = vector.broadcast %c512_i32_4 : i32 to vector<512x128xi32>
    %12 = arith.cmpi slt, %10, %11 : vector<512x128xi32>
    %cst = arith.constant 0.000000e+00 : f32
    %13 = vector.broadcast %cst : f32 to vector<512x128xf32>
    %14 = arith.select %12, %6, %13 : vector<512x128xi1>, vector<512x128xf32>
    %cst_5 = arith.constant dense<0.000000e+00> : vector<128xf32>
    %15 = vector.multi_reduction <add>, %14, %cst_5 [0] : vector<512x128xf32> to vector<128xf32>
    %16 = vector.shape_cast %15 : vector<128xf32> to vector<1x128xf32>
    %17 = arith.mulf %14, %14 : vector<512x128xf32>
    %cst_6 = arith.constant dense<0.000000e+00> : vector<128xf32>
    %18 = vector.multi_reduction <add>, %17, %cst_6 [0] : vector<512x128xf32> to vector<128xf32>
    %19 = vector.shape_cast %18 : vector<128xf32> to vector<1x128xf32>
    %c0_7 = arith.constant 0 : index
    %c0_8 = arith.constant 0 : index
    %20 = vector.load %arg3[%c0_7, %c0_8] : memref<8x128xf32, #tpu.memory_space<vmem>>, vector<8x128xf32>
    %21 = vector.shape_cast %16 : vector<1x128xf32> to vector<1x128xf32>
    %22 = vector.broadcast %21 : vector<1x128xf32> to vector<8x128xf32>
    %23 = arith.addf %20, %22 : vector<8x128xf32>
    %c0_9 = arith.constant 0 : index
    %c0_10 = arith.constant 0 : index
    %24 = vector.load %arg3[%c0_9, %c0_10] : memref<8x128xf32, #tpu.memory_space<vmem>>, vector<8x128xf32>
    tpu.vector_store %arg3[%c0_9, %c0_10], %23 {strides = array<i32>} : memref<8x128xf32, #tpu.memory_space<vmem>>, vector<8x128xf32>,
    %c0_11 = arith.constant 0 : index
    %c0_12 = arith.constant 0 : index
    %25 = vector.load %arg4[%c0_11, %c0_12] : memref<8x128xf32, #tpu.memory_space<vmem>>, vector<8x128xf32>
    %26 = vector.shape_cast %19 : vector<1x128xf32> to vector<1x128xf32>
    %27 = vector.broadcast %26 : vector<1x128xf32> to vector<8x128xf32>
    %28 = arith.addf %25, %27 : vector<8x128xf32>
    %c0_13 = arith.constant 0 : index
    %c0_14 = arith.constant 0 : index
    %29 = vector.load %arg4[%c0_13, %c0_14] : memref<8x128xf32, #tpu.memory_space<vmem>>, vector<8x128xf32>
    tpu.vector_store %arg4[%c0_13, %c0_14], %28 {strides = array<i32>} : memref<8x128xf32, #tpu.memory_space<vmem>>, vector<8x128xf32>,
    return
  }
  func.func @transform_0(%arg0: i32) -> (i32, i32) {
    %c0_i32 = arith.constant 0 : i32
    %c0_i32_0 = arith.constant 0 : i32
    return %arg0, %c0_i32 : i32, i32
  }
  func.func @transform_1(%arg0: i32) -> (i32, i32) {
    %c0_i32 = arith.constant 0 : i32
    %c0_i32_0 = arith.constant 0 : i32
    %c0_i32_1 = arith.constant 0 : i32
    return %c0_i32, %c0_i32_0 : i32, i32
  }
  func.func @transform_2(%arg0: i32) -> (i32, i32) {
    %c0_i32 = arith.constant 0 : i32
    %c0_i32_0 = arith.constant 0 : i32
    %c0_i32_1 = arith.constant 0 : i32
    return %c0_i32, %c0_i32_0 : i32, i32
  }
  func.func @transform_3(%arg0: i32) -> (i32, i32) {
    %c0_i32 = arith.constant 0 : i32
    %c0_i32_0 = arith.constant 0 : i32
    %c0_i32_1 = arith.constant 0 : i32
    return %c0_i32, %c0_i32_0 : i32, i32
  }
}

module attributes {stable_mosaic.version = 11 : i64} {
  func.func @_matmul_kernel(%arg0: i32, %arg1: i32, %arg2: memref<256x128xbf16, #tpu.memory_space<vmem>>, %arg3: memref<128x512xbf16, #tpu.memory_space<vmem>>, %arg4: memref<256x512xf32, #tpu.memory_space<vmem>>) attributes {dimension_semantics = [#tpu.dimension_semantics<parallel>, #tpu.dimension_semantics<parallel>], iteration_bounds = array<i64: 2, 2>, scalar_prefetch = 0 : i64, scratch_operands = 0 : i64, tpu.core_type = #tpu.core_type<tc>, window_params = [{transform_indices = @transform_0, window_bounds = array<i64: 256, 128>}, {transform_indices = @transform_1, window_bounds = array<i64: 128, 512>}, {transform_indices = @transform_2, window_bounds = array<i64: 256, 512>}]} {
    %c0 = arith.constant 0 : index
    %c0_0 = arith.constant 0 : index
    %0 = vector.load %arg2[%c0, %c0_0] : memref<256x128xbf16, #tpu.memory_space<vmem>>, vector<256x128xbf16>
    %c0_1 = arith.constant 0 : index
    %c0_2 = arith.constant 0 : index
    %1 = vector.load %arg3[%c0_1, %c0_2] : memref<128x512xbf16, #tpu.memory_space<vmem>>, vector<128x512xbf16>
    %cst = arith.constant dense<0.000000e+00> : vector<256x512xf32>
    %2 = tpu.matmul %0, %1, %cst {dimension_numbers = #tpu.dot_dimension_numbers<[1], [0], [0], [1], [0, 0, 1, 1], [], []>} : vector<256x128xbf16>, vector<128x512xbf16>, vector<256x512xf32> -> vector<256x512xf32>
    %c0_3 = arith.constant 0 : index
    %c0_4 = arith.constant 0 : index
    %3 = vector.load %arg4[%c0_3, %c0_4] : memref<256x512xf32, #tpu.memory_space<vmem>>, vector<256x512xf32>
    tpu.vector_store %arg4[%c0_3, %c0_4], %2 {strides = array<i32>} : memref<256x512xf32, #tpu.memory_space<vmem>>, vector<256x512xf32>,
    return
  }
  func.func @transform_0(%arg0: i32, %arg1: i32) -> (i32, i32) {
    %c0_i32 = arith.constant 0 : i32
    %c0_i32_0 = arith.constant 0 : i32
    return %arg0, %c0_i32 : i32, i32
  }
  func.func @transform_1(%arg0: i32, %arg1: i32) -> (i32, i32) {
    %c0_i32 = arith.constant 0 : i32
    %c0_i32_0 = arith.constant 0 : i32
    return %c0_i32, %arg1 : i32, i32
  }
  func.func @transform_2(%arg0: i32, %arg1: i32) -> (i32, i32) {
    %c0_i32 = arith.constant 0 : i32
    return %arg0, %arg1 : i32, i32
  }
}

module attributes {stable_mosaic.version = 11 : i64} {
  func.func @_bn_stats_kernel(%arg0: i32, %arg1: memref<512x128xf32, #tpu.memory_space<vmem>>, %arg2: memref<1x128xf32, #tpu.memory_space<vmem>>, %arg3: memref<8x128xf32, #tpu.memory_space<vmem>>, %arg4: memref<8x128xf32, #tpu.memory_space<vmem>>) attributes {dimension_semantics = [#tpu.dimension_semantics<arbitrary>], iteration_bounds = array<i64: 4>, scalar_prefetch = 0 : i64, scratch_operands = 0 : i64, tpu.core_type = #tpu.core_type<tc>, window_params = [{transform_indices = @transform_0, window_bounds = array<i64: 512, 128>}, {pipeline_mode = #tpu.pipeline_mode<synchronous>, transform_indices = @transform_1, window_bounds = array<i64: 1, 128>}, {pipeline_mode = #tpu.pipeline_mode<synchronous>, transform_indices = @transform_2, window_bounds = array<i64: 8, 128>}, {pipeline_mode = #tpu.pipeline_mode<synchronous>, transform_indices = @transform_3, window_bounds = array<i64: 8, 128>}]} {
    %c0_i32 = arith.constant 0 : i32
    %0 = arith.cmpi eq, %arg0, %c0_i32 : i32
    %1 = arith.extui %0 : i1 to i32
    %c0_i32_0 = arith.constant 0 : i32
    %2 = arith.cmpi ne, %1, %c0_i32_0 : i32
    scf.if %2 {
      %cst_14 = arith.constant 0.000000e+00 : f32
      %30 = vector.broadcast %cst_14 : f32 to vector<8x128xf32>
      %c0_15 = arith.constant 0 : index
      %c0_16 = arith.constant 0 : index
      %31 = vector.load %arg3[%c0_15, %c0_16] : memref<8x128xf32, #tpu.memory_space<vmem>>, vector<8x128xf32>
      tpu.vector_store %arg3[%c0_15, %c0_16], %30 {strides = array<i32>} : memref<8x128xf32, #tpu.memory_space<vmem>>, vector<8x128xf32>,
      %cst_17 = arith.constant 0.000000e+00 : f32
      %32 = vector.broadcast %cst_17 : f32 to vector<8x128xf32>
      %c0_18 = arith.constant 0 : index
      %c0_19 = arith.constant 0 : index
      %33 = vector.load %arg4[%c0_18, %c0_19] : memref<8x128xf32, #tpu.memory_space<vmem>>, vector<8x128xf32>
      tpu.vector_store %arg4[%c0_18, %c0_19], %32 {strides = array<i32>} : memref<8x128xf32, #tpu.memory_space<vmem>>, vector<8x128xf32>,
    } else {
    }
    %c0 = arith.constant 0 : index
    %c0_1 = arith.constant 0 : index
    %3 = vector.load %arg1[%c0, %c0_1] : memref<512x128xf32, #tpu.memory_space<vmem>>, vector<512x128xf32>
    %c0_2 = arith.constant 0 : index
    %c0_3 = arith.constant 0 : index
    %4 = vector.load %arg2[%c0_2, %c0_3] : memref<1x128xf32, #tpu.memory_space<vmem>>, vector<1x128xf32>
    %5 = vector.broadcast %4 : vector<1x128xf32> to vector<512x128xf32>
    %6 = arith.addf %3, %5 : vector<512x128xf32>
    %c512_i32 = arith.constant 512 : i32
    %7 = arith.muli %arg0, %c512_i32 : i32
    %8 = tpu.iota {dimensions = array<i32: 0>} : vector<512x128xi32>
    %9 = vector.broadcast %7 : i32 to vector<512x128xi32>
    %10 = arith.addi %9, %8 : vector<512x128xi32>
    %c2048_i32 = arith.constant 2048 : i32
    %11 = vector.broadcast %c2048_i32 : i32 to vector<512x128xi32>
    %12 = arith.cmpi slt, %10, %11 : vector<512x128xi32>
    %cst = arith.constant 0.000000e+00 : f32
    %13 = vector.broadcast %cst : f32 to vector<512x128xf32>
    %14 = arith.select %12, %6, %13 : vector<512x128xi1>, vector<512x128xf32>
    %cst_4 = arith.constant dense<0.000000e+00> : vector<128xf32>
    %15 = vector.multi_reduction <add>, %14, %cst_4 [0] : vector<512x128xf32> to vector<128xf32>
    %16 = vector.shape_cast %15 : vector<128xf32> to vector<1x128xf32>
    %17 = arith.mulf %14, %14 : vector<512x128xf32>
    %cst_5 = arith.constant dense<0.000000e+00> : vector<128xf32>
    %18 = vector.multi_reduction <add>, %17, %cst_5 [0] : vector<512x128xf32> to vector<128xf32>
    %19 = vector.shape_cast %18 : vector<128xf32> to vector<1x128xf32>
    %c0_6 = arith.constant 0 : index
    %c0_7 = arith.constant 0 : index
    %20 = vector.load %arg3[%c0_6, %c0_7] : memref<8x128xf32, #tpu.memory_space<vmem>>, vector<8x128xf32>
    %21 = vector.shape_cast %16 : vector<1x128xf32> to vector<1x128xf32>
    %22 = vector.broadcast %21 : vector<1x128xf32> to vector<8x128xf32>
    %23 = arith.addf %20, %22 : vector<8x128xf32>
    %c0_8 = arith.constant 0 : index
    %c0_9 = arith.constant 0 : index
    %24 = vector.load %arg3[%c0_8, %c0_9] : memref<8x128xf32, #tpu.memory_space<vmem>>, vector<8x128xf32>
    tpu.vector_store %arg3[%c0_8, %c0_9], %23 {strides = array<i32>} : memref<8x128xf32, #tpu.memory_space<vmem>>, vector<8x128xf32>,
    %c0_10 = arith.constant 0 : index
    %c0_11 = arith.constant 0 : index
    %25 = vector.load %arg4[%c0_10, %c0_11] : memref<8x128xf32, #tpu.memory_space<vmem>>, vector<8x128xf32>
    %26 = vector.shape_cast %19 : vector<1x128xf32> to vector<1x128xf32>
    %27 = vector.broadcast %26 : vector<1x128xf32> to vector<8x128xf32>
    %28 = arith.addf %25, %27 : vector<8x128xf32>
    %c0_12 = arith.constant 0 : index
    %c0_13 = arith.constant 0 : index
    %29 = vector.load %arg4[%c0_12, %c0_13] : memref<8x128xf32, #tpu.memory_space<vmem>>, vector<8x128xf32>
    tpu.vector_store %arg4[%c0_12, %c0_13], %28 {strides = array<i32>} : memref<8x128xf32, #tpu.memory_space<vmem>>, vector<8x128xf32>,
    return
  }
  func.func @transform_0(%arg0: i32) -> (i32, i32) {
    %c0_i32 = arith.constant 0 : i32
    %c0_i32_0 = arith.constant 0 : i32
    return %arg0, %c0_i32 : i32, i32
  }
  func.func @transform_1(%arg0: i32) -> (i32, i32) {
    %c0_i32 = arith.constant 0 : i32
    %c0_i32_0 = arith.constant 0 : i32
    %c0_i32_1 = arith.constant 0 : i32
    return %c0_i32, %c0_i32_0 : i32, i32
  }
  func.func @transform_2(%arg0: i32) -> (i32, i32) {
    %c0_i32 = arith.constant 0 : i32
    %c0_i32_0 = arith.constant 0 : i32
    %c0_i32_1 = arith.constant 0 : i32
    return %c0_i32, %c0_i32_0 : i32, i32
  }
  func.func @transform_3(%arg0: i32) -> (i32, i32) {
    %c0_i32 = arith.constant 0 : i32
    %c0_i32_0 = arith.constant 0 : i32
    %c0_i32_1 = arith.constant 0 : i32
    return %c0_i32, %c0_i32_0 : i32, i32
  }
}

module attributes {stable_mosaic.version = 11 : i64} {
  func.func @_bn_act_kernel(%arg0: i32, %arg1: memref<512x128xf32, #tpu.memory_space<vmem>>, %arg2: memref<1x128xf32, #tpu.memory_space<vmem>>, %arg3: memref<1x128xf32, #tpu.memory_space<vmem>>, %arg4: memref<1x128xf32, #tpu.memory_space<vmem>>, %arg5: memref<8x128xf32, #tpu.memory_space<vmem>>, %arg6: memref<8x128xf32, #tpu.memory_space<vmem>>, %arg7: memref<512x128xf32, #tpu.memory_space<vmem>>) attributes {dimension_semantics = [#tpu.dimension_semantics<parallel>], iteration_bounds = array<i64: 4>, scalar_prefetch = 0 : i64, scratch_operands = 0 : i64, tpu.core_type = #tpu.core_type<tc>, window_params = [{transform_indices = @transform_0, window_bounds = array<i64: 512, 128>}, {pipeline_mode = #tpu.pipeline_mode<synchronous>, transform_indices = @transform_1, window_bounds = array<i64: 1, 128>}, {pipeline_mode = #tpu.pipeline_mode<synchronous>, transform_indices = @transform_2, window_bounds = array<i64: 1, 128>}, {pipeline_mode = #tpu.pipeline_mode<synchronous>, transform_indices = @transform_3, window_bounds = array<i64: 1, 128>}, {pipeline_mode = #tpu.pipeline_mode<synchronous>, transform_indices = @transform_4, window_bounds = array<i64: 8, 128>}, {pipeline_mode = #tpu.pipeline_mode<synchronous>, transform_indices = @transform_5, window_bounds = array<i64: 8, 128>}, {transform_indices = @transform_6, window_bounds = array<i64: 512, 128>}]} {
    %c0 = arith.constant 0 : index
    %c0_0 = arith.constant 0 : index
    %0 = vector.load %arg5[%c0, %c0_0] : memref<8x128xf32, #tpu.memory_space<vmem>>, vector<1x128xf32>
    %cst = arith.constant 4.8828125E-4 : f32
    %1 = vector.broadcast %cst : f32 to vector<1x128xf32>
    %2 = arith.mulf %0, %1 : vector<1x128xf32>
    %c0_1 = arith.constant 0 : index
    %c0_2 = arith.constant 0 : index
    %3 = vector.load %arg6[%c0_1, %c0_2] : memref<8x128xf32, #tpu.memory_space<vmem>>, vector<1x128xf32>
    %cst_3 = arith.constant 4.8828125E-4 : f32
    %4 = vector.broadcast %cst_3 : f32 to vector<1x128xf32>
    %5 = arith.mulf %3, %4 : vector<1x128xf32>
    %6 = arith.mulf %2, %2 : vector<1x128xf32>
    %7 = arith.subf %5, %6 : vector<1x128xf32>
    %cst_4 = arith.constant 9.99999974E-6 : f32
    %8 = vector.broadcast %cst_4 : f32 to vector<1x128xf32>
    %9 = arith.addf %7, %8 : vector<1x128xf32>
    %10 = math.rsqrt %9 : vector<1x128xf32>
    %c0_5 = arith.constant 0 : index
    %c0_6 = arith.constant 0 : index
    %11 = vector.load %arg1[%c0_5, %c0_6] : memref<512x128xf32, #tpu.memory_space<vmem>>, vector<512x128xf32>
    %c0_7 = arith.constant 0 : index
    %c0_8 = arith.constant 0 : index
    %12 = vector.load %arg2[%c0_7, %c0_8] : memref<1x128xf32, #tpu.memory_space<vmem>>, vector<1x128xf32>
    %13 = vector.broadcast %12 : vector<1x128xf32> to vector<512x128xf32>
    %14 = arith.addf %11, %13 : vector<512x128xf32>
    %15 = vector.broadcast %2 : vector<1x128xf32> to vector<512x128xf32>
    %16 = arith.subf %14, %15 : vector<512x128xf32>
    %c0_9 = arith.constant 0 : index
    %c0_10 = arith.constant 0 : index
    %17 = vector.load %arg3[%c0_9, %c0_10] : memref<1x128xf32, #tpu.memory_space<vmem>>, vector<1x128xf32>
    %18 = arith.mulf %10, %17 : vector<1x128xf32>
    %19 = vector.broadcast %18 : vector<1x128xf32> to vector<512x128xf32>
    %20 = arith.mulf %16, %19 : vector<512x128xf32>
    %c0_11 = arith.constant 0 : index
    %c0_12 = arith.constant 0 : index
    %21 = vector.load %arg4[%c0_11, %c0_12] : memref<1x128xf32, #tpu.memory_space<vmem>>, vector<1x128xf32>
    %22 = vector.broadcast %21 : vector<1x128xf32> to vector<512x128xf32>
    %23 = arith.addf %20, %22 : vector<512x128xf32>
    %cst_13 = arith.constant 0.000000e+00 : f32
    %24 = vector.broadcast %cst_13 : f32 to vector<512x128xf32>
    %25 = arith.maximumf %23, %24 : vector<512x128xf32>
    %c0_14 = arith.constant 0 : index
    %c0_15 = arith.constant 0 : index
    %26 = vector.load %arg7[%c0_14, %c0_15] : memref<512x128xf32, #tpu.memory_space<vmem>>, vector<512x128xf32>
    tpu.vector_store %arg7[%c0_14, %c0_15], %25 {strides = array<i32>} : memref<512x128xf32, #tpu.memory_space<vmem>>, vector<512x128xf32>,
    return
  }
  func.func @transform_0(%arg0: i32) -> (i32, i32) {
    %c0_i32 = arith.constant 0 : i32
    %c0_i32_0 = arith.constant 0 : i32
    return %arg0, %c0_i32 : i32, i32
  }
  func.func @transform_1(%arg0: i32) -> (i32, i32) {
    %c0_i32 = arith.constant 0 : i32
    %c0_i32_0 = arith.constant 0 : i32
    %c0_i32_1 = arith.constant 0 : i32
    return %c0_i32, %c0_i32_0 : i32, i32
  }
  func.func @transform_2(%arg0: i32) -> (i32, i32) {
    %c0_i32 = arith.constant 0 : i32
    %c0_i32_0 = arith.constant 0 : i32
    %c0_i32_1 = arith.constant 0 : i32
    return %c0_i32, %c0_i32_0 : i32, i32
  }
  func.func @transform_3(%arg0: i32) -> (i32, i32) {
    %c0_i32 = arith.constant 0 : i32
    %c0_i32_0 = arith.constant 0 : i32
    %c0_i32_1 = arith.constant 0 : i32
    return %c0_i32, %c0_i32_0 : i32, i32
  }
  func.func @transform_4(%arg0: i32) -> (i32, i32) {
    %c0_i32 = arith.constant 0 : i32
    %c0_i32_0 = arith.constant 0 : i32
    %c0_i32_1 = arith.constant 0 : i32
    return %c0_i32, %c0_i32_0 : i32, i32
  }
  func.func @transform_5(%arg0: i32) -> (i32, i32) {
    %c0_i32 = arith.constant 0 : i32
    %c0_i32_0 = arith.constant 0 : i32
    %c0_i32_1 = arith.constant 0 : i32
    return %c0_i32, %c0_i32_0 : i32, i32
  }
  func.func @transform_6(%arg0: i32) -> (i32, i32) {
    %c0_i32 = arith.constant 0 : i32
    %c0_i32_0 = arith.constant 0 : i32
    return %arg0, %c0_i32 : i32, i32
  }
}

module attributes {stable_mosaic.version = 11 : i64} {
  func.func @_matmul_kernel(%arg0: i32, %arg1: i32, %arg2: memref<256x128xbf16, #tpu.memory_space<vmem>>, %arg3: memref<128x128xbf16, #tpu.memory_space<vmem>>, %arg4: memref<256x128xf32, #tpu.memory_space<vmem>>) attributes {dimension_semantics = [#tpu.dimension_semantics<parallel>, #tpu.dimension_semantics<parallel>], iteration_bounds = array<i64: 8, 1>, scalar_prefetch = 0 : i64, scratch_operands = 0 : i64, tpu.core_type = #tpu.core_type<tc>, window_params = [{transform_indices = @transform_0, window_bounds = array<i64: 256, 128>}, {transform_indices = @transform_1, window_bounds = array<i64: 128, 128>}, {transform_indices = @transform_2, window_bounds = array<i64: 256, 128>}]} {
    %c0 = arith.constant 0 : index
    %c0_0 = arith.constant 0 : index
    %0 = vector.load %arg2[%c0, %c0_0] : memref<256x128xbf16, #tpu.memory_space<vmem>>, vector<256x128xbf16>
    %c0_1 = arith.constant 0 : index
    %c0_2 = arith.constant 0 : index
    %1 = vector.load %arg3[%c0_1, %c0_2] : memref<128x128xbf16, #tpu.memory_space<vmem>>, vector<128x128xbf16>
    %cst = arith.constant dense<0.000000e+00> : vector<256x128xf32>
    %2 = tpu.matmul %0, %1, %cst {dimension_numbers = #tpu.dot_dimension_numbers<[1], [0], [0], [1], [0, 0, 1, 1], [], []>} : vector<256x128xbf16>, vector<128x128xbf16>, vector<256x128xf32> -> vector<256x128xf32>
    %c0_3 = arith.constant 0 : index
    %c0_4 = arith.constant 0 : index
    %3 = vector.load %arg4[%c0_3, %c0_4] : memref<256x128xf32, #tpu.memory_space<vmem>>, vector<256x128xf32>
    tpu.vector_store %arg4[%c0_3, %c0_4], %2 {strides = array<i32>} : memref<256x128xf32, #tpu.memory_space<vmem>>, vector<256x128xf32>,
    return
  }
  func.func @transform_0(%arg0: i32, %arg1: i32) -> (i32, i32) {
    %c0_i32 = arith.constant 0 : i32
    %c0_i32_0 = arith.constant 0 : i32
    return %arg0, %c0_i32 : i32, i32
  }
  func.func @transform_1(%arg0: i32, %arg1: i32) -> (i32, i32) {
    %c0_i32 = arith.constant 0 : i32
    %c0_i32_0 = arith.constant 0 : i32
    return %c0_i32, %arg1 : i32, i32
  }
  func.func @transform_2(%arg0: i32, %arg1: i32) -> (i32, i32) {
    %c0_i32 = arith.constant 0 : i32
    return %arg0, %arg1 : i32, i32
  }
}

module attributes {stable_mosaic.version = 11 : i64} {
  func.func @_bias_act_kernel(%arg0: i32, %arg1: memref<512x128xf32, #tpu.memory_space<vmem>>, %arg2: memref<1x128xf32, #tpu.memory_space<vmem>>, %arg3: memref<512x128xf32, #tpu.memory_space<vmem>>) attributes {dimension_semantics = [#tpu.dimension_semantics<parallel>], iteration_bounds = array<i64: 16>, scalar_prefetch = 0 : i64, scratch_operands = 0 : i64, tpu.core_type = #tpu.core_type<tc>, window_params = [{transform_indices = @transform_0, window_bounds = array<i64: 512, 128>}, {pipeline_mode = #tpu.pipeline_mode<synchronous>, transform_indices = @transform_1, window_bounds = array<i64: 1, 128>}, {transform_indices = @transform_2, window_bounds = array<i64: 512, 128>}]} {
    %c0 = arith.constant 0 : index
    %c0_0 = arith.constant 0 : index
    %0 = vector.load %arg1[%c0, %c0_0] : memref<512x128xf32, #tpu.memory_space<vmem>>, vector<512x128xf32>
    %c0_1 = arith.constant 0 : index
    %c0_2 = arith.constant 0 : index
    %1 = vector.load %arg2[%c0_1, %c0_2] : memref<1x128xf32, #tpu.memory_space<vmem>>, vector<1x128xf32>
    %2 = vector.broadcast %1 : vector<1x128xf32> to vector<512x128xf32>
    %3 = arith.addf %0, %2 : vector<512x128xf32>
    %4 = math.tanh %3 : vector<512x128xf32>
    %c0_3 = arith.constant 0 : index
    %c0_4 = arith.constant 0 : index
    %5 = vector.load %arg3[%c0_3, %c0_4] : memref<512x128xf32, #tpu.memory_space<vmem>>, vector<512x128xf32>
    tpu.vector_store %arg3[%c0_3, %c0_4], %4 {strides = array<i32>} : memref<512x128xf32, #tpu.memory_space<vmem>>, vector<512x128xf32>,
    return
  }
  func.func @transform_0(%arg0: i32) -> (i32, i32) {
    %c0_i32 = arith.constant 0 : i32
    %c0_i32_0 = arith.constant 0 : i32
    return %arg0, %c0_i32 : i32, i32
  }
  func.func @transform_1(%arg0: i32) -> (i32, i32) {
    %c0_i32 = arith.constant 0 : i32
    %c0_i32_0 = arith.constant 0 : i32
    %c0_i32_1 = arith.constant 0 : i32
    return %c0_i32, %c0_i32_0 : i32, i32
  }
  func.func @transform_2(%arg0: i32) -> (i32, i32) {
    %c0_i32 = arith.constant 0 : i32
    %c0_i32_0 = arith.constant 0 : i32
    return %arg0, %c0_i32 : i32, i32
  }
}

</mosaic_0001>

<llo_original>
// kernel: generator_forward.14
$region0: #{generator_forward.14}
  #allocation0 [shape = 'u32[]', space=smem, size = 0x4, offset = 0x4, fixed_abs, tag = 'smem constant byte address 0x4 - core index']
  #allocation1 [shape = 'u32[144,128]{1,0:T(1,128)}', space=vmem, size = 0x12000, scoped, tag = 'internal scratch']
  %s0 = inlined_call_operand.vmem [shape: bf16[8,128], index: 0, kind: input, shape index: {}]
  %s1 = inlined_call_operand.vmem [shape: bf16[128,8192], index: 1, kind: input, shape index: {}]
  %s2 = inlined_call_operand.vmem [shape: f32[8,8192], index: 2, kind: output, shape index: {}]
  %s3 = sld [smem:[#allocation0]]
  $region64: #{generator_forward.14} parent=0
    _
  %s5 = ssub.s32 1, %s3
  %s6 = scalar_select 0, %s5, %s3
  $region1: #{generator_forward.14} parent=0
    #allocation2 [shape = 'u8[262144]{0}', space=vmem, size = 0x40000, scoped, tag = 'input window, operand 1']
    loop: start=0, step=1, limit=18
    $region2: #{generator_forward.14} parent=1 // loop_pre_header
      _
    $region3: #{generator_forward.14} parent=1 // loop_header
      %s8 = sphi 0, %s12
      %p9 = scmp.ge.s32.totalorder %s8, 18
      %s15 = sphi 0, %s27
      %s16 = sphi 0, %s23
      %s17 = sphi 0, %s15
      %s18 = sphi 0, %s16
      %s19 = sphi 0, %s17
      %s20 = sphi 0, %s18
      %s30 = sphi 0, %s32
      %s33 = sphi 0, %s30
      %s34 = sphi 0, %s33
      %s50 = sphi 0, %s34
      %s56 = sphi 0, %s58
      %s59 = sphi 0, %s56
      %s60 = sphi 0, %s59
      %s76 = sphi 0, %s60
      %s84 = sphi 0, %s86
      %s87 = sphi 0, %s84
      %s88 = sphi 0, %s87
      %s104 = sphi 0, %s88
    $region4: #{generator_forward.14} parent=1 // loop_header_branch
      %11 = sbr.rel (%p9) target = $region8
    $region5: #{generator_forward.14} parent=1 // loop_body
      %s13 = ssub.s32 %s8, 1
      %s14 = ssub.s32 %s8, 2
      %s21 = sadd.s32 1, %s16
      %p22 = scmp.ge.s32.totalorder %s21, 16
      %s23 = scalar_select %p22, 0, %s21
      %s24 = sadd.s32 1, %s15
      %s25 = scalar_select %p22, %s24, %s15
      %p26 = scmp.ge.s32.totalorder %s25, 1
      %s27 = scalar_select %p26, 0, %s25
      %s28 = ssub.s32 %s15, %s27
      %p29 = scmp.eq.s32.totalorder %s28, 0
      %s31 = sadd.s32 %s30, 1
      %s32 = scalar_select %p29, %s30, %s31
      %p35 = pneg %p29
      %p36 = scmp.eq.s32.totalorder %s8, 15
      %p37 = por %p35, %p36
      %p38 = scmp.ne.s32.totalorder %s30, %s33
      %p39 = scmp.eq.s32.totalorder %s8, 0
      %p40 = por %p38, %p39
      %p41 = scmp.ne.s32.totalorder %s30, %s33
      %p42 = scmp.eq.s32.totalorder %s13, 15
      %p43 = por %p41, %p42
      %p44 = scmp.ne.s32.totalorder %s33, %s34
      %p45 = scmp.eq.s32.totalorder %s13, 0
      %p46 = por %p44, %p45
      %p47 = scmp.ne.s32.totalorder %s33, %s34
      %p48 = scmp.eq.s32.totalorder %s14, 15
      %p49 = por %p47, %p48
      %p51 = scmp.ne.s32.totalorder %s34, %s50
      %p52 = scmp.eq.s32.totalorder %s14, 0
      %p53 = por %p51, %p52
      %s54 = ssub.s32 %s16, %s23
      %p55 = scmp.eq.s32.totalorder %s54, 0
      %s57 = sadd.s32 %s56, 1
      %s58 = scalar_select %p55, %s56, %s57
      %p61 = pneg %p55
      %p62 = scmp.eq.s32.totalorder %s8, 15
      %p63 = por %p61, %p62
      %p64 = scmp.ne.s32.totalorder %s56, %s59
      %p65 = scmp.eq.s32.totalorder %s8, 0
      %p66 = por %p64, %p65
      %p67 = scmp.ne.s32.totalorder %s56, %s59
      %p68 = scmp.eq.s32.totalorder %s13, 15
      %p69 = por %p67, %p68
      %p70 = scmp.ne.s32.totalorder %s59, %s60
      %p71 = scmp.eq.s32.totalorder %s13, 0
      %p72 = por %p70, %p71
      %p73 = scmp.ne.s32.totalorder %s59, %s60
      %p74 = scmp.eq.s32.totalorder %s14, 15
      %p75 = por %p73, %p74
      %p77 = scmp.ne.s32.totalorder %s60, %s76
      %p78 = scmp.eq.s32.totalorder %s14, 0
      %p79 = por %p77, %p78
      %s80 = ssub.s32 %s15, %s27
      %s81 = ssub.s32 %s16, %s23
      %s82 = sor.u32 %s80, %s81
      %p83 = scmp.eq.s32.totalorder %s82, 0
      %s85 = sadd.s32 %s84, 1
      %s86 = scalar_select %p83, %s84, %s85
      %p89 = pneg %p83
      %p90 = scmp.eq.s32.totalorder %s8, 15
      %p91 = por %p89, %p90
      %p92 = scmp.ne.s32.totalorder %s84, %s87
      %p93 = scmp.eq.s32.totalorder %s8, 0
      %p94 = por %p92, %p93
      %p95 = scmp.ne.s32.totalorder %s84, %s87
      %p96 = scmp.eq.s32.totalorder %s13, 15
      %p97 = por %p95, %p96
      %p98 = scmp.ne.s32.totalorder %s87, %s88
      %p99 = scmp.eq.s32.totalorder %s13, 0
      %p100 = por %p98, %p99
      %p101 = scmp.ne.s32.totalorder %s87, %s88
      %p102 = scmp.eq.s32.totalorder %s14, 15
      %p103 = por %p101, %p102
      %p105 = scmp.ne.s32.totalorder %s88, %s104
      %p106 = scmp.eq.s32.totalorder %s14, 0
      %p107 = por %p105, %p106
      %p108 = scmp.le.s32.totalorder 1, %s8
      %p109 = scmp.lt.s32.totalorder %s8, 17
      %p110 = pnand %p108, %p109
      %p111 = pneg %p110
      // Predicated region
      $region9: #{generator_forward.14} parent=5 // pred_check
        _
      $region10: #{generator_forward.14} parent=5 // pred_check_branch
        %113 = sbr.rel (%p110) target = $region12
      $region11: #{generator_forward.14} parent=5 // pred_region
        %s114 = ssub.s32 %s8, 1
        // Predicated region
        $region13: #{generator_forward.14} parent=11 // pred_check
          %p115 = pneg %p46
        $region14: #{generator_forward.14} parent=11 // pred_check_branch
          %117 = sbr.rel (%p115) target = $region16
        $region15: #{generator_forward.14} parent=11 // pred_region
          %p118 = scmp.lt.s32.totalorder %s17, 0
          %s119 = scalar_select %p118, %s17, 0
          %s120 = smul.addr %s119, 4
          %s121 = scalar_lea.vmem %s0, %s120
        $region16: #{generator_forward.14} parent=11 // pred_fallthru
          _
      $region12: #{generator_forward.14} parent=5 // pred_fallthru
        _
      %p122 = scmp.lt.s32.totalorder %s8, 16
      // Predicated region
      $region17: #{generator_forward.14} parent=5 // pred_check
        %p123 = pneg %p122
      $region18: #{generator_forward.14} parent=5 // pred_check_branch
        %125 = sbr.rel (%p123) target = $region20
      $region19: #{generator_forward.14} parent=5 // pred_region
        // Predicated region
        $region21: #{generator_forward.14} parent=19 // pred_check
          %p126 = pneg %p66
        $region22: #{generator_forward.14} parent=19 // pred_check_branch
          %128 = sbr.rel (%p126) target = $region24
        $region23: #{generator_forward.14} parent=19 // pred_region
          %s129 = sand.u32 %s56, 1
          %s130 = sand.u32 %s56, 1
          %s131 = smul.addr %s130, 256
          %s132 = scalar_lea.vmem [#allocation2], %s131
          %s133 = smul.u32 4, %s16
          %s134 = smul.addr %s133, 4
          %s135 = scalar_lea.vmem %s1, %s134
          // Predicated region
          $region25: #{generator_forward.14} parent=23 // pred_check
            _
          $region26: #{generator_forward.14} parent=23 // pred_check_branch
            %137 = sbr.rel (0) target = $region28
          $region27: #{generator_forward.14} parent=23 // pred_region
            // Predicated region
            $region29: #{generator_forward.14} parent=27 // pred_check
              _
            $region30: #{generator_forward.14} parent=27 // pred_check_branch
              %139 = sbr.rel (0) target = $region32
            $region31: #{generator_forward.14} parent=27 // pred_region
              loop: start=0, step=1, limit=1
              $region33: #{generator_forward.14} parent=31 // loop_pre_header
                _
              $region34: #{generator_forward.14} parent=31 // loop_header
                %s141 = sphi 0, %s145
                %p142 = scmp.ge.s32.totalorder %s141, 1
                %s146 = sphi %s135, %s135
                %s147 = sphi %s132, %s132
              $region35: #{generator_forward.14} parent=31 // loop_header_branch
                %144 = sbr.rel (%p142) target = $region39
              $region36: #{generator_forward.14} parent=31 // loop_body
                %v148 = vld [vmem:[%s146] sm:$0xff]
                %149 = vst [vmem:[%s147] sm:$0xff] %v148
                %v150 = vld [vmem:[%s146 + $0x8] sm:$0xff]
                %151 = vst [vmem:[%s147 + $0x8] sm:$0xff] %v150
                %v152 = vld [vmem:[%s146 + $0x100] sm:$0xff]
                %153 = vst [vmem:[%s147 + $0x10] sm:$0xff] %v152
                %v154 = vld [vmem:[%s146 + $0x108] sm:$0xff]
                %155 = vst [vmem:[%s147 + $0x18] sm:$0xff] %v154
                %v156 = vld [vmem:[%s146 + $0x200] sm:$0xff]
                %157 = vst [vmem:[%s147 + $0x20] sm:$0xff] %v156
                %v158 = vld [vmem:[%s146 + $0x208] sm:$0xff]
                %159 = vst [vmem:[%s147 + $0x28] sm:$0xff] %v158
                %v160 = vld [vmem:[%s146 + $0x300] sm:$0xff]
                %161 = vst [vmem:[%s147 + $0x30] sm:$0xff] %v160
                %v162 = vld [vmem:[%s146 + $0x308] sm:$0xff]
                %163 = vst [vmem:[%s147 + $0x38] sm:$0xff] %v162
                %v164 = vld [vmem:[%s146 + $0x400] sm:$0xff]
                %165 = vst [vmem:[%s147 + $0x40] sm:$0xff] %v164
                %v166 = vld [vmem:[%s146 + $0x408] sm:$0xff]
                %167 = vst [vmem:[%s147 + $0x48] sm:$0xff] %v166
                %v168 = vld [vmem:[%s146 + $0x500] sm:$0xff]
                %169 = vst [vmem:[%s147 + $0x50] sm:$0xff] %v168
                %v170 = vld [vmem:[%s146 + $0x508] sm:$0xff]
                %171 = vst [vmem:[%s147 + $0x58] sm:$0xff] %v170
                %v172 = vld [vmem:[%s146 + $0x600] sm:$0xff]
                %173 = vst [vmem:[%s147 + $0x60] sm:$0xff] %v172
                %v174 = vld [vmem:[%s146 + $0x608] sm:$0xff]
                %175 = vst [vmem:[%s147 + $0x68] sm:$0xff] %v174
                %v176 = vld [vmem:[%s146 + $0x700] sm:$0xff]
                %177 = vst [vmem:[%s147 + $0x70] sm:$0xff] %v176
                %v178 = vld [vmem:[%s146 + $0x708] sm:$0xff]
                %179 = vst [vmem:[%s147 + $0x78] sm:$0xff] %v178
                %v180 = vld [vmem:[%s146 + $0x800] sm:$0xff]
                %181 = vst [vmem:[%s147 + $0x80] sm:$0xff] %v180
                %v182 = vld [vmem:[%s146 + $0x808] sm:$0xff]
                %183 = vst [vmem:[%s147 + $0x88] sm:$0xff] %v182
                %v184 = vld [vmem:[%s146 + $0x900] sm:$0xff]
                %185 = vst [vmem:[%s147 + $0x90] sm:$0xff] %v184
                %v186 = vld [vmem:[%s146 + $0x908] sm:$0xff]
                %187 = vst [vmem:[%s147 + $0x98] sm:$0xff] %v186
                %v188 = vld [vmem:[%s146 + $0xa00] sm:$0xff]
                %189 = vst [vmem:[%s147 + $0xa0] sm:$0xff] %v188
                %v190 = vld [vmem:[%s146 + $0xa08] sm:$0xff]
                %191 = vst [vmem:[%s147 + $0xa8] sm:$0xff] %v190
                %v192 = vld [vmem:[%s146 + $0xb00] sm:$0xff]
                %193 = vst [vmem:[%s147 + $0xb0] sm:$0xff] %v192
                %v194 = vld [vmem:[%s146 + $0xb08] sm:$0xff]
                %195 = vst [vmem:[%s147 + $0xb8] sm:$0xff] %v194
                %v196 = vld [vmem:[%s146 + $0xc00] sm:$0xff]
                %197 = vst [vmem:[%s147 + $0xc0] sm:$0xff] %v196
                %v198 = vld [vmem:[%s146 + $0xc08] sm:$0xff]
                %199 = vst [vmem:[%s147 + $0xc8] sm:$0xff] %v198
                %v200 = vld [vmem:[%s146 + $0xd00] sm:$0xff]
                %201 = vst [vmem:[%s147 + $0xd0] sm:$0xff] %v200
                %v202 = vld [vmem:[%s146 + $0xd08] sm:$0xff]
                %203 = vst [vmem:[%s147 + $0xd8] sm:$0xff] %v202
                %v204 = vld [vmem:[%s146 + $0xe00] sm:$0xff]
                %205 = vst [vmem:[%s147 + $0xe0] sm:$0xff] %v204
                %v206 = vld [vmem:[%s146 + $0xe08] sm:$0xff]
                %207 = vst [vmem:[%s147 + $0xe8] sm:$0xff] %v206
                %v208 = vld [vmem:[%s146 + $0xf00] sm:$0xff]
                %209 = vst [vmem:[%s147 + $0xf0] sm:$0xff] %v208
                %v210 = vld [vmem:[%s146 + $0xf08] sm:$0xff]
                %211 = vst [vmem:[%s147 + $0xf8] sm:$0xff] %v210
              $region37: #{generator_forward.14} parent=31 // loop_footer
                %s145 = sadd.s32 1, %s141
              $region38: #{generator_forward.14} parent=31 // loop_footer_branch
                %140 = sbr.rel target = $region34
              $region39: #{generator_forward.14} parent=31 // loop_exit
                _
            $region32: #{generator_forward.14} parent=27 // pred_fallthru
              _
            // Predicated region
            $region40: #{generator_forward.14} parent=27 // pred_check
              _
            $region41: #{generator_forward.14} parent=27 // pred_check_branch
              %213 = sbr.rel target = $region43
            $region42: #{generator_forward.14} parent=27 // pred_region
              _
            $region43: #{generator_forward.14} parent=27 // pred_fallthru
              _
          $region28: #{generator_forward.14} parent=23 // pred_fallthru
            _
          %214 = vnop
        $region24: #{generator_forward.14} parent=19 // pred_fallthru
          _
      $region20: #{generator_forward.14} parent=5 // pred_fallthru
        _
      %p215 = scmp.le.s32.totalorder 1, %s8
      %p216 = scmp.lt.s32.totalorder %s8, 17
      %p217 = pnand %p215, %p216
      %p218 = pneg %p217
      // Predicated region
      $region44: #{generator_forward.14} parent=5 // pred_check
        _
      $region45: #{generator_forward.14} parent=5 // pred_check_branch
        %220 = sbr.rel (%p217) target = $region47
      $region46: #{generator_forward.14} parent=5 // pred_region
        %s221 = ssub.s32 %s8, 1
        %s222 = sand.u32 %s59, 1
        %s223 = sand.u32 %s59, 1
        %s224 = smul.addr %s223, 256
        %s225 = scalar_lea.vmem [#allocation2], %s224
        // Predicated region
        $region48: #{generator_forward.14} parent=46 // pred_check
          %p226 = pneg %p72
        $region49: #{generator_forward.14} parent=46 // pred_check_branch
          %228 = sbr.rel (%p226) target = $region51
        $region50: #{generator_forward.14} parent=46 // pred_region
          _
        $region51: #{generator_forward.14} parent=46 // pred_fallthru
          _
        %p229 = scmp.lt.s32.totalorder %s17, 0
        %s230 = scalar_select %p229, %s17, 0
        %s231 = smul.addr %s230, 4
        %s232 = scalar_lea.vmem %s0, %s231
        %p233 = pneg %p46
        %p234 = pneg %p43
        %s235 = sand.u32 %s59, 1
        %s236 = sand.u32 %s59, 1
        %s237 = smul.addr %s236, 256
        %s238 = scalar_lea.vmem [#allocation2], %s237
        %p239 = pneg %p72
        %p240 = pneg %p69
        %p241 = pneg %p100
        %p242 = pneg %p97
        %s243 = smul.u32 4, %s18
        %p244 = scmp.lt.s32.totalorder %s17, 0
        %s245 = scalar_select %p244, %s17, 0
        %p246 = scmp.lt.s32.totalorder %s243, 63
        %s247 = scalar_select %p246, %s243, 63
        %s248 = smul.addr %s245, 64
        %s249 = sadd.s32 %s247, %s248
        %s250 = smul.addr %s249, 8
        %s251 = scalar_lea.vmem %s2, %s250
        %p252 = scmp.lt.s32.totalorder %s17, 0
        %s253 = scalar_select %p252, %s17, 0
        %s254 = smul.addr %s253, 4
        %s255 = scalar_lea.vmem %s0, %s254
        %s256 = smul.u32 4, %s18
        %s257 = smul.u32 4, %s18
        %p258 = scmp.lt.s32.totalorder %s17, 0
        %s259 = scalar_select %p258, %s17, 0
        %p260 = scmp.lt.s32.totalorder %s257, 63
        %s261 = scalar_select %p260, %s257, 63
        %s262 = smul.addr %s259, 64
        %s263 = sadd.s32 %s261, %s262
        %s264 = smul.addr %s263, 8
        %s265 = scalar_lea.vmem %s2, %s264
        %s266 = smul.u32 4, %s18
        %v268 = vld [vmem:[%s255] sm:$0xf]
        %v269 = vld [vmem:[%s225] sm:$0xff]
        %v270 = vld [vmem:[%s225 + $0x8] sm:$0xff]
        %v271 = vld [vmem:[%s225 + $0x10] sm:$0xff]
        %v272 = vld [vmem:[%s225 + $0x18] sm:$0xff]
        %v273 = vld [vmem:[%s225 + $0x20] sm:$0xff]
        %v274 = vld [vmem:[%s225 + $0x28] sm:$0xff]
        %v275 = vld [vmem:[%s225 + $0x30] sm:$0xff]
        %v276 = vld [vmem:[%s225 + $0x38] sm:$0xff]
        %v277 = vld [vmem:[%s225 + $0x40] sm:$0xff]
        %v278 = vld [vmem:[%s225 + $0x48] sm:$0xff]
        %v279 = vld [vmem:[%s225 + $0x50] sm:$0xff]
        %v280 = vld [vmem:[%s225 + $0x58] sm:$0xff]
        %v281 = vld [vmem:[%s225 + $0x60] sm:$0xff]
        %v282 = vld [vmem:[%s225 + $0x68] sm:$0xff]
        %v283 = vld [vmem:[%s225 + $0x70] sm:$0xff]
        %v284 = vld [vmem:[%s225 + $0x78] sm:$0xff]
        %v285 = vld [vmem:[%s225 + $0x80] sm:$0xff]
        %v286 = vld [vmem:[%s225 + $0x88] sm:$0xff]
        %v287 = vld [vmem:[%s225 + $0x90] sm:$0xff]
        %v288 = vld [vmem:[%s225 + $0x98] sm:$0xff]
        %v289 = vld [vmem:[%s225 + $0xa0] sm:$0xff]
        %v290 = vld [vmem:[%s225 + $0xa8] sm:$0xff]
        %v291 = vld [vmem:[%s225 + $0xb0] sm:$0xff]
        %v292 = vld [vmem:[%s225 + $0xb8] sm:$0xff]
        %v293 = vld [vmem:[%s225 + $0xc0] sm:$0xff]
        %v294 = vld [vmem:[%s225 + $0xc8] sm:$0xff]
        %v295 = vld [vmem:[%s225 + $0xd0] sm:$0xff]
        %v296 = vld [vmem:[%s225 + $0xd8] sm:$0xff]
        %v297 = vld [vmem:[%s225 + $0xe0] sm:$0xff]
        %v298 = vld [vmem:[%s225 + $0xe8] sm:$0xff]
        %v299 = vld [vmem:[%s225 + $0xf0] sm:$0xff]
        %v300 = vld [vmem:[%s225 + $0xf8] sm:$0xff]
        %v333 = vunpack.c.l.b16 %v269
        %v334 = vunpack.c.h.b16 %v269
        %v335 = vunpack.c.l.b16 %v270
        %v336 = vunpack.c.h.b16 %v270
        %v337 = vunpack.c.l.b16 %v271
        %v338 = vunpack.c.h.b16 %v271
        %v339 = vunpack.c.l.b16 %v272
        %v340 = vunpack.c.h.b16 %v272
        %v341 = vunpack.c.l.b16 %v273
        %v342 = vunpack.c.h.b16 %v273
        %v343 = vunpack.c.l.b16 %v274
        %v344 = vunpack.c.h.b16 %v274
        %v345 = vunpack.c.l.b16 %v275
        %v346 = vunpack.c.h.b16 %v275
        %v347 = vunpack.c.l.b16 %v276
        %v348 = vunpack.c.h.b16 %v276
        %v349 = vunpack.c.l.b16 %v277
        %v350 = vunpack.c.h.b16 %v277
        %v351 = vunpack.c.l.b16 %v278
        %v352 = vunpack.c.h.b16 %v278
        %v353 = vunpack.c.l.b16 %v279
        %v354 = vunpack.c.h.b16 %v279
        %v355 = vunpack.c.l.b16 %v280
        %v356 = vunpack.c.h.b16 %v280
        %v357 = vunpack.c.l.b16 %v281
        %v358 = vunpack.c.h.b16 %v281
        %v359 = vunpack.c.l.b16 %v282
        %v360 = vunpack.c.h.b16 %v282
        %v361 = vunpack.c.l.b16 %v283
        %v362 = vunpack.c.h.b16 %v283
        %v363 = vunpack.c.l.b16 %v284
        %v364 = vunpack.c.h.b16 %v284
        %v365 = vunpack.c.l.b16 %v285
        %v366 = vunpack.c.h.b16 %v285
        %v367 = vunpack.c.l.b16 %v286
        %v368 = vunpack.c.h.b16 %v286
        %v369 = vunpack.c.l.b16 %v287
        %v370 = vunpack.c.h.b16 %v287
        %v371 = vunpack.c.l.b16 %v288
        %v372 = vunpack.c.h.b16 %v288
        %v373 = vunpack.c.l.b16 %v289
        %v374 = vunpack.c.h.b16 %v289
        %v375 = vunpack.c.l.b16 %v290
        %v376 = vunpack.c.h.b16 %v290
        %v377 = vunpack.c.l.b16 %v291
        %v378 = vunpack.c.h.b16 %v291
        %v379 = vunpack.c.l.b16 %v292
        %v380 = vunpack.c.h.b16 %v292
        %v381 = vunpack.c.l.b16 %v293
        %v382 = vunpack.c.h.b16 %v293
        %v383 = vunpack.c.l.b16 %v294
        %v384 = vunpack.c.h.b16 %v294
        %v385 = vunpack.c.l.b16 %v295
        %v386 = vunpack.c.h.b16 %v295
        %v387 = vunpack.c.l.b16 %v296
        %v388 = vunpack.c.h.b16 %v296
        %v389 = vunpack.c.l.b16 %v297
        %v390 = vunpack.c.h.b16 %v297
        %v391 = vunpack.c.l.b16 %v298
        %v392 = vunpack.c.h.b16 %v298
        %v393 = vunpack.c.l.b16 %v299
        %v394 = vunpack.c.h.b16 %v299
        %v395 = vunpack.c.l.b16 %v300
        %v396 = vunpack.c.h.b16 %v300
        %v397 = vpack.c.b16 %v337, %v333
        %v398 = vpack.c.b16 %v338, %v334
        %v399 = vpack.c.b16 %v339, %v335
        %v400 = vpack.c.b16 %v340, %v336
        %v401 = vpack.c.b16 %v345, %v341
        %v402 = vpack.c.b16 %v346, %v342
        %v403 = vpack.c.b16 %v347, %v343
        %v404 = vpack.c.b16 %v348, %v344
        %v405 = vpack.c.b16 %v353, %v349
        %v406 = vpack.c.b16 %v354, %v350
        %v407 = vpack.c.b16 %v355, %v351
        %v408 = vpack.c.b16 %v356, %v352
        %v409 = vpack.c.b16 %v361, %v357
        %v410 = vpack.c.b16 %v362, %v358
        %v411 = vpack.c.b16 %v363, %v359
        %v412 = vpack.c.b16 %v364, %v360
        %v413 = vpack.c.b16 %v369, %v365
        %v414 = vpack.c.b16 %v370, %v366
        %v415 = vpack.c.b16 %v371, %v367
        %v416 = vpack.c.b16 %v372, %v368
        %v417 = vpack.c.b16 %v377, %v373
        %v418 = vpack.c.b16 %v378, %v374
        %v419 = vpack.c.b16 %v379, %v375
        %v420 = vpack.c.b16 %v380, %v376
        %v421 = vpack.c.b16 %v385, %v381
        %v422 = vpack.c.b16 %v386, %v382
        %v423 = vpack.c.b16 %v387, %v383
        %v424 = vpack.c.b16 %v388, %v384
        %v425 = vpack.c.b16 %v393, %v389
        %v426 = vpack.c.b16 %v394, %v390
        %v427 = vpack.c.b16 %v395, %v391
        %v428 = vpack.c.b16 %v396, %v392
        %461 = vmatprep.subr.bf16.mxu0 %v426
        %462 = vmatpush1.bf16.msra.mxu0 %v425
        %463 = vmatprep.subr.bf16.mxu0 %v422
        %464 = vmatpush1.bf16.msra.mxu0 %v421
        %465 = vmatprep.subr.bf16.mxu0 %v418
        %466 = vmatpush1.bf16.msra.mxu0 %v417
        %467 = vmatprep.subr.bf16.mxu0 %v414
        %468 = vmatpush1.bf16.msra.mxu0 %v413
        %469 = vmatprep.subr.bf16.mxu0 %v410
        %470 = vmatpush1.bf16.msra.mxu0 %v409
        %471 = vmatprep.subr.bf16.mxu0 %v406
        %472 = vmatpush1.bf16.msra.mxu0 %v405
        %473 = vmatprep.subr.bf16.mxu0 %v402
        %474 = vmatpush1.bf16.msra.mxu0 %v401
        %475 = vmatprep.subr.bf16.mxu0 %v398
        %476 = vmatpush1.bf16.msra.mxu0 %v397
        %477 = vmatprep.subr.bf16.mxu0 0
        %478 = vmatpush2.bf16.msra.mxu0 0
        %479 = vmatprep.subr.bf16.mxu0 0
        %480 = vmatpush2.bf16.msra.mxu0 0
        %481 = vmatprep.subr.bf16.mxu0 0
        %482 = vmatpush2.bf16.msra.mxu0 0
        %483 = vmatprep.subr.bf16.mxu0 0
        %484 = vmatpush2.bf16.msra.mxu0 0
        %485 = vmatprep.subr.bf16.mxu0 0
        %486 = vmatpush2.bf16.msra.mxu0 0
        %487 = vmatprep.subr.bf16.mxu0 0
        %488 = vmatpush2.bf16.msra.mxu0 0
        %489 = vmatprep.subr.bf16.mxu0 0
        %490 = vmatpush2.bf16.msra.mxu0 0
        %491 = vmatprep.subr.bf16.mxu0 0
        %492 = vmatpush2.bf16.msra.mxu0 0
        %493 = vmatprep.mubr.bf16.mxu0 0
        %494 = vmatmul.mubr.bf16.gmra.mxu0 %v268
        %v495 = vpop.f32.mrf.mxu0
        %v496 = vadd.f32 0.0, %v495
        %v497 = vpop.f32.mrf.mxu0
        %v498 = vadd.f32 0.0, %v497
        %v499 = vpop.f32.mrf.mxu0
        %v500 = vpop.f32.mrf.mxu0
        %501 = vdwg.mxu0
        %502 = vmatprep.subr.bf16.mxu0 %v428
        %503 = vmatpush1.bf16.msra.mxu0 %v427
        %504 = vmatprep.subr.bf16.mxu0 %v424
        %505 = vmatpush1.bf16.msra.mxu0 %v423
        %506 = vmatprep.subr.bf16.mxu0 %v420
        %507 = vmatpush1.bf16.msra.mxu0 %v419
        %508 = vmatprep.subr.bf16.mxu0 %v416
        %509 = vmatpush1.bf16.msra.mxu0 %v415
        %510 = vmatprep.subr.bf16.mxu0 %v412
        %511 = vmatpush1.bf16.msra.mxu0 %v411
        %512 = vmatprep.subr.bf16.mxu0 %v408
        %513 = vmatpush1.bf16.msra.mxu0 %v407
        %514 = vmatprep.subr.bf16.mxu0 %v404
        %515 = vmatpush1.bf16.msra.mxu0 %v403
        %516 = vmatprep.subr.bf16.mxu0 %v400
        %517 = vmatpush1.bf16.msra.mxu0 %v399
        %518 = vmatprep.subr.bf16.mxu0 0
        %519 = vmatpush2.bf16.msra.mxu0 0
        %520 = vmatprep.subr.bf16.mxu0 0
        %521 = vmatpush2.bf16.msra.mxu0 0
        %522 = vmatprep.subr.bf16.mxu0 0
        %523 = vmatpush2.bf16.msra.mxu0 0
        %524 = vmatprep.subr.bf16.mxu0 0
        %525 = vmatpush2.bf16.msra.mxu0 0
        %526 = vmatprep.subr.bf16.mxu0 0
        %527 = vmatpush2.bf16.msra.mxu0 0
        %528 = vmatprep.subr.bf16.mxu0 0
        %529 = vmatpush2.bf16.msra.mxu0 0
        %530 = vmatprep.subr.bf16.mxu0 0
        %531 = vmatpush2.bf16.msra.mxu0 0
        %532 = vmatprep.subr.bf16.mxu0 0
        %533 = vmatpush2.bf16.msra.mxu0 0
        %534 = vmatprep.mubr.bf16.mxu0 0
        %535 = vmatmul.mubr.bf16.gmra.mxu0 %v268
        %v536 = vpop.f32.mrf.mxu0
        %v537 = vadd.f32 0.0, %v536
        %v538 = vpop.f32.mrf.mxu0
        %v539 = vadd.f32 0.0, %v538
        %v540 = vpop.f32.mrf.mxu0
        %v541 = vpop.f32.mrf.mxu0
        %542 = vdwg.mxu0
        %543 = vst [vmem:[%s265] sm:$0xff] %v496
        %544 = vst [vmem:[%s265 + $0x8] sm:$0xff] %v498
        %545 = vst [vmem:[%s265 + $0x10] sm:$0xff] %v537
        %546 = vst [vmem:[%s265 + $0x18] sm:$0xff] %v539
        %s547 = smul.u32 4, %s18
        %p548 = scmp.lt.s32.totalorder %s17, 0
        %s549 = scalar_select %p548, %s17, 0
        %p550 = scmp.lt.s32.totalorder %s547, 63
        %s551 = scalar_select %p550, %s547, 63
        %s552 = smul.addr %s549, 64
        %s553 = sadd.s32 %s551, %s552
        %s554 = smul.addr %s553, 8
        %s555 = scalar_lea.vmem %s2, %s554
        // Predicated region
        $region52: #{generator_forward.14} parent=46 // pred_check
          %p556 = pneg %p97
        $region53: #{generator_forward.14} parent=46 // pred_check_branch
          %558 = sbr.rel (%p556) target = $region55
        $region54: #{generator_forward.14} parent=46 // pred_region
          %s559 = smul.u32 4, %s18
        $region55: #{generator_forward.14} parent=46 // pred_fallthru
          _
      $region47: #{generator_forward.14} parent=5 // pred_fallthru
        _
      %p560 = scmp.le.s32.totalorder 2, %s8
      // Predicated region
      $region56: #{generator_forward.14} parent=5 // pred_check
        %p561 = pneg %p560
      $region57: #{generator_forward.14} parent=5 // pred_check_branch
        %563 = sbr.rel (%p561) target = $region59
      $region58: #{generator_forward.14} parent=5 // pred_region
        %s564 = ssub.s32 %s8, 2
        // Predicated region
        $region60: #{generator_forward.14} parent=58 // pred_check
          %p565 = pneg %p103
        $region61: #{generator_forward.14} parent=58 // pred_check_branch
          %567 = sbr.rel (%p565) target = $region63
        $region62: #{generator_forward.14} parent=58 // pred_region
          %s568 = smul.u32 4, %s20
          %p569 = scmp.lt.s32.totalorder %s19, 0
          %s570 = scalar_select %p569, %s19, 0
          %p571 = scmp.lt.s32.totalorder %s568, 63
          %s572 = scalar_select %p571, %s568, 63
          %s573 = smul.addr %s570, 64
          %s574 = sadd.s32 %s572, %s573
          %s575 = smul.addr %s574, 8
          %s576 = scalar_lea.vmem %s2, %s575
        $region63: #{generator_forward.14} parent=58 // pred_fallthru
          _
      $region59: #{generator_forward.14} parent=5 // pred_fallthru
        _
    $region6: #{generator_forward.14} parent=1 // loop_footer
      %s12 = sadd.s32 1, %s8
    $region7: #{generator_forward.14} parent=1 // loop_footer_branch
      %7 = sbr.rel target = $region3
    $region8: #{generator_forward.14} parent=1 // loop_exit
      _

// kernel: generator_forward.15
$region0: #{generator_forward.15}
  #allocation0 [shape = 'u32[]', space=smem, size = 0x4, offset = 0x4, fixed_abs, tag = 'smem constant byte address 0x4 - core index']
  #allocation1 [shape = 'u32[144,128]{1,0:T(1,128)}', space=vmem, size = 0x12000, scoped, tag = 'internal scratch']
  %s0 = inlined_call_operand.vmem [shape: f32[32,512], index: 0, kind: input, shape index: {}]
  %s1 = inlined_call_operand.vmem [shape: f32[1,512], index: 1, kind: input, shape index: {}]
  %s2 = inlined_call_operand.vmem [shape: f32[8,512], index: 2, kind: output, shape index: {0}]
  %s3 = inlined_call_operand.vmem [shape: f32[8,512], index: 3, kind: output, shape index: {1}]
  %4 = xla_tuple %s2, %s3
  %s5 = sld [smem:[#allocation0]]
  $region30: #{generator_forward.15} parent=0
    _
  %s7 = ssub.s32 1, %s5
  %s8 = scalar_select 0, %s7, %s5
  // Predicated region
  $region2: #{generator_forward.15} parent=0 // pred_check
    _
  $region3: #{generator_forward.15} parent=0 // pred_check_branch
    %10 = sbr.rel (0) target = $region5
  $region4: #{generator_forward.15} parent=0 // pred_region
    _
  $region5: #{generator_forward.15} parent=0 // pred_fallthru
    _
  // Predicated region
  $region6: #{generator_forward.15} parent=0 // pred_check
    _
  $region7: #{generator_forward.15} parent=0 // pred_check_branch
    %12 = sbr.rel (0) target = $region9
  $region8: #{generator_forward.15} parent=0 // pred_region
    _
  $region9: #{generator_forward.15} parent=0 // pred_fallthru
    _
  %p13 = scmp.eq.s32.totalorder 0, 0
  // Predicated region
  $region10: #{generator_forward.15} parent=0 // pred_check
    %p14 = pneg %p13
  $region11: #{generator_forward.15} parent=0 // pred_check_branch
    %16 = sbr.rel (%p14) target = $region13
  $region12: #{generator_forward.15} parent=0 // pred_region
    %17 = vst [vmem:[%s2] sm:$0xff] 0.0
    %18 = vst [vmem:[%s2 + $0x8] sm:$0xff] 0.0
    %19 = vst [vmem:[%s2 + $0x10] sm:$0xff] 0.0
    %20 = vst [vmem:[%s2 + $0x18] sm:$0xff] 0.0
    %21 = vst [vmem:[%s3] sm:$0xff] 0.0
    %22 = vst [vmem:[%s3 + $0x8] sm:$0xff] 0.0
    %23 = vst [vmem:[%s3 + $0x10] sm:$0xff] 0.0
    %24 = vst [vmem:[%s3 + $0x18] sm:$0xff] 0.0
  $region13: #{generator_forward.15} parent=0 // pred_fallthru
    _
  %v25 = vld [vmem:[%s0] sm:$0xff]
  %v26 = vld [vmem:[%s0 + $0x8] sm:$0xff]
  %v27 = vld [vmem:[%s0 + $0x10] sm:$0xff]
  %v28 = vld [vmem:[%s0 + $0x18] sm:$0xff]
  %v29 = vld [vmem:[%s0 + $0x20] sm:$0xff]
  %v30 = vld [vmem:[%s0 + $0x28] sm:$0xff]
  %v31 = vld [vmem:[%s0 + $0x30] sm:$0xff]
  %v32 = vld [vmem:[%s0 + $0x38] sm:$0xff]
  %v33 = vld [vmem:[%s0 + $0x40] sm:$0xff]
  %v34 = vld [vmem:[%s0 + $0x48] sm:$0xff]
  %v35 = vld [vmem:[%s0 + $0x50] sm:$0xff]
  %v36 = vld [vmem:[%s0 + $0x58] sm:$0xff]
  %v37 = vld [vmem:[%s0 + $0x60] sm:$0xff]
  %v38 = vld [vmem:[%s0 + $0x68] sm:$0xff]
  %v39 = vld [vmem:[%s0 + $0x70] sm:$0xff]
  %v40 = vld [vmem:[%s0 + $0x78] sm:$0xff]
  %v41 = vld [vmem:[%s1] sm:$0xf]
  %v43 = vlaneseq
  %v44 = vshrl.u32 %v43, 7
  %v45 = vsub.s32 0, %v44
  %v46 = vrot.slane %v41, %v45
  %v47 = vlaneseq
  %v48 = vshrl.u32 %v47, 7
  %v49 = vsub.s32 1, %v48
  %v50 = vrot.slane %v41, %v49
  %v51 = vlaneseq
  %v52 = vshrl.u32 %v51, 7
  %v53 = vsub.s32 2, %v52
  %v54 = vrot.slane %v41, %v53
  %v55 = vlaneseq
  %v56 = vshrl.u32 %v55, 7
  %v57 = vsub.s32 3, %v56
  %v58 = vrot.slane %v41, %v57
  %v63 = vadd.f32 %v25, %v46
  %v64 = vadd.f32 %v26, %v50
  %v65 = vadd.f32 %v27, %v54
  %v66 = vadd.f32 %v28, %v58
  %v67 = vadd.f32 %v29, %v46
  %v68 = vadd.f32 %v30, %v50
  %v69 = vadd.f32 %v31, %v54
  %v70 = vadd.f32 %v32, %v58
  %v71 = vadd.f32 %v33, %v46
  %v72 = vadd.f32 %v34, %v50
  %v73 = vadd.f32 %v35, %v54
  %v74 = vadd.f32 %v36, %v58
  %v75 = vadd.f32 %v37, %v46
  %v76 = vadd.f32 %v38, %v50
  %v77 = vadd.f32 %v39, %v54
  %v78 = vadd.f32 %v40, %v58
  %s79 = smul.u32 0, 32
  %v80 = vlaneseq
  %v81 = vshrl.u32 %v80, 7
  %v82 = vadd.s32 %v81, 8
  %v83 = vadd.s32 %v81, 16
  %v84 = vadd.s32 %v81, 24
  %v85 = vstv %s79
  %v86 = vadd.s32 %v85, %v81
  %v87 = vadd.s32 %v85, %v82
  %v88 = vadd.s32 %v85, %v83
  %v89 = vadd.s32 %v85, %v84
  %vm90 = vcmp.lt.s32.totalorder %v86, 32
  %vm91 = vcmp.lt.s32.totalorder %v87, 32
  %vm92 = vcmp.lt.s32.totalorder %v88, 32
  %vm93 = vcmp.lt.s32.totalorder %v89, 32
  %v94 = vsel %vm90, %v63, 0.0
  %v95 = vsel %vm90, %v64, 0.0
  %v96 = vsel %vm90, %v65, 0.0
  %v97 = vsel %vm90, %v66, 0.0
  %v98 = vsel %vm91, %v67, 0.0
  %v99 = vsel %vm91, %v68, 0.0
  %v100 = vsel %vm91, %v69, 0.0
  %v101 = vsel %vm91, %v70, 0.0
  %v102 = vsel %vm92, %v71, 0.0
  %v103 = vsel %vm92, %v72, 0.0
  %v104 = vsel %vm92, %v73, 0.0
  %v105 = vsel %vm92, %v74, 0.0
  %v106 = vsel %vm93, %v75, 0.0
  %v107 = vsel %vm93, %v76, 0.0
  %v108 = vsel %vm93, %v77, 0.0
  %v109 = vsel %vm93, %v78, 0.0
  %v110 = vadd.f32 %v94, %v98
  %v111 = vadd.f32 %v110, %v102
  %v112 = vadd.f32 %v111, %v106
  %v113 = vrot.slane %v112, 4
  %v114 = vadd.f32 %v112, %v113
  %v115 = vrot.slane %v114, 2
  %v116 = vadd.f32 %v114, %v115
  %v117 = vrot.slane %v116, 1
  %v118 = vadd.f32 %v116, %v117
  %v119 = vadd.f32 %v95, %v99
  %v120 = vadd.f32 %v119, %v103
  %v121 = vadd.f32 %v120, %v107
  %v122 = vrot.slane %v121, 4
  %v123 = vadd.f32 %v121, %v122
  %v124 = vrot.slane %v123, 2
  %v125 = vadd.f32 %v123, %v124
  %v126 = vrot.slane %v125, 1
  %v127 = vadd.f32 %v125, %v126
  %v128 = vadd.f32 %v96, %v100
  %v129 = vadd.f32 %v128, %v104
  %v130 = vadd.f32 %v129, %v108
  %v131 = vrot.slane %v130, 4
  %v132 = vadd.f32 %v130, %v131
  %v133 = vrot.slane %v132, 2
  %v134 = vadd.f32 %v132, %v133
  %v135 = vrot.slane %v134, 1
  %v136 = vadd.f32 %v134, %v135
  %v137 = vadd.f32 %v97, %v101
  %v138 = vadd.f32 %v137, %v105
  %v139 = vadd.f32 %v138, %v109
  %v140 = vrot.slane %v139, 4
  %v141 = vadd.f32 %v139, %v140
  %v142 = vrot.slane %v141, 2
  %v143 = vadd.f32 %v141, %v142
  %v144 = vrot.slane %v143, 1
  %v145 = vadd.f32 %v143, %v144
  %v146 = vmul.f32 %v94, %v94
  %v147 = vmul.f32 %v95, %v95
  %v148 = vmul.f32 %v96, %v96
  %v149 = vmul.f32 %v97, %v97
  %v150 = vmul.f32 %v98, %v98
  %v151 = vmul.f32 %v99, %v99
  %v152 = vmul.f32 %v100, %v100
  %v153 = vmul.f32 %v101, %v101
  %v154 = vmul.f32 %v102, %v102
  %v155 = vmul.f32 %v103, %v103
  %v156 = vmul.f32 %v104, %v104
  %v157 = vmul.f32 %v105, %v105
  %v158 = vmul.f32 %v106, %v106
  %v159 = vmul.f32 %v107, %v107
  %v160 = vmul.f32 %v108, %v108
  %v161 = vmul.f32 %v109, %v109
  %v162 = vadd.f32 %v146, %v150
  %v163 = vadd.f32 %v162, %v154
  %v164 = vadd.f32 %v163, %v158
  %v165 = vrot.slane %v164, 4
  %v166 = vadd.f32 %v164, %v165
  %v167 = vrot.slane %v166, 2
  %v168 = vadd.f32 %v166, %v167
  %v169 = vrot.slane %v168, 1
  %v170 = vadd.f32 %v168, %v169
  %v171 = vadd.f32 %v147, %v151
  %v172 = vadd.f32 %v171, %v155
  %v173 = vadd.f32 %v172, %v159
  %v174 = vrot.slane %v173, 4
  %v175 = vadd.f32 %v173, %v174
  %v176 = vrot.slane %v175, 2
  %v177 = vadd.f32 %v175, %v176
  %v178 = vrot.slane %v177, 1
  %v179 = vadd.f32 %v177, %v178
  %v180 = vadd.f32 %v148, %v152
  %v181 = vadd.f32 %v180, %v156
  %v182 = vadd.f32 %v181, %v160
  %v183 = vrot.slane %v182, 4
  %v184 = vadd.f32 %v182, %v183
  %v185 = vrot.slane %v184, 2
  %v186 = vadd.f32 %v184, %v185
  %v187 = vrot.slane %v186, 1
  %v188 = vadd.f32 %v186, %v187
  %v189 = vadd.f32 %v149, %v153
  %v190 = vadd.f32 %v189, %v157
  %v191 = vadd.f32 %v190, %v161
  %v192 = vrot.slane %v191, 4
  %v193 = vadd.f32 %v191, %v192
  %v194 = vrot.slane %v193, 2
  %v195 = vadd.f32 %v193, %v194
  %v196 = vrot.slane %v195, 1
  %v197 = vadd.f32 %v195, %v196
  %v198 = vld [vmem:[%s2] sm:$0xff]
  %v199 = vld [vmem:[%s2 + $0x8] sm:$0xff]
  %v200 = vld [vmem:[%s2 + $0x10] sm:$0xff]
  %v201 = vld [vmem:[%s2 + $0x18] sm:$0xff]
  %v202 = vadd.f32 %v198, %v118
  %v203 = vadd.f32 %v199, %v127
  %v204 = vadd.f32 %v200, %v136
  %v205 = vadd.f32 %v201, %v145
  %206 = vst [vmem:[%s2] sm:$0xff] %v202
  %207 = vst [vmem:[%s2 + $0x8] sm:$0xff] %v203
  %208 = vst [vmem:[%s2 + $0x10] sm:$0xff] %v204
  %209 = vst [vmem:[%s2 + $0x18] sm:$0xff] %v205
  %v210 = vld [vmem:[%s3] sm:$0xff]
  %v211 = vld [vmem:[%s3 + $0x8] sm:$0xff]
  %v212 = vld [vmem:[%s3 + $0x10] sm:$0xff]
  %v213 = vld [vmem:[%s3 + $0x18] sm:$0xff]
  %v214 = vadd.f32 %v210, %v170
  %v215 = vadd.f32 %v211, %v179
  %v216 = vadd.f32 %v212, %v188
  %v217 = vadd.f32 %v213, %v197
  %218 = vst [vmem:[%s3] sm:$0xff] %v214
  %219 = vst [vmem:[%s3 + $0x8] sm:$0xff] %v215
  %220 = vst [vmem:[%s3 + $0x10] sm:$0xff] %v216
  %221 = vst [vmem:[%s3 + $0x18] sm:$0xff] %v217
  // Predicated region
  $region14: #{generator_forward.15} parent=0 // pred_check
    _
  $region15: #{generator_forward.15} parent=0 // pred_check_branch
    %223 = sbr.rel (0) target = $region17
  $region16: #{generator_forward.15} parent=0 // pred_region
    _
  $region17: #{generator_forward.15} parent=0 // pred_fallthru
    _
  // Predicated region
  $region18: #{generator_forward.15} parent=0 // pred_check
    _
  $region19: #{generator_forward.15} parent=0 // pred_check_branch
    %225 = sbr.rel (0) target = $region21
  $region20: #{generator_forward.15} parent=0 // pred_region
    _
  $region21: #{generator_forward.15} parent=0 // pred_fallthru
    _
  // Predicated region
  $region22: #{generator_forward.15} parent=0 // pred_check
    _
  $region23: #{generator_forward.15} parent=0 // pred_check_branch
    %227 = sbr.rel (0) target = $region25
  $region24: #{generator_forward.15} parent=0 // pred_region
    _
  $region25: #{generator_forward.15} parent=0 // pred_fallthru
    _
  // Predicated region
  $region26: #{generator_forward.15} parent=0 // pred_check
    _
  $region27: #{generator_forward.15} parent=0 // pred_check_branch
    %229 = sbr.rel (0) target = $region29
  $region28: #{generator_forward.15} parent=0 // pred_region
    _
  $region29: #{generator_forward.15} parent=0 // pred_fallthru
    _

// kernel: generator_forward.16
$region0: #{generator_forward.16}
  #allocation0 [shape = 'u32[]', space=smem, size = 0x4, offset = 0x4, fixed_abs, tag = 'smem constant byte address 0x4 - core index']
  #allocation1 [shape = 'u32[144,128]{1,0:T(1,128)}', space=vmem, size = 0x12000, scoped, tag = 'internal scratch']
  %s0 = inlined_call_operand.vmem [shape: f32[32,512], index: 0, kind: input, shape index: {}]
  %s1 = inlined_call_operand.vmem [shape: f32[1,512], index: 1, kind: input, shape index: {}]
  %s2 = inlined_call_operand.vmem [shape: f32[1,512], index: 2, kind: input, shape index: {}]
  %s3 = inlined_call_operand.vmem [shape: f32[1,512], index: 3, kind: input, shape index: {}]
  %s4 = inlined_call_operand.vmem [shape: f32[8,512], index: 4, kind: input, shape index: {}]
  %s5 = inlined_call_operand.vmem [shape: f32[8,512], index: 5, kind: input, shape index: {}]
  %s6 = inlined_call_operand.vmem [shape: f32[32,512], index: 6, kind: output, shape index: {}]
  %s7 = sld [smem:[#allocation0]]
  $region34: #{generator_forward.16} parent=0
    _
  %s9 = ssub.s32 1, %s7
  %s10 = scalar_select 0, %s9, %s7
  // Predicated region
  $region2: #{generator_forward.16} parent=0 // pred_check
    _
  $region3: #{generator_forward.16} parent=0 // pred_check_branch
    %12 = sbr.rel (0) target = $region5
  $region4: #{generator_forward.16} parent=0 // pred_region
    _
  $region5: #{generator_forward.16} parent=0 // pred_fallthru
    _
  // Predicated region
  $region6: #{generator_forward.16} parent=0 // pred_check
    _
  $region7: #{generator_forward.16} parent=0 // pred_check_branch
    %14 = sbr.rel (0) target = $region9
  $region8: #{generator_forward.16} parent=0 // pred_region
    _
  $region9: #{generator_forward.16} parent=0 // pred_fallthru
    _
  // Predicated region
  $region10: #{generator_forward.16} parent=0 // pred_check
    _
  $region11: #{generator_forward.16} parent=0 // pred_check_branch
    %16 = sbr.rel (0) target = $region13
  $region12: #{generator_forward.16} parent=0 // pred_region
    _
  $region13: #{generator_forward.16} parent=0 // pred_fallthru
    _
  // Predicated region
  $region14: #{generator_forward.16} parent=0 // pred_check
    _
  $region15: #{generator_forward.16} parent=0 // pred_check_branch
    %18 = sbr.rel (0) target = $region17
  $region16: #{generator_forward.16} parent=0 // pred_region
    _
  $region17: #{generator_forward.16} parent=0 // pred_fallthru
    _
  // Predicated region
  $region18: #{generator_forward.16} parent=0 // pred_check
    _
  $region19: #{generator_forward.16} parent=0 // pred_check_branch
    %20 = sbr.rel (0) target = $region21
  $region20: #{generator_forward.16} parent=0 // pred_region
    _
  $region21: #{generator_forward.16} parent=0 // pred_fallthru
    _
  // Predicated region
  $region22: #{generator_forward.16} parent=0 // pred_check
    _
  $region23: #{generator_forward.16} parent=0 // pred_check_branch
    %22 = sbr.rel (0) target = $region25
  $region24: #{generator_forward.16} parent=0 // pred_region
    _
  $region25: #{generator_forward.16} parent=0 // pred_fallthru
    _
  %v23 = vld [vmem:[%s4] ss:$8 sm:$0xf]
  %v24 = vmul.f32 %v23, 0.03125
  %v25 = vld [vmem:[%s5] ss:$8 sm:$0xf]
  %v26 = vmul.f32 %v25, 0.03125
  %v27 = vmul.f32 %v24, %v24
  %v28 = vsub.f32 %v26, %v27
  %v29 = vadd.f32 %v28, 1e-05
  %v30 = vrsqrt.pop %v29
  %v31 = vld [vmem:[%s0] sm:$0xff]
  %v32 = vld [vmem:[%s0 + $0x8] sm:$0xff]
  %v33 = vld [vmem:[%s0 + $0x10] sm:$0xff]
  %v34 = vld [vmem:[%s0 + $0x18] sm:$0xff]
  %v35 = vld [vmem:[%s0 + $0x20] sm:$0xff]
  %v36 = vld [vmem:[%s0 + $0x28] sm:$0xff]
  %v37 = vld [vmem:[%s0 + $0x30] sm:$0xff]
  %v38 = vld [vmem:[%s0 + $0x38] sm:$0xff]
  %v39 = vld [vmem:[%s0 + $0x40] sm:$0xff]
  %v40 = vld [vmem:[%s0 + $0x48] sm:$0xff]
  %v41 = vld [vmem:[%s0 + $0x50] sm:$0xff]
  %v42 = vld [vmem:[%s0 + $0x58] sm:$0xff]
  %v43 = vld [vmem:[%s0 + $0x60] sm:$0xff]
  %v44 = vld [vmem:[%s0 + $0x68] sm:$0xff]
  %v45 = vld [vmem:[%s0 + $0x70] sm:$0xff]
  %v46 = vld [vmem:[%s0 + $0x78] sm:$0xff]
  %v47 = vld [vmem:[%s1] sm:$0xf]
  %v49 = vlaneseq
  %v50 = vshrl.u32 %v49, 7
  %v51 = vsub.s32 0, %v50
  %v52 = vrot.slane %v47, %v51
  %v53 = vlaneseq
  %v54 = vshrl.u32 %v53, 7
  %v55 = vsub.s32 1, %v54
  %v56 = vrot.slane %v47, %v55
  %v57 = vlaneseq
  %v58 = vshrl.u32 %v57, 7
  %v59 = vsub.s32 2, %v58
  %v60 = vrot.slane %v47, %v59
  %v61 = vlaneseq
  %v62 = vshrl.u32 %v61, 7
  %v63 = vsub.s32 3, %v62
  %v64 = vrot.slane %v47, %v63
  %v69 = vadd.f32 %v31, %v52
  %v70 = vadd.f32 %v32, %v56
  %v71 = vadd.f32 %v33, %v60
  %v72 = vadd.f32 %v34, %v64
  %v73 = vadd.f32 %v35, %v52
  %v74 = vadd.f32 %v36, %v56
  %v75 = vadd.f32 %v37, %v60
  %v76 = vadd.f32 %v38, %v64
  %v77 = vadd.f32 %v39, %v52
  %v78 = vadd.f32 %v40, %v56
  %v79 = vadd.f32 %v41, %v60
  %v80 = vadd.f32 %v42, %v64
  %v81 = vadd.f32 %v43, %v52
  %v82 = vadd.f32 %v44, %v56
  %v83 = vadd.f32 %v45, %v60
  %v84 = vadd.f32 %v46, %v64
  %v86 = vlaneseq
  %v87 = vshrl.u32 %v86, 7
  %v88 = vsub.s32 0, %v87
  %v89 = vrot.slane %v24, %v88
  %v90 = vlaneseq
  %v91 = vshrl.u32 %v90, 7
  %v92 = vsub.s32 1, %v91
  %v93 = vrot.slane %v24, %v92
  %v94 = vlaneseq
  %v95 = vshrl.u32 %v94, 7
  %v96 = vsub.s32 2, %v95
  %v97 = vrot.slane %v24, %v96
  %v98 = vlaneseq
  %v99 = vshrl.u32 %v98, 7
  %v100 = vsub.s32 3, %v99
  %v101 = vrot.slane %v24, %v100
  %v106 = vsub.f32 %v69, %v89
  %v107 = vsub.f32 %v70, %v93
  %v108 = vsub.f32 %v71, %v97
  %v109 = vsub.f32 %v72, %v101
  %v110 = vsub.f32 %v73, %v89
  %v111 = vsub.f32 %v74, %v93
  %v112 = vsub.f32 %v75, %v97
  %v113 = vsub.f32 %v76, %v101
  %v114 = vsub.f32 %v77, %v89
  %v115 = vsub.f32 %v78, %v93
  %v116 = vsub.f32 %v79, %v97
  %v117 = vsub.f32 %v80, %v101
  %v118 = vsub.f32 %v81, %v89
  %v119 = vsub.f32 %v82, %v93
  %v120 = vsub.f32 %v83, %v97
  %v121 = vsub.f32 %v84, %v101
  %v122 = vld [vmem:[%s2] sm:$0xf]
  %v123 = vmul.f32 %v30, %v122
  %v125 = vlaneseq
  %v126 = vshrl.u32 %v125, 7
  %v127 = vsub.s32 0, %v126
  %v128 = vrot.slane %v123, %v127
  %v129 = vlaneseq
  %v130 = vshrl.u32 %v129, 7
  %v131 = vsub.s32 1, %v130
  %v132 = vrot.slane %v123, %v131
  %v133 = vlaneseq
  %v134 = vshrl.u32 %v133, 7
  %v135 = vsub.s32 2, %v134
  %v136 = vrot.slane %v123, %v135
  %v137 = vlaneseq
  %v138 = vshrl.u32 %v137, 7
  %v139 = vsub.s32 3, %v138
  %v140 = vrot.slane %v123, %v139
  %v145 = vmul.f32 %v106, %v128
  %v146 = vmul.f32 %v107, %v132
  %v147 = vmul.f32 %v108, %v136
  %v148 = vmul.f32 %v109, %v140
  %v149 = vmul.f32 %v110, %v128
  %v150 = vmul.f32 %v111, %v132
  %v151 = vmul.f32 %v112, %v136
  %v152 = vmul.f32 %v113, %v140
  %v153 = vmul.f32 %v114, %v128
  %v154 = vmul.f32 %v115, %v132
  %v155 = vmul.f32 %v116, %v136
  %v156 = vmul.f32 %v117, %v140
  %v157 = vmul.f32 %v118, %v128
  %v158 = vmul.f32 %v119, %v132
  %v159 = vmul.f32 %v120, %v136
  %v160 = vmul.f32 %v121, %v140
  %v161 = vld [vmem:[%s3] sm:$0xf]
  %v163 = vlaneseq
  %v164 = vshrl.u32 %v163, 7
  %v165 = vsub.s32 0, %v164
  %v166 = vrot.slane %v161, %v165
  %v167 = vlaneseq
  %v168 = vshrl.u32 %v167, 7
  %v169 = vsub.s32 1, %v168
  %v170 = vrot.slane %v161, %v169
  %v171 = vlaneseq
  %v172 = vshrl.u32 %v171, 7
  %v173 = vsub.s32 2, %v172
  %v174 = vrot.slane %v161, %v173
  %v175 = vlaneseq
  %v176 = vshrl.u32 %v175, 7
  %v177 = vsub.s32 3, %v176
  %v178 = vrot.slane %v161, %v177
  %v183 = vadd.f32 %v145, %v166
  %v184 = vadd.f32 %v146, %v170
  %v185 = vadd.f32 %v147, %v174
  %v186 = vadd.f32 %v148, %v178
  %v187 = vadd.f32 %v149, %v166
  %v188 = vadd.f32 %v150, %v170
  %v189 = vadd.f32 %v151, %v174
  %v190 = vadd.f32 %v152, %v178
  %v191 = vadd.f32 %v153, %v166
  %v192 = vadd.f32 %v154, %v170
  %v193 = vadd.f32 %v155, %v174
  %v194 = vadd.f32 %v156, %v178
  %v195 = vadd.f32 %v157, %v166
  %v196 = vadd.f32 %v158, %v170
  %v197 = vadd.f32 %v159, %v174
  %v198 = vadd.f32 %v160, %v178
  %v199 = vmax.f32 %v183, 0.0
  %v200 = vmax.f32 %v184, 0.0
  %v201 = vmax.f32 %v185, 0.0
  %v202 = vmax.f32 %v186, 0.0
  %v203 = vmax.f32 %v187, 0.0
  %v204 = vmax.f32 %v188, 0.0
  %v205 = vmax.f32 %v189, 0.0
  %v206 = vmax.f32 %v190, 0.0
  %v207 = vmax.f32 %v191, 0.0
  %v208 = vmax.f32 %v192, 0.0
  %v209 = vmax.f32 %v193, 0.0
  %v210 = vmax.f32 %v194, 0.0
  %v211 = vmax.f32 %v195, 0.0
  %v212 = vmax.f32 %v196, 0.0
  %v213 = vmax.f32 %v197, 0.0
  %v214 = vmax.f32 %v198, 0.0
  %215 = vst [vmem:[%s6] sm:$0xff] %v199
  %216 = vst [vmem:[%s6 + $0x8] sm:$0xff] %v200
  %217 = vst [vmem:[%s6 + $0x10] sm:$0xff] %v201
  %218 = vst [vmem:[%s6 + $0x18] sm:$0xff] %v202
  %219 = vst [vmem:[%s6 + $0x20] sm:$0xff] %v203
  %220 = vst [vmem:[%s6 + $0x28] sm:$0xff] %v204
  %221 = vst [vmem:[%s6 + $0x30] sm:$0xff] %v205
  %222 = vst [vmem:[%s6 + $0x38] sm:$0xff] %v206
  %223 = vst [vmem:[%s6 + $0x40] sm:$0xff] %v207
  %224 = vst [vmem:[%s6 + $0x48] sm:$0xff] %v208
  %225 = vst [vmem:[%s6 + $0x50] sm:$0xff] %v209
  %226 = vst [vmem:[%s6 + $0x58] sm:$0xff] %v210
  %227 = vst [vmem:[%s6 + $0x60] sm:$0xff] %v211
  %228 = vst [vmem:[%s6 + $0x68] sm:$0xff] %v212
  %229 = vst [vmem:[%s6 + $0x70] sm:$0xff] %v213
  %230 = vst [vmem:[%s6 + $0x78] sm:$0xff] %v214
  // Predicated region
  $region26: #{generator_forward.16} parent=0 // pred_check
    _
  $region27: #{generator_forward.16} parent=0 // pred_check_branch
    %232 = sbr.rel (0) target = $region29
  $region28: #{generator_forward.16} parent=0 // pred_region
    _
  $region29: #{generator_forward.16} parent=0 // pred_fallthru
    _
  // Predicated region
  $region30: #{generator_forward.16} parent=0 // pred_check
    _
  $region31: #{generator_forward.16} parent=0 // pred_check_branch
    %234 = sbr.rel (0) target = $region33
  $region32: #{generator_forward.16} parent=0 // pred_region
    _
  $region33: #{generator_forward.16} parent=0 // pred_fallthru
    _

// kernel: generator_forward.17
$region0: #{generator_forward.17}
  #allocation0 [shape = 'u32[]', space=smem, size = 0x4, offset = 0x4, fixed_abs, tag = 'smem constant byte address 0x4 - core index']
  #allocation1 [shape = 'u32[144,128]{1,0:T(1,128)}', space=vmem, size = 0x12000, scoped, tag = 'internal scratch']
  %s0 = inlined_call_operand.vmem [shape: bf16[32,512], index: 0, kind: input, shape index: {}]
  %s1 = inlined_call_operand.vmem [shape: bf16[512,4096], index: 1, kind: input, shape index: {}]
  %s2 = inlined_call_operand.vmem [shape: f32[32,4096], index: 2, kind: output, shape index: {}]
  %s3 = sld [smem:[#allocation0]]
  $region83: #{generator_forward.17} parent=0
    _
  %s5 = ssub.s32 1, %s3
  %s6 = scalar_select 0, %s5, %s3
  $region1: #{generator_forward.17} parent=0
    #allocation2 [shape = 'u8[1048576]{0}', space=vmem, size = 0x100000, scoped, tag = 'input window, operand 1']
    #allocation3 [shape = 'u8[131072]{0}', space=vmem, size = 0x20000, scoped, tag = 'output window, operand 0']
    loop: start=0, step=1, limit=10
    $region2: #{generator_forward.17} parent=1 // loop_pre_header
      _
    $region3: #{generator_forward.17} parent=1 // loop_header
      %s8 = sphi 0, %s12
      %p9 = scmp.ge.s32.totalorder %s8, 10
      %s15 = sphi 0, %s27
      %s16 = sphi 0, %s23
      %s17 = sphi 0, %s15
      %s18 = sphi 0, %s16
      %s19 = sphi 0, %s17
      %s20 = sphi 0, %s18
      %s30 = sphi 0, %s32
      %s33 = sphi 0, %s30
      %s34 = sphi 0, %s33
      %s50 = sphi 0, %s34
      %s56 = sphi 0, %s58
      %s59 = sphi 0, %s56
      %s60 = sphi 0, %s59
      %s76 = sphi 0, %s60
      %s84 = sphi 0, %s86
      %s87 = sphi 0, %s84
      %s88 = sphi 0, %s87
      %s104 = sphi 0, %s88
    $region4: #{generator_forward.17} parent=1 // loop_header_branch
      %11 = sbr.rel (%p9) target = $region8
    $region5: #{generator_forward.17} parent=1 // loop_body
      %s13 = ssub.s32 %s8, 1
      %s14 = ssub.s32 %s8, 2
      %s21 = sadd.s32 1, %s16
      %p22 = scmp.ge.s32.totalorder %s21, 8
      %s23 = scalar_select %p22, 0, %s21
      %s24 = sadd.s32 1, %s15
      %s25 = scalar_select %p22, %s24, %s15
      %p26 = scmp.ge.s32.totalorder %s25, 1
      %s27 = scalar_select %p26, 0, %s25
      %s28 = ssub.s32 %s15, %s27
      %p29 = scmp.eq.s32.totalorder %s28, 0
      %s31 = sadd.s32 %s30, 1
      %s32 = scalar_select %p29, %s30, %s31
      %p35 = pneg %p29
      %p36 = scmp.eq.s32.totalorder %s8, 7
      %p37 = por %p35, %p36
      %p38 = scmp.ne.s32.totalorder %s30, %s33
      %p39 = scmp.eq.s32.totalorder %s8, 0
      %p40 = por %p38, %p39
      %p41 = scmp.ne.s32.totalorder %s30, %s33
      %p42 = scmp.eq.s32.totalorder %s13, 7
      %p43 = por %p41, %p42
      %p44 = scmp.ne.s32.totalorder %s33, %s34
      %p45 = scmp.eq.s32.totalorder %s13, 0
      %p46 = por %p44, %p45
      %p47 = scmp.ne.s32.totalorder %s33, %s34
      %p48 = scmp.eq.s32.totalorder %s14, 7
      %p49 = por %p47, %p48
      %p51 = scmp.ne.s32.totalorder %s34, %s50
      %p52 = scmp.eq.s32.totalorder %s14, 0
      %p53 = por %p51, %p52
      %s54 = ssub.s32 %s16, %s23
      %p55 = scmp.eq.s32.totalorder %s54, 0
      %s57 = sadd.s32 %s56, 1
      %s58 = scalar_select %p55, %s56, %s57
      %p61 = pneg %p55
      %p62 = scmp.eq.s32.totalorder %s8, 7
      %p63 = por %p61, %p62
      %p64 = scmp.ne.s32.totalorder %s56, %s59
      %p65 = scmp.eq.s32.totalorder %s8, 0
      %p66 = por %p64, %p65
      %p67 = scmp.ne.s32.totalorder %s56, %s59
      %p68 = scmp.eq.s32.totalorder %s13, 7
      %p69 = por %p67, %p68
      %p70 = scmp.ne.s32.totalorder %s59, %s60
      %p71 = scmp.eq.s32.totalorder %s13, 0
      %p72 = por %p70, %p71
      %p73 = scmp.ne.s32.totalorder %s59, %s60
      %p74 = scmp.eq.s32.totalorder %s14, 7
      %p75 = por %p73, %p74
      %p77 = scmp.ne.s32.totalorder %s60, %s76
      %p78 = scmp.eq.s32.totalorder %s14, 0
      %p79 = por %p77, %p78
      %s80 = ssub.s32 %s15, %s27
      %s81 = ssub.s32 %s16, %s23
      %s82 = sor.u32 %s80, %s81
      %p83 = scmp.eq.s32.totalorder %s82, 0
      %s85 = sadd.s32 %s84, 1
      %s86 = scalar_select %p83, %s84, %s85
      %p89 = pneg %p83
      %p90 = scmp.eq.s32.totalorder %s8, 7
      %p91 = por %p89, %p90
      %p92 = scmp.ne.s32.totalorder %s84, %s87
      %p93 = scmp.eq.s32.totalorder %s8, 0
      %p94 = por %p92, %p93
      %p95 = scmp.ne.s32.totalorder %s84, %s87
      %p96 = scmp.eq.s32.totalorder %s13, 7
      %p97 = por %p95, %p96
      %p98 = scmp.ne.s32.totalorder %s87, %s88
      %p99 = scmp.eq.s32.totalorder %s13, 0
      %p100 = por %p98, %p99
      %p101 = scmp.ne.s32.totalorder %s87, %s88
      %p102 = scmp.eq.s32.totalorder %s14, 7
      %p103 = por %p101, %p102
      %p105 = scmp.ne.s32.totalorder %s88, %s104
      %p106 = scmp.eq.s32.totalorder %s14, 0
      %p107 = por %p105, %p106
      %p108 = scmp.le.s32.totalorder 1, %s8
      %p109 = scmp.lt.s32.totalorder %s8, 9
      %p110 = pnand %p108, %p109
      %p111 = pneg %p110
      // Predicated region
      $region9: #{generator_forward.17} parent=5 // pred_check
        _
      $region10: #{generator_forward.17} parent=5 // pred_check_branch
        %113 = sbr.rel (%p110) target = $region12
      $region11: #{generator_forward.17} parent=5 // pred_region
        %s114 = ssub.s32 %s8, 1
        // Predicated region
        $region13: #{generator_forward.17} parent=11 // pred_check
          %p115 = pneg %p46
        $region14: #{generator_forward.17} parent=11 // pred_check_branch
          %117 = sbr.rel (%p115) target = $region16
        $region15: #{generator_forward.17} parent=11 // pred_region
          %s118 = smul.u32 4, %s17
          %p119 = scmp.lt.s32.totalorder %s118, 3
          %s120 = scalar_select %p119, %s118, 3
          %s121 = smul.addr %s120, 4
          %s122 = smul.addr %s121, 4
          %s123 = scalar_lea.vmem %s0, %s122
          %s124 = smul.u32 4, %s17
        $region16: #{generator_forward.17} parent=11 // pred_fallthru
          _
      $region12: #{generator_forward.17} parent=5 // pred_fallthru
        _
      %p125 = scmp.lt.s32.totalorder %s8, 8
      // Predicated region
      $region17: #{generator_forward.17} parent=5 // pred_check
        %p126 = pneg %p125
      $region18: #{generator_forward.17} parent=5 // pred_check_branch
        %128 = sbr.rel (%p126) target = $region20
      $region19: #{generator_forward.17} parent=5 // pred_region
        // Predicated region
        $region21: #{generator_forward.17} parent=19 // pred_check
          %p129 = pneg %p66
        $region22: #{generator_forward.17} parent=19 // pred_check_branch
          %131 = sbr.rel (%p129) target = $region24
        $region23: #{generator_forward.17} parent=19 // pred_region
          %s132 = sand.u32 %s56, 1
          %s133 = sand.u32 %s56, 1
          %s134 = smul.addr %s133, 1024
          %s135 = scalar_lea.vmem [#allocation2], %s134
          %s136 = smul.u32 4, %s16
          %s137 = smul.addr %s136, 4
          %s138 = scalar_lea.vmem %s1, %s137
          // Predicated region
          $region25: #{generator_forward.17} parent=23 // pred_check
            _
          $region26: #{generator_forward.17} parent=23 // pred_check_branch
            %140 = sbr.rel (0) target = $region28
          $region27: #{generator_forward.17} parent=23 // pred_region
            // Predicated region
            $region29: #{generator_forward.17} parent=27 // pred_check
              _
            $region30: #{generator_forward.17} parent=27 // pred_check_branch
              %142 = sbr.rel (0) target = $region32
            $region31: #{generator_forward.17} parent=27 // pred_region
              loop: start=0, step=1, limit=1
              $region33: #{generator_forward.17} parent=31 // loop_pre_header
                _
              $region34: #{generator_forward.17} parent=31 // loop_header
                %s144 = sphi 0, %s148
                %p145 = scmp.ge.s32.totalorder %s144, 1
                %s149 = sphi %s138, %s138
                %s150 = sphi %s135, %s135
              $region35: #{generator_forward.17} parent=31 // loop_header_branch
                %147 = sbr.rel (%p145) target = $region39
              $region36: #{generator_forward.17} parent=31 // loop_body
                %v151 = vld [vmem:[%s149] sm:$0xff]
                %152 = vst [vmem:[%s150] sm:$0xff] %v151
                %v153 = vld [vmem:[%s149 + $0x8] sm:$0xff]
                %154 = vst [vmem:[%s150 + $0x8] sm:$0xff] %v153
                %v155 = vld [vmem:[%s149 + $0x80] sm:$0xff]
                %156 = vst [vmem:[%s150 + $0x10] sm:$0xff] %v155
                %v157 = vld [vmem:[%s149 + $0x88] sm:$0xff]
                %158 = vst [vmem:[%s150 + $0x18] sm:$0xff] %v157
                %v159 = vld [vmem:[%s149 + $0x100] sm:$0xff]
                %160 = vst [vmem:[%s150 + $0x20] sm:$0xff] %v159
                %v161 = vld [vmem:[%s149 + $0x108] sm:$0xff]
                %162 = vst [vmem:[%s150 + $0x28] sm:$0xff] %v161
                %v163 = vld [vmem:[%s149 + $0x180] sm:$0xff]
                %164 = vst [vmem:[%s150 + $0x30] sm:$0xff] %v163
                %v165 = vld [vmem:[%s149 + $0x188] sm:$0xff]
                %166 = vst [vmem:[%s150 + $0x38] sm:$0xff] %v165
                %v167 = vld [vmem:[%s149 + $0x200] sm:$0xff]
                %168 = vst [vmem:[%s150 + $0x40] sm:$0xff] %v167
                %v169 = vld [vmem:[%s149 + $0x208] sm:$0xff]
                %170 = vst [vmem:[%s150 + $0x48] sm:$0xff] %v169
                %v171 = vld [vmem:[%s149 + $0x280] sm:$0xff]
                %172 = vst [vmem:[%s150 + $0x50] sm:$0xff] %v171
                %v173 = vld [vmem:[%s149 + $0x288] sm:$0xff]
                %174 = vst [vmem:[%s150 + $0x58] sm:$0xff] %v173
                %v175 = vld [vmem:[%s149 + $0x300] sm:$0xff]
                %176 = vst [vmem:[%s150 + $0x60] sm:$0xff] %v175
                %v177 = vld [vmem:[%s149 + $0x308] sm:$0xff]
                %178 = vst [vmem:[%s150 + $0x68] sm:$0xff] %v177
                %v179 = vld [vmem:[%s149 + $0x380] sm:$0xff]
                %180 = vst [vmem:[%s150 + $0x70] sm:$0xff] %v179
                %v181 = vld [vmem:[%s149 + $0x388] sm:$0xff]
                %182 = vst [vmem:[%s150 + $0x78] sm:$0xff] %v181
                %v183 = vld [vmem:[%s149 + $0x400] sm:$0xff]
                %184 = vst [vmem:[%s150 + $0x80] sm:$0xff] %v183
                %v185 = vld [vmem:[%s149 + $0x408] sm:$0xff]
                %186 = vst [vmem:[%s150 + $0x88] sm:$0xff] %v185
                %v187 = vld [vmem:[%s149 + $0x480] sm:$0xff]
                %188 = vst [vmem:[%s150 + $0x90] sm:$0xff] %v187
                %v189 = vld [vmem:[%s149 + $0x488] sm:$0xff]
                %190 = vst [vmem:[%s150 + $0x98] sm:$0xff] %v189
                %v191 = vld [vmem:[%s149 + $0x500] sm:$0xff]
                %192 = vst [vmem:[%s150 + $0xa0] sm:$0xff] %v191
                %v193 = vld [vmem:[%s149 + $0x508] sm:$0xff]
                %194 = vst [vmem:[%s150 + $0xa8] sm:$0xff] %v193
                %v195 = vld [vmem:[%s149 + $0x580] sm:$0xff]
                %196 = vst [vmem:[%s150 + $0xb0] sm:$0xff] %v195
                %v197 = vld [vmem:[%s149 + $0x588] sm:$0xff]
                %198 = vst [vmem:[%s150 + $0xb8] sm:$0xff] %v197
                %v199 = vld [vmem:[%s149 + $0x600] sm:$0xff]
                %200 = vst [vmem:[%s150 + $0xc0] sm:$0xff] %v199
                %v201 = vld [vmem:[%s149 + $0x608] sm:$0xff]
                %202 = vst [vmem:[%s150 + $0xc8] sm:$0xff] %v201
                %v203 = vld [vmem:[%s149 + $0x680] sm:$0xff]
                %204 = vst [vmem:[%s150 + $0xd0] sm:$0xff] %v203
                %v205 = vld [vmem:[%s149 + $0x688] sm:$0xff]
                %206 = vst [vmem:[%s150 + $0xd8] sm:$0xff] %v205
                %v207 = vld [vmem:[%s149 + $0x700] sm:$0xff]
                %208 = vst [vmem:[%s150 + $0xe0] sm:$0xff] %v207
                %v209 = vld [vmem:[%s149 + $0x708] sm:$0xff]
                %210 = vst [vmem:[%s150 + $0xe8] sm:$0xff] %v209
                %v211 = vld [vmem:[%s149 + $0x780] sm:$0xff]
                %212 = vst [vmem:[%s150 + $0xf0] sm:$0xff] %v211
                %v213 = vld [vmem:[%s149 + $0x788] sm:$0xff]
                %214 = vst [vmem:[%s150 + $0xf8] sm:$0xff] %v213
                %v215 = vld [vmem:[%s149 + $0x800] sm:$0xff]
                %216 = vst [vmem:[%s150 + $0x100] sm:$0xff] %v215
                %v217 = vld [vmem:[%s149 + $0x808] sm:$0xff]
                %218 = vst [vmem:[%s150 + $0x108] sm:$0xff] %v217
                %v219 = vld [vmem:[%s149 + $0x880] sm:$0xff]
                %220 = vst [vmem:[%s150 + $0x110] sm:$0xff] %v219
                %v221 = vld [vmem:[%s149 + $0x888] sm:$0xff]
                %222 = vst [vmem:[%s150 + $0x118] sm:$0xff] %v221
                %v223 = vld [vmem:[%s149 + $0x900] sm:$0xff]
                %224 = vst [vmem:[%s150 + $0x120] sm:$0xff] %v223
                %v225 = vld [vmem:[%s149 + $0x908] sm:$0xff]
                %226 = vst [vmem:[%s150 + $0x128] sm:$0xff] %v225
                %v227 = vld [vmem:[%s149 + $0x980] sm:$0xff]
                %228 = vst [vmem:[%s150 + $0x130] sm:$0xff] %v227
                %v229 = vld [vmem:[%s149 + $0x988] sm:$0xff]
                %230 = vst [vmem:[%s150 + $0x138] sm:$0xff] %v229
                %v231 = vld [vmem:[%s149 + $0xa00] sm:$0xff]
                %232 = vst [vmem:[%s150 + $0x140] sm:$0xff] %v231
                %v233 = vld [vmem:[%s149 + $0xa08] sm:$0xff]
                %234 = vst [vmem:[%s150 + $0x148] sm:$0xff] %v233
                %v235 = vld [vmem:[%s149 + $0xa80] sm:$0xff]
                %236 = vst [vmem:[%s150 + $0x150] sm:$0xff] %v235
                %v237 = vld [vmem:[%s149 + $0xa88] sm:$0xff]
                %238 = vst [vmem:[%s150 + $0x158] sm:$0xff] %v237
                %v239 = vld [vmem:[%s149 + $0xb00] sm:$0xff]
                %240 = vst [vmem:[%s150 + $0x160] sm:$0xff] %v239
                %v241 = vld [vmem:[%s149 + $0xb08] sm:$0xff]
                %242 = vst [vmem:[%s150 + $0x168] sm:$0xff] %v241
                %v243 = vld [vmem:[%s149 + $0xb80] sm:$0xff]
                %244 = vst [vmem:[%s150 + $0x170] sm:$0xff] %v243
                %v245 = vld [vmem:[%s149 + $0xb88] sm:$0xff]
                %246 = vst [vmem:[%s150 + $0x178] sm:$0xff] %v245
                %v247 = vld [vmem:[%s149 + $0xc00] sm:$0xff]
                %248 = vst [vmem:[%s150 + $0x180] sm:$0xff] %v247
                %v249 = vld [vmem:[%s149 + $0xc08] sm:$0xff]
                %250 = vst [vmem:[%s150 + $0x188] sm:$0xff] %v249
                %v251 = vld [vmem:[%s149 + $0xc80] sm:$0xff]
                %252 = vst [vmem:[%s150 + $0x190] sm:$0xff] %v251
                %v253 = vld [vmem:[%s149 + $0xc88] sm:$0xff]
                %254 = vst [vmem:[%s150 + $0x198] sm:$0xff] %v253
                %v255 = vld [vmem:[%s149 + $0xd00] sm:$0xff]
                %256 = vst [vmem:[%s150 + $0x1a0] sm:$0xff] %v255
                %v257 = vld [vmem:[%s149 + $0xd08] sm:$0xff]
                %258 = vst [vmem:[%s150 + $0x1a8] sm:$0xff] %v257
                %v259 = vld [vmem:[%s149 + $0xd80] sm:$0xff]
                %260 = vst [vmem:[%s150 + $0x1b0] sm:$0xff] %v259
                %v261 = vld [vmem:[%s149 + $0xd88] sm:$0xff]
                %262 = vst [vmem:[%s150 + $0x1b8] sm:$0xff] %v261
                %v263 = vld [vmem:[%s149 + $0xe00] sm:$0xff]
                %264 = vst [vmem:[%s150 + $0x1c0] sm:$0xff] %v263
                %v265 = vld [vmem:[%s149 + $0xe08] sm:$0xff]
                %266 = vst [vmem:[%s150 + $0x1c8] sm:$0xff] %v265
                %v267 = vld [vmem:[%s149 + $0xe80] sm:$0xff]
                %268 = vst [vmem:[%s150 + $0x1d0] sm:$0xff] %v267
                %v269 = vld [vmem:[%s149 + $0xe88] sm:$0xff]
                %270 = vst [vmem:[%s150 + $0x1d8] sm:$0xff] %v269
                %v271 = vld [vmem:[%s149 + $0xf00] sm:$0xff]
                %272 = vst [vmem:[%s150 + $0x1e0] sm:$0xff] %v271
                %v273 = vld [vmem:[%s149 + $0xf08] sm:$0xff]
                %274 = vst [vmem:[%s150 + $0x1e8] sm:$0xff] %v273
                %v275 = vld [vmem:[%s149 + $0xf80] sm:$0xff]
                %276 = vst [vmem:[%s150 + $0x1f0] sm:$0xff] %v275
                %v277 = vld [vmem:[%s149 + $0xf88] sm:$0xff]
                %278 = vst [vmem:[%s150 + $0x1f8] sm:$0xff] %v277
                %v279 = vld [vmem:[%s149 + $0x1000] sm:$0xff]
                %280 = vst [vmem:[%s150 + $0x200] sm:$0xff] %v279
                %v281 = vld [vmem:[%s149 + $0x1008] sm:$0xff]
                %282 = vst [vmem:[%s150 + $0x208] sm:$0xff] %v281
                %v283 = vld [vmem:[%s149 + $0x1080] sm:$0xff]
                %284 = vst [vmem:[%s150 + $0x210] sm:$0xff] %v283
                %v285 = vld [vmem:[%s149 + $0x1088] sm:$0xff]
                %286 = vst [vmem:[%s150 + $0x218] sm:$0xff] %v285
                %v287 = vld [vmem:[%s149 + $0x1100] sm:$0xff]
                %288 = vst [vmem:[%s150 + $0x220] sm:$0xff] %v287
                %v289 = vld [vmem:[%s149 + $0x1108] sm:$0xff]
                %290 = vst [vmem:[%s150 + $0x228] sm:$0xff] %v289
                %v291 = vld [vmem:[%s149 + $0x1180] sm:$0xff]
                %292 = vst [vmem:[%s150 + $0x230] sm:$0xff] %v291
                %v293 = vld [vmem:[%s149 + $0x1188] sm:$0xff]
                %294 = vst [vmem:[%s150 + $0x238] sm:$0xff] %v293
                %v295 = vld [vmem:[%s149 + $0x1200] sm:$0xff]
                %296 = vst [vmem:[%s150 + $0x240] sm:$0xff] %v295
                %v297 = vld [vmem:[%s149 + $0x1208] sm:$0xff]
                %298 = vst [vmem:[%s150 + $0x248] sm:$0xff] %v297
                %v299 = vld [vmem:[%s149 + $0x1280] sm:$0xff]
                %300 = vst [vmem:[%s150 + $0x250] sm:$0xff] %v299
                %v301 = vld [vmem:[%s149 + $0x1288] sm:$0xff]
                %302 = vst [vmem:[%s150 + $0x258] sm:$0xff] %v301
                %v303 = vld [vmem:[%s149 + $0x1300] sm:$0xff]
                %304 = vst [vmem:[%s150 + $0x260] sm:$0xff] %v303
                %v305 = vld [vmem:[%s149 + $0x1308] sm:$0xff]
                %306 = vst [vmem:[%s150 + $0x268] sm:$0xff] %v305
                %v307 = vld [vmem:[%s149 + $0x1380] sm:$0xff]
                %308 = vst [vmem:[%s150 + $0x270] sm:$0xff] %v307
                %v309 = vld [vmem:[%s149 + $0x1388] sm:$0xff]
                %310 = vst [vmem:[%s150 + $0x278] sm:$0xff] %v309
                %v311 = vld [vmem:[%s149 + $0x1400] sm:$0xff]
                %312 = vst [vmem:[%s150 + $0x280] sm:$0xff] %v311
                %v313 = vld [vmem:[%s149 + $0x1408] sm:$0xff]
                %314 = vst [vmem:[%s150 + $0x288] sm:$0xff] %v313
                %v315 = vld [vmem:[%s149 + $0x1480] sm:$0xff]
                %316 = vst [vmem:[%s150 + $0x290] sm:$0xff] %v315
                %v317 = vld [vmem:[%s149 + $0x1488] sm:$0xff]
                %318 = vst [vmem:[%s150 + $0x298] sm:$0xff] %v317
                %v319 = vld [vmem:[%s149 + $0x1500] sm:$0xff]
                %320 = vst [vmem:[%s150 + $0x2a0] sm:$0xff] %v319
                %v321 = vld [vmem:[%s149 + $0x1508] sm:$0xff]
                %322 = vst [vmem:[%s150 + $0x2a8] sm:$0xff] %v321
                %v323 = vld [vmem:[%s149 + $0x1580] sm:$0xff]
                %324 = vst [vmem:[%s150 + $0x2b0] sm:$0xff] %v323
                %v325 = vld [vmem:[%s149 + $0x1588] sm:$0xff]
                %326 = vst [vmem:[%s150 + $0x2b8] sm:$0xff] %v325
                %v327 = vld [vmem:[%s149 + $0x1600] sm:$0xff]
                %328 = vst [vmem:[%s150 + $0x2c0] sm:$0xff] %v327
                %v329 = vld [vmem:[%s149 + $0x1608] sm:$0xff]
                %330 = vst [vmem:[%s150 + $0x2c8] sm:$0xff] %v329
                %v331 = vld [vmem:[%s149 + $0x1680] sm:$0xff]
                %332 = vst [vmem:[%s150 + $0x2d0] sm:$0xff] %v331
                %v333 = vld [vmem:[%s149 + $0x1688] sm:$0xff]
                %334 = vst [vmem:[%s150 + $0x2d8] sm:$0xff] %v333
                %v335 = vld [vmem:[%s149 + $0x1700] sm:$0xff]
                %336 = vst [vmem:[%s150 + $0x2e0] sm:$0xff] %v335
                %v337 = vld [vmem:[%s149 + $0x1708] sm:$0xff]
                %338 = vst [vmem:[%s150 + $0x2e8] sm:$0xff] %v337
                %v339 = vld [vmem:[%s149 + $0x1780] sm:$0xff]
                %340 = vst [vmem:[%s150 + $0x2f0] sm:$0xff] %v339
                %v341 = vld [vmem:[%s149 + $0x1788] sm:$0xff]
                %342 = vst [vmem:[%s150 + $0x2f8] sm:$0xff] %v341
                %v343 = vld [vmem:[%s149 + $0x1800] sm:$0xff]
                %344 = vst [vmem:[%s150 + $0x300] sm:$0xff] %v343
                %v345 = vld [vmem:[%s149 + $0x1808] sm:$0xff]
                %346 = vst [vmem:[%s150 + $0x308] sm:$0xff] %v345
                %v347 = vld [vmem:[%s149 + $0x1880] sm:$0xff]
                %348 = vst [vmem:[%s150 + $0x310] sm:$0xff] %v347
                %v349 = vld [vmem:[%s149 + $0x1888] sm:$0xff]
                %350 = vst [vmem:[%s150 + $0x318] sm:$0xff] %v349
                %v351 = vld [vmem:[%s149 + $0x1900] sm:$0xff]
                %352 = vst [vmem:[%s150 + $0x320] sm:$0xff] %v351
                %v353 = vld [vmem:[%s149 + $0x1908] sm:$0xff]
                %354 = vst [vmem:[%s150 + $0x328] sm:$0xff] %v353
                %v355 = vld [vmem:[%s149 + $0x1980] sm:$0xff]
                %356 = vst [vmem:[%s150 + $0x330] sm:$0xff] %v355
                %v357 = vld [vmem:[%s149 + $0x1988] sm:$0xff]
                %358 = vst [vmem:[%s150 + $0x338] sm:$0xff] %v357
                %v359 = vld [vmem:[%s149 + $0x1a00] sm:$0xff]
                %360 = vst [vmem:[%s150 + $0x340] sm:$0xff] %v359
                %v361 = vld [vmem:[%s149 + $0x1a08] sm:$0xff]
                %362 = vst [vmem:[%s150 + $0x348] sm:$0xff] %v361
                %v363 = vld [vmem:[%s149 + $0x1a80] sm:$0xff]
                %364 = vst [vmem:[%s150 + $0x350] sm:$0xff] %v363
                %v365 = vld [vmem:[%s149 + $0x1a88] sm:$0xff]
                %366 = vst [vmem:[%s150 + $0x358] sm:$0xff] %v365
                %v367 = vld [vmem:[%s149 + $0x1b00] sm:$0xff]
                %368 = vst [vmem:[%s150 + $0x360] sm:$0xff] %v367
                %v369 = vld [vmem:[%s149 + $0x1b08] sm:$0xff]
                %370 = vst [vmem:[%s150 + $0x368] sm:$0xff] %v369
                %v371 = vld [vmem:[%s149 + $0x1b80] sm:$0xff]
                %372 = vst [vmem:[%s150 + $0x370] sm:$0xff] %v371
                %v373 = vld [vmem:[%s149 + $0x1b88] sm:$0xff]
                %374 = vst [vmem:[%s150 + $0x378] sm:$0xff] %v373
                %v375 = vld [vmem:[%s149 + $0x1c00] sm:$0xff]
                %376 = vst [vmem:[%s150 + $0x380] sm:$0xff] %v375
                %v377 = vld [vmem:[%s149 + $0x1c08] sm:$0xff]
                %378 = vst [vmem:[%s150 + $0x388] sm:$0xff] %v377
                %v379 = vld [vmem:[%s149 + $0x1c80] sm:$0xff]
                %380 = vst [vmem:[%s150 + $0x390] sm:$0xff] %v379
                %v381 = vld [vmem:[%s149 + $0x1c88] sm:$0xff]
                %382 = vst [vmem:[%s150 + $0x398] sm:$0xff] %v381
                %v383 = vld [vmem:[%s149 + $0x1d00] sm:$0xff]
                %384 = vst [vmem:[%s150 + $0x3a0] sm:$0xff] %v383
                %v385 = vld [vmem:[%s149 + $0x1d08] sm:$0xff]
                %386 = vst [vmem:[%s150 + $0x3a8] sm:$0xff] %v385
                %v387 = vld [vmem:[%s149 + $0x1d80] sm:$0xff]
                %388 = vst [vmem:[%s150 + $0x3b0] sm:$0xff] %v387
                %v389 = vld [vmem:[%s149 + $0x1d88] sm:$0xff]
                %390 = vst [vmem:[%s150 + $0x3b8] sm:$0xff] %v389
                %v391 = vld [vmem:[%s149 + $0x1e00] sm:$0xff]
                %392 = vst [vmem:[%s150 + $0x3c0] sm:$0xff] %v391
                %v393 = vld [vmem:[%s149 + $0x1e08] sm:$0xff]
                %394 = vst [vmem:[%s150 + $0x3c8] sm:$0xff] %v393
                %v395 = vld [vmem:[%s149 + $0x1e80] sm:$0xff]
                %396 = vst [vmem:[%s150 + $0x3d0] sm:$0xff] %v395
                %v397 = vld [vmem:[%s149 + $0x1e88] sm:$0xff]
                %398 = vst [vmem:[%s150 + $0x3d8] sm:$0xff] %v397
                %v399 = vld [vmem:[%s149 + $0x1f00] sm:$0xff]
                %400 = vst [vmem:[%s150 + $0x3e0] sm:$0xff] %v399
                %v401 = vld [vmem:[%s149 + $0x1f08] sm:$0xff]
                %402 = vst [vmem:[%s150 + $0x3e8] sm:$0xff] %v401
                %v403 = vld [vmem:[%s149 + $0x1f80] sm:$0xff]
                %404 = vst [vmem:[%s150 + $0x3f0] sm:$0xff] %v403
                %v405 = vld [vmem:[%s149 + $0x1f88] sm:$0xff]
                %406 = vst [vmem:[%s150 + $0x3f8] sm:$0xff] %v405
              $region37: #{generator_forward.17} parent=31 // loop_footer
                %s148 = sadd.s32 1, %s144
              $region38: #{generator_forward.17} parent=31 // loop_footer_branch
                %143 = sbr.rel target = $region34
              $region39: #{generator_forward.17} parent=31 // loop_exit
                _
            $region32: #{generator_forward.17} parent=27 // pred_fallthru
              _
            // Predicated region
            $region40: #{generator_forward.17} parent=27 // pred_check
              _
            $region41: #{generator_forward.17} parent=27 // pred_check_branch
              %408 = sbr.rel target = $region43
            $region42: #{generator_forward.17} parent=27 // pred_region
              _
            $region43: #{generator_forward.17} parent=27 // pred_fallthru
              _
          $region28: #{generator_forward.17} parent=23 // pred_fallthru
            _
          %409 = vnop
        $region24: #{generator_forward.17} parent=19 // pred_fallthru
          _
      $region20: #{generator_forward.17} parent=5 // pred_fallthru
        _
      %p410 = scmp.le.s32.totalorder 1, %s8
      %p411 = scmp.lt.s32.totalorder %s8, 9
      %p412 = pnand %p410, %p411
      %p413 = pneg %p412
      // Predicated region
      $region44: #{generator_forward.17} parent=5 // pred_check
        _
      $region45: #{generator_forward.17} parent=5 // pred_check_branch
        %415 = sbr.rel (%p412) target = $region47
      $region46: #{generator_forward.17} parent=5 // pred_region
        %s416 = ssub.s32 %s8, 1
        %s417 = sand.u32 %s59, 1
        %s418 = sand.u32 %s59, 1
        %s419 = smul.addr %s418, 1024
        %s420 = scalar_lea.vmem [#allocation2], %s419
        // Predicated region
        $region48: #{generator_forward.17} parent=46 // pred_check
          %p421 = pneg %p72
        $region49: #{generator_forward.17} parent=46 // pred_check_branch
          %423 = sbr.rel (%p421) target = $region51
        $region50: #{generator_forward.17} parent=46 // pred_region
          _
        $region51: #{generator_forward.17} parent=46 // pred_fallthru
          _
        %s424 = smul.u32 4, %s17
        %p425 = scmp.lt.s32.totalorder %s424, 3
        %s426 = scalar_select %p425, %s424, 3
        %s427 = smul.addr %s426, 4
        %s428 = smul.addr %s427, 4
        %s429 = scalar_lea.vmem %s0, %s428
        %p430 = pneg %p46
        %p431 = pneg %p43
        %s432 = sand.u32 %s59, 1
        %s433 = sand.u32 %s59, 1
        %s434 = smul.addr %s433, 1024
        %s435 = scalar_lea.vmem [#allocation2], %s434
        %p436 = pneg %p72
        %p437 = pneg %p69
        %p438 = pneg %p100
        %p439 = pneg %p97
        %s440 = sand.u32 %s87, 1
        %s441 = sand.u32 %s87, 1
        %s442 = smul.addr %s441, 128
        %s443 = scalar_lea.vmem [#allocation3], %s442
        %s444 = smul.u32 4, %s17
        %p445 = scmp.lt.s32.totalorder %s444, 3
        %s446 = scalar_select %p445, %s444, 3
        %s447 = smul.addr %s446, 4
        %s448 = smul.addr %s447, 4
        %s449 = scalar_lea.vmem %s0, %s448
        %s450 = smul.u32 4, %s17
        %s451 = smul.u32 4, %s18
        %s452 = smul.u32 4, %s17
        %s453 = smul.u32 4, %s18
        %v454 = vld [vmem:[%s449] sm:$0xff]
        %v455 = vld [vmem:[%s449 + $0x8] sm:$0xff]
        %v456 = vld [vmem:[%s449 + $0x10] sm:$0xff]
        %v457 = vld [vmem:[%s449 + $0x18] sm:$0xff]
        %v458 = vld [vmem:[%s449 + $0x20] sm:$0xff]
        %v459 = vld [vmem:[%s449 + $0x28] sm:$0xff]
        %v460 = vld [vmem:[%s449 + $0x30] sm:$0xff]
        %v461 = vld [vmem:[%s449 + $0x38] sm:$0xff]
        %v462 = vld [vmem:[%s420] sm:$0xff]
        %v463 = vld [vmem:[%s420 + $0x8] sm:$0xff]
        %v464 = vld [vmem:[%s420 + $0x10] sm:$0xff]
        %v465 = vld [vmem:[%s420 + $0x18] sm:$0xff]
        %v466 = vld [vmem:[%s420 + $0x20] sm:$0xff]
        %v467 = vld [vmem:[%s420 + $0x28] sm:$0xff]
        %v468 = vld [vmem:[%s420 + $0x30] sm:$0xff]
        %v469 = vld [vmem:[%s420 + $0x38] sm:$0xff]
        %v470 = vld [vmem:[%s420 + $0x40] sm:$0xff]
        %v471 = vld [vmem:[%s420 + $0x48] sm:$0xff]
        %v472 = vld [vmem:[%s420 + $0x50] sm:$0xff]
        %v473 = vld [vmem:[%s420 + $0x58] sm:$0xff]
        %v474 = vld [vmem:[%s420 + $0x60] sm:$0xff]
        %v475 = vld [vmem:[%s420 + $0x68] sm:$0xff]
        %v476 = vld [vmem:[%s420 + $0x70] sm:$0xff]
        %v477 = vld [vmem:[%s420 + $0x78] sm:$0xff]
        %v478 = vld [vmem:[%s420 + $0x80] sm:$0xff]
        %v479 = vld [vmem:[%s420 + $0x88] sm:$0xff]
        %v480 = vld [vmem:[%s420 + $0x90] sm:$0xff]
        %v481 = vld [vmem:[%s420 + $0x98] sm:$0xff]
        %v482 = vld [vmem:[%s420 + $0xa0] sm:$0xff]
        %v483 = vld [vmem:[%s420 + $0xa8] sm:$0xff]
        %v484 = vld [vmem:[%s420 + $0xb0] sm:$0xff]
        %v485 = vld [vmem:[%s420 + $0xb8] sm:$0xff]
        %v486 = vld [vmem:[%s420 + $0xc0] sm:$0xff]
        %v487 = vld [vmem:[%s420 + $0xc8] sm:$0xff]
        %v488 = vld [vmem:[%s420 + $0xd0] sm:$0xff]
        %v489 = vld [vmem:[%s420 + $0xd8] sm:$0xff]
        %v490 = vld [vmem:[%s420 + $0xe0] sm:$0xff]
        %v491 = vld [vmem:[%s420 + $0xe8] sm:$0xff]
        %v492 = vld [vmem:[%s420 + $0xf0] sm:$0xff]
        %v493 = vld [vmem:[%s420 + $0xf8] sm:$0xff]
        %v494 = vld [vmem:[%s420 + $0x100] sm:$0xff]
        %v495 = vld [vmem:[%s420 + $0x108] sm:$0xff]
        %v496 = vld [vmem:[%s420 + $0x110] sm:$0xff]
        %v497 = vld [vmem:[%s420 + $0x118] sm:$0xff]
        %v498 = vld [vmem:[%s420 + $0x120] sm:$0xff]
        %v499 = vld [vmem:[%s420 + $0x128] sm:$0xff]
        %v500 = vld [vmem:[%s420 + $0x130] sm:$0xff]
        %v501 = vld [vmem:[%s420 + $0x138] sm:$0xff]
        %v502 = vld [vmem:[%s420 + $0x140] sm:$0xff]
        %v503 = vld [vmem:[%s420 + $0x148] sm:$0xff]
        %v504 = vld [vmem:[%s420 + $0x150] sm:$0xff]
        %v505 = vld [vmem:[%s420 + $0x158] sm:$0xff]
        %v506 = vld [vmem:[%s420 + $0x160] sm:$0xff]
        %v507 = vld [vmem:[%s420 + $0x168] sm:$0xff]
        %v508 = vld [vmem:[%s420 + $0x170] sm:$0xff]
        %v509 = vld [vmem:[%s420 + $0x178] sm:$0xff]
        %v510 = vld [vmem:[%s420 + $0x180] sm:$0xff]
        %v511 = vld [vmem:[%s420 + $0x188] sm:$0xff]
        %v512 = vld [vmem:[%s420 + $0x190] sm:$0xff]
        %v513 = vld [vmem:[%s420 + $0x198] sm:$0xff]
        %v514 = vld [vmem:[%s420 + $0x1a0] sm:$0xff]
        %v515 = vld [vmem:[%s420 + $0x1a8] sm:$0xff]
        %v516 = vld [vmem:[%s420 + $0x1b0] sm:$0xff]
        %v517 = vld [vmem:[%s420 + $0x1b8] sm:$0xff]
        %v518 = vld [vmem:[%s420 + $0x1c0] sm:$0xff]
        %v519 = vld [vmem:[%s420 + $0x1c8] sm:$0xff]
        %v520 = vld [vmem:[%s420 + $0x1d0] sm:$0xff]
        %v521 = vld [vmem:[%s420 + $0x1d8] sm:$0xff]
        %v522 = vld [vmem:[%s420 + $0x1e0] sm:$0xff]
        %v523 = vld [vmem:[%s420 + $0x1e8] sm:$0xff]
        %v524 = vld [vmem:[%s420 + $0x1f0] sm:$0xff]
        %v525 = vld [vmem:[%s420 + $0x1f8] sm:$0xff]
        %v526 = vld [vmem:[%s420 + $0x200] sm:$0xff]
        %v527 = vld [vmem:[%s420 + $0x208] sm:$0xff]
        %v528 = vld [vmem:[%s420 + $0x210] sm:$0xff]
        %v529 = vld [vmem:[%s420 + $0x218] sm:$0xff]
        %v530 = vld [vmem:[%s420 + $0x220] sm:$0xff]
        %v531 = vld [vmem:[%s420 + $0x228] sm:$0xff]
        %v532 = vld [vmem:[%s420 + $0x230] sm:$0xff]
        %v533 = vld [vmem:[%s420 + $0x238] sm:$0xff]
        %v534 = vld [vmem:[%s420 + $0x240] sm:$0xff]
        %v535 = vld [vmem:[%s420 + $0x248] sm:$0xff]
        %v536 = vld [vmem:[%s420 + $0x250] sm:$0xff]
        %v537 = vld [vmem:[%s420 + $0x258] sm:$0xff]
        %v538 = vld [vmem:[%s420 + $0x260] sm:$0xff]
        %v539 = vld [vmem:[%s420 + $0x268] sm:$0xff]
        %v540 = vld [vmem:[%s420 + $0x270] sm:$0xff]
        %v541 = vld [vmem:[%s420 + $0x278] sm:$0xff]
        %v542 = vld [vmem:[%s420 + $0x280] sm:$0xff]
        %v543 = vld [vmem:[%s420 + $0x288] sm:$0xff]
        %v544 = vld [vmem:[%s420 + $0x290] sm:$0xff]
        %v545 = vld [vmem:[%s420 + $0x298] sm:$0xff]
        %v546 = vld [vmem:[%s420 + $0x2a0] sm:$0xff]
        %v547 = vld [vmem:[%s420 + $0x2a8] sm:$0xff]
        %v548 = vld [vmem:[%s420 + $0x2b0] sm:$0xff]
        %v549 = vld [vmem:[%s420 + $0x2b8] sm:$0xff]
        %v550 = vld [vmem:[%s420 + $0x2c0] sm:$0xff]
        %v551 = vld [vmem:[%s420 + $0x2c8] sm:$0xff]
        %v552 = vld [vmem:[%s420 + $0x2d0] sm:$0xff]
        %v553 = vld [vmem:[%s420 + $0x2d8] sm:$0xff]
        %v554 = vld [vmem:[%s420 + $0x2e0] sm:$0xff]
        %v555 = vld [vmem:[%s420 + $0x2e8] sm:$0xff]
        %v556 = vld [vmem:[%s420 + $0x2f0] sm:$0xff]
        %v557 = vld [vmem:[%s420 + $0x2f8] sm:$0xff]
        %v558 = vld [vmem:[%s420 + $0x300] sm:$0xff]
        %v559 = vld [vmem:[%s420 + $0x308] sm:$0xff]
        %v560 = vld [vmem:[%s420 + $0x310] sm:$0xff]
        %v561 = vld [vmem:[%s420 + $0x318] sm:$0xff]
        %v562 = vld [vmem:[%s420 + $0x320] sm:$0xff]
        %v563 = vld [vmem:[%s420 + $0x328] sm:$0xff]
        %v564 = vld [vmem:[%s420 + $0x330] sm:$0xff]
        %v565 = vld [vmem:[%s420 + $0x338] sm:$0xff]
        %v566 = vld [vmem:[%s420 + $0x340] sm:$0xff]
        %v567 = vld [vmem:[%s420 + $0x348] sm:$0xff]
        %v568 = vld [vmem:[%s420 + $0x350] sm:$0xff]
        %v569 = vld [vmem:[%s420 + $0x358] sm:$0xff]
        %v570 = vld [vmem:[%s420 + $0x360] sm:$0xff]
        %v571 = vld [vmem:[%s420 + $0x368] sm:$0xff]
        %v572 = vld [vmem:[%s420 + $0x370] sm:$0xff]
        %v573 = vld [vmem:[%s420 + $0x378] sm:$0xff]
        %v574 = vld [vmem:[%s420 + $0x380] sm:$0xff]
        %v575 = vld [vmem:[%s420 + $0x388] sm:$0xff]
        %v576 = vld [vmem:[%s420 + $0x390] sm:$0xff]
        %v577 = vld [vmem:[%s420 + $0x398] sm:$0xff]
        %v578 = vld [vmem:[%s420 + $0x3a0] sm:$0xff]
        %v579 = vld [vmem:[%s420 + $0x3a8] sm:$0xff]
        %v580 = vld [vmem:[%s420 + $0x3b0] sm:$0xff]
        %v581 = vld [vmem:[%s420 + $0x3b8] sm:$0xff]
        %v582 = vld [vmem:[%s420 + $0x3c0] sm:$0xff]
        %v583 = vld [vmem:[%s420 + $0x3c8] sm:$0xff]
        %v584 = vld [vmem:[%s420 + $0x3d0] sm:$0xff]
        %v585 = vld [vmem:[%s420 + $0x3d8] sm:$0xff]
        %v586 = vld [vmem:[%s420 + $0x3e0] sm:$0xff]
        %v587 = vld [vmem:[%s420 + $0x3e8] sm:$0xff]
        %v588 = vld [vmem:[%s420 + $0x3f0] sm:$0xff]
        %v589 = vld [vmem:[%s420 + $0x3f8] sm:$0xff]
        %v598 = vunpack.c.l.b16 %v454
        %v599 = vunpack.c.h.b16 %v454
        %v600 = vunpack.c.l.b16 %v455
        %v601 = vunpack.c.h.b16 %v455
        %v602 = vunpack.c.l.b16 %v456
        %v603 = vunpack.c.h.b16 %v456
        %v604 = vunpack.c.l.b16 %v457
        %v605 = vunpack.c.h.b16 %v457
        %v606 = vunpack.c.l.b16 %v458
        %v607 = vunpack.c.h.b16 %v458
        %v608 = vunpack.c.l.b16 %v459
        %v609 = vunpack.c.h.b16 %v459
        %v610 = vunpack.c.l.b16 %v460
        %v611 = vunpack.c.h.b16 %v460
        %v612 = vunpack.c.l.b16 %v461
        %v613 = vunpack.c.h.b16 %v461
        %v614 = vpack.c.b16 %v602, %v598
        %v615 = vpack.c.b16 %v603, %v599
        %v616 = vpack.c.b16 %v604, %v600
        %v617 = vpack.c.b16 %v605, %v601
        %v618 = vpack.c.b16 %v610, %v606
        %v619 = vpack.c.b16 %v611, %v607
        %v620 = vpack.c.b16 %v612, %v608
        %v621 = vpack.c.b16 %v613, %v609
        %v758 = vunpack.c.l.b16 %v462
        %v759 = vunpack.c.h.b16 %v462
        %v760 = vunpack.c.l.b16 %v463
        %v761 = vunpack.c.h.b16 %v463
        %v762 = vunpack.c.l.b16 %v464
        %v763 = vunpack.c.h.b16 %v464
        %v764 = vunpack.c.l.b16 %v465
        %v765 = vunpack.c.h.b16 %v465
        %v766 = vunpack.c.l.b16 %v466
        %v767 = vunpack.c.h.b16 %v466
        %v768 = vunpack.c.l.b16 %v467
        %v769 = vunpack.c.h.b16 %v467
        %v770 = vunpack.c.l.b16 %v468
        %v771 = vunpack.c.h.b16 %v468
        %v772 = vunpack.c.l.b16 %v469
        %v773 = vunpack.c.h.b16 %v469
        %v774 = vunpack.c.l.b16 %v470
        %v775 = vunpack.c.h.b16 %v470
        %v776 = vunpack.c.l.b16 %v471
        %v777 = vunpack.c.h.b16 %v471
        %v778 = vunpack.c.l.b16 %v472
        %v779 = vunpack.c.h.b16 %v472
        %v780 = vunpack.c.l.b16 %v473
        %v781 = vunpack.c.h.b16 %v473
        %v782 = vunpack.c.l.b16 %v474
        %v783 = vunpack.c.h.b16 %v474
        %v784 = vunpack.c.l.b16 %v475
        %v785 = vunpack.c.h.b16 %v475
        %v786 = vunpack.c.l.b16 %v476
        %v787 = vunpack.c.h.b16 %v476
        %v788 = vunpack.c.l.b16 %v477
        %v789 = vunpack.c.h.b16 %v477
        %v790 = vunpack.c.l.b16 %v478
        %v791 = vunpack.c.h.b16 %v478
        %v792 = vunpack.c.l.b16 %v479
        %v793 = vunpack.c.h.b16 %v479
        %v794 = vunpack.c.l.b16 %v480
        %v795 = vunpack.c.h.b16 %v480
        %v796 = vunpack.c.l.b16 %v481
        %v797 = vunpack.c.h.b16 %v481
        %v798 = vunpack.c.l.b16 %v482
        %v799 = vunpack.c.h.b16 %v482
        %v800 = vunpack.c.l.b16 %v483
        %v801 = vunpack.c.h.b16 %v483
        %v802 = vunpack.c.l.b16 %v484
        %v803 = vunpack.c.h.b16 %v484
        %v804 = vunpack.c.l.b16 %v485
        %v805 = vunpack.c.h.b16 %v485
        %v806 = vunpack.c.l.b16 %v486
        %v807 = vunpack.c.h.b16 %v486
        %v808 = vunpack.c.l.b16 %v487
        %v809 = vunpack.c.h.b16 %v487
        %v810 = vunpack.c.l.b16 %v488
        %v811 = vunpack.c.h.b16 %v488
        %v812 = vunpack.c.l.b16 %v489
        %v813 = vunpack.c.h.b16 %v489
        %v814 = vunpack.c.l.b16 %v490
        %v815 = vunpack.c.h.b16 %v490
        %v816 = vunpack.c.l.b16 %v491
        %v817 = vunpack.c.h.b16 %v491
        %v818 = vunpack.c.l.b16 %v492
        %v819 = vunpack.c.h.b16 %v492
        %v820 = vunpack.c.l.b16 %v493
        %v821 = vunpack.c.h.b16 %v493
        %v822 = vunpack.c.l.b16 %v494
        %v823 = vunpack.c.h.b16 %v494
        %v824 = vunpack.c.l.b16 %v495
        %v825 = vunpack.c.h.b16 %v495
        %v826 = vunpack.c.l.b16 %v496
        %v827 = vunpack.c.h.b16 %v496
        %v828 = vunpack.c.l.b16 %v497
        %v829 = vunpack.c.h.b16 %v497
        %v830 = vunpack.c.l.b16 %v498
        %v831 = vunpack.c.h.b16 %v498
        %v832 = vunpack.c.l.b16 %v499
        %v833 = vunpack.c.h.b16 %v499
        %v834 = vunpack.c.l.b16 %v500
        %v835 = vunpack.c.h.b16 %v500
        %v836 = vunpack.c.l.b16 %v501
        %v837 = vunpack.c.h.b16 %v501
        %v838 = vunpack.c.l.b16 %v502
        %v839 = vunpack.c.h.b16 %v502
        %v840 = vunpack.c.l.b16 %v503
        %v841 = vunpack.c.h.b16 %v503
        %v842 = vunpack.c.l.b16 %v504
        %v843 = vunpack.c.h.b16 %v504
        %v844 = vunpack.c.l.b16 %v505
        %v845 = vunpack.c.h.b16 %v505
        %v846 = vunpack.c.l.b16 %v506
        %v847 = vunpack.c.h.b16 %v506
        %v848 = vunpack.c.l.b16 %v507
        %v849 = vunpack.c.h.b16 %v507
        %v850 = vunpack.c.l.b16 %v508
        %v851 = vunpack.c.h.b16 %v508
        %v852 = vunpack.c.l.b16 %v509
        %v853 = vunpack.c.h.b16 %v509
        %v854 = vunpack.c.l.b16 %v510
        %v855 = vunpack.c.h.b16 %v510
        %v856 = vunpack.c.l.b16 %v511
        %v857 = vunpack.c.h.b16 %v511
        %v858 = vunpack.c.l.b16 %v512
        %v859 = vunpack.c.h.b16 %v512
        %v860 = vunpack.c.l.b16 %v513
        %v861 = vunpack.c.h.b16 %v513
        %v862 = vunpack.c.l.b16 %v514
        %v863 = vunpack.c.h.b16 %v514
        %v864 = vunpack.c.l.b16 %v515
        %v865 = vunpack.c.h.b16 %v515
        %v866 = vunpack.c.l.b16 %v516
        %v867 = vunpack.c.h.b16 %v516
        %v868 = vunpack.c.l.b16 %v517
        %v869 = vunpack.c.h.b16 %v517
        %v870 = vunpack.c.l.b16 %v518
        %v871 = vunpack.c.h.b16 %v518
        %v872 = vunpack.c.l.b16 %v519
        %v873 = vunpack.c.h.b16 %v519
        %v874 = vunpack.c.l.b16 %v520
        %v875 = vunpack.c.h.b16 %v520
        %v876 = vunpack.c.l.b16 %v521
        %v877 = vunpack.c.h.b16 %v521
        %v878 = vunpack.c.l.b16 %v522
        %v879 = vunpack.c.h.b16 %v522
        %v880 = vunpack.c.l.b16 %v523
        %v881 = vunpack.c.h.b16 %v523
        %v882 = vunpack.c.l.b16 %v524
        %v883 = vunpack.c.h.b16 %v524
        %v884 = vunpack.c.l.b16 %v525
        %v885 = vunpack.c.h.b16 %v525
        %v886 = vunpack.c.l.b16 %v526
        %v887 = vunpack.c.h.b16 %v526
        %v888 = vunpack.c.l.b16 %v527
        %v889 = vunpack.c.h.b16 %v527
        %v890 = vunpack.c.l.b16 %v528
        %v891 = vunpack.c.h.b16 %v528
        %v892 = vunpack.c.l.b16 %v529
        %v893 = vunpack.c.h.b16 %v529
        %v894 = vunpack.c.l.b16 %v530
        %v895 = vunpack.c.h.b16 %v530
        %v896 = vunpack.c.l.b16 %v531
        %v897 = vunpack.c.h.b16 %v531
        %v898 = vunpack.c.l.b16 %v532
        %v899 = vunpack.c.h.b16 %v532
        %v900 = vunpack.c.l.b16 %v533
        %v901 = vunpack.c.h.b16 %v533
        %v902 = vunpack.c.l.b16 %v534
        %v903 = vunpack.c.h.b16 %v534
        %v904 = vunpack.c.l.b16 %v535
        %v905 = vunpack.c.h.b16 %v535
        %v906 = vunpack.c.l.b16 %v536
        %v907 = vunpack.c.h.b16 %v536
        %v908 = vunpack.c.l.b16 %v537
        %v909 = vunpack.c.h.b16 %v537
        %v910 = vunpack.c.l.b16 %v538
        %v911 = vunpack.c.h.b16 %v538
        %v912 = vunpack.c.l.b16 %v539
        %v913 = vunpack.c.h.b16 %v539
        %v914 = vunpack.c.l.b16 %v540
        %v915 = vunpack.c.h.b16 %v540
        %v916 = vunpack.c.l.b16 %v541
        %v917 = vunpack.c.h.b16 %v541
        %v918 = vunpack.c.l.b16 %v542
        %v919 = vunpack.c.h.b16 %v542
        %v920 = vunpack.c.l.b16 %v543
        %v921 = vunpack.c.h.b16 %v543
        %v922 = vunpack.c.l.b16 %v544
        %v923 = vunpack.c.h.b16 %v544
        %v924 = vunpack.c.l.b16 %v545
        %v925 = vunpack.c.h.b16 %v545
        %v926 = vunpack.c.l.b16 %v546
        %v927 = vunpack.c.h.b16 %v546
        %v928 = vunpack.c.l.b16 %v547
        %v929 = vunpack.c.h.b16 %v547
        %v930 = vunpack.c.l.b16 %v548
        %v931 = vunpack.c.h.b16 %v548
        %v932 = vunpack.c.l.b16 %v549
        %v933 = vunpack.c.h.b16 %v549
        %v934 = vunpack.c.l.b16 %v550
        %v935 = vunpack.c.h.b16 %v550
        %v936 = vunpack.c.l.b16 %v551
        %v937 = vunpack.c.h.b16 %v551
        %v938 = vunpack.c.l.b16 %v552
        %v939 = vunpack.c.h.b16 %v552
        %v940 = vunpack.c.l.b16 %v553
        %v941 = vunpack.c.h.b16 %v553
        %v942 = vunpack.c.l.b16 %v554
        %v943 = vunpack.c.h.b16 %v554
        %v944 = vunpack.c.l.b16 %v555
        %v945 = vunpack.c.h.b16 %v555
        %v946 = vunpack.c.l.b16 %v556
        %v947 = vunpack.c.h.b16 %v556
        %v948 = vunpack.c.l.b16 %v557
        %v949 = vunpack.c.h.b16 %v557
        %v950 = vunpack.c.l.b16 %v558
        %v951 = vunpack.c.h.b16 %v558
        %v952 = vunpack.c.l.b16 %v559
        %v953 = vunpack.c.h.b16 %v559
        %v954 = vunpack.c.l.b16 %v560
        %v955 = vunpack.c.h.b16 %v560
        %v956 = vunpack.c.l.b16 %v561
        %v957 = vunpack.c.h.b16 %v561
        %v958 = vunpack.c.l.b16 %v562
        %v959 = vunpack.c.h.b16 %v562
        %v960 = vunpack.c.l.b16 %v563
        %v961 = vunpack.c.h.b16 %v563
        %v962 = vunpack.c.l.b16 %v564
        %v963 = vunpack.c.h.b16 %v564
        %v964 = vunpack.c.l.b16 %v565
        %v965 = vunpack.c.h.b16 %v565
        %v966 = vunpack.c.l.b16 %v566
        %v967 = vunpack.c.h.b16 %v566
        %v968 = vunpack.c.l.b16 %v567
        %v969 = vunpack.c.h.b16 %v567
        %v970 = vunpack.c.l.b16 %v568
        %v971 = vunpack.c.h.b16 %v568
        %v972 = vunpack.c.l.b16 %v569
        %v973 = vunpack.c.h.b16 %v569
        %v974 = vunpack.c.l.b16 %v570
        %v975 = vunpack.c.h.b16 %v570
        %v976 = vunpack.c.l.b16 %v571
        %v977 = vunpack.c.h.b16 %v571
        %v978 = vunpack.c.l.b16 %v572
        %v979 = vunpack.c.h.b16 %v572
        %v980 = vunpack.c.l.b16 %v573
        %v981 = vunpack.c.h.b16 %v573
        %v982 = vunpack.c.l.b16 %v574
        %v983 = vunpack.c.h.b16 %v574
        %v984 = vunpack.c.l.b16 %v575
        %v985 = vunpack.c.h.b16 %v575
        %v986 = vunpack.c.l.b16 %v576
        %v987 = vunpack.c.h.b16 %v576
        %v988 = vunpack.c.l.b16 %v577
        %v989 = vunpack.c.h.b16 %v577
        %v990 = vunpack.c.l.b16 %v578
        %v991 = vunpack.c.h.b16 %v578
        %v992 = vunpack.c.l.b16 %v579
        %v993 = vunpack.c.h.b16 %v579
        %v994 = vunpack.c.l.b16 %v580
        %v995 = vunpack.c.h.b16 %v580
        %v996 = vunpack.c.l.b16 %v581
        %v997 = vunpack.c.h.b16 %v581
        %v998 = vunpack.c.l.b16 %v582
        %v999 = vunpack.c.h.b16 %v582
        %v1000 = vunpack.c.l.b16 %v583
        %v1001 = vunpack.c.h.b16 %v583
        %v1002 = vunpack.c.l.b16 %v584
        %v1003 = vunpack.c.h.b16 %v584
        %v1004 = vunpack.c.l.b16 %v585
        %v1005 = vunpack.c.h.b16 %v585
        %v1006 = vunpack.c.l.b16 %v586
        %v1007 = vunpack.c.h.b16 %v586
        %v1008 = vunpack.c.l.b16 %v587
        %v1009 = vunpack.c.h.b16 %v587
        %v1010 = vunpack.c.l.b16 %v588
        %v1011 = vunpack.c.h.b16 %v588
        %v1012 = vunpack.c.l.b16 %v589
        %v1013 = vunpack.c.h.b16 %v589
        %v1014 = vpack.c.b16 %v762, %v758
        %v1015 = vpack.c.b16 %v763, %v759
        %v1016 = vpack.c.b16 %v764, %v760
        %v1017 = vpack.c.b16 %v765, %v761
        %v1018 = vpack.c.b16 %v770, %v766
        %v1019 = vpack.c.b16 %v771, %v767
        %v1020 = vpack.c.b16 %v772, %v768
        %v1021 = vpack.c.b16 %v773, %v769
        %v1022 = vpack.c.b16 %v778, %v774
        %v1023 = vpack.c.b16 %v779, %v775
        %v1024 = vpack.c.b16 %v780, %v776
        %v1025 = vpack.c.b16 %v781, %v777
        %v1026 = vpack.c.b16 %v786, %v782
        %v1027 = vpack.c.b16 %v787, %v783
        %v1028 = vpack.c.b16 %v788, %v784
        %v1029 = vpack.c.b16 %v789, %v785
        %v1030 = vpack.c.b16 %v794, %v790
        %v1031 = vpack.c.b16 %v795, %v791
        %v1032 = vpack.c.b16 %v796, %v792
        %v1033 = vpack.c.b16 %v797, %v793
        %v1034 = vpack.c.b16 %v802, %v798
        %v1035 = vpack.c.b16 %v803, %v799
        %v1036 = vpack.c.b16 %v804, %v800
        %v1037 = vpack.c.b16 %v805, %v801
        %v1038 = vpack.c.b16 %v810, %v806
        %v1039 = vpack.c.b16 %v811, %v807
        %v1040 = vpack.c.b16 %v812, %v808
        %v1041 = vpack.c.b16 %v813, %v809
        %v1042 = vpack.c.b16 %v818, %v814
        %v1043 = vpack.c.b16 %v819, %v815
        %v1044 = vpack.c.b16 %v820, %v816
        %v1045 = vpack.c.b16 %v821, %v817
        %v1046 = vpack.c.b16 %v826, %v822
        %v1047 = vpack.c.b16 %v827, %v823
        %v1048 = vpack.c.b16 %v828, %v824
        %v1049 = vpack.c.b16 %v829, %v825
        %v1050 = vpack.c.b16 %v834, %v830
        %v1051 = vpack.c.b16 %v835, %v831
        %v1052 = vpack.c.b16 %v836, %v832
        %v1053 = vpack.c.b16 %v837, %v833
        %v1054 = vpack.c.b16 %v842, %v838
        %v1055 = vpack.c.b16 %v843, %v839
        %v1056 = vpack.c.b16 %v844, %v840
        %v1057 = vpack.c.b16 %v845, %v841
        %v1058 = vpack.c.b16 %v850, %v846
        %v1059 = vpack.c.b16 %v851, %v847
        %v1060 = vpack.c.b16 %v852, %v848
        %v1061 = vpack.c.b16 %v853, %v849
        %v1062 = vpack.c.b16 %v858, %v854
        %v1063 = vpack.c.b16 %v859, %v855
        %v1064 = vpack.c.b16 %v860, %v856
        %v1065 = vpack.c.b16 %v861, %v857
        %v1066 = vpack.c.b16 %v866, %v862
        %v1067 = vpack.c.b16 %v867, %v863
        %v1068 = vpack.c.b16 %v868, %v864
        %v1069 = vpack.c.b16 %v869, %v865
        %v1070 = vpack.c.b16 %v874, %v870
        %v1071 = vpack.c.b16 %v875, %v871
        %v1072 = vpack.c.b16 %v876, %v872
        %v1073 = vpack.c.b16 %v877, %v873
        %v1074 = vpack.c.b16 %v882, %v878
        %v1075 = vpack.c.b16 %v883, %v879
        %v1076 = vpack.c.b16 %v884, %v880
        %v1077 = vpack.c.b16 %v885, %v881
        %v1078 = vpack.c.b16 %v890, %v886
        %v1079 = vpack.c.b16 %v891, %v887
        %v1080 = vpack.c.b16 %v892, %v888
        %v1081 = vpack.c.b16 %v893, %v889
        %v1082 = vpack.c.b16 %v898, %v894
        %v1083 = vpack.c.b16 %v899, %v895
        %v1084 = vpack.c.b16 %v900, %v896
        %v1085 = vpack.c.b16 %v901, %v897
        %v1086 = vpack.c.b16 %v906, %v902
        %v1087 = vpack.c.b16 %v907, %v903
        %v1088 = vpack.c.b16 %v908, %v904
        %v1089 = vpack.c.b16 %v909, %v905
        %v1090 = vpack.c.b16 %v914, %v910
        %v1091 = vpack.c.b16 %v915, %v911
        %v1092 = vpack.c.b16 %v916, %v912
        %v1093 = vpack.c.b16 %v917, %v913
        %v1094 = vpack.c.b16 %v922, %v918
        %v1095 = vpack.c.b16 %v923, %v919
        %v1096 = vpack.c.b16 %v924, %v920
        %v1097 = vpack.c.b16 %v925, %v921
        %v1098 = vpack.c.b16 %v930, %v926
        %v1099 = vpack.c.b16 %v931, %v927
        %v1100 = vpack.c.b16 %v932, %v928
        %v1101 = vpack.c.b16 %v933, %v929
        %v1102 = vpack.c.b16 %v938, %v934
        %v1103 = vpack.c.b16 %v939, %v935
        %v1104 = vpack.c.b16 %v940, %v936
        %v1105 = vpack.c.b16 %v941, %v937
        %v1106 = vpack.c.b16 %v946, %v942
        %v1107 = vpack.c.b16 %v947, %v943
        %v1108 = vpack.c.b16 %v948, %v944
        %v1109 = vpack.c.b16 %v949, %v945
        %v1110 = vpack.c.b16 %v954, %v950
        %v1111 = vpack.c.b16 %v955, %v951
        %v1112 = vpack.c.b16 %v956, %v952
        %v1113 = vpack.c.b16 %v957, %v953
        %v1114 = vpack.c.b16 %v962, %v958
        %v1115 = vpack.c.b16 %v963, %v959
        %v1116 = vpack.c.b16 %v964, %v960
        %v1117 = vpack.c.b16 %v965, %v961
        %v1118 = vpack.c.b16 %v970, %v966
        %v1119 = vpack.c.b16 %v971, %v967
        %v1120 = vpack.c.b16 %v972, %v968
        %v1121 = vpack.c.b16 %v973, %v969
        %v1122 = vpack.c.b16 %v978, %v974
        %v1123 = vpack.c.b16 %v979, %v975
        %v1124 = vpack.c.b16 %v980, %v976
        %v1125 = vpack.c.b16 %v981, %v977
        %v1126 = vpack.c.b16 %v986, %v982
        %v1127 = vpack.c.b16 %v987, %v983
        %v1128 = vpack.c.b16 %v988, %v984
        %v1129 = vpack.c.b16 %v989, %v985
        %v1130 = vpack.c.b16 %v994, %v990
        %v1131 = vpack.c.b16 %v995, %v991
        %v1132 = vpack.c.b16 %v996, %v992
        %v1133 = vpack.c.b16 %v997, %v993
        %v1134 = vpack.c.b16 %v1002, %v998
        %v1135 = vpack.c.b16 %v1003, %v999
        %v1136 = vpack.c.b16 %v1004, %v1000
        %v1137 = vpack.c.b16 %v1005, %v1001
        %v1138 = vpack.c.b16 %v1010, %v1006
        %v1139 = vpack.c.b16 %v1011, %v1007
        %v1140 = vpack.c.b16 %v1012, %v1008
        %v1141 = vpack.c.b16 %v1013, %v1009
        %1270 = vmatprep.subr.bf16.mxu0 %v1043
        %1271 = vmatpush1.bf16.msra.mxu0 %v1042
        %1272 = vmatprep.subr.bf16.mxu0 %v1039
        %1273 = vmatpush1.bf16.msra.mxu0 %v1038
        %1274 = vmatprep.subr.bf16.mxu0 %v1035
        %1275 = vmatpush1.bf16.msra.mxu0 %v1034
        %1276 = vmatprep.subr.bf16.mxu0 %v1031
        %1277 = vmatpush1.bf16.msra.mxu0 %v1030
        %1278 = vmatprep.subr.bf16.mxu0 %v1027
        %1279 = vmatpush1.bf16.msra.mxu0 %v1026
        %1280 = vmatprep.subr.bf16.mxu0 %v1023
        %1281 = vmatpush1.bf16.msra.mxu0 %v1022
        %1282 = vmatprep.subr.bf16.mxu0 %v1019
        %1283 = vmatpush1.bf16.msra.mxu0 %v1018
        %1284 = vmatprep.subr.bf16.mxu0 %v1015
        %1285 = vmatpush1.bf16.msra.mxu0 %v1014
        %1286 = vmatprep.subr.bf16.mxu0 %v1075
        %1287 = vmatpush2.bf16.msra.mxu0 %v1074
        %1288 = vmatprep.subr.bf16.mxu0 %v1071
        %1289 = vmatpush2.bf16.msra.mxu0 %v1070
        %1290 = vmatprep.subr.bf16.mxu0 %v1067
        %1291 = vmatpush2.bf16.msra.mxu0 %v1066
        %1292 = vmatprep.subr.bf16.mxu0 %v1063
        %1293 = vmatpush2.bf16.msra.mxu0 %v1062
        %1294 = vmatprep.subr.bf16.mxu0 %v1059
        %1295 = vmatpush2.bf16.msra.mxu0 %v1058
        %1296 = vmatprep.subr.bf16.mxu0 %v1055
        %1297 = vmatpush2.bf16.msra.mxu0 %v1054
        %1298 = vmatprep.subr.bf16.mxu0 %v1051
        %1299 = vmatpush2.bf16.msra.mxu0 %v1050
        %1300 = vmatprep.subr.bf16.mxu0 %v1047
        %1301 = vmatpush2.bf16.msra.mxu0 %v1046
        %1302 = vmatprep.mubr.bf16.mxu0 %v615
        %1303 = vmatmul.mubr.bf16.gmra.mxu0 %v614
        %v1304 = vpop.f32.mrf.mxu0
        %v1305 = vadd.f32 0.0, %v1304
        %v1306 = vpop.f32.mrf.mxu0
        %v1307 = vadd.f32 0.0, %v1306
        %v1308 = vpop.f32.mrf.mxu0
        %v1309 = vadd.f32 0.0, %v1308
        %v1310 = vpop.f32.mrf.mxu0
        %v1311 = vadd.f32 0.0, %v1310
        %1312 = vmatprep.mubr.bf16.mxu0 %v619
        %1313 = vmatmul.mubr.bf16.gmra.mxu0 %v618
        %v1314 = vpop.f32.mrf.mxu0
        %v1315 = vadd.f32 0.0, %v1314
        %v1316 = vpop.f32.mrf.mxu0
        %v1317 = vadd.f32 0.0, %v1316
        %v1318 = vpop.f32.mrf.mxu0
        %v1319 = vadd.f32 0.0, %v1318
        %v1320 = vpop.f32.mrf.mxu0
        %v1321 = vadd.f32 0.0, %v1320
        %1322 = vdwg.mxu0
        %1323 = vmatprep.subr.bf16.mxu0 %v1107
        %1324 = vmatpush1.bf16.msra.mxu0 %v1106
        %1325 = vmatprep.subr.bf16.mxu0 %v1103
        %1326 = vmatpush1.bf16.msra.mxu0 %v1102
        %1327 = vmatprep.subr.bf16.mxu0 %v1099
        %1328 = vmatpush1.bf16.msra.mxu0 %v1098
        %1329 = vmatprep.subr.bf16.mxu0 %v1095
        %1330 = vmatpush1.bf16.msra.mxu0 %v1094
        %1331 = vmatprep.subr.bf16.mxu0 %v1091
        %1332 = vmatpush1.bf16.msra.mxu0 %v1090
        %1333 = vmatprep.subr.bf16.mxu0 %v1087
        %1334 = vmatpush1.bf16.msra.mxu0 %v1086
        %1335 = vmatprep.subr.bf16.mxu0 %v1083
        %1336 = vmatpush1.bf16.msra.mxu0 %v1082
        %1337 = vmatprep.subr.bf16.mxu0 %v1079
        %1338 = vmatpush1.bf16.msra.mxu0 %v1078
        %1339 = vmatprep.subr.bf16.mxu0 %v1139
        %1340 = vmatpush2.bf16.msra.mxu0 %v1138
        %1341 = vmatprep.subr.bf16.mxu0 %v1135
        %1342 = vmatpush2.bf16.msra.mxu0 %v1134
        %1343 = vmatprep.subr.bf16.mxu0 %v1131
        %1344 = vmatpush2.bf16.msra.mxu0 %v1130
        %1345 = vmatprep.subr.bf16.mxu0 %v1127
        %1346 = vmatpush2.bf16.msra.mxu0 %v1126
        %1347 = vmatprep.subr.bf16.mxu0 %v1123
        %1348 = vmatpush2.bf16.msra.mxu0 %v1122
        %1349 = vmatprep.subr.bf16.mxu0 %v1119
        %1350 = vmatpush2.bf16.msra.mxu0 %v1118
        %1351 = vmatprep.subr.bf16.mxu0 %v1115
        %1352 = vmatpush2.bf16.msra.mxu0 %v1114
        %1353 = vmatprep.subr.bf16.mxu0 %v1111
        %1354 = vmatpush2.bf16.msra.mxu0 %v1110
        %1355 = vmatprep.mubr.bf16.mxu0 %v617
        %1356 = vmatmul.mubr.bf16.gmra.mxu0 %v616
        %v1357 = vpop.f32.mrf.mxu0
        %v1358 = vadd.f32 %v1305, %v1357
        %v1359 = vpop.f32.mrf.mxu0
        %v1360 = vadd.f32 %v1307, %v1359
        %v1361 = vpop.f32.mrf.mxu0
        %v1362 = vadd.f32 %v1309, %v1361
        %v1363 = vpop.f32.mrf.mxu0
        %v1364 = vadd.f32 %v1311, %v1363
        %1365 = vmatprep.mubr.bf16.mxu0 %v621
        %1366 = vmatmul.mubr.bf16.gmra.mxu0 %v620
        %v1367 = vpop.f32.mrf.mxu0
        %v1368 = vadd.f32 %v1315, %v1367
        %v1369 = vpop.f32.mrf.mxu0
        %v1370 = vadd.f32 %v1317, %v1369
        %v1371 = vpop.f32.mrf.mxu0
        %v1372 = vadd.f32 %v1319, %v1371
        %v1373 = vpop.f32.mrf.mxu0
        %v1374 = vadd.f32 %v1321, %v1373
        %1375 = vdwg.mxu0
        %1376 = vmatprep.subr.bf16.mxu0 %v1045
        %1377 = vmatpush1.bf16.msra.mxu0 %v1044
        %1378 = vmatprep.subr.bf16.mxu0 %v1041
        %1379 = vmatpush1.bf16.msra.mxu0 %v1040
        %1380 = vmatprep.subr.bf16.mxu0 %v1037
        %1381 = vmatpush1.bf16.msra.mxu0 %v1036
        %1382 = vmatprep.subr.bf16.mxu0 %v1033
        %1383 = vmatpush1.bf16.msra.mxu0 %v1032
        %1384 = vmatprep.subr.bf16.mxu0 %v1029
        %1385 = vmatpush1.bf16.msra.mxu0 %v1028
        %1386 = vmatprep.subr.bf16.mxu0 %v1025
        %1387 = vmatpush1.bf16.msra.mxu0 %v1024
        %1388 = vmatprep.subr.bf16.mxu0 %v1021
        %1389 = vmatpush1.bf16.msra.mxu0 %v1020
        %1390 = vmatprep.subr.bf16.mxu0 %v1017
        %1391 = vmatpush1.bf16.msra.mxu0 %v1016
        %1392 = vmatprep.subr.bf16.mxu0 %v1077
        %1393 = vmatpush2.bf16.msra.mxu0 %v1076
        %1394 = vmatprep.subr.bf16.mxu0 %v1073
        %1395 = vmatpush2.bf16.msra.mxu0 %v1072
        %1396 = vmatprep.subr.bf16.mxu0 %v1069
        %1397 = vmatpush2.bf16.msra.mxu0 %v1068
        %1398 = vmatprep.subr.bf16.mxu0 %v1065
        %1399 = vmatpush2.bf16.msra.mxu0 %v1064
        %1400 = vmatprep.subr.bf16.mxu0 %v1061
        %1401 = vmatpush2.bf16.msra.mxu0 %v1060
        %1402 = vmatprep.subr.bf16.mxu0 %v1057
        %1403 = vmatpush2.bf16.msra.mxu0 %v1056
        %1404 = vmatprep.subr.bf16.mxu0 %v1053
        %1405 = vmatpush2.bf16.msra.mxu0 %v1052
        %1406 = vmatprep.subr.bf16.mxu0 %v1049
        %1407 = vmatpush2.bf16.msra.mxu0 %v1048
        %1408 = vmatprep.mubr.bf16.mxu0 %v615
        %1409 = vmatmul.mubr.bf16.gmra.mxu0 %v614
        %v1410 = vpop.f32.mrf.mxu0
        %v1411 = vadd.f32 0.0, %v1410
        %v1412 = vpop.f32.mrf.mxu0
        %v1413 = vadd.f32 0.0, %v1412
        %v1414 = vpop.f32.mrf.mxu0
        %v1415 = vadd.f32 0.0, %v1414
        %v1416 = vpop.f32.mrf.mxu0
        %v1417 = vadd.f32 0.0, %v1416
        %1418 = vmatprep.mubr.bf16.mxu0 %v619
        %1419 = vmatmul.mubr.bf16.gmra.mxu0 %v618
        %v1420 = vpop.f32.mrf.mxu0
        %v1421 = vadd.f32 0.0, %v1420
        %v1422 = vpop.f32.mrf.mxu0
        %v1423 = vadd.f32 0.0, %v1422
        %v1424 = vpop.f32.mrf.mxu0
        %v1425 = vadd.f32 0.0, %v1424
        %v1426 = vpop.f32.mrf.mxu0
        %v1427 = vadd.f32 0.0, %v1426
        %1428 = vdwg.mxu0
        %1429 = vmatprep.subr.bf16.mxu0 %v1109
        %1430 = vmatpush1.bf16.msra.mxu0 %v1108
        %1431 = vmatprep.subr.bf16.mxu0 %v1105
        %1432 = vmatpush1.bf16.msra.mxu0 %v1104
        %1433 = vmatprep.subr.bf16.mxu0 %v1101
        %1434 = vmatpush1.bf16.msra.mxu0 %v1100
        %1435 = vmatprep.subr.bf16.mxu0 %v1097
        %1436 = vmatpush1.bf16.msra.mxu0 %v1096
        %1437 = vmatprep.subr.bf16.mxu0 %v1093
        %1438 = vmatpush1.bf16.msra.mxu0 %v1092
        %1439 = vmatprep.subr.bf16.mxu0 %v1089
        %1440 = vmatpush1.bf16.msra.mxu0 %v1088
        %1441 = vmatprep.subr.bf16.mxu0 %v1085
        %1442 = vmatpush1.bf16.msra.mxu0 %v1084
        %1443 = vmatprep.subr.bf16.mxu0 %v1081
        %1444 = vmatpush1.bf16.msra.mxu0 %v1080
        %1445 = vmatprep.subr.bf16.mxu0 %v1141
        %1446 = vmatpush2.bf16.msra.mxu0 %v1140
        %1447 = vmatprep.subr.bf16.mxu0 %v1137
        %1448 = vmatpush2.bf16.msra.mxu0 %v1136
        %1449 = vmatprep.subr.bf16.mxu0 %v1133
        %1450 = vmatpush2.bf16.msra.mxu0 %v1132
        %1451 = vmatprep.subr.bf16.mxu0 %v1129
        %1452 = vmatpush2.bf16.msra.mxu0 %v1128
        %1453 = vmatprep.subr.bf16.mxu0 %v1125
        %1454 = vmatpush2.bf16.msra.mxu0 %v1124
        %1455 = vmatprep.subr.bf16.mxu0 %v1121
        %1456 = vmatpush2.bf16.msra.mxu0 %v1120
        %1457 = vmatprep.subr.bf16.mxu0 %v1117
        %1458 = vmatpush2.bf16.msra.mxu0 %v1116
        %1459 = vmatprep.subr.bf16.mxu0 %v1113
        %1460 = vmatpush2.bf16.msra.mxu0 %v1112
        %1461 = vmatprep.mubr.bf16.mxu0 %v617
        %1462 = vmatmul.mubr.bf16.gmra.mxu0 %v616
        %v1463 = vpop.f32.mrf.mxu0
        %v1464 = vadd.f32 %v1411, %v1463
        %v1465 = vpop.f32.mrf.mxu0
        %v1466 = vadd.f32 %v1413, %v1465
        %v1467 = vpop.f32.mrf.mxu0
        %v1468 = vadd.f32 %v1415, %v1467
        %v1469 = vpop.f32.mrf.mxu0
        %v1470 = vadd.f32 %v1417, %v1469
        %1471 = vmatprep.mubr.bf16.mxu0 %v621
        %1472 = vmatmul.mubr.bf16.gmra.mxu0 %v620
        %v1473 = vpop.f32.mrf.mxu0
        %v1474 = vadd.f32 %v1421, %v1473
        %v1475 = vpop.f32.mrf.mxu0
        %v1476 = vadd.f32 %v1423, %v1475
        %v1477 = vpop.f32.mrf.mxu0
        %v1478 = vadd.f32 %v1425, %v1477
        %v1479 = vpop.f32.mrf.mxu0
        %v1480 = vadd.f32 %v1427, %v1479
        %1481 = vdwg.mxu0
        %1482 = vst [vmem:[%s443] sm:$0xff] %v1358
        %1483 = vst [vmem:[%s443 + $0x8] sm:$0xff] %v1360
        %1484 = vst [vmem:[%s443 + $0x10] sm:$0xff] %v1464
        %1485 = vst [vmem:[%s443 + $0x18] sm:$0xff] %v1466
        %1486 = vst [vmem:[%s443 + $0x20] sm:$0xff] %v1362
        %1487 = vst [vmem:[%s443 + $0x28] sm:$0xff] %v1364
        %1488 = vst [vmem:[%s443 + $0x30] sm:$0xff] %v1468
        %1489 = vst [vmem:[%s443 + $0x38] sm:$0xff] %v1470
        %1490 = vst [vmem:[%s443 + $0x40] sm:$0xff] %v1368
        %1491 = vst [vmem:[%s443 + $0x48] sm:$0xff] %v1370
        %1492 = vst [vmem:[%s443 + $0x50] sm:$0xff] %v1474
        %1493 = vst [vmem:[%s443 + $0x58] sm:$0xff] %v1476
        %1494 = vst [vmem:[%s443 + $0x60] sm:$0xff] %v1372
        %1495 = vst [vmem:[%s443 + $0x68] sm:$0xff] %v1374
        %1496 = vst [vmem:[%s443 + $0x70] sm:$0xff] %v1478
        %1497 = vst [vmem:[%s443 + $0x78] sm:$0xff] %v1480
        %s1498 = sand.u32 %s87, 1
        %s1499 = sand.u32 %s87, 1
        %s1500 = smul.addr %s1499, 128
        %s1501 = scalar_lea.vmem [#allocation3], %s1500
        // Predicated region
        $region52: #{generator_forward.17} parent=46 // pred_check
          %p1502 = pneg %p97
        $region53: #{generator_forward.17} parent=46 // pred_check_branch
          %1504 = sbr.rel (%p1502) target = $region55
        $region54: #{generator_forward.17} parent=46 // pred_region
          %s1505 = smul.u32 4, %s17
          %s1506 = smul.u32 4, %s18
          %s1507 = smul.addr %s1505, 32
          %s1508 = sadd.s32 %s1506, %s1507
          %s1509 = smul.addr %s1508, 8
          %s1510 = scalar_lea.vmem %s2, %s1509
          // Predicated region
          $region56: #{generator_forward.17} parent=54 // pred_check
            _
          $region57: #{generator_forward.17} parent=54 // pred_check_branch
            %1512 = sbr.rel (0) target = $region59
          $region58: #{generator_forward.17} parent=54 // pred_region
            // Predicated region
            $region60: #{generator_forward.17} parent=58 // pred_check
              _
            $region61: #{generator_forward.17} parent=58 // pred_check_branch
              %1514 = sbr.rel (0) target = $region63
            $region62: #{generator_forward.17} parent=58 // pred_region
              loop: start=0, step=1, limit=1
              $region64: #{generator_forward.17} parent=62 // loop_pre_header
                _
              $region65: #{generator_forward.17} parent=62 // loop_header
                %s1516 = sphi 0, %s1520
                %p1517 = scmp.ge.s32.totalorder %s1516, 1
                %s1521 = sphi %s1501, %s1501
                %s1522 = sphi %s1510, %s1510
              $region66: #{generator_forward.17} parent=62 // loop_header_branch
                %1519 = sbr.rel (%p1517) target = $region70
              $region67: #{generator_forward.17} parent=62 // loop_body
                %v1523 = vld [vmem:[%s1521] sm:$0xff]
                %1524 = vst [vmem:[%s1522] sm:$0xff] %v1523
                %v1525 = vld [vmem:[%s1521 + $0x8] sm:$0xff]
                %1526 = vst [vmem:[%s1522 + $0x8] sm:$0xff] %v1525
                %v1527 = vld [vmem:[%s1521 + $0x10] sm:$0xff]
                %1528 = vst [vmem:[%s1522 + $0x10] sm:$0xff] %v1527
                %v1529 = vld [vmem:[%s1521 + $0x18] sm:$0xff]
                %1530 = vst [vmem:[%s1522 + $0x18] sm:$0xff] %v1529
                %v1531 = vld [vmem:[%s1521 + $0x20] sm:$0xff]
                %1532 = vst [vmem:[%s1522 + $0x100] sm:$0xff] %v1531
                %v1533 = vld [vmem:[%s1521 + $0x28] sm:$0xff]
                %1534 = vst [vmem:[%s1522 + $0x108] sm:$0xff] %v1533
                %v1535 = vld [vmem:[%s1521 + $0x30] sm:$0xff]
                %1536 = vst [vmem:[%s1522 + $0x110] sm:$0xff] %v1535
                %v1537 = vld [vmem:[%s1521 + $0x38] sm:$0xff]
                %1538 = vst [vmem:[%s1522 + $0x118] sm:$0xff] %v1537
                %v1539 = vld [vmem:[%s1521 + $0x40] sm:$0xff]
                %1540 = vst [vmem:[%s1522 + $0x200] sm:$0xff] %v1539
                %v1541 = vld [vmem:[%s1521 + $0x48] sm:$0xff]
                %1542 = vst [vmem:[%s1522 + $0x208] sm:$0xff] %v1541
                %v1543 = vld [vmem:[%s1521 + $0x50] sm:$0xff]
                %1544 = vst [vmem:[%s1522 + $0x210] sm:$0xff] %v1543
                %v1545 = vld [vmem:[%s1521 + $0x58] sm:$0xff]
                %1546 = vst [vmem:[%s1522 + $0x218] sm:$0xff] %v1545
                %v1547 = vld [vmem:[%s1521 + $0x60] sm:$0xff]
                %1548 = vst [vmem:[%s1522 + $0x300] sm:$0xff] %v1547
                %v1549 = vld [vmem:[%s1521 + $0x68] sm:$0xff]
                %1550 = vst [vmem:[%s1522 + $0x308] sm:$0xff] %v1549
                %v1551 = vld [vmem:[%s1521 + $0x70] sm:$0xff]
                %1552 = vst [vmem:[%s1522 + $0x310] sm:$0xff] %v1551
                %v1553 = vld [vmem:[%s1521 + $0x78] sm:$0xff]
                %1554 = vst [vmem:[%s1522 + $0x318] sm:$0xff] %v1553
              $region68: #{generator_forward.17} parent=62 // loop_footer
                %s1520 = sadd.s32 1, %s1516
              $region69: #{generator_forward.17} parent=62 // loop_footer_branch
                %1515 = sbr.rel target = $region65
              $region70: #{generator_forward.17} parent=62 // loop_exit
                _
            $region63: #{generator_forward.17} parent=58 // pred_fallthru
              _
            // Predicated region
            $region71: #{generator_forward.17} parent=58 // pred_check
              _
            $region72: #{generator_forward.17} parent=58 // pred_check_branch
              %1556 = sbr.rel target = $region74
            $region73: #{generator_forward.17} parent=58 // pred_region
              _
            $region74: #{generator_forward.17} parent=58 // pred_fallthru
              _
          $region59: #{generator_forward.17} parent=54 // pred_fallthru
            _
          %1557 = vnop
        $region55: #{generator_forward.17} parent=46 // pred_fallthru
          _
      $region47: #{generator_forward.17} parent=5 // pred_fallthru
        _
      %p1558 = scmp.le.s32.totalorder 2, %s8
      // Predicated region
      $region75: #{generator_forward.17} parent=5 // pred_check
        %p1559 = pneg %p1558
      $region76: #{generator_forward.17} parent=5 // pred_check_branch
        %1561 = sbr.rel (%p1559) target = $region78
      $region77: #{generator_forward.17} parent=5 // pred_region
        %s1562 = ssub.s32 %s8, 2
        // Predicated region
        $region79: #{generator_forward.17} parent=77 // pred_check
          %p1563 = pneg %p103
        $region80: #{generator_forward.17} parent=77 // pred_check_branch
          %1565 = sbr.rel (%p1563) target = $region82
        $region81: #{generator_forward.17} parent=77 // pred_region
          %s1566 = sand.u32 %s88, 1
          %s1567 = sand.u32 %s88, 1
          %s1568 = smul.addr %s1567, 128
          %s1569 = scalar_lea.vmem [#allocation3], %s1568
        $region82: #{generator_forward.17} parent=77 // pred_fallthru
          _
      $region78: #{generator_forward.17} parent=5 // pred_fallthru
        _
    $region6: #{generator_forward.17} parent=1 // loop_footer
      %s12 = sadd.s32 1, %s8
    $region7: #{generator_forward.17} parent=1 // loop_footer_branch
      %7 = sbr.rel target = $region3
    $region8: #{generator_forward.17} parent=1 // loop_exit
      _

// kernel: generator_forward.18
$region0: #{generator_forward.18}
  #allocation0 [shape = 'u32[]', space=smem, size = 0x4, offset = 0x4, fixed_abs, tag = 'smem constant byte address 0x4 - core index']
  #allocation1 [shape = 'u32[144,128]{1,0:T(1,128)}', space=vmem, size = 0x12000, scoped, tag = 'internal scratch']
  %s0 = inlined_call_operand.vmem [shape: f32[128,256], index: 0, kind: input, shape index: {}]
  %s1 = inlined_call_operand.vmem [shape: f32[1,256], index: 1, kind: input, shape index: {}]
  %s2 = inlined_call_operand.vmem [shape: f32[8,256], index: 2, kind: output, shape index: {0}]
  %s3 = inlined_call_operand.vmem [shape: f32[8,256], index: 3, kind: output, shape index: {1}]
  %4 = xla_tuple %s2, %s3
  %s5 = sld [smem:[#allocation0]]
  $region30: #{generator_forward.18} parent=0
    _
  %s7 = ssub.s32 1, %s5
  %s8 = scalar_select 0, %s7, %s5
  // Predicated region
  $region2: #{generator_forward.18} parent=0 // pred_check
    _
  $region3: #{generator_forward.18} parent=0 // pred_check_branch
    %10 = sbr.rel (0) target = $region5
  $region4: #{generator_forward.18} parent=0 // pred_region
    _
  $region5: #{generator_forward.18} parent=0 // pred_fallthru
    _
  // Predicated region
  $region6: #{generator_forward.18} parent=0 // pred_check
    _
  $region7: #{generator_forward.18} parent=0 // pred_check_branch
    %12 = sbr.rel (0) target = $region9
  $region8: #{generator_forward.18} parent=0 // pred_region
    _
  $region9: #{generator_forward.18} parent=0 // pred_fallthru
    _
  %p13 = scmp.eq.s32.totalorder 0, 0
  // Predicated region
  $region10: #{generator_forward.18} parent=0 // pred_check
    %p14 = pneg %p13
  $region11: #{generator_forward.18} parent=0 // pred_check_branch
    %16 = sbr.rel (%p14) target = $region13
  $region12: #{generator_forward.18} parent=0 // pred_region
    %17 = vst [vmem:[%s2] sm:$0xff] 0.0
    %18 = vst [vmem:[%s2 + $0x8] sm:$0xff] 0.0
    %19 = vst [vmem:[%s3] sm:$0xff] 0.0
    %20 = vst [vmem:[%s3 + $0x8] sm:$0xff] 0.0
  $region13: #{generator_forward.18} parent=0 // pred_fallthru
    _
  %v21 = vld [vmem:[%s0] sm:$0xff]
  %v22 = vld [vmem:[%s0 + $0x8] sm:$0xff]
  %v23 = vld [vmem:[%s0 + $0x10] sm:$0xff]
  %v24 = vld [vmem:[%s0 + $0x18] sm:$0xff]
  %v25 = vld [vmem:[%s0 + $0x20] sm:$0xff]
  %v26 = vld [vmem:[%s0 + $0x28] sm:$0xff]
  %v27 = vld [vmem:[%s0 + $0x30] sm:$0xff]
  %v28 = vld [vmem:[%s0 + $0x38] sm:$0xff]
  %v29 = vld [vmem:[%s0 + $0x40] sm:$0xff]
  %v30 = vld [vmem:[%s0 + $0x48] sm:$0xff]
  %v31 = vld [vmem:[%s0 + $0x50] sm:$0xff]
  %v32 = vld [vmem:[%s0 + $0x58] sm:$0xff]
  %v33 = vld [vmem:[%s0 + $0x60] sm:$0xff]
  %v34 = vld [vmem:[%s0 + $0x68] sm:$0xff]
  %v35 = vld [vmem:[%s0 + $0x70] sm:$0xff]
  %v36 = vld [vmem:[%s0 + $0x78] sm:$0xff]
  %v37 = vld [vmem:[%s0 + $0x80] sm:$0xff]
  %v38 = vld [vmem:[%s0 + $0x88] sm:$0xff]
  %v39 = vld [vmem:[%s0 + $0x90] sm:$0xff]
  %v40 = vld [vmem:[%s0 + $0x98] sm:$0xff]
  %v41 = vld [vmem:[%s0 + $0xa0] sm:$0xff]
  %v42 = vld [vmem:[%s0 + $0xa8] sm:$0xff]
  %v43 = vld [vmem:[%s0 + $0xb0] sm:$0xff]
  %v44 = vld [vmem:[%s0 + $0xb8] sm:$0xff]
  %v45 = vld [vmem:[%s0 + $0xc0] sm:$0xff]
  %v46 = vld [vmem:[%s0 + $0xc8] sm:$0xff]
  %v47 = vld [vmem:[%s0 + $0xd0] sm:$0xff]
  %v48 = vld [vmem:[%s0 + $0xd8] sm:$0xff]
  %v49 = vld [vmem:[%s0 + $0xe0] sm:$0xff]
  %v50 = vld [vmem:[%s0 + $0xe8] sm:$0xff]
  %v51 = vld [vmem:[%s0 + $0xf0] sm:$0xff]
  %v52 = vld [vmem:[%s0 + $0xf8] sm:$0xff]
  %v53 = vld [vmem:[%s1] sm:$0x3]
  %v55 = vlaneseq
  %v56 = vshrl.u32 %v55, 7
  %v57 = vsub.s32 0, %v56
  %v58 = vrot.slane %v53, %v57
  %v59 = vlaneseq
  %v60 = vshrl.u32 %v59, 7
  %v61 = vsub.s32 1, %v60
  %v62 = vrot.slane %v53, %v61
  %v65 = vadd.f32 %v21, %v58
  %v66 = vadd.f32 %v22, %v62
  %v67 = vadd.f32 %v23, %v58
  %v68 = vadd.f32 %v24, %v62
  %v69 = vadd.f32 %v25, %v58
  %v70 = vadd.f32 %v26, %v62
  %v71 = vadd.f32 %v27, %v58
  %v72 = vadd.f32 %v28, %v62
  %v73 = vadd.f32 %v29, %v58
  %v74 = vadd.f32 %v30, %v62
  %v75 = vadd.f32 %v31, %v58
  %v76 = vadd.f32 %v32, %v62
  %v77 = vadd.f32 %v33, %v58
  %v78 = vadd.f32 %v34, %v62
  %v79 = vadd.f32 %v35, %v58
  %v80 = vadd.f32 %v36, %v62
  %v81 = vadd.f32 %v37, %v58
  %v82 = vadd.f32 %v38, %v62
  %v83 = vadd.f32 %v39, %v58
  %v84 = vadd.f32 %v40, %v62
  %v85 = vadd.f32 %v41, %v58
  %v86 = vadd.f32 %v42, %v62
  %v87 = vadd.f32 %v43, %v58
  %v88 = vadd.f32 %v44, %v62
  %v89 = vadd.f32 %v45, %v58
  %v90 = vadd.f32 %v46, %v62
  %v91 = vadd.f32 %v47, %v58
  %v92 = vadd.f32 %v48, %v62
  %v93 = vadd.f32 %v49, %v58
  %v94 = vadd.f32 %v50, %v62
  %v95 = vadd.f32 %v51, %v58
  %v96 = vadd.f32 %v52, %v62
  %s97 = smul.u32 0, 128
  %v98 = vlaneseq
  %v99 = vshrl.u32 %v98, 7
  %v100 = vadd.s32 %v99, 8
  %v101 = vadd.s32 %v99, 16
  %v102 = vadd.s32 %v99, 24
  %v103 = vadd.s32 %v99, 32
  %v104 = vadd.s32 %v99, 40
  %v105 = vadd.s32 %v99, 48
  %v106 = vadd.s32 %v99, 56
  %v107 = vadd.s32 %v99, 64
  %v108 = vadd.s32 %v99, 72
  %v109 = vadd.s32 %v99, 80
  %v110 = vadd.s32 %v99, 88
  %v111 = vadd.s32 %v99, 96
  %v112 = vadd.s32 %v99, 104
  %v113 = vadd.s32 %v99, 112
  %v114 = vadd.s32 %v99, 120
  %v115 = vstv %s97
  %v116 = vadd.s32 %v115, %v99
  %v117 = vadd.s32 %v115, %v100
  %v118 = vadd.s32 %v115, %v101
  %v119 = vadd.s32 %v115, %v102
  %v120 = vadd.s32 %v115, %v103
  %v121 = vadd.s32 %v115, %v104
  %v122 = vadd.s32 %v115, %v105
  %v123 = vadd.s32 %v115, %v106
  %v124 = vadd.s32 %v115, %v107
  %v125 = vadd.s32 %v115, %v108
  %v126 = vadd.s32 %v115, %v109
  %v127 = vadd.s32 %v115, %v110
  %v128 = vadd.s32 %v115, %v111
  %v129 = vadd.s32 %v115, %v112
  %v130 = vadd.s32 %v115, %v113
  %v131 = vadd.s32 %v115, %v114
  %vm132 = vcmp.lt.s32.totalorder %v116, 128
  %vm133 = vcmp.lt.s32.totalorder %v117, 128
  %vm134 = vcmp.lt.s32.totalorder %v118, 128
  %vm135 = vcmp.lt.s32.totalorder %v119, 128
  %vm136 = vcmp.lt.s32.totalorder %v120, 128
  %vm137 = vcmp.lt.s32.totalorder %v121, 128
  %vm138 = vcmp.lt.s32.totalorder %v122, 128
  %vm139 = vcmp.lt.s32.totalorder %v123, 128
  %vm140 = vcmp.lt.s32.totalorder %v124, 128
  %vm141 = vcmp.lt.s32.totalorder %v125, 128
  %vm142 = vcmp.lt.s32.totalorder %v126, 128
  %vm143 = vcmp.lt.s32.totalorder %v127, 128
  %vm144 = vcmp.lt.s32.totalorder %v128, 128
  %vm145 = vcmp.lt.s32.totalorder %v129, 128
  %vm146 = vcmp.lt.s32.totalorder %v130, 128
  %vm147 = vcmp.lt.s32.totalorder %v131, 128
  %v148 = vsel %vm132, %v65, 0.0
  %v149 = vsel %vm132, %v66, 0.0
  %v150 = vsel %vm133, %v67, 0.0
  %v151 = vsel %vm133, %v68, 0.0
  %v152 = vsel %vm134, %v69, 0.0
  %v153 = vsel %vm134, %v70, 0.0
  %v154 = vsel %vm135, %v71, 0.0
  %v155 = vsel %vm135, %v72, 0.0
  %v156 = vsel %vm136, %v73, 0.0
  %v157 = vsel %vm136, %v74, 0.0
  %v158 = vsel %vm137, %v75, 0.0
  %v159 = vsel %vm137, %v76, 0.0
  %v160 = vsel %vm138, %v77, 0.0
  %v161 = vsel %vm138, %v78, 0.0
  %v162 = vsel %vm139, %v79, 0.0
  %v163 = vsel %vm139, %v80, 0.0
  %v164 = vsel %vm140, %v81, 0.0
  %v165 = vsel %vm140, %v82, 0.0
  %v166 = vsel %vm141, %v83, 0.0
  %v167 = vsel %vm141, %v84, 0.0
  %v168 = vsel %vm142, %v85, 0.0
  %v169 = vsel %vm142, %v86, 0.0
  %v170 = vsel %vm143, %v87, 0.0
  %v171 = vsel %vm143, %v88, 0.0
  %v172 = vsel %vm144, %v89, 0.0
  %v173 = vsel %vm144, %v90, 0.0
  %v174 = vsel %vm145, %v91, 0.0
  %v175 = vsel %vm145, %v92, 0.0
  %v176 = vsel %vm146, %v93, 0.0
  %v177 = vsel %vm146, %v94, 0.0
  %v178 = vsel %vm147, %v95, 0.0
  %v179 = vsel %vm147, %v96, 0.0
  %v180 = vadd.f32 %v148, %v150
  %v181 = vadd.f32 %v180, %v152
  %v182 = vadd.f32 %v181, %v154
  %v183 = vadd.f32 %v182, %v156
  %v184 = vadd.f32 %v183, %v158
  %v185 = vadd.f32 %v184, %v160
  %v186 = vadd.f32 %v185, %v162
  %v187 = vadd.f32 %v186, %v164
  %v188 = vadd.f32 %v187, %v166
  %v189 = vadd.f32 %v188, %v168
  %v190 = vadd.f32 %v189, %v170
  %v191 = vadd.f32 %v190, %v172
  %v192 = vadd.f32 %v191, %v174
  %v193 = vadd.f32 %v192, %v176
  %v194 = vadd.f32 %v193, %v178
  %v195 = vrot.slane %v194, 4
  %v196 = vadd.f32 %v194, %v195
  %v197 = vrot.slane %v196, 2
  %v198 = vadd.f32 %v196, %v197
  %v199 = vrot.slane %v198, 1
  %v200 = vadd.f32 %v198, %v199
  %v201 = vadd.f32 %v149, %v151
  %v202 = vadd.f32 %v201, %v153
  %v203 = vadd.f32 %v202, %v155
  %v204 = vadd.f32 %v203, %v157
  %v205 = vadd.f32 %v204, %v159
  %v206 = vadd.f32 %v205, %v161
  %v207 = vadd.f32 %v206, %v163
  %v208 = vadd.f32 %v207, %v165
  %v209 = vadd.f32 %v208, %v167
  %v210 = vadd.f32 %v209, %v169
  %v211 = vadd.f32 %v210, %v171
  %v212 = vadd.f32 %v211, %v173
  %v213 = vadd.f32 %v212, %v175
  %v214 = vadd.f32 %v213, %v177
  %v215 = vadd.f32 %v214, %v179
  %v216 = vrot.slane %v215, 4
  %v217 = vadd.f32 %v215, %v216
  %v218 = vrot.slane %v217, 2
  %v219 = vadd.f32 %v217, %v218
  %v220 = vrot.slane %v219, 1
  %v221 = vadd.f32 %v219, %v220
  %v222 = vmul.f32 %v148, %v148
  %v223 = vmul.f32 %v149, %v149
  %v224 = vmul.f32 %v150, %v150
  %v225 = vmul.f32 %v151, %v151
  %v226 = vmul.f32 %v152, %v152
  %v227 = vmul.f32 %v153, %v153
  %v228 = vmul.f32 %v154, %v154
  %v229 = vmul.f32 %v155, %v155
  %v230 = vmul.f32 %v156, %v156
  %v231 = vmul.f32 %v157, %v157
  %v232 = vmul.f32 %v158, %v158
  %v233 = vmul.f32 %v159, %v159
  %v234 = vmul.f32 %v160, %v160
  %v235 = vmul.f32 %v161, %v161
  %v236 = vmul.f32 %v162, %v162
  %v237 = vmul.f32 %v163, %v163
  %v238 = vmul.f32 %v164, %v164
  %v239 = vmul.f32 %v165, %v165
  %v240 = vmul.f32 %v166, %v166
  %v241 = vmul.f32 %v167, %v167
  %v242 = vmul.f32 %v168, %v168
  %v243 = vmul.f32 %v169, %v169
  %v244 = vmul.f32 %v170, %v170
  %v245 = vmul.f32 %v171, %v171
  %v246 = vmul.f32 %v172, %v172
  %v247 = vmul.f32 %v173, %v173
  %v248 = vmul.f32 %v174, %v174
  %v249 = vmul.f32 %v175, %v175
  %v250 = vmul.f32 %v176, %v176
  %v251 = vmul.f32 %v177, %v177
  %v252 = vmul.f32 %v178, %v178
  %v253 = vmul.f32 %v179, %v179
  %v254 = vadd.f32 %v222, %v224
  %v255 = vadd.f32 %v254, %v226
  %v256 = vadd.f32 %v255, %v228
  %v257 = vadd.f32 %v256, %v230
  %v258 = vadd.f32 %v257, %v232
  %v259 = vadd.f32 %v258, %v234
  %v260 = vadd.f32 %v259, %v236
  %v261 = vadd.f32 %v260, %v238
  %v262 = vadd.f32 %v261, %v240
  %v263 = vadd.f32 %v262, %v242
  %v264 = vadd.f32 %v263, %v244
  %v265 = vadd.f32 %v264, %v246
  %v266 = vadd.f32 %v265, %v248
  %v267 = vadd.f32 %v266, %v250
  %v268 = vadd.f32 %v267, %v252
  %v269 = vrot.slane %v268, 4
  %v270 = vadd.f32 %v268, %v269
  %v271 = vrot.slane %v270, 2
  %v272 = vadd.f32 %v270, %v271
  %v273 = vrot.slane %v272, 1
  %v274 = vadd.f32 %v272, %v273
  %v275 = vadd.f32 %v223, %v225
  %v276 = vadd.f32 %v275, %v227
  %v277 = vadd.f32 %v276, %v229
  %v278 = vadd.f32 %v277, %v231
  %v279 = vadd.f32 %v278, %v233
  %v280 = vadd.f32 %v279, %v235
  %v281 = vadd.f32 %v280, %v237
  %v282 = vadd.f32 %v281, %v239
  %v283 = vadd.f32 %v282, %v241
  %v284 = vadd.f32 %v283, %v243
  %v285 = vadd.f32 %v284, %v245
  %v286 = vadd.f32 %v285, %v247
  %v287 = vadd.f32 %v286, %v249
  %v288 = vadd.f32 %v287, %v251
  %v289 = vadd.f32 %v288, %v253
  %v290 = vrot.slane %v289, 4
  %v291 = vadd.f32 %v289, %v290
  %v292 = vrot.slane %v291, 2
  %v293 = vadd.f32 %v291, %v292
  %v294 = vrot.slane %v293, 1
  %v295 = vadd.f32 %v293, %v294
  %v296 = vld [vmem:[%s2] sm:$0xff]
  %v297 = vld [vmem:[%s2 + $0x8] sm:$0xff]
  %v298 = vadd.f32 %v296, %v200
  %v299 = vadd.f32 %v297, %v221
  %300 = vst [vmem:[%s2] sm:$0xff] %v298
  %301 = vst [vmem:[%s2 + $0x8] sm:$0xff] %v299
  %v302 = vld [vmem:[%s3] sm:$0xff]
  %v303 = vld [vmem:[%s3 + $0x8] sm:$0xff]
  %v304 = vadd.f32 %v302, %v274
  %v305 = vadd.f32 %v303, %v295
  %306 = vst [vmem:[%s3] sm:$0xff] %v304
  %307 = vst [vmem:[%s3 + $0x8] sm:$0xff] %v305
  // Predicated region
  $region14: #{generator_forward.18} parent=0 // pred_check
    _
  $region15: #{generator_forward.18} parent=0 // pred_check_branch
    %309 = sbr.rel (0) target = $region17
  $region16: #{generator_forward.18} parent=0 // pred_region
    _
  $region17: #{generator_forward.18} parent=0 // pred_fallthru
    _
  // Predicated region
  $region18: #{generator_forward.18} parent=0 // pred_check
    _
  $region19: #{generator_forward.18} parent=0 // pred_check_branch
    %311 = sbr.rel (0) target = $region21
  $region20: #{generator_forward.18} parent=0 // pred_region
    _
  $region21: #{generator_forward.18} parent=0 // pred_fallthru
    _
  // Predicated region
  $region22: #{generator_forward.18} parent=0 // pred_check
    _
  $region23: #{generator_forward.18} parent=0 // pred_check_branch
    %313 = sbr.rel (0) target = $region25
  $region24: #{generator_forward.18} parent=0 // pred_region
    _
  $region25: #{generator_forward.18} parent=0 // pred_fallthru
    _
  // Predicated region
  $region26: #{generator_forward.18} parent=0 // pred_check
    _
  $region27: #{generator_forward.18} parent=0 // pred_check_branch
    %315 = sbr.rel (0) target = $region29
  $region28: #{generator_forward.18} parent=0 // pred_region
    _
  $region29: #{generator_forward.18} parent=0 // pred_fallthru
    _

// kernel: generator_forward.19
$region0: #{generator_forward.19}
  #allocation0 [shape = 'u32[]', space=smem, size = 0x4, offset = 0x4, fixed_abs, tag = 'smem constant byte address 0x4 - core index']
  #allocation1 [shape = 'u32[144,128]{1,0:T(1,128)}', space=vmem, size = 0x12000, scoped, tag = 'internal scratch']
  %s0 = inlined_call_operand.vmem [shape: f32[128,256], index: 0, kind: input, shape index: {}]
  %s1 = inlined_call_operand.vmem [shape: f32[1,256], index: 1, kind: input, shape index: {}]
  %s2 = inlined_call_operand.vmem [shape: f32[1,256], index: 2, kind: input, shape index: {}]
  %s3 = inlined_call_operand.vmem [shape: f32[1,256], index: 3, kind: input, shape index: {}]
  %s4 = inlined_call_operand.vmem [shape: f32[8,256], index: 4, kind: input, shape index: {}]
  %s5 = inlined_call_operand.vmem [shape: f32[8,256], index: 5, kind: input, shape index: {}]
  %s6 = inlined_call_operand.vmem [shape: f32[128,256], index: 6, kind: output, shape index: {}]
  %s7 = sld [smem:[#allocation0]]
  $region34: #{generator_forward.19} parent=0
    _
  %s9 = ssub.s32 1, %s7
  %s10 = scalar_select 0, %s9, %s7
  // Predicated region
  $region2: #{generator_forward.19} parent=0 // pred_check
    _
  $region3: #{generator_forward.19} parent=0 // pred_check_branch
    %12 = sbr.rel (0) target = $region5
  $region4: #{generator_forward.19} parent=0 // pred_region
    _
  $region5: #{generator_forward.19} parent=0 // pred_fallthru
    _
  // Predicated region
  $region6: #{generator_forward.19} parent=0 // pred_check
    _
  $region7: #{generator_forward.19} parent=0 // pred_check_branch
    %14 = sbr.rel (0) target = $region9
  $region8: #{generator_forward.19} parent=0 // pred_region
    _
  $region9: #{generator_forward.19} parent=0 // pred_fallthru
    _
  // Predicated region
  $region10: #{generator_forward.19} parent=0 // pred_check
    _
  $region11: #{generator_forward.19} parent=0 // pred_check_branch
    %16 = sbr.rel (0) target = $region13
  $region12: #{generator_forward.19} parent=0 // pred_region
    _
  $region13: #{generator_forward.19} parent=0 // pred_fallthru
    _
  // Predicated region
  $region14: #{generator_forward.19} parent=0 // pred_check
    _
  $region15: #{generator_forward.19} parent=0 // pred_check_branch
    %18 = sbr.rel (0) target = $region17
  $region16: #{generator_forward.19} parent=0 // pred_region
    _
  $region17: #{generator_forward.19} parent=0 // pred_fallthru
    _
  // Predicated region
  $region18: #{generator_forward.19} parent=0 // pred_check
    _
  $region19: #{generator_forward.19} parent=0 // pred_check_branch
    %20 = sbr.rel (0) target = $region21
  $region20: #{generator_forward.19} parent=0 // pred_region
    _
  $region21: #{generator_forward.19} parent=0 // pred_fallthru
    _
  // Predicated region
  $region22: #{generator_forward.19} parent=0 // pred_check
    _
  $region23: #{generator_forward.19} parent=0 // pred_check_branch
    %22 = sbr.rel (0) target = $region25
  $region24: #{generator_forward.19} parent=0 // pred_region
    _
  $region25: #{generator_forward.19} parent=0 // pred_fallthru
    _
  %v23 = vld [vmem:[%s4] ss:$8 sm:$0x3]
  %v24 = vmul.f32 %v23, 0.0078125
  %v25 = vld [vmem:[%s5] ss:$8 sm:$0x3]
  %v26 = vmul.f32 %v25, 0.0078125
  %v27 = vmul.f32 %v24, %v24
  %v28 = vsub.f32 %v26, %v27
  %v29 = vadd.f32 %v28, 1e-05
  %v30 = vrsqrt.pop %v29
  %v31 = vld [vmem:[%s0] sm:$0xff]
  %v32 = vld [vmem:[%s0 + $0x8] sm:$0xff]
  %v33 = vld [vmem:[%s0 + $0x10] sm:$0xff]
  %v34 = vld [vmem:[%s0 + $0x18] sm:$0xff]
  %v35 = vld [vmem:[%s0 + $0x20] sm:$0xff]
  %v36 = vld [vmem:[%s0 + $0x28] sm:$0xff]
  %v37 = vld [vmem:[%s0 + $0x30] sm:$0xff]
  %v38 = vld [vmem:[%s0 + $0x38] sm:$0xff]
  %v39 = vld [vmem:[%s0 + $0x40] sm:$0xff]
  %v40 = vld [vmem:[%s0 + $0x48] sm:$0xff]
  %v41 = vld [vmem:[%s0 + $0x50] sm:$0xff]
  %v42 = vld [vmem:[%s0 + $0x58] sm:$0xff]
  %v43 = vld [vmem:[%s0 + $0x60] sm:$0xff]
  %v44 = vld [vmem:[%s0 + $0x68] sm:$0xff]
  %v45 = vld [vmem:[%s0 + $0x70] sm:$0xff]
  %v46 = vld [vmem:[%s0 + $0x78] sm:$0xff]
  %v47 = vld [vmem:[%s0 + $0x80] sm:$0xff]
  %v48 = vld [vmem:[%s0 + $0x88] sm:$0xff]
  %v49 = vld [vmem:[%s0 + $0x90] sm:$0xff]
  %v50 = vld [vmem:[%s0 + $0x98] sm:$0xff]
  %v51 = vld [vmem:[%s0 + $0xa0] sm:$0xff]
  %v52 = vld [vmem:[%s0 + $0xa8] sm:$0xff]
  %v53 = vld [vmem:[%s0 + $0xb0] sm:$0xff]
  %v54 = vld [vmem:[%s0 + $0xb8] sm:$0xff]
  %v55 = vld [vmem:[%s0 + $0xc0] sm:$0xff]
  %v56 = vld [vmem:[%s0 + $0xc8] sm:$0xff]
  %v57 = vld [vmem:[%s0 + $0xd0] sm:$0xff]
  %v58 = vld [vmem:[%s0 + $0xd8] sm:$0xff]
  %v59 = vld [vmem:[%s0 + $0xe0] sm:$0xff]
  %v60 = vld [vmem:[%s0 + $0xe8] sm:$0xff]
  %v61 = vld [vmem:[%s0 + $0xf0] sm:$0xff]
  %v62 = vld [vmem:[%s0 + $0xf8] sm:$0xff]
  %v63 = vld [vmem:[%s1] sm:$0x3]
  %v65 = vlaneseq
  %v66 = vshrl.u32 %v65, 7
  %v67 = vsub.s32 0, %v66
  %v68 = vrot.slane %v63, %v67
  %v69 = vlaneseq
  %v70 = vshrl.u32 %v69, 7
  %v71 = vsub.s32 1, %v70
  %v72 = vrot.slane %v63, %v71
  %v75 = vadd.f32 %v31, %v68
  %v76 = vadd.f32 %v32, %v72
  %v77 = vadd.f32 %v33, %v68
  %v78 = vadd.f32 %v34, %v72
  %v79 = vadd.f32 %v35, %v68
  %v80 = vadd.f32 %v36, %v72
  %v81 = vadd.f32 %v37, %v68
  %v82 = vadd.f32 %v38, %v72
  %v83 = vadd.f32 %v39, %v68
  %v84 = vadd.f32 %v40, %v72
  %v85 = vadd.f32 %v41, %v68
  %v86 = vadd.f32 %v42, %v72
  %v87 = vadd.f32 %v43, %v68
  %v88 = vadd.f32 %v44, %v72
  %v89 = vadd.f32 %v45, %v68
  %v90 = vadd.f32 %v46, %v72
  %v91 = vadd.f32 %v47, %v68
  %v92 = vadd.f32 %v48, %v72
  %v93 = vadd.f32 %v49, %v68
  %v94 = vadd.f32 %v50, %v72
  %v95 = vadd.f32 %v51, %v68
  %v96 = vadd.f32 %v52, %v72
  %v97 = vadd.f32 %v53, %v68
  %v98 = vadd.f32 %v54, %v72
  %v99 = vadd.f32 %v55, %v68
  %v100 = vadd.f32 %v56, %v72
  %v101 = vadd.f32 %v57, %v68
  %v102 = vadd.f32 %v58, %v72
  %v103 = vadd.f32 %v59, %v68
  %v104 = vadd.f32 %v60, %v72
  %v105 = vadd.f32 %v61, %v68
  %v106 = vadd.f32 %v62, %v72
  %v108 = vlaneseq
  %v109 = vshrl.u32 %v108, 7
  %v110 = vsub.s32 0, %v109
  %v111 = vrot.slane %v24, %v110
  %v112 = vlaneseq
  %v113 = vshrl.u32 %v112, 7
  %v114 = vsub.s32 1, %v113
  %v115 = vrot.slane %v24, %v114
  %v118 = vsub.f32 %v75, %v111
  %v119 = vsub.f32 %v76, %v115
  %v120 = vsub.f32 %v77, %v111
  %v121 = vsub.f32 %v78, %v115
  %v122 = vsub.f32 %v79, %v111
  %v123 = vsub.f32 %v80, %v115
  %v124 = vsub.f32 %v81, %v111
  %v125 = vsub.f32 %v82, %v115
  %v126 = vsub.f32 %v83, %v111
  %v127 = vsub.f32 %v84, %v115
  %v128 = vsub.f32 %v85, %v111
  %v129 = vsub.f32 %v86, %v115
  %v130 = vsub.f32 %v87, %v111
  %v131 = vsub.f32 %v88, %v115
  %v132 = vsub.f32 %v89, %v111
  %v133 = vsub.f32 %v90, %v115
  %v134 = vsub.f32 %v91, %v111
  %v135 = vsub.f32 %v92, %v115
  %v136 = vsub.f32 %v93, %v111
  %v137 = vsub.f32 %v94, %v115
  %v138 = vsub.f32 %v95, %v111
  %v139 = vsub.f32 %v96, %v115
  %v140 = vsub.f32 %v97, %v111
  %v141 = vsub.f32 %v98, %v115
  %v142 = vsub.f32 %v99, %v111
  %v143 = vsub.f32 %v100, %v115
  %v144 = vsub.f32 %v101, %v111
  %v145 = vsub.f32 %v102, %v115
  %v146 = vsub.f32 %v103, %v111
  %v147 = vsub.f32 %v104, %v115
  %v148 = vsub.f32 %v105, %v111
  %v149 = vsub.f32 %v106, %v115
  %v150 = vld [vmem:[%s2] sm:$0x3]
  %v151 = vmul.f32 %v30, %v150
  %v153 = vlaneseq
  %v154 = vshrl.u32 %v153, 7
  %v155 = vsub.s32 0, %v154
  %v156 = vrot.slane %v151, %v155
  %v157 = vlaneseq
  %v158 = vshrl.u32 %v157, 7
  %v159 = vsub.s32 1, %v158
  %v160 = vrot.slane %v151, %v159
  %v163 = vmul.f32 %v118, %v156
  %v164 = vmul.f32 %v119, %v160
  %v165 = vmul.f32 %v120, %v156
  %v166 = vmul.f32 %v121, %v160
  %v167 = vmul.f32 %v122, %v156
  %v168 = vmul.f32 %v123, %v160
  %v169 = vmul.f32 %v124, %v156
  %v170 = vmul.f32 %v125, %v160
  %v171 = vmul.f32 %v126, %v156
  %v172 = vmul.f32 %v127, %v160
  %v173 = vmul.f32 %v128, %v156
  %v174 = vmul.f32 %v129, %v160
  %v175 = vmul.f32 %v130, %v156
  %v176 = vmul.f32 %v131, %v160
  %v177 = vmul.f32 %v132, %v156
  %v178 = vmul.f32 %v133, %v160
  %v179 = vmul.f32 %v134, %v156
  %v180 = vmul.f32 %v135, %v160
  %v181 = vmul.f32 %v136, %v156
  %v182 = vmul.f32 %v137, %v160
  %v183 = vmul.f32 %v138, %v156
  %v184 = vmul.f32 %v139, %v160
  %v185 = vmul.f32 %v140, %v156
  %v186 = vmul.f32 %v141, %v160
  %v187 = vmul.f32 %v142, %v156
  %v188 = vmul.f32 %v143, %v160
  %v189 = vmul.f32 %v144, %v156
  %v190 = vmul.f32 %v145, %v160
  %v191 = vmul.f32 %v146, %v156
  %v192 = vmul.f32 %v147, %v160
  %v193 = vmul.f32 %v148, %v156
  %v194 = vmul.f32 %v149, %v160
  %v195 = vld [vmem:[%s3] sm:$0x3]
  %v197 = vlaneseq
  %v198 = vshrl.u32 %v197, 7
  %v199 = vsub.s32 0, %v198
  %v200 = vrot.slane %v195, %v199
  %v201 = vlaneseq
  %v202 = vshrl.u32 %v201, 7
  %v203 = vsub.s32 1, %v202
  %v204 = vrot.slane %v195, %v203
  %v207 = vadd.f32 %v163, %v200
  %v208 = vadd.f32 %v164, %v204
  %v209 = vadd.f32 %v165, %v200
  %v210 = vadd.f32 %v166, %v204
  %v211 = vadd.f32 %v167, %v200
  %v212 = vadd.f32 %v168, %v204
  %v213 = vadd.f32 %v169, %v200
  %v214 = vadd.f32 %v170, %v204
  %v215 = vadd.f32 %v171, %v200
  %v216 = vadd.f32 %v172, %v204
  %v217 = vadd.f32 %v173, %v200
  %v218 = vadd.f32 %v174, %v204
  %v219 = vadd.f32 %v175, %v200
  %v220 = vadd.f32 %v176, %v204
  %v221 = vadd.f32 %v177, %v200
  %v222 = vadd.f32 %v178, %v204
  %v223 = vadd.f32 %v179, %v200
  %v224 = vadd.f32 %v180, %v204
  %v225 = vadd.f32 %v181, %v200
  %v226 = vadd.f32 %v182, %v204
  %v227 = vadd.f32 %v183, %v200
  %v228 = vadd.f32 %v184, %v204
  %v229 = vadd.f32 %v185, %v200
  %v230 = vadd.f32 %v186, %v204
  %v231 = vadd.f32 %v187, %v200
  %v232 = vadd.f32 %v188, %v204
  %v233 = vadd.f32 %v189, %v200
  %v234 = vadd.f32 %v190, %v204
  %v235 = vadd.f32 %v191, %v200
  %v236 = vadd.f32 %v192, %v204
  %v237 = vadd.f32 %v193, %v200
  %v238 = vadd.f32 %v194, %v204
  %v239 = vmax.f32 %v207, 0.0
  %v240 = vmax.f32 %v208, 0.0
  %v241 = vmax.f32 %v209, 0.0
  %v242 = vmax.f32 %v210, 0.0
  %v243 = vmax.f32 %v211, 0.0
  %v244 = vmax.f32 %v212, 0.0
  %v245 = vmax.f32 %v213, 0.0
  %v246 = vmax.f32 %v214, 0.0
  %v247 = vmax.f32 %v215, 0.0
  %v248 = vmax.f32 %v216, 0.0
  %v249 = vmax.f32 %v217, 0.0
  %v250 = vmax.f32 %v218, 0.0
  %v251 = vmax.f32 %v219, 0.0
  %v252 = vmax.f32 %v220, 0.0
  %v253 = vmax.f32 %v221, 0.0
  %v254 = vmax.f32 %v222, 0.0
  %v255 = vmax.f32 %v223, 0.0
  %v256 = vmax.f32 %v224, 0.0
  %v257 = vmax.f32 %v225, 0.0
  %v258 = vmax.f32 %v226, 0.0
  %v259 = vmax.f32 %v227, 0.0
  %v260 = vmax.f32 %v228, 0.0
  %v261 = vmax.f32 %v229, 0.0
  %v262 = vmax.f32 %v230, 0.0
  %v263 = vmax.f32 %v231, 0.0
  %v264 = vmax.f32 %v232, 0.0
  %v265 = vmax.f32 %v233, 0.0
  %v266 = vmax.f32 %v234, 0.0
  %v267 = vmax.f32 %v235, 0.0
  %v268 = vmax.f32 %v236, 0.0
  %v269 = vmax.f32 %v237, 0.0
  %v270 = vmax.f32 %v238, 0.0
  %271 = vst [vmem:[%s6] sm:$0xff] %v239
  %272 = vst [vmem:[%s6 + $0x8] sm:$0xff] %v240
  %273 = vst [vmem:[%s6 + $0x10] sm:$0xff] %v241
  %274 = vst [vmem:[%s6 + $0x18] sm:$0xff] %v242
  %275 = vst [vmem:[%s6 + $0x20] sm:$0xff] %v243
  %276 = vst [vmem:[%s6 + $0x28] sm:$0xff] %v244
  %277 = vst [vmem:[%s6 + $0x30] sm:$0xff] %v245
  %278 = vst [vmem:[%s6 + $0x38] sm:$0xff] %v246
  %279 = vst [vmem:[%s6 + $0x40] sm:$0xff] %v247
  %280 = vst [vmem:[%s6 + $0x48] sm:$0xff] %v248
  %281 = vst [vmem:[%s6 + $0x50] sm:$0xff] %v249
  %282 = vst [vmem:[%s6 + $0x58] sm:$0xff] %v250
  %283 = vst [vmem:[%s6 + $0x60] sm:$0xff] %v251
  %284 = vst [vmem:[%s6 + $0x68] sm:$0xff] %v252
  %285 = vst [vmem:[%s6 + $0x70] sm:$0xff] %v253
  %286 = vst [vmem:[%s6 + $0x78] sm:$0xff] %v254
  %287 = vst [vmem:[%s6 + $0x80] sm:$0xff] %v255
  %288 = vst [vmem:[%s6 + $0x88] sm:$0xff] %v256
  %289 = vst [vmem:[%s6 + $0x90] sm:$0xff] %v257
  %290 = vst [vmem:[%s6 + $0x98] sm:$0xff] %v258
  %291 = vst [vmem:[%s6 + $0xa0] sm:$0xff] %v259
  %292 = vst [vmem:[%s6 + $0xa8] sm:$0xff] %v260
  %293 = vst [vmem:[%s6 + $0xb0] sm:$0xff] %v261
  %294 = vst [vmem:[%s6 + $0xb8] sm:$0xff] %v262
  %295 = vst [vmem:[%s6 + $0xc0] sm:$0xff] %v263
  %296 = vst [vmem:[%s6 + $0xc8] sm:$0xff] %v264
  %297 = vst [vmem:[%s6 + $0xd0] sm:$0xff] %v265
  %298 = vst [vmem:[%s6 + $0xd8] sm:$0xff] %v266
  %299 = vst [vmem:[%s6 + $0xe0] sm:$0xff] %v267
  %300 = vst [vmem:[%s6 + $0xe8] sm:$0xff] %v268
  %301 = vst [vmem:[%s6 + $0xf0] sm:$0xff] %v269
  %302 = vst [vmem:[%s6 + $0xf8] sm:$0xff] %v270
  // Predicated region
  $region26: #{generator_forward.19} parent=0 // pred_check
    _
  $region27: #{generator_forward.19} parent=0 // pred_check_branch
    %304 = sbr.rel (0) target = $region29
  $region28: #{generator_forward.19} parent=0 // pred_region
    _
  $region29: #{generator_forward.19} parent=0 // pred_fallthru
    _
  // Predicated region
  $region30: #{generator_forward.19} parent=0 // pred_check
    _
  $region31: #{generator_forward.19} parent=0 // pred_check_branch
    %306 = sbr.rel (0) target = $region33
  $region32: #{generator_forward.19} parent=0 // pred_region
    _
  $region33: #{generator_forward.19} parent=0 // pred_fallthru
    _

// kernel: generator_forward.20
$region0: #{generator_forward.20}
  #allocation0 [shape = 'u32[]', space=smem, size = 0x4, offset = 0x4, fixed_abs, tag = 'smem constant byte address 0x4 - core index']
  #allocation1 [shape = 'u32[144,128]{1,0:T(1,128)}', space=vmem, size = 0x12000, scoped, tag = 'internal scratch']
  %s0 = inlined_call_operand.vmem [shape: bf16[128,256], index: 0, kind: input, shape index: {}]
  %s1 = inlined_call_operand.vmem [shape: bf16[256,2048], index: 1, kind: input, shape index: {}]
  %s2 = inlined_call_operand.vmem [shape: f32[128,2048], index: 2, kind: output, shape index: {}]
  %s3 = sld [smem:[#allocation0]]
  $region83: #{generator_forward.20} parent=0
    _
  %s5 = ssub.s32 1, %s3
  %s6 = scalar_select 0, %s5, %s3
  $region1: #{generator_forward.20} parent=0
    #allocation2 [shape = 'u8[524288]{0}', space=vmem, size = 0x80000, scoped, tag = 'input window, operand 1']
    #allocation3 [shape = 'u8[524288]{0}', space=vmem, size = 0x80000, scoped, tag = 'output window, operand 0']
    loop: start=0, step=1, limit=6
    $region2: #{generator_forward.20} parent=1 // loop_pre_header
      _
    $region3: #{generator_forward.20} parent=1 // loop_header
      %s8 = sphi 0, %s12
      %p9 = scmp.ge.s32.totalorder %s8, 6
      %s15 = sphi 0, %s27
      %s16 = sphi 0, %s23
      %s17 = sphi 0, %s15
      %s18 = sphi 0, %s16
      %s19 = sphi 0, %s17
      %s20 = sphi 0, %s18
      %s30 = sphi 0, %s32
      %s33 = sphi 0, %s30
      %s34 = sphi 0, %s33
      %s50 = sphi 0, %s34
      %s56 = sphi 0, %s58
      %s59 = sphi 0, %s56
      %s60 = sphi 0, %s59
      %s76 = sphi 0, %s60
      %s84 = sphi 0, %s86
      %s87 = sphi 0, %s84
      %s88 = sphi 0, %s87
      %s104 = sphi 0, %s88
    $region4: #{generator_forward.20} parent=1 // loop_header_branch
      %11 = sbr.rel (%p9) target = $region8
    $region5: #{generator_forward.20} parent=1 // loop_body
      %s13 = ssub.s32 %s8, 1
      %s14 = ssub.s32 %s8, 2
      %s21 = sadd.s32 1, %s16
      %p22 = scmp.ge.s32.totalorder %s21, 4
      %s23 = scalar_select %p22, 0, %s21
      %s24 = sadd.s32 1, %s15
      %s25 = scalar_select %p22, %s24, %s15
      %p26 = scmp.ge.s32.totalorder %s25, 1
      %s27 = scalar_select %p26, 0, %s25
      %s28 = ssub.s32 %s15, %s27
      %p29 = scmp.eq.s32.totalorder %s28, 0
      %s31 = sadd.s32 %s30, 1
      %s32 = scalar_select %p29, %s30, %s31
      %p35 = pneg %p29
      %p36 = scmp.eq.s32.totalorder %s8, 3
      %p37 = por %p35, %p36
      %p38 = scmp.ne.s32.totalorder %s30, %s33
      %p39 = scmp.eq.s32.totalorder %s8, 0
      %p40 = por %p38, %p39
      %p41 = scmp.ne.s32.totalorder %s30, %s33
      %p42 = scmp.eq.s32.totalorder %s13, 3
      %p43 = por %p41, %p42
      %p44 = scmp.ne.s32.totalorder %s33, %s34
      %p45 = scmp.eq.s32.totalorder %s13, 0
      %p46 = por %p44, %p45
      %p47 = scmp.ne.s32.totalorder %s33, %s34
      %p48 = scmp.eq.s32.totalorder %s14, 3
      %p49 = por %p47, %p48
      %p51 = scmp.ne.s32.totalorder %s34, %s50
      %p52 = scmp.eq.s32.totalorder %s14, 0
      %p53 = por %p51, %p52
      %s54 = ssub.s32 %s16, %s23
      %p55 = scmp.eq.s32.totalorder %s54, 0
      %s57 = sadd.s32 %s56, 1
      %s58 = scalar_select %p55, %s56, %s57
      %p61 = pneg %p55
      %p62 = scmp.eq.s32.totalorder %s8, 3
      %p63 = por %p61, %p62
      %p64 = scmp.ne.s32.totalorder %s56, %s59
      %p65 = scmp.eq.s32.totalorder %s8, 0
      %p66 = por %p64, %p65
      %p67 = scmp.ne.s32.totalorder %s56, %s59
      %p68 = scmp.eq.s32.totalorder %s13, 3
      %p69 = por %p67, %p68
      %p70 = scmp.ne.s32.totalorder %s59, %s60
      %p71 = scmp.eq.s32.totalorder %s13, 0
      %p72 = por %p70, %p71
      %p73 = scmp.ne.s32.totalorder %s59, %s60
      %p74 = scmp.eq.s32.totalorder %s14, 3
      %p75 = por %p73, %p74
      %p77 = scmp.ne.s32.totalorder %s60, %s76
      %p78 = scmp.eq.s32.totalorder %s14, 0
      %p79 = por %p77, %p78
      %s80 = ssub.s32 %s15, %s27
      %s81 = ssub.s32 %s16, %s23
      %s82 = sor.u32 %s80, %s81
      %p83 = scmp.eq.s32.totalorder %s82, 0
      %s85 = sadd.s32 %s84, 1
      %s86 = scalar_select %p83, %s84, %s85
      %p89 = pneg %p83
      %p90 = scmp.eq.s32.totalorder %s8, 3
      %p91 = por %p89, %p90
      %p92 = scmp.ne.s32.totalorder %s84, %s87
      %p93 = scmp.eq.s32.totalorder %s8, 0
      %p94 = por %p92, %p93
      %p95 = scmp.ne.s32.totalorder %s84, %s87
      %p96 = scmp.eq.s32.totalorder %s13, 3
      %p97 = por %p95, %p96
      %p98 = scmp.ne.s32.totalorder %s87, %s88
      %p99 = scmp.eq.s32.totalorder %s13, 0
      %p100 = por %p98, %p99
      %p101 = scmp.ne.s32.totalorder %s87, %s88
      %p102 = scmp.eq.s32.totalorder %s14, 3
      %p103 = por %p101, %p102
      %p105 = scmp.ne.s32.totalorder %s88, %s104
      %p106 = scmp.eq.s32.totalorder %s14, 0
      %p107 = por %p105, %p106
      %p108 = scmp.le.s32.totalorder 1, %s8
      %p109 = scmp.lt.s32.totalorder %s8, 5
      %p110 = pnand %p108, %p109
      %p111 = pneg %p110
      // Predicated region
      $region9: #{generator_forward.20} parent=5 // pred_check
        _
      $region10: #{generator_forward.20} parent=5 // pred_check_branch
        %113 = sbr.rel (%p110) target = $region12
      $region11: #{generator_forward.20} parent=5 // pred_region
        %s114 = ssub.s32 %s8, 1
        // Predicated region
        $region13: #{generator_forward.20} parent=11 // pred_check
          %p115 = pneg %p46
        $region14: #{generator_forward.20} parent=11 // pred_check_branch
          %117 = sbr.rel (%p115) target = $region16
        $region15: #{generator_forward.20} parent=11 // pred_region
          %s118 = smul.u32 16, %s17
          %p119 = scmp.lt.s32.totalorder %s118, 15
          %s120 = scalar_select %p119, %s118, 15
          %s121 = smul.addr %s120, 2
          %s122 = smul.addr %s121, 4
          %s123 = scalar_lea.vmem %s0, %s122
          %s124 = smul.u32 16, %s17
        $region16: #{generator_forward.20} parent=11 // pred_fallthru
          _
      $region12: #{generator_forward.20} parent=5 // pred_fallthru
        _
      %p125 = scmp.lt.s32.totalorder %s8, 4
      // Predicated region
      $region17: #{generator_forward.20} parent=5 // pred_check
        %p126 = pneg %p125
      $region18: #{generator_forward.20} parent=5 // pred_check_branch
        %128 = sbr.rel (%p126) target = $region20
      $region19: #{generator_forward.20} parent=5 // pred_region
        // Predicated region
        $region21: #{generator_forward.20} parent=19 // pred_check
          %p129 = pneg %p66
        $region22: #{generator_forward.20} parent=19 // pred_check_branch
          %131 = sbr.rel (%p129) target = $region24
        $region23: #{generator_forward.20} parent=19 // pred_region
          %s132 = sand.u32 %s56, 1
          %s133 = sand.u32 %s56, 1
          %s134 = smul.addr %s133, 512
          %s135 = scalar_lea.vmem [#allocation2], %s134
          %s136 = smul.u32 4, %s16
          %s137 = smul.addr %s136, 4
          %s138 = scalar_lea.vmem %s1, %s137
          // Predicated region
          $region25: #{generator_forward.20} parent=23 // pred_check
            _
          $region26: #{generator_forward.20} parent=23 // pred_check_branch
            %140 = sbr.rel (0) target = $region28
          $region27: #{generator_forward.20} parent=23 // pred_region
            // Predicated region
            $region29: #{generator_forward.20} parent=27 // pred_check
              _
            $region30: #{generator_forward.20} parent=27 // pred_check_branch
              %142 = sbr.rel (0) target = $region32
            $region31: #{generator_forward.20} parent=27 // pred_region
              loop: start=0, step=1, limit=1
              $region33: #{generator_forward.20} parent=31 // loop_pre_header
                _
              $region34: #{generator_forward.20} parent=31 // loop_header
                %s144 = sphi 0, %s148
                %p145 = scmp.ge.s32.totalorder %s144, 1
                %s149 = sphi %s138, %s138
                %s150 = sphi %s135, %s135
              $region35: #{generator_forward.20} parent=31 // loop_header_branch
                %147 = sbr.rel (%p145) target = $region39
              $region36: #{generator_forward.20} parent=31 // loop_body
                %v151 = vld [vmem:[%s149] sm:$0xff]
                %152 = vst [vmem:[%s150] sm:$0xff] %v151
                %v153 = vld [vmem:[%s149 + $0x8] sm:$0xff]
                %154 = vst [vmem:[%s150 + $0x8] sm:$0xff] %v153
                %v155 = vld [vmem:[%s149 + $0x40] sm:$0xff]
                %156 = vst [vmem:[%s150 + $0x10] sm:$0xff] %v155
                %v157 = vld [vmem:[%s149 + $0x48] sm:$0xff]
                %158 = vst [vmem:[%s150 + $0x18] sm:$0xff] %v157
                %v159 = vld [vmem:[%s149 + $0x80] sm:$0xff]
                %160 = vst [vmem:[%s150 + $0x20] sm:$0xff] %v159
                %v161 = vld [vmem:[%s149 + $0x88] sm:$0xff]
                %162 = vst [vmem:[%s150 + $0x28] sm:$0xff] %v161
                %v163 = vld [vmem:[%s149 + $0xc0] sm:$0xff]
                %164 = vst [vmem:[%s150 + $0x30] sm:$0xff] %v163
                %v165 = vld [vmem:[%s149 + $0xc8] sm:$0xff]
                %166 = vst [vmem:[%s150 + $0x38] sm:$0xff] %v165
                %v167 = vld [vmem:[%s149 + $0x100] sm:$0xff]
                %168 = vst [vmem:[%s150 + $0x40] sm:$0xff] %v167
                %v169 = vld [vmem:[%s149 + $0x108] sm:$0xff]
                %170 = vst [vmem:[%s150 + $0x48] sm:$0xff] %v169
                %v171 = vld [vmem:[%s149 + $0x140] sm:$0xff]
                %172 = vst [vmem:[%s150 + $0x50] sm:$0xff] %v171
                %v173 = vld [vmem:[%s149 + $0x148] sm:$0xff]
                %174 = vst [vmem:[%s150 + $0x58] sm:$0xff] %v173
                %v175 = vld [vmem:[%s149 + $0x180] sm:$0xff]
                %176 = vst [vmem:[%s150 + $0x60] sm:$0xff] %v175
                %v177 = vld [vmem:[%s149 + $0x188] sm:$0xff]
                %178 = vst [vmem:[%s150 + $0x68] sm:$0xff] %v177
                %v179 = vld [vmem:[%s149 + $0x1c0] sm:$0xff]
                %180 = vst [vmem:[%s150 + $0x70] sm:$0xff] %v179
                %v181 = vld [vmem:[%s149 + $0x1c8] sm:$0xff]
                %182 = vst [vmem:[%s150 + $0x78] sm:$0xff] %v181
                %v183 = vld [vmem:[%s149 + $0x200] sm:$0xff]
                %184 = vst [vmem:[%s150 + $0x80] sm:$0xff] %v183
                %v185 = vld [vmem:[%s149 + $0x208] sm:$0xff]
                %186 = vst [vmem:[%s150 + $0x88] sm:$0xff] %v185
                %v187 = vld [vmem:[%s149 + $0x240] sm:$0xff]
                %188 = vst [vmem:[%s150 + $0x90] sm:$0xff] %v187
                %v189 = vld [vmem:[%s149 + $0x248] sm:$0xff]
                %190 = vst [vmem:[%s150 + $0x98] sm:$0xff] %v189
                %v191 = vld [vmem:[%s149 + $0x280] sm:$0xff]
                %192 = vst [vmem:[%s150 + $0xa0] sm:$0xff] %v191
                %v193 = vld [vmem:[%s149 + $0x288] sm:$0xff]
                %194 = vst [vmem:[%s150 + $0xa8] sm:$0xff] %v193
                %v195 = vld [vmem:[%s149 + $0x2c0] sm:$0xff]
                %196 = vst [vmem:[%s150 + $0xb0] sm:$0xff] %v195
                %v197 = vld [vmem:[%s149 + $0x2c8] sm:$0xff]
                %198 = vst [vmem:[%s150 + $0xb8] sm:$0xff] %v197
                %v199 = vld [vmem:[%s149 + $0x300] sm:$0xff]
                %200 = vst [vmem:[%s150 + $0xc0] sm:$0xff] %v199
                %v201 = vld [vmem:[%s149 + $0x308] sm:$0xff]
                %202 = vst [vmem:[%s150 + $0xc8] sm:$0xff] %v201
                %v203 = vld [vmem:[%s149 + $0x340] sm:$0xff]
                %204 = vst [vmem:[%s150 + $0xd0] sm:$0xff] %v203
                %v205 = vld [vmem:[%s149 + $0x348] sm:$0xff]
                %206 = vst [vmem:[%s150 + $0xd8] sm:$0xff] %v205
                %v207 = vld [vmem:[%s149 + $0x380] sm:$0xff]
                %208 = vst [vmem:[%s150 + $0xe0] sm:$0xff] %v207
                %v209 = vld [vmem:[%s149 + $0x388] sm:$0xff]
                %210 = vst [vmem:[%s150 + $0xe8] sm:$0xff] %v209
                %v211 = vld [vmem:[%s149 + $0x3c0] sm:$0xff]
                %212 = vst [vmem:[%s150 + $0xf0] sm:$0xff] %v211
                %v213 = vld [vmem:[%s149 + $0x3c8] sm:$0xff]
                %214 = vst [vmem:[%s150 + $0xf8] sm:$0xff] %v213
                %v215 = vld [vmem:[%s149 + $0x400] sm:$0xff]
                %216 = vst [vmem:[%s150 + $0x100] sm:$0xff] %v215
                %v217 = vld [vmem:[%s149 + $0x408] sm:$0xff]
                %218 = vst [vmem:[%s150 + $0x108] sm:$0xff] %v217
                %v219 = vld [vmem:[%s149 + $0x440] sm:$0xff]
                %220 = vst [vmem:[%s150 + $0x110] sm:$0xff] %v219
                %v221 = vld [vmem:[%s149 + $0x448] sm:$0xff]
                %222 = vst [vmem:[%s150 + $0x118] sm:$0xff] %v221
                %v223 = vld [vmem:[%s149 + $0x480] sm:$0xff]
                %224 = vst [vmem:[%s150 + $0x120] sm:$0xff] %v223
                %v225 = vld [vmem:[%s149 + $0x488] sm:$0xff]
                %226 = vst [vmem:[%s150 + $0x128] sm:$0xff] %v225
                %v227 = vld [vmem:[%s149 + $0x4c0] sm:$0xff]
                %228 = vst [vmem:[%s150 + $0x130] sm:$0xff] %v227
                %v229 = vld [vmem:[%s149 + $0x4c8] sm:$0xff]
                %230 = vst [vmem:[%s150 + $0x138] sm:$0xff] %v229
                %v231 = vld [vmem:[%s149 + $0x500] sm:$0xff]
                %232 = vst [vmem:[%s150 + $0x140] sm:$0xff] %v231
                %v233 = vld [vmem:[%s149 + $0x508] sm:$0xff]
                %234 = vst [vmem:[%s150 + $0x148] sm:$0xff] %v233
                %v235 = vld [vmem:[%s149 + $0x540] sm:$0xff]
                %236 = vst [vmem:[%s150 + $0x150] sm:$0xff] %v235
                %v237 = vld [vmem:[%s149 + $0x548] sm:$0xff]
                %238 = vst [vmem:[%s150 + $0x158] sm:$0xff] %v237
                %v239 = vld [vmem:[%s149 + $0x580] sm:$0xff]
                %240 = vst [vmem:[%s150 + $0x160] sm:$0xff] %v239
                %v241 = vld [vmem:[%s149 + $0x588] sm:$0xff]
                %242 = vst [vmem:[%s150 + $0x168] sm:$0xff] %v241
                %v243 = vld [vmem:[%s149 + $0x5c0] sm:$0xff]
                %244 = vst [vmem:[%s150 + $0x170] sm:$0xff] %v243
                %v245 = vld [vmem:[%s149 + $0x5c8] sm:$0xff]
                %246 = vst [vmem:[%s150 + $0x178] sm:$0xff] %v245
                %v247 = vld [vmem:[%s149 + $0x600] sm:$0xff]
                %248 = vst [vmem:[%s150 + $0x180] sm:$0xff] %v247
                %v249 = vld [vmem:[%s149 + $0x608] sm:$0xff]
                %250 = vst [vmem:[%s150 + $0x188] sm:$0xff] %v249
                %v251 = vld [vmem:[%s149 + $0x640] sm:$0xff]
                %252 = vst [vmem:[%s150 + $0x190] sm:$0xff] %v251
                %v253 = vld [vmem:[%s149 + $0x648] sm:$0xff]
                %254 = vst [vmem:[%s150 + $0x198] sm:$0xff] %v253
                %v255 = vld [vmem:[%s149 + $0x680] sm:$0xff]
                %256 = vst [vmem:[%s150 + $0x1a0] sm:$0xff] %v255
                %v257 = vld [vmem:[%s149 + $0x688] sm:$0xff]
                %258 = vst [vmem:[%s150 + $0x1a8] sm:$0xff] %v257
                %v259 = vld [vmem:[%s149 + $0x6c0] sm:$0xff]
                %260 = vst [vmem:[%s150 + $0x1b0] sm:$0xff] %v259
                %v261 = vld [vmem:[%s149 + $0x6c8] sm:$0xff]
                %262 = vst [vmem:[%s150 + $0x1b8] sm:$0xff] %v261
                %v263 = vld [vmem:[%s149 + $0x700] sm:$0xff]
                %264 = vst [vmem:[%s150 + $0x1c0] sm:$0xff] %v263
                %v265 = vld [vmem:[%s149 + $0x708] sm:$0xff]
                %266 = vst [vmem:[%s150 + $0x1c8] sm:$0xff] %v265
                %v267 = vld [vmem:[%s149 + $0x740] sm:$0xff]
                %268 = vst [vmem:[%s150 + $0x1d0] sm:$0xff] %v267
                %v269 = vld [vmem:[%s149 + $0x748] sm:$0xff]
                %270 = vst [vmem:[%s150 + $0x1d8] sm:$0xff] %v269
                %v271 = vld [vmem:[%s149 + $0x780] sm:$0xff]
                %272 = vst [vmem:[%s150 + $0x1e0] sm:$0xff] %v271
                %v273 = vld [vmem:[%s149 + $0x788] sm:$0xff]
                %274 = vst [vmem:[%s150 + $0x1e8] sm:$0xff] %v273
                %v275 = vld [vmem:[%s149 + $0x7c0] sm:$0xff]
                %276 = vst [vmem:[%s150 + $0x1f0] sm:$0xff] %v275
                %v277 = vld [vmem:[%s149 + $0x7c8] sm:$0xff]
                %278 = vst [vmem:[%s150 + $0x1f8] sm:$0xff] %v277
              $region37: #{generator_forward.20} parent=31 // loop_footer
                %s148 = sadd.s32 1, %s144
              $region38: #{generator_forward.20} parent=31 // loop_footer_branch
                %143 = sbr.rel target = $region34
              $region39: #{generator_forward.20} parent=31 // loop_exit
                _
            $region32: #{generator_forward.20} parent=27 // pred_fallthru
              _
            // Predicated region
            $region40: #{generator_forward.20} parent=27 // pred_check
              _
            $region41: #{generator_forward.20} parent=27 // pred_check_branch
              %280 = sbr.rel target = $region43
            $region42: #{generator_forward.20} parent=27 // pred_region
              _
            $region43: #{generator_forward.20} parent=27 // pred_fallthru
              _
          $region28: #{generator_forward.20} parent=23 // pred_fallthru
            _
          %281 = vnop
        $region24: #{generator_forward.20} parent=19 // pred_fallthru
          _
      $region20: #{generator_forward.20} parent=5 // pred_fallthru
        _
      %p282 = scmp.le.s32.totalorder 1, %s8
      %p283 = scmp.lt.s32.totalorder %s8, 5
      %p284 = pnand %p282, %p283
      %p285 = pneg %p284
      // Predicated region
      $region44: #{generator_forward.20} parent=5 // pred_check
        _
      $region45: #{generator_forward.20} parent=5 // pred_check_branch
        %287 = sbr.rel (%p284) target = $region47
      $region46: #{generator_forward.20} parent=5 // pred_region
        %s288 = ssub.s32 %s8, 1
        %s289 = sand.u32 %s59, 1
        %s290 = sand.u32 %s59, 1
        %s291 = smul.addr %s290, 512
        %s292 = scalar_lea.vmem [#allocation2], %s291
        // Predicated region
        $region48: #{generator_forward.20} parent=46 // pred_check
          %p293 = pneg %p72
        $region49: #{generator_forward.20} parent=46 // pred_check_branch
          %295 = sbr.rel (%p293) target = $region51
        $region50: #{generator_forward.20} parent=46 // pred_region
          _
        $region51: #{generator_forward.20} parent=46 // pred_fallthru
          _
        %s296 = smul.u32 16, %s17
        %p297 = scmp.lt.s32.totalorder %s296, 15
        %s298 = scalar_select %p297, %s296, 15
        %s299 = smul.addr %s298, 2
        %s300 = smul.addr %s299, 4
        %s301 = scalar_lea.vmem %s0, %s300
        %p302 = pneg %p46
        %p303 = pneg %p43
        %s304 = sand.u32 %s59, 1
        %s305 = sand.u32 %s59, 1
        %s306 = smul.addr %s305, 512
        %s307 = scalar_lea.vmem [#allocation2], %s306
        %p308 = pneg %p72
        %p309 = pneg %p69
        %p310 = pneg %p100
        %p311 = pneg %p97
        %s312 = sand.u32 %s87, 1
        %s313 = sand.u32 %s87, 1
        %s314 = smul.addr %s313, 512
        %s315 = scalar_lea.vmem [#allocation3], %s314
        %s316 = smul.u32 16, %s17
        %p317 = scmp.lt.s32.totalorder %s316, 15
        %s318 = scalar_select %p317, %s316, 15
        %s319 = smul.addr %s318, 2
        %s320 = smul.addr %s319, 4
        %s321 = scalar_lea.vmem %s0, %s320
        %s322 = smul.u32 16, %s17
        %s323 = smul.u32 4, %s18
        %s324 = smul.u32 16, %s17
        %s325 = smul.u32 4, %s18
        %v326 = vld [vmem:[%s321] sm:$0xff]
        %v327 = vld [vmem:[%s321 + $0x8] sm:$0xff]
        %v328 = vld [vmem:[%s321 + $0x10] sm:$0xff]
        %v329 = vld [vmem:[%s321 + $0x18] sm:$0xff]
        %v330 = vld [vmem:[%s321 + $0x20] sm:$0xff]
        %v331 = vld [vmem:[%s321 + $0x28] sm:$0xff]
        %v332 = vld [vmem:[%s321 + $0x30] sm:$0xff]
        %v333 = vld [vmem:[%s321 + $0x38] sm:$0xff]
        %v334 = vld [vmem:[%s321 + $0x40] sm:$0xff]
        %v335 = vld [vmem:[%s321 + $0x48] sm:$0xff]
        %v336 = vld [vmem:[%s321 + $0x50] sm:$0xff]
        %v337 = vld [vmem:[%s321 + $0x58] sm:$0xff]
        %v338 = vld [vmem:[%s321 + $0x60] sm:$0xff]
        %v339 = vld [vmem:[%s321 + $0x68] sm:$0xff]
        %v340 = vld [vmem:[%s321 + $0x70] sm:$0xff]
        %v341 = vld [vmem:[%s321 + $0x78] sm:$0xff]
        %v342 = vld [vmem:[%s292] sm:$0xff]
        %v343 = vld [vmem:[%s292 + $0x8] sm:$0xff]
        %v344 = vld [vmem:[%s292 + $0x10] sm:$0xff]
        %v345 = vld [vmem:[%s292 + $0x18] sm:$0xff]
        %v346 = vld [vmem:[%s292 + $0x20] sm:$0xff]
        %v347 = vld [vmem:[%s292 + $0x28] sm:$0xff]
        %v348 = vld [vmem:[%s292 + $0x30] sm:$0xff]
        %v349 = vld [vmem:[%s292 + $0x38] sm:$0xff]
        %v350 = vld [vmem:[%s292 + $0x40] sm:$0xff]
        %v351 = vld [vmem:[%s292 + $0x48] sm:$0xff]
        %v352 = vld [vmem:[%s292 + $0x50] sm:$0xff]
        %v353 = vld [vmem:[%s292 + $0x58] sm:$0xff]
        %v354 = vld [vmem:[%s292 + $0x60] sm:$0xff]
        %v355 = vld [vmem:[%s292 + $0x68] sm:$0xff]
        %v356 = vld [vmem:[%s292 + $0x70] sm:$0xff]
        %v357 = vld [vmem:[%s292 + $0x78] sm:$0xff]
        %v358 = vld [vmem:[%s292 + $0x80] sm:$0xff]
        %v359 = vld [vmem:[%s292 + $0x88] sm:$0xff]
        %v360 = vld [vmem:[%s292 + $0x90] sm:$0xff]
        %v361 = vld [vmem:[%s292 + $0x98] sm:$0xff]
        %v362 = vld [vmem:[%s292 + $0xa0] sm:$0xff]
        %v363 = vld [vmem:[%s292 + $0xa8] sm:$0xff]
        %v364 = vld [vmem:[%s292 + $0xb0] sm:$0xff]
        %v365 = vld [vmem:[%s292 + $0xb8] sm:$0xff]
        %v366 = vld [vmem:[%s292 + $0xc0] sm:$0xff]
        %v367 = vld [vmem:[%s292 + $0xc8] sm:$0xff]
        %v368 = vld [vmem:[%s292 + $0xd0] sm:$0xff]
        %v369 = vld [vmem:[%s292 + $0xd8] sm:$0xff]
        %v370 = vld [vmem:[%s292 + $0xe0] sm:$0xff]
        %v371 = vld [vmem:[%s292 + $0xe8] sm:$0xff]
        %v372 = vld [vmem:[%s292 + $0xf0] sm:$0xff]
        %v373 = vld [vmem:[%s292 + $0xf8] sm:$0xff]
        %v374 = vld [vmem:[%s292 + $0x100] sm:$0xff]
        %v375 = vld [vmem:[%s292 + $0x108] sm:$0xff]
        %v376 = vld [vmem:[%s292 + $0x110] sm:$0xff]
        %v377 = vld [vmem:[%s292 + $0x118] sm:$0xff]
        %v378 = vld [vmem:[%s292 + $0x120] sm:$0xff]
        %v379 = vld [vmem:[%s292 + $0x128] sm:$0xff]
        %v380 = vld [vmem:[%s292 + $0x130] sm:$0xff]
        %v381 = vld [vmem:[%s292 + $0x138] sm:$0xff]
        %v382 = vld [vmem:[%s292 + $0x140] sm:$0xff]
        %v383 = vld [vmem:[%s292 + $0x148] sm:$0xff]
        %v384 = vld [vmem:[%s292 + $0x150] sm:$0xff]
        %v385 = vld [vmem:[%s292 + $0x158] sm:$0xff]
        %v386 = vld [vmem:[%s292 + $0x160] sm:$0xff]
        %v387 = vld [vmem:[%s292 + $0x168] sm:$0xff]
        %v388 = vld [vmem:[%s292 + $0x170] sm:$0xff]
        %v389 = vld [vmem:[%s292 + $0x178] sm:$0xff]
        %v390 = vld [vmem:[%s292 + $0x180] sm:$0xff]
        %v391 = vld [vmem:[%s292 + $0x188] sm:$0xff]
        %v392 = vld [vmem:[%s292 + $0x190] sm:$0xff]
        %v393 = vld [vmem:[%s292 + $0x198] sm:$0xff]
        %v394 = vld [vmem:[%s292 + $0x1a0] sm:$0xff]
        %v395 = vld [vmem:[%s292 + $0x1a8] sm:$0xff]
        %v396 = vld [vmem:[%s292 + $0x1b0] sm:$0xff]
        %v397 = vld [vmem:[%s292 + $0x1b8] sm:$0xff]
        %v398 = vld [vmem:[%s292 + $0x1c0] sm:$0xff]
        %v399 = vld [vmem:[%s292 + $0x1c8] sm:$0xff]
        %v400 = vld [vmem:[%s292 + $0x1d0] sm:$0xff]
        %v401 = vld [vmem:[%s292 + $0x1d8] sm:$0xff]
        %v402 = vld [vmem:[%s292 + $0x1e0] sm:$0xff]
        %v403 = vld [vmem:[%s292 + $0x1e8] sm:$0xff]
        %v404 = vld [vmem:[%s292 + $0x1f0] sm:$0xff]
        %v405 = vld [vmem:[%s292 + $0x1f8] sm:$0xff]
        %v422 = vunpack.c.l.b16 %v326
        %v423 = vunpack.c.h.b16 %v326
        %v424 = vunpack.c.l.b16 %v327
        %v425 = vunpack.c.h.b16 %v327
        %v426 = vunpack.c.l.b16 %v328
        %v427 = vunpack.c.h.b16 %v328
        %v428 = vunpack.c.l.b16 %v329
        %v429 = vunpack.c.h.b16 %v329
        %v430 = vunpack.c.l.b16 %v330
        %v431 = vunpack.c.h.b16 %v330
        %v432 = vunpack.c.l.b16 %v331
        %v433 = vunpack.c.h.b16 %v331
        %v434 = vunpack.c.l.b16 %v332
        %v435 = vunpack.c.h.b16 %v332
        %v436 = vunpack.c.l.b16 %v333
        %v437 = vunpack.c.h.b16 %v333
        %v438 = vunpack.c.l.b16 %v334
        %v439 = vunpack.c.h.b16 %v334
        %v440 = vunpack.c.l.b16 %v335
        %v441 = vunpack.c.h.b16 %v335
        %v442 = vunpack.c.l.b16 %v336
        %v443 = vunpack.c.h.b16 %v336
        %v444 = vunpack.c.l.b16 %v337
        %v445 = vunpack.c.h.b16 %v337
        %v446 = vunpack.c.l.b16 %v338
        %v447 = vunpack.c.h.b16 %v338
        %v448 = vunpack.c.l.b16 %v339
        %v449 = vunpack.c.h.b16 %v339
        %v450 = vunpack.c.l.b16 %v340
        %v451 = vunpack.c.h.b16 %v340
        %v452 = vunpack.c.l.b16 %v341
        %v453 = vunpack.c.h.b16 %v341
        %v454 = vpack.c.b16 %v424, %v422
        %v455 = vpack.c.b16 %v425, %v423
        %v456 = vpack.c.b16 %v428, %v426
        %v457 = vpack.c.b16 %v429, %v427
        %v458 = vpack.c.b16 %v432, %v430
        %v459 = vpack.c.b16 %v433, %v431
        %v460 = vpack.c.b16 %v436, %v434
        %v461 = vpack.c.b16 %v437, %v435
        %v462 = vpack.c.b16 %v440, %v438
        %v463 = vpack.c.b16 %v441, %v439
        %v464 = vpack.c.b16 %v444, %v442
        %v465 = vpack.c.b16 %v445, %v443
        %v466 = vpack.c.b16 %v448, %v446
        %v467 = vpack.c.b16 %v449, %v447
        %v468 = vpack.c.b16 %v452, %v450
        %v469 = vpack.c.b16 %v453, %v451
        %v550 = vunpack.c.l.b16 %v342
        %v551 = vunpack.c.h.b16 %v342
        %v552 = vunpack.c.l.b16 %v343
        %v553 = vunpack.c.h.b16 %v343
        %v554 = vunpack.c.l.b16 %v344
        %v555 = vunpack.c.h.b16 %v344
        %v556 = vunpack.c.l.b16 %v345
        %v557 = vunpack.c.h.b16 %v345
        %v558 = vunpack.c.l.b16 %v346
        %v559 = vunpack.c.h.b16 %v346
        %v560 = vunpack.c.l.b16 %v347
        %v561 = vunpack.c.h.b16 %v347
        %v562 = vunpack.c.l.b16 %v348
        %v563 = vunpack.c.h.b16 %v348
        %v564 = vunpack.c.l.b16 %v349
        %v565 = vunpack.c.h.b16 %v349
        %v566 = vunpack.c.l.b16 %v350
        %v567 = vunpack.c.h.b16 %v350
        %v568 = vunpack.c.l.b16 %v351
        %v569 = vunpack.c.h.b16 %v351
        %v570 = vunpack.c.l.b16 %v352
        %v571 = vunpack.c.h.b16 %v352
        %v572 = vunpack.c.l.b16 %v353
        %v573 = vunpack.c.h.b16 %v353
        %v574 = vunpack.c.l.b16 %v354
        %v575 = vunpack.c.h.b16 %v354
        %v576 = vunpack.c.l.b16 %v355
        %v577 = vunpack.c.h.b16 %v355
        %v578 = vunpack.c.l.b16 %v356
        %v579 = vunpack.c.h.b16 %v356
        %v580 = vunpack.c.l.b16 %v357
        %v581 = vunpack.c.h.b16 %v357
        %v582 = vunpack.c.l.b16 %v358
        %v583 = vunpack.c.h.b16 %v358
        %v584 = vunpack.c.l.b16 %v359
        %v585 = vunpack.c.h.b16 %v359
        %v586 = vunpack.c.l.b16 %v360
        %v587 = vunpack.c.h.b16 %v360
        %v588 = vunpack.c.l.b16 %v361
        %v589 = vunpack.c.h.b16 %v361
        %v590 = vunpack.c.l.b16 %v362
        %v591 = vunpack.c.h.b16 %v362
        %v592 = vunpack.c.l.b16 %v363
        %v593 = vunpack.c.h.b16 %v363
        %v594 = vunpack.c.l.b16 %v364
        %v595 = vunpack.c.h.b16 %v364
        %v596 = vunpack.c.l.b16 %v365
        %v597 = vunpack.c.h.b16 %v365
        %v598 = vunpack.c.l.b16 %v366
        %v599 = vunpack.c.h.b16 %v366
        %v600 = vunpack.c.l.b16 %v367
        %v601 = vunpack.c.h.b16 %v367
        %v602 = vunpack.c.l.b16 %v368
        %v603 = vunpack.c.h.b16 %v368
        %v604 = vunpack.c.l.b16 %v369
        %v605 = vunpack.c.h.b16 %v369
        %v606 = vunpack.c.l.b16 %v370
        %v607 = vunpack.c.h.b16 %v370
        %v608 = vunpack.c.l.b16 %v371
        %v609 = vunpack.c.h.b16 %v371
        %v610 = vunpack.c.l.b16 %v372
        %v611 = vunpack.c.h.b16 %v372
        %v612 = vunpack.c.l.b16 %v373
        %v613 = vunpack.c.h.b16 %v373
        %v614 = vunpack.c.l.b16 %v374
        %v615 = vunpack.c.h.b16 %v374
        %v616 = vunpack.c.l.b16 %v375
        %v617 = vunpack.c.h.b16 %v375
        %v618 = vunpack.c.l.b16 %v376
        %v619 = vunpack.c.h.b16 %v376
        %v620 = vunpack.c.l.b16 %v377
        %v621 = vunpack.c.h.b16 %v377
        %v622 = vunpack.c.l.b16 %v378
        %v623 = vunpack.c.h.b16 %v378
        %v624 = vunpack.c.l.b16 %v379
        %v625 = vunpack.c.h.b16 %v379
        %v626 = vunpack.c.l.b16 %v380
        %v627 = vunpack.c.h.b16 %v380
        %v628 = vunpack.c.l.b16 %v381
        %v629 = vunpack.c.h.b16 %v381
        %v630 = vunpack.c.l.b16 %v382
        %v631 = vunpack.c.h.b16 %v382
        %v632 = vunpack.c.l.b16 %v383
        %v633 = vunpack.c.h.b16 %v383
        %v634 = vunpack.c.l.b16 %v384
        %v635 = vunpack.c.h.b16 %v384
        %v636 = vunpack.c.l.b16 %v385
        %v637 = vunpack.c.h.b16 %v385
        %v638 = vunpack.c.l.b16 %v386
        %v639 = vunpack.c.h.b16 %v386
        %v640 = vunpack.c.l.b16 %v387
        %v641 = vunpack.c.h.b16 %v387
        %v642 = vunpack.c.l.b16 %v388
        %v643 = vunpack.c.h.b16 %v388
        %v644 = vunpack.c.l.b16 %v389
        %v645 = vunpack.c.h.b16 %v389
        %v646 = vunpack.c.l.b16 %v390
        %v647 = vunpack.c.h.b16 %v390
        %v648 = vunpack.c.l.b16 %v391
        %v649 = vunpack.c.h.b16 %v391
        %v650 = vunpack.c.l.b16 %v392
        %v651 = vunpack.c.h.b16 %v392
        %v652 = vunpack.c.l.b16 %v393
        %v653 = vunpack.c.h.b16 %v393
        %v654 = vunpack.c.l.b16 %v394
        %v655 = vunpack.c.h.b16 %v394
        %v656 = vunpack.c.l.b16 %v395
        %v657 = vunpack.c.h.b16 %v395
        %v658 = vunpack.c.l.b16 %v396
        %v659 = vunpack.c.h.b16 %v396
        %v660 = vunpack.c.l.b16 %v397
        %v661 = vunpack.c.h.b16 %v397
        %v662 = vunpack.c.l.b16 %v398
        %v663 = vunpack.c.h.b16 %v398
        %v664 = vunpack.c.l.b16 %v399
        %v665 = vunpack.c.h.b16 %v399
        %v666 = vunpack.c.l.b16 %v400
        %v667 = vunpack.c.h.b16 %v400
        %v668 = vunpack.c.l.b16 %v401
        %v669 = vunpack.c.h.b16 %v401
        %v670 = vunpack.c.l.b16 %v402
        %v671 = vunpack.c.h.b16 %v402
        %v672 = vunpack.c.l.b16 %v403
        %v673 = vunpack.c.h.b16 %v403
        %v674 = vunpack.c.l.b16 %v404
        %v675 = vunpack.c.h.b16 %v404
        %v676 = vunpack.c.l.b16 %v405
        %v677 = vunpack.c.h.b16 %v405
        %v678 = vpack.c.b16 %v554, %v550
        %v679 = vpack.c.b16 %v555, %v551
        %v680 = vpack.c.b16 %v556, %v552
        %v681 = vpack.c.b16 %v557, %v553
        %v682 = vpack.c.b16 %v562, %v558
        %v683 = vpack.c.b16 %v563, %v559
        %v684 = vpack.c.b16 %v564, %v560
        %v685 = vpack.c.b16 %v565, %v561
        %v686 = vpack.c.b16 %v570, %v566
        %v687 = vpack.c.b16 %v571, %v567
        %v688 = vpack.c.b16 %v572, %v568
        %v689 = vpack.c.b16 %v573, %v569
        %v690 = vpack.c.b16 %v578, %v574
        %v691 = vpack.c.b16 %v579, %v575
        %v692 = vpack.c.b16 %v580, %v576
        %v693 = vpack.c.b16 %v581, %v577
        %v694 = vpack.c.b16 %v586, %v582
        %v695 = vpack.c.b16 %v587, %v583
        %v696 = vpack.c.b16 %v588, %v584
        %v697 = vpack.c.b16 %v589, %v585
        %v698 = vpack.c.b16 %v594, %v590
        %v699 = vpack.c.b16 %v595, %v591
        %v700 = vpack.c.b16 %v596, %v592
        %v701 = vpack.c.b16 %v597, %v593
        %v702 = vpack.c.b16 %v602, %v598
        %v703 = vpack.c.b16 %v603, %v599
        %v704 = vpack.c.b16 %v604, %v600
        %v705 = vpack.c.b16 %v605, %v601
        %v706 = vpack.c.b16 %v610, %v606
        %v707 = vpack.c.b16 %v611, %v607
        %v708 = vpack.c.b16 %v612, %v608
        %v709 = vpack.c.b16 %v613, %v609
        %v710 = vpack.c.b16 %v618, %v614
        %v711 = vpack.c.b16 %v619, %v615
        %v712 = vpack.c.b16 %v620, %v616
        %v713 = vpack.c.b16 %v621, %v617
        %v714 = vpack.c.b16 %v626, %v622
        %v715 = vpack.c.b16 %v627, %v623
        %v716 = vpack.c.b16 %v628, %v624
        %v717 = vpack.c.b16 %v629, %v625
        %v718 = vpack.c.b16 %v634, %v630
        %v719 = vpack.c.b16 %v635, %v631
        %v720 = vpack.c.b16 %v636, %v632
        %v721 = vpack.c.b16 %v637, %v633
        %v722 = vpack.c.b16 %v642, %v638
        %v723 = vpack.c.b16 %v643, %v639
        %v724 = vpack.c.b16 %v644, %v640
        %v725 = vpack.c.b16 %v645, %v641
        %v726 = vpack.c.b16 %v650, %v646
        %v727 = vpack.c.b16 %v651, %v647
        %v728 = vpack.c.b16 %v652, %v648
        %v729 = vpack.c.b16 %v653, %v649
        %v730 = vpack.c.b16 %v658, %v654
        %v731 = vpack.c.b16 %v659, %v655
        %v732 = vpack.c.b16 %v660, %v656
        %v733 = vpack.c.b16 %v661, %v657
        %v734 = vpack.c.b16 %v666, %v662
        %v735 = vpack.c.b16 %v667, %v663
        %v736 = vpack.c.b16 %v668, %v664
        %v737 = vpack.c.b16 %v669, %v665
        %v738 = vpack.c.b16 %v674, %v670
        %v739 = vpack.c.b16 %v675, %v671
        %v740 = vpack.c.b16 %v676, %v672
        %v741 = vpack.c.b16 %v677, %v673
        %806 = vmatprep.subr.bf16.mxu0 %v707
        %807 = vmatpush1.bf16.msra.mxu0 %v706
        %808 = vmatprep.subr.bf16.mxu0 %v703
        %809 = vmatpush1.bf16.msra.mxu0 %v702
        %810 = vmatprep.subr.bf16.mxu0 %v699
        %811 = vmatpush1.bf16.msra.mxu0 %v698
        %812 = vmatprep.subr.bf16.mxu0 %v695
        %813 = vmatpush1.bf16.msra.mxu0 %v694
        %814 = vmatprep.subr.bf16.mxu0 %v691
        %815 = vmatpush1.bf16.msra.mxu0 %v690
        %816 = vmatprep.subr.bf16.mxu0 %v687
        %817 = vmatpush1.bf16.msra.mxu0 %v686
        %818 = vmatprep.subr.bf16.mxu0 %v683
        %819 = vmatpush1.bf16.msra.mxu0 %v682
        %820 = vmatprep.subr.bf16.mxu0 %v679
        %821 = vmatpush1.bf16.msra.mxu0 %v678
        %822 = vmatprep.subr.bf16.mxu0 %v739
        %823 = vmatpush2.bf16.msra.mxu0 %v738
        %824 = vmatprep.subr.bf16.mxu0 %v735
        %825 = vmatpush2.bf16.msra.mxu0 %v734
        %826 = vmatprep.subr.bf16.mxu0 %v731
        %827 = vmatpush2.bf16.msra.mxu0 %v730
        %828 = vmatprep.subr.bf16.mxu0 %v727
        %829 = vmatpush2.bf16.msra.mxu0 %v726
        %830 = vmatprep.subr.bf16.mxu0 %v723
        %831 = vmatpush2.bf16.msra.mxu0 %v722
        %832 = vmatprep.subr.bf16.mxu0 %v719
        %833 = vmatpush2.bf16.msra.mxu0 %v718
        %834 = vmatprep.subr.bf16.mxu0 %v715
        %835 = vmatpush2.bf16.msra.mxu0 %v714
        %836 = vmatprep.subr.bf16.mxu0 %v711
        %837 = vmatpush2.bf16.msra.mxu0 %v710
        %838 = vmatprep.mubr.bf16.mxu0 %v455
        %839 = vmatmul.mubr.bf16.gmra.mxu0 %v454
        %v840 = vpop.f32.mrf.mxu0
        %v841 = vadd.f32 0.0, %v840
        %v842 = vpop.f32.mrf.mxu0
        %v843 = vadd.f32 0.0, %v842
        %v844 = vpop.f32.mrf.mxu0
        %v845 = vadd.f32 0.0, %v844
        %v846 = vpop.f32.mrf.mxu0
        %v847 = vadd.f32 0.0, %v846
        %848 = vmatprep.mubr.bf16.mxu0 %v457
        %849 = vmatmul.mubr.bf16.gmra.mxu0 %v456
        %v850 = vpop.f32.mrf.mxu0
        %v851 = vadd.f32 0.0, %v850
        %v852 = vpop.f32.mrf.mxu0
        %v853 = vadd.f32 0.0, %v852
        %v854 = vpop.f32.mrf.mxu0
        %v855 = vadd.f32 0.0, %v854
        %v856 = vpop.f32.mrf.mxu0
        %v857 = vadd.f32 0.0, %v856
        %858 = vmatprep.mubr.bf16.mxu0 %v459
        %859 = vmatmul.mubr.bf16.gmra.mxu0 %v458
        %v860 = vpop.f32.mrf.mxu0
        %v861 = vadd.f32 0.0, %v860
        %v862 = vpop.f32.mrf.mxu0
        %v863 = vadd.f32 0.0, %v862
        %v864 = vpop.f32.mrf.mxu0
        %v865 = vadd.f32 0.0, %v864
        %v866 = vpop.f32.mrf.mxu0
        %v867 = vadd.f32 0.0, %v866
        %868 = vmatprep.mubr.bf16.mxu0 %v461
        %869 = vmatmul.mubr.bf16.gmra.mxu0 %v460
        %v870 = vpop.f32.mrf.mxu0
        %v871 = vadd.f32 0.0, %v870
        %v872 = vpop.f32.mrf.mxu0
        %v873 = vadd.f32 0.0, %v872
        %v874 = vpop.f32.mrf.mxu0
        %v875 = vadd.f32 0.0, %v874
        %v876 = vpop.f32.mrf.mxu0
        %v877 = vadd.f32 0.0, %v876
        %878 = vmatprep.mubr.bf16.mxu0 %v463
        %879 = vmatmul.mubr.bf16.gmra.mxu0 %v462
        %v880 = vpop.f32.mrf.mxu0
        %v881 = vadd.f32 0.0, %v880
        %v882 = vpop.f32.mrf.mxu0
        %v883 = vadd.f32 0.0, %v882
        %v884 = vpop.f32.mrf.mxu0
        %v885 = vadd.f32 0.0, %v884
        %v886 = vpop.f32.mrf.mxu0
        %v887 = vadd.f32 0.0, %v886
        %888 = vmatprep.mubr.bf16.mxu0 %v465
        %889 = vmatmul.mubr.bf16.gmra.mxu0 %v464
        %v890 = vpop.f32.mrf.mxu0
        %v891 = vadd.f32 0.0, %v890
        %v892 = vpop.f32.mrf.mxu0
        %v893 = vadd.f32 0.0, %v892
        %v894 = vpop.f32.mrf.mxu0
        %v895 = vadd.f32 0.0, %v894
        %v896 = vpop.f32.mrf.mxu0
        %v897 = vadd.f32 0.0, %v896
        %898 = vmatprep.mubr.bf16.mxu0 %v467
        %899 = vmatmul.mubr.bf16.gmra.mxu0 %v466
        %v900 = vpop.f32.mrf.mxu0
        %v901 = vadd.f32 0.0, %v900
        %v902 = vpop.f32.mrf.mxu0
        %v903 = vadd.f32 0.0, %v902
        %v904 = vpop.f32.mrf.mxu0
        %v905 = vadd.f32 0.0, %v904
        %v906 = vpop.f32.mrf.mxu0
        %v907 = vadd.f32 0.0, %v906
        %908 = vmatprep.mubr.bf16.mxu0 %v469
        %909 = vmatmul.mubr.bf16.gmra.mxu0 %v468
        %v910 = vpop.f32.mrf.mxu0
        %v911 = vadd.f32 0.0, %v910
        %v912 = vpop.f32.mrf.mxu0
        %v913 = vadd.f32 0.0, %v912
        %v914 = vpop.f32.mrf.mxu0
        %v915 = vadd.f32 0.0, %v914
        %v916 = vpop.f32.mrf.mxu0
        %v917 = vadd.f32 0.0, %v916
        %918 = vdwg.mxu0
        %919 = vmatprep.subr.bf16.mxu0 %v709
        %920 = vmatpush1.bf16.msra.mxu0 %v708
        %921 = vmatprep.subr.bf16.mxu0 %v705
        %922 = vmatpush1.bf16.msra.mxu0 %v704
        %923 = vmatprep.subr.bf16.mxu0 %v701
        %924 = vmatpush1.bf16.msra.mxu0 %v700
        %925 = vmatprep.subr.bf16.mxu0 %v697
        %926 = vmatpush1.bf16.msra.mxu0 %v696
        %927 = vmatprep.subr.bf16.mxu0 %v693
        %928 = vmatpush1.bf16.msra.mxu0 %v692
        %929 = vmatprep.subr.bf16.mxu0 %v689
        %930 = vmatpush1.bf16.msra.mxu0 %v688
        %931 = vmatprep.subr.bf16.mxu0 %v685
        %932 = vmatpush1.bf16.msra.mxu0 %v684
        %933 = vmatprep.subr.bf16.mxu0 %v681
        %934 = vmatpush1.bf16.msra.mxu0 %v680
        %935 = vmatprep.subr.bf16.mxu0 %v741
        %936 = vmatpush2.bf16.msra.mxu0 %v740
        %937 = vmatprep.subr.bf16.mxu0 %v737
        %938 = vmatpush2.bf16.msra.mxu0 %v736
        %939 = vmatprep.subr.bf16.mxu0 %v733
        %940 = vmatpush2.bf16.msra.mxu0 %v732
        %941 = vmatprep.subr.bf16.mxu0 %v729
        %942 = vmatpush2.bf16.msra.mxu0 %v728
        %943 = vmatprep.subr.bf16.mxu0 %v725
        %944 = vmatpush2.bf16.msra.mxu0 %v724
        %945 = vmatprep.subr.bf16.mxu0 %v721
        %946 = vmatpush2.bf16.msra.mxu0 %v720
        %947 = vmatprep.subr.bf16.mxu0 %v717
        %948 = vmatpush2.bf16.msra.mxu0 %v716
        %949 = vmatprep.subr.bf16.mxu0 %v713
        %950 = vmatpush2.bf16.msra.mxu0 %v712
        %951 = vmatprep.mubr.bf16.mxu0 %v455
        %952 = vmatmul.mubr.bf16.gmra.mxu0 %v454
        %v953 = vpop.f32.mrf.mxu0
        %v954 = vadd.f32 0.0, %v953
        %v955 = vpop.f32.mrf.mxu0
        %v956 = vadd.f32 0.0, %v955
        %v957 = vpop.f32.mrf.mxu0
        %v958 = vadd.f32 0.0, %v957
        %v959 = vpop.f32.mrf.mxu0
        %v960 = vadd.f32 0.0, %v959
        %961 = vmatprep.mubr.bf16.mxu0 %v457
        %962 = vmatmul.mubr.bf16.gmra.mxu0 %v456
        %v963 = vpop.f32.mrf.mxu0
        %v964 = vadd.f32 0.0, %v963
        %v965 = vpop.f32.mrf.mxu0
        %v966 = vadd.f32 0.0, %v965
        %v967 = vpop.f32.mrf.mxu0
        %v968 = vadd.f32 0.0, %v967
        %v969 = vpop.f32.mrf.mxu0
        %v970 = vadd.f32 0.0, %v969
        %971 = vmatprep.mubr.bf16.mxu0 %v459
        %972 = vmatmul.mubr.bf16.gmra.mxu0 %v458
        %v973 = vpop.f32.mrf.mxu0
        %v974 = vadd.f32 0.0, %v973
        %v975 = vpop.f32.mrf.mxu0
        %v976 = vadd.f32 0.0, %v975
        %v977 = vpop.f32.mrf.mxu0
        %v978 = vadd.f32 0.0, %v977
        %v979 = vpop.f32.mrf.mxu0
        %v980 = vadd.f32 0.0, %v979
        %981 = vmatprep.mubr.bf16.mxu0 %v461
        %982 = vmatmul.mubr.bf16.gmra.mxu0 %v460
        %v983 = vpop.f32.mrf.mxu0
        %v984 = vadd.f32 0.0, %v983
        %v985 = vpop.f32.mrf.mxu0
        %v986 = vadd.f32 0.0, %v985
        %v987 = vpop.f32.mrf.mxu0
        %v988 = vadd.f32 0.0, %v987
        %v989 = vpop.f32.mrf.mxu0
        %v990 = vadd.f32 0.0, %v989
        %991 = vmatprep.mubr.bf16.mxu0 %v463
        %992 = vmatmul.mubr.bf16.gmra.mxu0 %v462
        %v993 = vpop.f32.mrf.mxu0
        %v994 = vadd.f32 0.0, %v993
        %v995 = vpop.f32.mrf.mxu0
        %v996 = vadd.f32 0.0, %v995
        %v997 = vpop.f32.mrf.mxu0
        %v998 = vadd.f32 0.0, %v997
        %v999 = vpop.f32.mrf.mxu0
        %v1000 = vadd.f32 0.0, %v999
        %1001 = vmatprep.mubr.bf16.mxu0 %v465
        %1002 = vmatmul.mubr.bf16.gmra.mxu0 %v464
        %v1003 = vpop.f32.mrf.mxu0
        %v1004 = vadd.f32 0.0, %v1003
        %v1005 = vpop.f32.mrf.mxu0
        %v1006 = vadd.f32 0.0, %v1005
        %v1007 = vpop.f32.mrf.mxu0
        %v1008 = vadd.f32 0.0, %v1007
        %v1009 = vpop.f32.mrf.mxu0
        %v1010 = vadd.f32 0.0, %v1009
        %1011 = vmatprep.mubr.bf16.mxu0 %v467
        %1012 = vmatmul.mubr.bf16.gmra.mxu0 %v466
        %v1013 = vpop.f32.mrf.mxu0
        %v1014 = vadd.f32 0.0, %v1013
        %v1015 = vpop.f32.mrf.mxu0
        %v1016 = vadd.f32 0.0, %v1015
        %v1017 = vpop.f32.mrf.mxu0
        %v1018 = vadd.f32 0.0, %v1017
        %v1019 = vpop.f32.mrf.mxu0
        %v1020 = vadd.f32 0.0, %v1019
        %1021 = vmatprep.mubr.bf16.mxu0 %v469
        %1022 = vmatmul.mubr.bf16.gmra.mxu0 %v468
        %v1023 = vpop.f32.mrf.mxu0
        %v1024 = vadd.f32 0.0, %v1023
        %v1025 = vpop.f32.mrf.mxu0
        %v1026 = vadd.f32 0.0, %v1025
        %v1027 = vpop.f32.mrf.mxu0
        %v1028 = vadd.f32 0.0, %v1027
        %v1029 = vpop.f32.mrf.mxu0
        %v1030 = vadd.f32 0.0, %v1029
        %1031 = vdwg.mxu0
        %1032 = vst [vmem:[%s315] sm:$0xff] %v841
        %1033 = vst [vmem:[%s315 + $0x8] sm:$0xff] %v843
        %1034 = vst [vmem:[%s315 + $0x10] sm:$0xff] %v954
        %1035 = vst [vmem:[%s315 + $0x18] sm:$0xff] %v956
        %1036 = vst [vmem:[%s315 + $0x20] sm:$0xff] %v845
        %1037 = vst [vmem:[%s315 + $0x28] sm:$0xff] %v847
        %1038 = vst [vmem:[%s315 + $0x30] sm:$0xff] %v958
        %1039 = vst [vmem:[%s315 + $0x38] sm:$0xff] %v960
        %1040 = vst [vmem:[%s315 + $0x40] sm:$0xff] %v851
        %1041 = vst [vmem:[%s315 + $0x48] sm:$0xff] %v853
        %1042 = vst [vmem:[%s315 + $0x50] sm:$0xff] %v964
        %1043 = vst [vmem:[%s315 + $0x58] sm:$0xff] %v966
        %1044 = vst [vmem:[%s315 + $0x60] sm:$0xff] %v855
        %1045 = vst [vmem:[%s315 + $0x68] sm:$0xff] %v857
        %1046 = vst [vmem:[%s315 + $0x70] sm:$0xff] %v968
        %1047 = vst [vmem:[%s315 + $0x78] sm:$0xff] %v970
        %1048 = vst [vmem:[%s315 + $0x80] sm:$0xff] %v861
        %1049 = vst [vmem:[%s315 + $0x88] sm:$0xff] %v863
        %1050 = vst [vmem:[%s315 + $0x90] sm:$0xff] %v974
        %1051 = vst [vmem:[%s315 + $0x98] sm:$0xff] %v976
        %1052 = vst [vmem:[%s315 + $0xa0] sm:$0xff] %v865
        %1053 = vst [vmem:[%s315 + $0xa8] sm:$0xff] %v867
        %1054 = vst [vmem:[%s315 + $0xb0] sm:$0xff] %v978
        %1055 = vst [vmem:[%s315 + $0xb8] sm:$0xff] %v980
        %1056 = vst [vmem:[%s315 + $0xc0] sm:$0xff] %v871
        %1057 = vst [vmem:[%s315 + $0xc8] sm:$0xff] %v873
        %1058 = vst [vmem:[%s315 + $0xd0] sm:$0xff] %v984
        %1059 = vst [vmem:[%s315 + $0xd8] sm:$0xff] %v986
        %1060 = vst [vmem:[%s315 + $0xe0] sm:$0xff] %v875
        %1061 = vst [vmem:[%s315 + $0xe8] sm:$0xff] %v877
        %1062 = vst [vmem:[%s315 + $0xf0] sm:$0xff] %v988
        %1063 = vst [vmem:[%s315 + $0xf8] sm:$0xff] %v990
        %1064 = vst [vmem:[%s315 + $0x100] sm:$0xff] %v881
        %1065 = vst [vmem:[%s315 + $0x108] sm:$0xff] %v883
        %1066 = vst [vmem:[%s315 + $0x110] sm:$0xff] %v994
        %1067 = vst [vmem:[%s315 + $0x118] sm:$0xff] %v996
        %1068 = vst [vmem:[%s315 + $0x120] sm:$0xff] %v885
        %1069 = vst [vmem:[%s315 + $0x128] sm:$0xff] %v887
        %1070 = vst [vmem:[%s315 + $0x130] sm:$0xff] %v998
        %1071 = vst [vmem:[%s315 + $0x138] sm:$0xff] %v1000
        %1072 = vst [vmem:[%s315 + $0x140] sm:$0xff] %v891
        %1073 = vst [vmem:[%s315 + $0x148] sm:$0xff] %v893
        %1074 = vst [vmem:[%s315 + $0x150] sm:$0xff] %v1004
        %1075 = vst [vmem:[%s315 + $0x158] sm:$0xff] %v1006
        %1076 = vst [vmem:[%s315 + $0x160] sm:$0xff] %v895
        %1077 = vst [vmem:[%s315 + $0x168] sm:$0xff] %v897
        %1078 = vst [vmem:[%s315 + $0x170] sm:$0xff] %v1008
        %1079 = vst [vmem:[%s315 + $0x178] sm:$0xff] %v1010
        %1080 = vst [vmem:[%s315 + $0x180] sm:$0xff] %v901
        %1081 = vst [vmem:[%s315 + $0x188] sm:$0xff] %v903
        %1082 = vst [vmem:[%s315 + $0x190] sm:$0xff] %v1014
        %1083 = vst [vmem:[%s315 + $0x198] sm:$0xff] %v1016
        %1084 = vst [vmem:[%s315 + $0x1a0] sm:$0xff] %v905
        %1085 = vst [vmem:[%s315 + $0x1a8] sm:$0xff] %v907
        %1086 = vst [vmem:[%s315 + $0x1b0] sm:$0xff] %v1018
        %1087 = vst [vmem:[%s315 + $0x1b8] sm:$0xff] %v1020
        %1088 = vst [vmem:[%s315 + $0x1c0] sm:$0xff] %v911
        %1089 = vst [vmem:[%s315 + $0x1c8] sm:$0xff] %v913
        %1090 = vst [vmem:[%s315 + $0x1d0] sm:$0xff] %v1024
        %1091 = vst [vmem:[%s315 + $0x1d8] sm:$0xff] %v1026
        %1092 = vst [vmem:[%s315 + $0x1e0] sm:$0xff] %v915
        %1093 = vst [vmem:[%s315 + $0x1e8] sm:$0xff] %v917
        %1094 = vst [vmem:[%s315 + $0x1f0] sm:$0xff] %v1028
        %1095 = vst [vmem:[%s315 + $0x1f8] sm:$0xff] %v1030
        %s1096 = sand.u32 %s87, 1
        %s1097 = sand.u32 %s87, 1
        %s1098 = smul.addr %s1097, 512
        %s1099 = scalar_lea.vmem [#allocation3], %s1098
        // Predicated region
        $region52: #{generator_forward.20} parent=46 // pred_check
          %p1100 = pneg %p97
        $region53: #{generator_forward.20} parent=46 // pred_check_branch
          %1102 = sbr.rel (%p1100) target = $region55
        $region54: #{generator_forward.20} parent=46 // pred_region
          %s1103 = smul.u32 16, %s17
          %s1104 = smul.u32 4, %s18
          %s1105 = smul.addr %s1103, 16
          %s1106 = sadd.s32 %s1104, %s1105
          %s1107 = smul.addr %s1106, 8
          %s1108 = scalar_lea.vmem %s2, %s1107
          // Predicated region
          $region56: #{generator_forward.20} parent=54 // pred_check
            _
          $region57: #{generator_forward.20} parent=54 // pred_check_branch
            %1110 = sbr.rel (0) target = $region59
          $region58: #{generator_forward.20} parent=54 // pred_region
            // Predicated region
            $region60: #{generator_forward.20} parent=58 // pred_check
              _
            $region61: #{generator_forward.20} parent=58 // pred_check_branch
              %1112 = sbr.rel (0) target = $region63
            $region62: #{generator_forward.20} parent=58 // pred_region
              loop: start=0, step=1, limit=1
              $region64: #{generator_forward.20} parent=62 // loop_pre_header
                _
              $region65: #{generator_forward.20} parent=62 // loop_header
                %s1114 = sphi 0, %s1118
                %p1115 = scmp.ge.s32.totalorder %s1114, 1
                %s1119 = sphi %s1099, %s1099
                %s1120 = sphi %s1108, %s1108
              $region66: #{generator_forward.20} parent=62 // loop_header_branch
                %1117 = sbr.rel (%p1115) target = $region70
              $region67: #{generator_forward.20} parent=62 // loop_body
                %v1121 = vld [vmem:[%s1119] sm:$0xff]
                %1122 = vst [vmem:[%s1120] sm:$0xff] %v1121
                %v1123 = vld [vmem:[%s1119 + $0x8] sm:$0xff]
                %1124 = vst [vmem:[%s1120 + $0x8] sm:$0xff] %v1123
                %v1125 = vld [vmem:[%s1119 + $0x10] sm:$0xff]
                %1126 = vst [vmem:[%s1120 + $0x10] sm:$0xff] %v1125
                %v1127 = vld [vmem:[%s1119 + $0x18] sm:$0xff]
                %1128 = vst [vmem:[%s1120 + $0x18] sm:$0xff] %v1127
                %v1129 = vld [vmem:[%s1119 + $0x20] sm:$0xff]
                %1130 = vst [vmem:[%s1120 + $0x80] sm:$0xff] %v1129
                %v1131 = vld [vmem:[%s1119 + $0x28] sm:$0xff]
                %1132 = vst [vmem:[%s1120 + $0x88] sm:$0xff] %v1131
                %v1133 = vld [vmem:[%s1119 + $0x30] sm:$0xff]
                %1134 = vst [vmem:[%s1120 + $0x90] sm:$0xff] %v1133
                %v1135 = vld [vmem:[%s1119 + $0x38] sm:$0xff]
                %1136 = vst [vmem:[%s1120 + $0x98] sm:$0xff] %v1135
                %v1137 = vld [vmem:[%s1119 + $0x40] sm:$0xff]
                %1138 = vst [vmem:[%s1120 + $0x100] sm:$0xff] %v1137
                %v1139 = vld [vmem:[%s1119 + $0x48] sm:$0xff]
                %1140 = vst [vmem:[%s1120 + $0x108] sm:$0xff] %v1139
                %v1141 = vld [vmem:[%s1119 + $0x50] sm:$0xff]
                %1142 = vst [vmem:[%s1120 + $0x110] sm:$0xff] %v1141
                %v1143 = vld [vmem:[%s1119 + $0x58] sm:$0xff]
                %1144 = vst [vmem:[%s1120 + $0x118] sm:$0xff] %v1143
                %v1145 = vld [vmem:[%s1119 + $0x60] sm:$0xff]
                %1146 = vst [vmem:[%s1120 + $0x180] sm:$0xff] %v1145
                %v1147 = vld [vmem:[%s1119 + $0x68] sm:$0xff]
                %1148 = vst [vmem:[%s1120 + $0x188] sm:$0xff] %v1147
                %v1149 = vld [vmem:[%s1119 + $0x70] sm:$0xff]
                %1150 = vst [vmem:[%s1120 + $0x190] sm:$0xff] %v1149
                %v1151 = vld [vmem:[%s1119 + $0x78] sm:$0xff]
                %1152 = vst [vmem:[%s1120 + $0x198] sm:$0xff] %v1151
                %v1153 = vld [vmem:[%s1119 + $0x80] sm:$0xff]
                %1154 = vst [vmem:[%s1120 + $0x200] sm:$0xff] %v1153
                %v1155 = vld [vmem:[%s1119 + $0x88] sm:$0xff]
                %1156 = vst [vmem:[%s1120 + $0x208] sm:$0xff] %v1155
                %v1157 = vld [vmem:[%s1119 + $0x90] sm:$0xff]
                %1158 = vst [vmem:[%s1120 + $0x210] sm:$0xff] %v1157
                %v1159 = vld [vmem:[%s1119 + $0x98] sm:$0xff]
                %1160 = vst [vmem:[%s1120 + $0x218] sm:$0xff] %v1159
                %v1161 = vld [vmem:[%s1119 + $0xa0] sm:$0xff]
                %1162 = vst [vmem:[%s1120 + $0x280] sm:$0xff] %v1161
                %v1163 = vld [vmem:[%s1119 + $0xa8] sm:$0xff]
                %1164 = vst [vmem:[%s1120 + $0x288] sm:$0xff] %v1163
                %v1165 = vld [vmem:[%s1119 + $0xb0] sm:$0xff]
                %1166 = vst [vmem:[%s1120 + $0x290] sm:$0xff] %v1165
                %v1167 = vld [vmem:[%s1119 + $0xb8] sm:$0xff]
                %1168 = vst [vmem:[%s1120 + $0x298] sm:$0xff] %v1167
                %v1169 = vld [vmem:[%s1119 + $0xc0] sm:$0xff]
                %1170 = vst [vmem:[%s1120 + $0x300] sm:$0xff] %v1169
                %v1171 = vld [vmem:[%s1119 + $0xc8] sm:$0xff]
                %1172 = vst [vmem:[%s1120 + $0x308] sm:$0xff] %v1171
                %v1173 = vld [vmem:[%s1119 + $0xd0] sm:$0xff]
                %1174 = vst [vmem:[%s1120 + $0x310] sm:$0xff] %v1173
                %v1175 = vld [vmem:[%s1119 + $0xd8] sm:$0xff]
                %1176 = vst [vmem:[%s1120 + $0x318] sm:$0xff] %v1175
                %v1177 = vld [vmem:[%s1119 + $0xe0] sm:$0xff]
                %1178 = vst [vmem:[%s1120 + $0x380] sm:$0xff] %v1177
                %v1179 = vld [vmem:[%s1119 + $0xe8] sm:$0xff]
                %1180 = vst [vmem:[%s1120 + $0x388] sm:$0xff] %v1179
                %v1181 = vld [vmem:[%s1119 + $0xf0] sm:$0xff]
                %1182 = vst [vmem:[%s1120 + $0x390] sm:$0xff] %v1181
                %v1183 = vld [vmem:[%s1119 + $0xf8] sm:$0xff]
                %1184 = vst [vmem:[%s1120 + $0x398] sm:$0xff] %v1183
                %v1185 = vld [vmem:[%s1119 + $0x100] sm:$0xff]
                %1186 = vst [vmem:[%s1120 + $0x400] sm:$0xff] %v1185
                %v1187 = vld [vmem:[%s1119 + $0x108] sm:$0xff]
                %1188 = vst [vmem:[%s1120 + $0x408] sm:$0xff] %v1187
                %v1189 = vld [vmem:[%s1119 + $0x110] sm:$0xff]
                %1190 = vst [vmem:[%s1120 + $0x410] sm:$0xff] %v1189
                %v1191 = vld [vmem:[%s1119 + $0x118] sm:$0xff]
                %1192 = vst [vmem:[%s1120 + $0x418] sm:$0xff] %v1191
                %v1193 = vld [vmem:[%s1119 + $0x120] sm:$0xff]
                %1194 = vst [vmem:[%s1120 + $0x480] sm:$0xff] %v1193
                %v1195 = vld [vmem:[%s1119 + $0x128] sm:$0xff]
                %1196 = vst [vmem:[%s1120 + $0x488] sm:$0xff] %v1195
                %v1197 = vld [vmem:[%s1119 + $0x130] sm:$0xff]
                %1198 = vst [vmem:[%s1120 + $0x490] sm:$0xff] %v1197
                %v1199 = vld [vmem:[%s1119 + $0x138] sm:$0xff]
                %1200 = vst [vmem:[%s1120 + $0x498] sm:$0xff] %v1199
                %v1201 = vld [vmem:[%s1119 + $0x140] sm:$0xff]
                %1202 = vst [vmem:[%s1120 + $0x500] sm:$0xff] %v1201
                %v1203 = vld [vmem:[%s1119 + $0x148] sm:$0xff]
                %1204 = vst [vmem:[%s1120 + $0x508] sm:$0xff] %v1203
                %v1205 = vld [vmem:[%s1119 + $0x150] sm:$0xff]
                %1206 = vst [vmem:[%s1120 + $0x510] sm:$0xff] %v1205
                %v1207 = vld [vmem:[%s1119 + $0x158] sm:$0xff]
                %1208 = vst [vmem:[%s1120 + $0x518] sm:$0xff] %v1207
                %v1209 = vld [vmem:[%s1119 + $0x160] sm:$0xff]
                %1210 = vst [vmem:[%s1120 + $0x580] sm:$0xff] %v1209
                %v1211 = vld [vmem:[%s1119 + $0x168] sm:$0xff]
                %1212 = vst [vmem:[%s1120 + $0x588] sm:$0xff] %v1211
                %v1213 = vld [vmem:[%s1119 + $0x170] sm:$0xff]
                %1214 = vst [vmem:[%s1120 + $0x590] sm:$0xff] %v1213
                %v1215 = vld [vmem:[%s1119 + $0x178] sm:$0xff]
                %1216 = vst [vmem:[%s1120 + $0x598] sm:$0xff] %v1215
                %v1217 = vld [vmem:[%s1119 + $0x180] sm:$0xff]
                %1218 = vst [vmem:[%s1120 + $0x600] sm:$0xff] %v1217
                %v1219 = vld [vmem:[%s1119 + $0x188] sm:$0xff]
                %1220 = vst [vmem:[%s1120 + $0x608] sm:$0xff] %v1219
                %v1221 = vld [vmem:[%s1119 + $0x190] sm:$0xff]
                %1222 = vst [vmem:[%s1120 + $0x610] sm:$0xff] %v1221
                %v1223 = vld [vmem:[%s1119 + $0x198] sm:$0xff]
                %1224 = vst [vmem:[%s1120 + $0x618] sm:$0xff] %v1223
                %v1225 = vld [vmem:[%s1119 + $0x1a0] sm:$0xff]
                %1226 = vst [vmem:[%s1120 + $0x680] sm:$0xff] %v1225
                %v1227 = vld [vmem:[%s1119 + $0x1a8] sm:$0xff]
                %1228 = vst [vmem:[%s1120 + $0x688] sm:$0xff] %v1227
                %v1229 = vld [vmem:[%s1119 + $0x1b0] sm:$0xff]
                %1230 = vst [vmem:[%s1120 + $0x690] sm:$0xff] %v1229
                %v1231 = vld [vmem:[%s1119 + $0x1b8] sm:$0xff]
                %1232 = vst [vmem:[%s1120 + $0x698] sm:$0xff] %v1231
                %v1233 = vld [vmem:[%s1119 + $0x1c0] sm:$0xff]
                %1234 = vst [vmem:[%s1120 + $0x700] sm:$0xff] %v1233
                %v1235 = vld [vmem:[%s1119 + $0x1c8] sm:$0xff]
                %1236 = vst [vmem:[%s1120 + $0x708] sm:$0xff] %v1235
                %v1237 = vld [vmem:[%s1119 + $0x1d0] sm:$0xff]
                %1238 = vst [vmem:[%s1120 + $0x710] sm:$0xff] %v1237
                %v1239 = vld [vmem:[%s1119 + $0x1d8] sm:$0xff]
                %1240 = vst [vmem:[%s1120 + $0x718] sm:$0xff] %v1239
                %v1241 = vld [vmem:[%s1119 + $0x1e0] sm:$0xff]
                %1242 = vst [vmem:[%s1120 + $0x780] sm:$0xff] %v1241
                %v1243 = vld [vmem:[%s1119 + $0x1e8] sm:$0xff]
                %1244 = vst [vmem:[%s1120 + $0x788] sm:$0xff] %v1243
                %v1245 = vld [vmem:[%s1119 + $0x1f0] sm:$0xff]
                %1246 = vst [vmem:[%s1120 + $0x790] sm:$0xff] %v1245
                %v1247 = vld [vmem:[%s1119 + $0x1f8] sm:$0xff]
                %1248 = vst [vmem:[%s1120 + $0x798] sm:$0xff] %v1247
              $region68: #{generator_forward.20} parent=62 // loop_footer
                %s1118 = sadd.s32 1, %s1114
              $region69: #{generator_forward.20} parent=62 // loop_footer_branch
                %1113 = sbr.rel target = $region65
              $region70: #{generator_forward.20} parent=62 // loop_exit
                _
            $region63: #{generator_forward.20} parent=58 // pred_fallthru
              _
            // Predicated region
            $region71: #{generator_forward.20} parent=58 // pred_check
              _
            $region72: #{generator_forward.20} parent=58 // pred_check_branch
              %1250 = sbr.rel target = $region74
            $region73: #{generator_forward.20} parent=58 // pred_region
              _
            $region74: #{generator_forward.20} parent=58 // pred_fallthru
              _
          $region59: #{generator_forward.20} parent=54 // pred_fallthru
            _
          %1251 = vnop
        $region55: #{generator_forward.20} parent=46 // pred_fallthru
          _
      $region47: #{generator_forward.20} parent=5 // pred_fallthru
        _
      %p1252 = scmp.le.s32.totalorder 2, %s8
      // Predicated region
      $region75: #{generator_forward.20} parent=5 // pred_check
        %p1253 = pneg %p1252
      $region76: #{generator_forward.20} parent=5 // pred_check_branch
        %1255 = sbr.rel (%p1253) target = $region78
      $region77: #{generator_forward.20} parent=5 // pred_region
        %s1256 = ssub.s32 %s8, 2
        // Predicated region
        $region79: #{generator_forward.20} parent=77 // pred_check
          %p1257 = pneg %p103
        $region80: #{generator_forward.20} parent=77 // pred_check_branch
          %1259 = sbr.rel (%p1257) target = $region82
        $region81: #{generator_forward.20} parent=77 // pred_region
          %s1260 = sand.u32 %s88, 1
          %s1261 = sand.u32 %s88, 1
          %s1262 = smul.addr %s1261, 512
          %s1263 = scalar_lea.vmem [#allocation3], %s1262
        $region82: #{generator_forward.20} parent=77 // pred_fallthru
          _
      $region78: #{generator_forward.20} parent=5 // pred_fallthru
        _
    $region6: #{generator_forward.20} parent=1 // loop_footer
      %s12 = sadd.s32 1, %s8
    $region7: #{generator_forward.20} parent=1 // loop_footer_branch
      %7 = sbr.rel target = $region3
    $region8: #{generator_forward.20} parent=1 // loop_exit
      _

// kernel: generator_forward.22
$region0: #{generator_forward.22}
  #allocation0 [shape = 'u32[]', space=smem, size = 0x4, offset = 0x4, fixed_abs, tag = 'smem constant byte address 0x4 - core index']
  #allocation1 [shape = 'u32[144,128]{1,0:T(1,128)}', space=vmem, size = 0x12000, scoped, tag = 'internal scratch']
  %s0 = inlined_call_operand.vmem [shape: f32[512,128], index: 0, kind: input, shape index: {}]
  %s1 = inlined_call_operand.vmem [shape: f32[1,128], index: 1, kind: input, shape index: {}]
  %s2 = inlined_call_operand.vmem [shape: f32[1,128], index: 2, kind: input, shape index: {}]
  %s3 = inlined_call_operand.vmem [shape: f32[1,128], index: 3, kind: input, shape index: {}]
  %s4 = inlined_call_operand.vmem [shape: f32[8,128], index: 4, kind: input, shape index: {}]
  %s5 = inlined_call_operand.vmem [shape: f32[8,128], index: 5, kind: input, shape index: {}]
  %s6 = inlined_call_operand.vmem [shape: f32[512,128], index: 6, kind: output, shape index: {}]
  %s7 = sld [smem:[#allocation0]]
  $region34: #{generator_forward.22} parent=0
    _
  %s9 = ssub.s32 1, %s7
  %s10 = scalar_select 0, %s9, %s7
  // Predicated region
  $region2: #{generator_forward.22} parent=0 // pred_check
    _
  $region3: #{generator_forward.22} parent=0 // pred_check_branch
    %12 = sbr.rel (0) target = $region5
  $region4: #{generator_forward.22} parent=0 // pred_region
    _
  $region5: #{generator_forward.22} parent=0 // pred_fallthru
    _
  // Predicated region
  $region6: #{generator_forward.22} parent=0 // pred_check
    _
  $region7: #{generator_forward.22} parent=0 // pred_check_branch
    %14 = sbr.rel (0) target = $region9
  $region8: #{generator_forward.22} parent=0 // pred_region
    _
  $region9: #{generator_forward.22} parent=0 // pred_fallthru
    _
  // Predicated region
  $region10: #{generator_forward.22} parent=0 // pred_check
    _
  $region11: #{generator_forward.22} parent=0 // pred_check_branch
    %16 = sbr.rel (0) target = $region13
  $region12: #{generator_forward.22} parent=0 // pred_region
    _
  $region13: #{generator_forward.22} parent=0 // pred_fallthru
    _
  // Predicated region
  $region14: #{generator_forward.22} parent=0 // pred_check
    _
  $region15: #{generator_forward.22} parent=0 // pred_check_branch
    %18 = sbr.rel (0) target = $region17
  $region16: #{generator_forward.22} parent=0 // pred_region
    _
  $region17: #{generator_forward.22} parent=0 // pred_fallthru
    _
  // Predicated region
  $region18: #{generator_forward.22} parent=0 // pred_check
    _
  $region19: #{generator_forward.22} parent=0 // pred_check_branch
    %20 = sbr.rel (0) target = $region21
  $region20: #{generator_forward.22} parent=0 // pred_region
    _
  $region21: #{generator_forward.22} parent=0 // pred_fallthru
    _
  // Predicated region
  $region22: #{generator_forward.22} parent=0 // pred_check
    _
  $region23: #{generator_forward.22} parent=0 // pred_check_branch
    %22 = sbr.rel (0) target = $region25
  $region24: #{generator_forward.22} parent=0 // pred_region
    _
  $region25: #{generator_forward.22} parent=0 // pred_fallthru
    _
  %v23 = vld [vmem:[%s4] sm:$0x1]
  %v24 = vmul.f32 %v23, 0.001953125
  %v25 = vld [vmem:[%s5] sm:$0x1]
  %v26 = vmul.f32 %v25, 0.001953125
  %v27 = vmul.f32 %v24, %v24
  %v28 = vsub.f32 %v26, %v27
  %v29 = vadd.f32 %v28, 1e-05
  %v30 = vrsqrt.pop %v29
  %v31 = vld [vmem:[%s0] sm:$0xff]
  %v32 = vld [vmem:[%s0 + $0x8] sm:$0xff]
  %v33 = vld [vmem:[%s0 + $0x10] sm:$0xff]
  %v34 = vld [vmem:[%s0 + $0x18] sm:$0xff]
  %v35 = vld [vmem:[%s0 + $0x20] sm:$0xff]
  %v36 = vld [vmem:[%s0 + $0x28] sm:$0xff]
  %v37 = vld [vmem:[%s0 + $0x30] sm:$0xff]
  %v38 = vld [vmem:[%s0 + $0x38] sm:$0xff]
  %v39 = vld [vmem:[%s0 + $0x40] sm:$0xff]
  %v40 = vld [vmem:[%s0 + $0x48] sm:$0xff]
  %v41 = vld [vmem:[%s0 + $0x50] sm:$0xff]
  %v42 = vld [vmem:[%s0 + $0x58] sm:$0xff]
  %v43 = vld [vmem:[%s0 + $0x60] sm:$0xff]
  %v44 = vld [vmem:[%s0 + $0x68] sm:$0xff]
  %v45 = vld [vmem:[%s0 + $0x70] sm:$0xff]
  %v46 = vld [vmem:[%s0 + $0x78] sm:$0xff]
  %v47 = vld [vmem:[%s0 + $0x80] sm:$0xff]
  %v48 = vld [vmem:[%s0 + $0x88] sm:$0xff]
  %v49 = vld [vmem:[%s0 + $0x90] sm:$0xff]
  %v50 = vld [vmem:[%s0 + $0x98] sm:$0xff]
  %v51 = vld [vmem:[%s0 + $0xa0] sm:$0xff]
  %v52 = vld [vmem:[%s0 + $0xa8] sm:$0xff]
  %v53 = vld [vmem:[%s0 + $0xb0] sm:$0xff]
  %v54 = vld [vmem:[%s0 + $0xb8] sm:$0xff]
  %v55 = vld [vmem:[%s0 + $0xc0] sm:$0xff]
  %v56 = vld [vmem:[%s0 + $0xc8] sm:$0xff]
  %v57 = vld [vmem:[%s0 + $0xd0] sm:$0xff]
  %v58 = vld [vmem:[%s0 + $0xd8] sm:$0xff]
  %v59 = vld [vmem:[%s0 + $0xe0] sm:$0xff]
  %v60 = vld [vmem:[%s0 + $0xe8] sm:$0xff]
  %v61 = vld [vmem:[%s0 + $0xf0] sm:$0xff]
  %v62 = vld [vmem:[%s0 + $0xf8] sm:$0xff]
  %v63 = vld [vmem:[%s0 + $0x100] sm:$0xff]
  %v64 = vld [vmem:[%s0 + $0x108] sm:$0xff]
  %v65 = vld [vmem:[%s0 + $0x110] sm:$0xff]
  %v66 = vld [vmem:[%s0 + $0x118] sm:$0xff]
  %v67 = vld [vmem:[%s0 + $0x120] sm:$0xff]
  %v68 = vld [vmem:[%s0 + $0x128] sm:$0xff]
  %v69 = vld [vmem:[%s0 + $0x130] sm:$0xff]
  %v70 = vld [vmem:[%s0 + $0x138] sm:$0xff]
  %v71 = vld [vmem:[%s0 + $0x140] sm:$0xff]
  %v72 = vld [vmem:[%s0 + $0x148] sm:$0xff]
  %v73 = vld [vmem:[%s0 + $0x150] sm:$0xff]
  %v74 = vld [vmem:[%s0 + $0x158] sm:$0xff]
  %v75 = vld [vmem:[%s0 + $0x160] sm:$0xff]
  %v76 = vld [vmem:[%s0 + $0x168] sm:$0xff]
  %v77 = vld [vmem:[%s0 + $0x170] sm:$0xff]
  %v78 = vld [vmem:[%s0 + $0x178] sm:$0xff]
  %v79 = vld [vmem:[%s0 + $0x180] sm:$0xff]
  %v80 = vld [vmem:[%s0 + $0x188] sm:$0xff]
  %v81 = vld [vmem:[%s0 + $0x190] sm:$0xff]
  %v82 = vld [vmem:[%s0 + $0x198] sm:$0xff]
  %v83 = vld [vmem:[%s0 + $0x1a0] sm:$0xff]
  %v84 = vld [vmem:[%s0 + $0x1a8] sm:$0xff]
  %v85 = vld [vmem:[%s0 + $0x1b0] sm:$0xff]
  %v86 = vld [vmem:[%s0 + $0x1b8] sm:$0xff]
  %v87 = vld [vmem:[%s0 + $0x1c0] sm:$0xff]
  %v88 = vld [vmem:[%s0 + $0x1c8] sm:$0xff]
  %v89 = vld [vmem:[%s0 + $0x1d0] sm:$0xff]
  %v90 = vld [vmem:[%s0 + $0x1d8] sm:$0xff]
  %v91 = vld [vmem:[%s0 + $0x1e0] sm:$0xff]
  %v92 = vld [vmem:[%s0 + $0x1e8] sm:$0xff]
  %v93 = vld [vmem:[%s0 + $0x1f0] sm:$0xff]
  %v94 = vld [vmem:[%s0 + $0x1f8] sm:$0xff]
  %v95 = vld [vmem:[%s1] sm:$0x1]
  %v97 = vlaneseq
  %v98 = vshrl.u32 %v97, 7
  %v99 = vsub.s32 0, %v98
  %v100 = vrot.slane %v95, %v99
  %v102 = vadd.f32 %v31, %v100
  %v103 = vadd.f32 %v32, %v100
  %v104 = vadd.f32 %v33, %v100
  %v105 = vadd.f32 %v34, %v100
  %v106 = vadd.f32 %v35, %v100
  %v107 = vadd.f32 %v36, %v100
  %v108 = vadd.f32 %v37, %v100
  %v109 = vadd.f32 %v38, %v100
  %v110 = vadd.f32 %v39, %v100
  %v111 = vadd.f32 %v40, %v100
  %v112 = vadd.f32 %v41, %v100
  %v113 = vadd.f32 %v42, %v100
  %v114 = vadd.f32 %v43, %v100
  %v115 = vadd.f32 %v44, %v100
  %v116 = vadd.f32 %v45, %v100
  %v117 = vadd.f32 %v46, %v100
  %v118 = vadd.f32 %v47, %v100
  %v119 = vadd.f32 %v48, %v100
  %v120 = vadd.f32 %v49, %v100
  %v121 = vadd.f32 %v50, %v100
  %v122 = vadd.f32 %v51, %v100
  %v123 = vadd.f32 %v52, %v100
  %v124 = vadd.f32 %v53, %v100
  %v125 = vadd.f32 %v54, %v100
  %v126 = vadd.f32 %v55, %v100
  %v127 = vadd.f32 %v56, %v100
  %v128 = vadd.f32 %v57, %v100
  %v129 = vadd.f32 %v58, %v100
  %v130 = vadd.f32 %v59, %v100
  %v131 = vadd.f32 %v60, %v100
  %v132 = vadd.f32 %v61, %v100
  %v133 = vadd.f32 %v62, %v100
  %v134 = vadd.f32 %v63, %v100
  %v135 = vadd.f32 %v64, %v100
  %v136 = vadd.f32 %v65, %v100
  %v137 = vadd.f32 %v66, %v100
  %v138 = vadd.f32 %v67, %v100
  %v139 = vadd.f32 %v68, %v100
  %v140 = vadd.f32 %v69, %v100
  %v141 = vadd.f32 %v70, %v100
  %v142 = vadd.f32 %v71, %v100
  %v143 = vadd.f32 %v72, %v100
  %v144 = vadd.f32 %v73, %v100
  %v145 = vadd.f32 %v74, %v100
  %v146 = vadd.f32 %v75, %v100
  %v147 = vadd.f32 %v76, %v100
  %v148 = vadd.f32 %v77, %v100
  %v149 = vadd.f32 %v78, %v100
  %v150 = vadd.f32 %v79, %v100
  %v151 = vadd.f32 %v80, %v100
  %v152 = vadd.f32 %v81, %v100
  %v153 = vadd.f32 %v82, %v100
  %v154 = vadd.f32 %v83, %v100
  %v155 = vadd.f32 %v84, %v100
  %v156 = vadd.f32 %v85, %v100
  %v157 = vadd.f32 %v86, %v100
  %v158 = vadd.f32 %v87, %v100
  %v159 = vadd.f32 %v88, %v100
  %v160 = vadd.f32 %v89, %v100
  %v161 = vadd.f32 %v90, %v100
  %v162 = vadd.f32 %v91, %v100
  %v163 = vadd.f32 %v92, %v100
  %v164 = vadd.f32 %v93, %v100
  %v165 = vadd.f32 %v94, %v100
  %v166 = vlaneseq
  %v167 = vshrl.u32 %v166, 7
  %v168 = vsub.s32 0, %v167
  %v169 = vrot.slane %v24, %v168
  %v170 = vsub.f32 %v102, %v169
  %v171 = vsub.f32 %v103, %v169
  %v172 = vsub.f32 %v104, %v169
  %v173 = vsub.f32 %v105, %v169
  %v174 = vsub.f32 %v106, %v169
  %v175 = vsub.f32 %v107, %v169
  %v176 = vsub.f32 %v108, %v169
  %v177 = vsub.f32 %v109, %v169
  %v178 = vsub.f32 %v110, %v169
  %v179 = vsub.f32 %v111, %v169
  %v180 = vsub.f32 %v112, %v169
  %v181 = vsub.f32 %v113, %v169
  %v182 = vsub.f32 %v114, %v169
  %v183 = vsub.f32 %v115, %v169
  %v184 = vsub.f32 %v116, %v169
  %v185 = vsub.f32 %v117, %v169
  %v186 = vsub.f32 %v118, %v169
  %v187 = vsub.f32 %v119, %v169
  %v188 = vsub.f32 %v120, %v169
  %v189 = vsub.f32 %v121, %v169
  %v190 = vsub.f32 %v122, %v169
  %v191 = vsub.f32 %v123, %v169
  %v192 = vsub.f32 %v124, %v169
  %v193 = vsub.f32 %v125, %v169
  %v194 = vsub.f32 %v126, %v169
  %v195 = vsub.f32 %v127, %v169
  %v196 = vsub.f32 %v128, %v169
  %v197 = vsub.f32 %v129, %v169
  %v198 = vsub.f32 %v130, %v169
  %v199 = vsub.f32 %v131, %v169
  %v200 = vsub.f32 %v132, %v169
  %v201 = vsub.f32 %v133, %v169
  %v202 = vsub.f32 %v134, %v169
  %v203 = vsub.f32 %v135, %v169
  %v204 = vsub.f32 %v136, %v169
  %v205 = vsub.f32 %v137, %v169
  %v206 = vsub.f32 %v138, %v169
  %v207 = vsub.f32 %v139, %v169
  %v208 = vsub.f32 %v140, %v169
  %v209 = vsub.f32 %v141, %v169
  %v210 = vsub.f32 %v142, %v169
  %v211 = vsub.f32 %v143, %v169
  %v212 = vsub.f32 %v144, %v169
  %v213 = vsub.f32 %v145, %v169
  %v214 = vsub.f32 %v146, %v169
  %v215 = vsub.f32 %v147, %v169
  %v216 = vsub.f32 %v148, %v169
  %v217 = vsub.f32 %v149, %v169
  %v218 = vsub.f32 %v150, %v169
  %v219 = vsub.f32 %v151, %v169
  %v220 = vsub.f32 %v152, %v169
  %v221 = vsub.f32 %v153, %v169
  %v222 = vsub.f32 %v154, %v169
  %v223 = vsub.f32 %v155, %v169
  %v224 = vsub.f32 %v156, %v169
  %v225 = vsub.f32 %v157, %v169
  %v226 = vsub.f32 %v158, %v169
  %v227 = vsub.f32 %v159, %v169
  %v228 = vsub.f32 %v160, %v169
  %v229 = vsub.f32 %v161, %v169
  %v230 = vsub.f32 %v162, %v169
  %v231 = vsub.f32 %v163, %v169
  %v232 = vsub.f32 %v164, %v169
  %v233 = vsub.f32 %v165, %v169
  %v234 = vld [vmem:[%s2] sm:$0x1]
  %v235 = vmul.f32 %v30, %v234
  %v236 = vlaneseq
  %v237 = vshrl.u32 %v236, 7
  %v238 = vsub.s32 0, %v237
  %v239 = vrot.slane %v235, %v238
  %v240 = vmul.f32 %v170, %v239
  %v241 = vmul.f32 %v171, %v239
  %v242 = vmul.f32 %v172, %v239
  %v243 = vmul.f32 %v173, %v239
  %v244 = vmul.f32 %v174, %v239
  %v245 = vmul.f32 %v175, %v239
  %v246 = vmul.f32 %v176, %v239
  %v247 = vmul.f32 %v177, %v239
  %v248 = vmul.f32 %v178, %v239
  %v249 = vmul.f32 %v179, %v239
  %v250 = vmul.f32 %v180, %v239
  %v251 = vmul.f32 %v181, %v239
  %v252 = vmul.f32 %v182, %v239
  %v253 = vmul.f32 %v183, %v239
  %v254 = vmul.f32 %v184, %v239
  %v255 = vmul.f32 %v185, %v239
  %v256 = vmul.f32 %v186, %v239
  %v257 = vmul.f32 %v187, %v239
  %v258 = vmul.f32 %v188, %v239
  %v259 = vmul.f32 %v189, %v239
  %v260 = vmul.f32 %v190, %v239
  %v261 = vmul.f32 %v191, %v239
  %v262 = vmul.f32 %v192, %v239
  %v263 = vmul.f32 %v193, %v239
  %v264 = vmul.f32 %v194, %v239
  %v265 = vmul.f32 %v195, %v239
  %v266 = vmul.f32 %v196, %v239
  %v267 = vmul.f32 %v197, %v239
  %v268 = vmul.f32 %v198, %v239
  %v269 = vmul.f32 %v199, %v239
  %v270 = vmul.f32 %v200, %v239
  %v271 = vmul.f32 %v201, %v239
  %v272 = vmul.f32 %v202, %v239
  %v273 = vmul.f32 %v203, %v239
  %v274 = vmul.f32 %v204, %v239
  %v275 = vmul.f32 %v205, %v239
  %v276 = vmul.f32 %v206, %v239
  %v277 = vmul.f32 %v207, %v239
  %v278 = vmul.f32 %v208, %v239
  %v279 = vmul.f32 %v209, %v239
  %v280 = vmul.f32 %v210, %v239
  %v281 = vmul.f32 %v211, %v239
  %v282 = vmul.f32 %v212, %v239
  %v283 = vmul.f32 %v213, %v239
  %v284 = vmul.f32 %v214, %v239
  %v285 = vmul.f32 %v215, %v239
  %v286 = vmul.f32 %v216, %v239
  %v287 = vmul.f32 %v217, %v239
  %v288 = vmul.f32 %v218, %v239
  %v289 = vmul.f32 %v219, %v239
  %v290 = vmul.f32 %v220, %v239
  %v291 = vmul.f32 %v221, %v239
  %v292 = vmul.f32 %v222, %v239
  %v293 = vmul.f32 %v223, %v239
  %v294 = vmul.f32 %v224, %v239
  %v295 = vmul.f32 %v225, %v239
  %v296 = vmul.f32 %v226, %v239
  %v297 = vmul.f32 %v227, %v239
  %v298 = vmul.f32 %v228, %v239
  %v299 = vmul.f32 %v229, %v239
  %v300 = vmul.f32 %v230, %v239
  %v301 = vmul.f32 %v231, %v239
  %v302 = vmul.f32 %v232, %v239
  %v303 = vmul.f32 %v233, %v239
  %v304 = vld [vmem:[%s3] sm:$0x1]
  %v306 = vlaneseq
  %v307 = vshrl.u32 %v306, 7
  %v308 = vsub.s32 0, %v307
  %v309 = vrot.slane %v304, %v308
  %v311 = vadd.f32 %v240, %v309
  %v312 = vadd.f32 %v241, %v309
  %v313 = vadd.f32 %v242, %v309
  %v314 = vadd.f32 %v243, %v309
  %v315 = vadd.f32 %v244, %v309
  %v316 = vadd.f32 %v245, %v309
  %v317 = vadd.f32 %v246, %v309
  %v318 = vadd.f32 %v247, %v309
  %v319 = vadd.f32 %v248, %v309
  %v320 = vadd.f32 %v249, %v309
  %v321 = vadd.f32 %v250, %v309
  %v322 = vadd.f32 %v251, %v309
  %v323 = vadd.f32 %v252, %v309
  %v324 = vadd.f32 %v253, %v309
  %v325 = vadd.f32 %v254, %v309
  %v326 = vadd.f32 %v255, %v309
  %v327 = vadd.f32 %v256, %v309
  %v328 = vadd.f32 %v257, %v309
  %v329 = vadd.f32 %v258, %v309
  %v330 = vadd.f32 %v259, %v309
  %v331 = vadd.f32 %v260, %v309
  %v332 = vadd.f32 %v261, %v309
  %v333 = vadd.f32 %v262, %v309
  %v334 = vadd.f32 %v263, %v309
  %v335 = vadd.f32 %v264, %v309
  %v336 = vadd.f32 %v265, %v309
  %v337 = vadd.f32 %v266, %v309
  %v338 = vadd.f32 %v267, %v309
  %v339 = vadd.f32 %v268, %v309
  %v340 = vadd.f32 %v269, %v309
  %v341 = vadd.f32 %v270, %v309
  %v342 = vadd.f32 %v271, %v309
  %v343 = vadd.f32 %v272, %v309
  %v344 = vadd.f32 %v273, %v309
  %v345 = vadd.f32 %v274, %v309
  %v346 = vadd.f32 %v275, %v309
  %v347 = vadd.f32 %v276, %v309
  %v348 = vadd.f32 %v277, %v309
  %v349 = vadd.f32 %v278, %v309
  %v350 = vadd.f32 %v279, %v309
  %v351 = vadd.f32 %v280, %v309
  %v352 = vadd.f32 %v281, %v309
  %v353 = vadd.f32 %v282, %v309
  %v354 = vadd.f32 %v283, %v309
  %v355 = vadd.f32 %v284, %v309
  %v356 = vadd.f32 %v285, %v309
  %v357 = vadd.f32 %v286, %v309
  %v358 = vadd.f32 %v287, %v309
  %v359 = vadd.f32 %v288, %v309
  %v360 = vadd.f32 %v289, %v309
  %v361 = vadd.f32 %v290, %v309
  %v362 = vadd.f32 %v291, %v309
  %v363 = vadd.f32 %v292, %v309
  %v364 = vadd.f32 %v293, %v309
  %v365 = vadd.f32 %v294, %v309
  %v366 = vadd.f32 %v295, %v309
  %v367 = vadd.f32 %v296, %v309
  %v368 = vadd.f32 %v297, %v309
  %v369 = vadd.f32 %v298, %v309
  %v370 = vadd.f32 %v299, %v309
  %v371 = vadd.f32 %v300, %v309
  %v372 = vadd.f32 %v301, %v309
  %v373 = vadd.f32 %v302, %v309
  %v374 = vadd.f32 %v303, %v309
  %v375 = vmax.f32 %v311, 0.0
  %v376 = vmax.f32 %v312, 0.0
  %v377 = vmax.f32 %v313, 0.0
  %v378 = vmax.f32 %v314, 0.0
  %v379 = vmax.f32 %v315, 0.0
  %v380 = vmax.f32 %v316, 0.0
  %v381 = vmax.f32 %v317, 0.0
  %v382 = vmax.f32 %v318, 0.0
  %v383 = vmax.f32 %v319, 0.0
  %v384 = vmax.f32 %v320, 0.0
  %v385 = vmax.f32 %v321, 0.0
  %v386 = vmax.f32 %v322, 0.0
  %v387 = vmax.f32 %v323, 0.0
  %v388 = vmax.f32 %v324, 0.0
  %v389 = vmax.f32 %v325, 0.0
  %v390 = vmax.f32 %v326, 0.0
  %v391 = vmax.f32 %v327, 0.0
  %v392 = vmax.f32 %v328, 0.0
  %v393 = vmax.f32 %v329, 0.0
  %v394 = vmax.f32 %v330, 0.0
  %v395 = vmax.f32 %v331, 0.0
  %v396 = vmax.f32 %v332, 0.0
  %v397 = vmax.f32 %v333, 0.0
  %v398 = vmax.f32 %v334, 0.0
  %v399 = vmax.f32 %v335, 0.0
  %v400 = vmax.f32 %v336, 0.0
  %v401 = vmax.f32 %v337, 0.0
  %v402 = vmax.f32 %v338, 0.0
  %v403 = vmax.f32 %v339, 0.0
  %v404 = vmax.f32 %v340, 0.0
  %v405 = vmax.f32 %v341, 0.0
  %v406 = vmax.f32 %v342, 0.0
  %v407 = vmax.f32 %v343, 0.0
  %v408 = vmax.f32 %v344, 0.0
  %v409 = vmax.f32 %v345, 0.0
  %v410 = vmax.f32 %v346, 0.0
  %v411 = vmax.f32 %v347, 0.0
  %v412 = vmax.f32 %v348, 0.0
  %v413 = vmax.f32 %v349, 0.0
  %v414 = vmax.f32 %v350, 0.0
  %v415 = vmax.f32 %v351, 0.0
  %v416 = vmax.f32 %v352, 0.0
  %v417 = vmax.f32 %v353, 0.0
  %v418 = vmax.f32 %v354, 0.0
  %v419 = vmax.f32 %v355, 0.0
  %v420 = vmax.f32 %v356, 0.0
  %v421 = vmax.f32 %v357, 0.0
  %v422 = vmax.f32 %v358, 0.0
  %v423 = vmax.f32 %v359, 0.0
  %v424 = vmax.f32 %v360, 0.0
  %v425 = vmax.f32 %v361, 0.0
  %v426 = vmax.f32 %v362, 0.0
  %v427 = vmax.f32 %v363, 0.0
  %v428 = vmax.f32 %v364, 0.0
  %v429 = vmax.f32 %v365, 0.0
  %v430 = vmax.f32 %v366, 0.0
  %v431 = vmax.f32 %v367, 0.0
  %v432 = vmax.f32 %v368, 0.0
  %v433 = vmax.f32 %v369, 0.0
  %v434 = vmax.f32 %v370, 0.0
  %v435 = vmax.f32 %v371, 0.0
  %v436 = vmax.f32 %v372, 0.0
  %v437 = vmax.f32 %v373, 0.0
  %v438 = vmax.f32 %v374, 0.0
  %439 = vst [vmem:[%s6] sm:$0xff] %v375
  %440 = vst [vmem:[%s6 + $0x8] sm:$0xff] %v376
  %441 = vst [vmem:[%s6 + $0x10] sm:$0xff] %v377
  %442 = vst [vmem:[%s6 + $0x18] sm:$0xff] %v378
  %443 = vst [vmem:[%s6 + $0x20] sm:$0xff] %v379
  %444 = vst [vmem:[%s6 + $0x28] sm:$0xff] %v380
  %445 = vst [vmem:[%s6 + $0x30] sm:$0xff] %v381
  %446 = vst [vmem:[%s6 + $0x38] sm:$0xff] %v382
  %447 = vst [vmem:[%s6 + $0x40] sm:$0xff] %v383
  %448 = vst [vmem:[%s6 + $0x48] sm:$0xff] %v384
  %449 = vst [vmem:[%s6 + $0x50] sm:$0xff] %v385
  %450 = vst [vmem:[%s6 + $0x58] sm:$0xff] %v386
  %451 = vst [vmem:[%s6 + $0x60] sm:$0xff] %v387
  %452 = vst [vmem:[%s6 + $0x68] sm:$0xff] %v388
  %453 = vst [vmem:[%s6 + $0x70] sm:$0xff] %v389
  %454 = vst [vmem:[%s6 + $0x78] sm:$0xff] %v390
  %455 = vst [vmem:[%s6 + $0x80] sm:$0xff] %v391
  %456 = vst [vmem:[%s6 + $0x88] sm:$0xff] %v392
  %457 = vst [vmem:[%s6 + $0x90] sm:$0xff] %v393
  %458 = vst [vmem:[%s6 + $0x98] sm:$0xff] %v394
  %459 = vst [vmem:[%s6 + $0xa0] sm:$0xff] %v395
  %460 = vst [vmem:[%s6 + $0xa8] sm:$0xff] %v396
  %461 = vst [vmem:[%s6 + $0xb0] sm:$0xff] %v397
  %462 = vst [vmem:[%s6 + $0xb8] sm:$0xff] %v398
  %463 = vst [vmem:[%s6 + $0xc0] sm:$0xff] %v399
  %464 = vst [vmem:[%s6 + $0xc8] sm:$0xff] %v400
  %465 = vst [vmem:[%s6 + $0xd0] sm:$0xff] %v401
  %466 = vst [vmem:[%s6 + $0xd8] sm:$0xff] %v402
  %467 = vst [vmem:[%s6 + $0xe0] sm:$0xff] %v403
  %468 = vst [vmem:[%s6 + $0xe8] sm:$0xff] %v404
  %469 = vst [vmem:[%s6 + $0xf0] sm:$0xff] %v405
  %470 = vst [vmem:[%s6 + $0xf8] sm:$0xff] %v406
  %471 = vst [vmem:[%s6 + $0x100] sm:$0xff] %v407
  %472 = vst [vmem:[%s6 + $0x108] sm:$0xff] %v408
  %473 = vst [vmem:[%s6 + $0x110] sm:$0xff] %v409
  %474 = vst [vmem:[%s6 + $0x118] sm:$0xff] %v410
  %475 = vst [vmem:[%s6 + $0x120] sm:$0xff] %v411
  %476 = vst [vmem:[%s6 + $0x128] sm:$0xff] %v412
  %477 = vst [vmem:[%s6 + $0x130] sm:$0xff] %v413
  %478 = vst [vmem:[%s6 + $0x138] sm:$0xff] %v414
  %479 = vst [vmem:[%s6 + $0x140] sm:$0xff] %v415
  %480 = vst [vmem:[%s6 + $0x148] sm:$0xff] %v416
  %481 = vst [vmem:[%s6 + $0x150] sm:$0xff] %v417
  %482 = vst [vmem:[%s6 + $0x158] sm:$0xff] %v418
  %483 = vst [vmem:[%s6 + $0x160] sm:$0xff] %v419
  %484 = vst [vmem:[%s6 + $0x168] sm:$0xff] %v420
  %485 = vst [vmem:[%s6 + $0x170] sm:$0xff] %v421
  %486 = vst [vmem:[%s6 + $0x178] sm:$0xff] %v422
  %487 = vst [vmem:[%s6 + $0x180] sm:$0xff] %v423
  %488 = vst [vmem:[%s6 + $0x188] sm:$0xff] %v424
  %489 = vst [vmem:[%s6 + $0x190] sm:$0xff] %v425
  %490 = vst [vmem:[%s6 + $0x198] sm:$0xff] %v426
  %491 = vst [vmem:[%s6 + $0x1a0] sm:$0xff] %v427
  %492 = vst [vmem:[%s6 + $0x1a8] sm:$0xff] %v428
  %493 = vst [vmem:[%s6 + $0x1b0] sm:$0xff] %v429
  %494 = vst [vmem:[%s6 + $0x1b8] sm:$0xff] %v430
  %495 = vst [vmem:[%s6 + $0x1c0] sm:$0xff] %v431
  %496 = vst [vmem:[%s6 + $0x1c8] sm:$0xff] %v432
  %497 = vst [vmem:[%s6 + $0x1d0] sm:$0xff] %v433
  %498 = vst [vmem:[%s6 + $0x1d8] sm:$0xff] %v434
  %499 = vst [vmem:[%s6 + $0x1e0] sm:$0xff] %v435
  %500 = vst [vmem:[%s6 + $0x1e8] sm:$0xff] %v436
  %501 = vst [vmem:[%s6 + $0x1f0] sm:$0xff] %v437
  %502 = vst [vmem:[%s6 + $0x1f8] sm:$0xff] %v438
  // Predicated region
  $region26: #{generator_forward.22} parent=0 // pred_check
    _
  $region27: #{generator_forward.22} parent=0 // pred_check_branch
    %504 = sbr.rel (0) target = $region29
  $region28: #{generator_forward.22} parent=0 // pred_region
    _
  $region29: #{generator_forward.22} parent=0 // pred_fallthru
    _
  // Predicated region
  $region30: #{generator_forward.22} parent=0 // pred_check
    _
  $region31: #{generator_forward.22} parent=0 // pred_check_branch
    %506 = sbr.rel (0) target = $region33
  $region32: #{generator_forward.22} parent=0 // pred_region
    _
  $region33: #{generator_forward.22} parent=0 // pred_fallthru
    _

// kernel: generator_forward.21
$region0: #{generator_forward.21}
  #allocation0 [shape = 'u32[]', space=smem, size = 0x4, offset = 0x4, fixed_abs, tag = 'smem constant byte address 0x4 - core index']
  #allocation1 [shape = 'u32[144,128]{1,0:T(1,128)}', space=vmem, size = 0x12000, scoped, tag = 'internal scratch']
  %s0 = inlined_call_operand.vmem [shape: f32[512,128], index: 0, kind: input, shape index: {}]
  %s1 = inlined_call_operand.vmem [shape: f32[1,128], index: 1, kind: input, shape index: {}]
  %s2 = inlined_call_operand.vmem [shape: f32[8,128], index: 2, kind: output, shape index: {0}]
  %s3 = inlined_call_operand.vmem [shape: f32[8,128], index: 3, kind: output, shape index: {1}]
  %4 = xla_tuple %s2, %s3
  %s5 = sld [smem:[#allocation0]]
  $region30: #{generator_forward.21} parent=0
    _
  %s7 = ssub.s32 1, %s5
  %s8 = scalar_select 0, %s7, %s5
  // Predicated region
  $region2: #{generator_forward.21} parent=0 // pred_check
    _
  $region3: #{generator_forward.21} parent=0 // pred_check_branch
    %10 = sbr.rel (0) target = $region5
  $region4: #{generator_forward.21} parent=0 // pred_region
    _
  $region5: #{generator_forward.21} parent=0 // pred_fallthru
    _
  // Predicated region
  $region6: #{generator_forward.21} parent=0 // pred_check
    _
  $region7: #{generator_forward.21} parent=0 // pred_check_branch
    %12 = sbr.rel (0) target = $region9
  $region8: #{generator_forward.21} parent=0 // pred_region
    _
  $region9: #{generator_forward.21} parent=0 // pred_fallthru
    _
  %p13 = scmp.eq.s32.totalorder 0, 0
  // Predicated region
  $region10: #{generator_forward.21} parent=0 // pred_check
    %p14 = pneg %p13
  $region11: #{generator_forward.21} parent=0 // pred_check_branch
    %16 = sbr.rel (%p14) target = $region13
  $region12: #{generator_forward.21} parent=0 // pred_region
    %17 = vst [vmem:[%s2] sm:$0xff] 0.0
    %18 = vst [vmem:[%s3] sm:$0xff] 0.0
  $region13: #{generator_forward.21} parent=0 // pred_fallthru
    _
  %v19 = vld [vmem:[%s0] sm:$0xff]
  %v20 = vld [vmem:[%s0 + $0x8] sm:$0xff]
  %v21 = vld [vmem:[%s0 + $0x10] sm:$0xff]
  %v22 = vld [vmem:[%s0 + $0x18] sm:$0xff]
  %v23 = vld [vmem:[%s0 + $0x20] sm:$0xff]
  %v24 = vld [vmem:[%s0 + $0x28] sm:$0xff]
  %v25 = vld [vmem:[%s0 + $0x30] sm:$0xff]
  %v26 = vld [vmem:[%s0 + $0x38] sm:$0xff]
  %v27 = vld [vmem:[%s0 + $0x40] sm:$0xff]
  %v28 = vld [vmem:[%s0 + $0x48] sm:$0xff]
  %v29 = vld [vmem:[%s0 + $0x50] sm:$0xff]
  %v30 = vld [vmem:[%s0 + $0x58] sm:$0xff]
  %v31 = vld [vmem:[%s0 + $0x60] sm:$0xff]
  %v32 = vld [vmem:[%s0 + $0x68] sm:$0xff]
  %v33 = vld [vmem:[%s0 + $0x70] sm:$0xff]
  %v34 = vld [vmem:[%s0 + $0x78] sm:$0xff]
  %v35 = vld [vmem:[%s0 + $0x80] sm:$0xff]
  %v36 = vld [vmem:[%s0 + $0x88] sm:$0xff]
  %v37 = vld [vmem:[%s0 + $0x90] sm:$0xff]
  %v38 = vld [vmem:[%s0 + $0x98] sm:$0xff]
  %v39 = vld [vmem:[%s0 + $0xa0] sm:$0xff]
  %v40 = vld [vmem:[%s0 + $0xa8] sm:$0xff]
  %v41 = vld [vmem:[%s0 + $0xb0] sm:$0xff]
  %v42 = vld [vmem:[%s0 + $0xb8] sm:$0xff]
  %v43 = vld [vmem:[%s0 + $0xc0] sm:$0xff]
  %v44 = vld [vmem:[%s0 + $0xc8] sm:$0xff]
  %v45 = vld [vmem:[%s0 + $0xd0] sm:$0xff]
  %v46 = vld [vmem:[%s0 + $0xd8] sm:$0xff]
  %v47 = vld [vmem:[%s0 + $0xe0] sm:$0xff]
  %v48 = vld [vmem:[%s0 + $0xe8] sm:$0xff]
  %v49 = vld [vmem:[%s0 + $0xf0] sm:$0xff]
  %v50 = vld [vmem:[%s0 + $0xf8] sm:$0xff]
  %v51 = vld [vmem:[%s0 + $0x100] sm:$0xff]
  %v52 = vld [vmem:[%s0 + $0x108] sm:$0xff]
  %v53 = vld [vmem:[%s0 + $0x110] sm:$0xff]
  %v54 = vld [vmem:[%s0 + $0x118] sm:$0xff]
  %v55 = vld [vmem:[%s0 + $0x120] sm:$0xff]
  %v56 = vld [vmem:[%s0 + $0x128] sm:$0xff]
  %v57 = vld [vmem:[%s0 + $0x130] sm:$0xff]
  %v58 = vld [vmem:[%s0 + $0x138] sm:$0xff]
  %v59 = vld [vmem:[%s0 + $0x140] sm:$0xff]
  %v60 = vld [vmem:[%s0 + $0x148] sm:$0xff]
  %v61 = vld [vmem:[%s0 + $0x150] sm:$0xff]
  %v62 = vld [vmem:[%s0 + $0x158] sm:$0xff]
  %v63 = vld [vmem:[%s0 + $0x160] sm:$0xff]
  %v64 = vld [vmem:[%s0 + $0x168] sm:$0xff]
  %v65 = vld [vmem:[%s0 + $0x170] sm:$0xff]
  %v66 = vld [vmem:[%s0 + $0x178] sm:$0xff]
  %v67 = vld [vmem:[%s0 + $0x180] sm:$0xff]
  %v68 = vld [vmem:[%s0 + $0x188] sm:$0xff]
  %v69 = vld [vmem:[%s0 + $0x190] sm:$0xff]
  %v70 = vld [vmem:[%s0 + $0x198] sm:$0xff]
  %v71 = vld [vmem:[%s0 + $0x1a0] sm:$0xff]
  %v72 = vld [vmem:[%s0 + $0x1a8] sm:$0xff]
  %v73 = vld [vmem:[%s0 + $0x1b0] sm:$0xff]
  %v74 = vld [vmem:[%s0 + $0x1b8] sm:$0xff]
  %v75 = vld [vmem:[%s0 + $0x1c0] sm:$0xff]
  %v76 = vld [vmem:[%s0 + $0x1c8] sm:$0xff]
  %v77 = vld [vmem:[%s0 + $0x1d0] sm:$0xff]
  %v78 = vld [vmem:[%s0 + $0x1d8] sm:$0xff]
  %v79 = vld [vmem:[%s0 + $0x1e0] sm:$0xff]
  %v80 = vld [vmem:[%s0 + $0x1e8] sm:$0xff]
  %v81 = vld [vmem:[%s0 + $0x1f0] sm:$0xff]
  %v82 = vld [vmem:[%s0 + $0x1f8] sm:$0xff]
  %v83 = vld [vmem:[%s1] sm:$0x1]
  %v85 = vlaneseq
  %v86 = vshrl.u32 %v85, 7
  %v87 = vsub.s32 0, %v86
  %v88 = vrot.slane %v83, %v87
  %v90 = vadd.f32 %v19, %v88
  %v91 = vadd.f32 %v20, %v88
  %v92 = vadd.f32 %v21, %v88
  %v93 = vadd.f32 %v22, %v88
  %v94 = vadd.f32 %v23, %v88
  %v95 = vadd.f32 %v24, %v88
  %v96 = vadd.f32 %v25, %v88
  %v97 = vadd.f32 %v26, %v88
  %v98 = vadd.f32 %v27, %v88
  %v99 = vadd.f32 %v28, %v88
  %v100 = vadd.f32 %v29, %v88
  %v101 = vadd.f32 %v30, %v88
  %v102 = vadd.f32 %v31, %v88
  %v103 = vadd.f32 %v32, %v88
  %v104 = vadd.f32 %v33, %v88
  %v105 = vadd.f32 %v34, %v88
  %v106 = vadd.f32 %v35, %v88
  %v107 = vadd.f32 %v36, %v88
  %v108 = vadd.f32 %v37, %v88
  %v109 = vadd.f32 %v38, %v88
  %v110 = vadd.f32 %v39, %v88
  %v111 = vadd.f32 %v40, %v88
  %v112 = vadd.f32 %v41, %v88
  %v113 = vadd.f32 %v42, %v88
  %v114 = vadd.f32 %v43, %v88
  %v115 = vadd.f32 %v44, %v88
  %v116 = vadd.f32 %v45, %v88
  %v117 = vadd.f32 %v46, %v88
  %v118 = vadd.f32 %v47, %v88
  %v119 = vadd.f32 %v48, %v88
  %v120 = vadd.f32 %v49, %v88
  %v121 = vadd.f32 %v50, %v88
  %v122 = vadd.f32 %v51, %v88
  %v123 = vadd.f32 %v52, %v88
  %v124 = vadd.f32 %v53, %v88
  %v125 = vadd.f32 %v54, %v88
  %v126 = vadd.f32 %v55, %v88
  %v127 = vadd.f32 %v56, %v88
  %v128 = vadd.f32 %v57, %v88
  %v129 = vadd.f32 %v58, %v88
  %v130 = vadd.f32 %v59, %v88
  %v131 = vadd.f32 %v60, %v88
  %v132 = vadd.f32 %v61, %v88
  %v133 = vadd.f32 %v62, %v88
  %v134 = vadd.f32 %v63, %v88
  %v135 = vadd.f32 %v64, %v88
  %v136 = vadd.f32 %v65, %v88
  %v137 = vadd.f32 %v66, %v88
  %v138 = vadd.f32 %v67, %v88
  %v139 = vadd.f32 %v68, %v88
  %v140 = vadd.f32 %v69, %v88
  %v141 = vadd.f32 %v70, %v88
  %v142 = vadd.f32 %v71, %v88
  %v143 = vadd.f32 %v72, %v88
  %v144 = vadd.f32 %v73, %v88
  %v145 = vadd.f32 %v74, %v88
  %v146 = vadd.f32 %v75, %v88
  %v147 = vadd.f32 %v76, %v88
  %v148 = vadd.f32 %v77, %v88
  %v149 = vadd.f32 %v78, %v88
  %v150 = vadd.f32 %v79, %v88
  %v151 = vadd.f32 %v80, %v88
  %v152 = vadd.f32 %v81, %v88
  %v153 = vadd.f32 %v82, %v88
  %s154 = smul.u32 0, 512
  %v155 = vlaneseq
  %v156 = vshrl.u32 %v155, 7
  %v157 = vadd.s32 %v156, 8
  %v158 = vadd.s32 %v156, 16
  %v159 = vadd.s32 %v156, 24
  %v160 = vadd.s32 %v156, 32
  %v161 = vadd.s32 %v156, 40
  %v162 = vadd.s32 %v156, 48
  %v163 = vadd.s32 %v156, 56
  %v164 = vadd.s32 %v156, 64
  %v165 = vadd.s32 %v156, 72
  %v166 = vadd.s32 %v156, 80
  %v167 = vadd.s32 %v156, 88
  %v168 = vadd.s32 %v156, 96
  %v169 = vadd.s32 %v156, 104
  %v170 = vadd.s32 %v156, 112
  %v171 = vadd.s32 %v156, 120
  %v172 = vadd.s32 %v156, 128
  %v173 = vadd.s32 %v156, 136
  %v174 = vadd.s32 %v156, 144
  %v175 = vadd.s32 %v156, 152
  %v176 = vadd.s32 %v156, 160
  %v177 = vadd.s32 %v156, 168
  %v178 = vadd.s32 %v156, 176
  %v179 = vadd.s32 %v156, 184
  %v180 = vadd.s32 %v156, 192
  %v181 = vadd.s32 %v156, 200
  %v182 = vadd.s32 %v156, 208
  %v183 = vadd.s32 %v156, 216
  %v184 = vadd.s32 %v156, 224
  %v185 = vadd.s32 %v156, 232
  %v186 = vadd.s32 %v156, 240
  %v187 = vadd.s32 %v156, 248
  %v188 = vadd.s32 %v156, 256
  %v189 = vadd.s32 %v156, 264
  %v190 = vadd.s32 %v156, 272
  %v191 = vadd.s32 %v156, 280
  %v192 = vadd.s32 %v156, 288
  %v193 = vadd.s32 %v156, 296
  %v194 = vadd.s32 %v156, 304
  %v195 = vadd.s32 %v156, 312
  %v196 = vadd.s32 %v156, 320
  %v197 = vadd.s32 %v156, 328
  %v198 = vadd.s32 %v156, 336
  %v199 = vadd.s32 %v156, 344
  %v200 = vadd.s32 %v156, 352
  %v201 = vadd.s32 %v156, 360
  %v202 = vadd.s32 %v156, 368
  %v203 = vadd.s32 %v156, 376
  %v204 = vadd.s32 %v156, 384
  %v205 = vadd.s32 %v156, 392
  %v206 = vadd.s32 %v156, 400
  %v207 = vadd.s32 %v156, 408
  %v208 = vadd.s32 %v156, 416
  %v209 = vadd.s32 %v156, 424
  %v210 = vadd.s32 %v156, 432
  %v211 = vadd.s32 %v156, 440
  %v212 = vadd.s32 %v156, 448
  %v213 = vadd.s32 %v156, 456
  %v214 = vadd.s32 %v156, 464
  %v215 = vadd.s32 %v156, 472
  %v216 = vadd.s32 %v156, 480
  %v217 = vadd.s32 %v156, 488
  %v218 = vadd.s32 %v156, 496
  %v219 = vadd.s32 %v156, 504
  %v220 = vstv %s154
  %v221 = vadd.s32 %v220, %v156
  %v222 = vadd.s32 %v220, %v157
  %v223 = vadd.s32 %v220, %v158
  %v224 = vadd.s32 %v220, %v159
  %v225 = vadd.s32 %v220, %v160
  %v226 = vadd.s32 %v220, %v161
  %v227 = vadd.s32 %v220, %v162
  %v228 = vadd.s32 %v220, %v163
  %v229 = vadd.s32 %v220, %v164
  %v230 = vadd.s32 %v220, %v165
  %v231 = vadd.s32 %v220, %v166
  %v232 = vadd.s32 %v220, %v167
  %v233 = vadd.s32 %v220, %v168
  %v234 = vadd.s32 %v220, %v169
  %v235 = vadd.s32 %v220, %v170
  %v236 = vadd.s32 %v220, %v171
  %v237 = vadd.s32 %v220, %v172
  %v238 = vadd.s32 %v220, %v173
  %v239 = vadd.s32 %v220, %v174
  %v240 = vadd.s32 %v220, %v175
  %v241 = vadd.s32 %v220, %v176
  %v242 = vadd.s32 %v220, %v177
  %v243 = vadd.s32 %v220, %v178
  %v244 = vadd.s32 %v220, %v179
  %v245 = vadd.s32 %v220, %v180
  %v246 = vadd.s32 %v220, %v181
  %v247 = vadd.s32 %v220, %v182
  %v248 = vadd.s32 %v220, %v183
  %v249 = vadd.s32 %v220, %v184
  %v250 = vadd.s32 %v220, %v185
  %v251 = vadd.s32 %v220, %v186
  %v252 = vadd.s32 %v220, %v187
  %v253 = vadd.s32 %v220, %v188
  %v254 = vadd.s32 %v220, %v189
  %v255 = vadd.s32 %v220, %v190
  %v256 = vadd.s32 %v220, %v191
  %v257 = vadd.s32 %v220, %v192
  %v258 = vadd.s32 %v220, %v193
  %v259 = vadd.s32 %v220, %v194
  %v260 = vadd.s32 %v220, %v195
  %v261 = vadd.s32 %v220, %v196
  %v262 = vadd.s32 %v220, %v197
  %v263 = vadd.s32 %v220, %v198
  %v264 = vadd.s32 %v220, %v199
  %v265 = vadd.s32 %v220, %v200
  %v266 = vadd.s32 %v220, %v201
  %v267 = vadd.s32 %v220, %v202
  %v268 = vadd.s32 %v220, %v203
  %v269 = vadd.s32 %v220, %v204
  %v270 = vadd.s32 %v220, %v205
  %v271 = vadd.s32 %v220, %v206
  %v272 = vadd.s32 %v220, %v207
  %v273 = vadd.s32 %v220, %v208
  %v274 = vadd.s32 %v220, %v209
  %v275 = vadd.s32 %v220, %v210
  %v276 = vadd.s32 %v220, %v211
  %v277 = vadd.s32 %v220, %v212
  %v278 = vadd.s32 %v220, %v213
  %v279 = vadd.s32 %v220, %v214
  %v280 = vadd.s32 %v220, %v215
  %v281 = vadd.s32 %v220, %v216
  %v282 = vadd.s32 %v220, %v217
  %v283 = vadd.s32 %v220, %v218
  %v284 = vadd.s32 %v220, %v219
  %vm285 = vcmp.lt.s32.totalorder %v221, 512
  %vm286 = vcmp.lt.s32.totalorder %v222, 512
  %vm287 = vcmp.lt.s32.totalorder %v223, 512
  %vm288 = vcmp.lt.s32.totalorder %v224, 512
  %vm289 = vcmp.lt.s32.totalorder %v225, 512
  %vm290 = vcmp.lt.s32.totalorder %v226, 512
  %vm291 = vcmp.lt.s32.totalorder %v227, 512
  %vm292 = vcmp.lt.s32.totalorder %v228, 512
  %vm293 = vcmp.lt.s32.totalorder %v229, 512
  %vm294 = vcmp.lt.s32.totalorder %v230, 512
  %vm295 = vcmp.lt.s32.totalorder %v231, 512
  %vm296 = vcmp.lt.s32.totalorder %v232, 512
  %vm297 = vcmp.lt.s32.totalorder %v233, 512
  %vm298 = vcmp.lt.s32.totalorder %v234, 512
  %vm299 = vcmp.lt.s32.totalorder %v235, 512
  %vm300 = vcmp.lt.s32.totalorder %v236, 512
  %vm301 = vcmp.lt.s32.totalorder %v237, 512
  %vm302 = vcmp.lt.s32.totalorder %v238, 512
  %vm303 = vcmp.lt.s32.totalorder %v239, 512
  %vm304 = vcmp.lt.s32.totalorder %v240, 512
  %vm305 = vcmp.lt.s32.totalorder %v241, 512
  %vm306 = vcmp.lt.s32.totalorder %v242, 512
  %vm307 = vcmp.lt.s32.totalorder %v243, 512
  %vm308 = vcmp.lt.s32.totalorder %v244, 512
  %vm309 = vcmp.lt.s32.totalorder %v245, 512
  %vm310 = vcmp.lt.s32.totalorder %v246, 512
  %vm311 = vcmp.lt.s32.totalorder %v247, 512
  %vm312 = vcmp.lt.s32.totalorder %v248, 512
  %vm313 = vcmp.lt.s32.totalorder %v249, 512
  %vm314 = vcmp.lt.s32.totalorder %v250, 512
  %vm315 = vcmp.lt.s32.totalorder %v251, 512
  %vm316 = vcmp.lt.s32.totalorder %v252, 512
  %vm317 = vcmp.lt.s32.totalorder %v253, 512
  %vm318 = vcmp.lt.s32.totalorder %v254, 512
  %vm319 = vcmp.lt.s32.totalorder %v255, 512
  %vm320 = vcmp.lt.s32.totalorder %v256, 512
  %vm321 = vcmp.lt.s32.totalorder %v257, 512
  %vm322 = vcmp.lt.s32.totalorder %v258, 512
  %vm323 = vcmp.lt.s32.totalorder %v259, 512
  %vm324 = vcmp.lt.s32.totalorder %v260, 512
  %vm325 = vcmp.lt.s32.totalorder %v261, 512
  %vm326 = vcmp.lt.s32.totalorder %v262, 512
  %vm327 = vcmp.lt.s32.totalorder %v263, 512
  %vm328 = vcmp.lt.s32.totalorder %v264, 512
  %vm329 = vcmp.lt.s32.totalorder %v265, 512
  %vm330 = vcmp.lt.s32.totalorder %v266, 512
  %vm331 = vcmp.lt.s32.totalorder %v267, 512
  %vm332 = vcmp.lt.s32.totalorder %v268, 512
  %vm333 = vcmp.lt.s32.totalorder %v269, 512
  %vm334 = vcmp.lt.s32.totalorder %v270, 512
  %vm335 = vcmp.lt.s32.totalorder %v271, 512
  %vm336 = vcmp.lt.s32.totalorder %v272, 512
  %vm337 = vcmp.lt.s32.totalorder %v273, 512
  %vm338 = vcmp.lt.s32.totalorder %v274, 512
  %vm339 = vcmp.lt.s32.totalorder %v275, 512
  %vm340 = vcmp.lt.s32.totalorder %v276, 512
  %vm341 = vcmp.lt.s32.totalorder %v277, 512
  %vm342 = vcmp.lt.s32.totalorder %v278, 512
  %vm343 = vcmp.lt.s32.totalorder %v279, 512
  %vm344 = vcmp.lt.s32.totalorder %v280, 512
  %vm345 = vcmp.lt.s32.totalorder %v281, 512
  %vm346 = vcmp.lt.s32.totalorder %v282, 512
  %vm347 = vcmp.lt.s32.totalorder %v283, 512
  %vm348 = vcmp.lt.s32.totalorder %v284, 512
  %v349 = vsel %vm285, %v90, 0.0
  %v350 = vsel %vm286, %v91, 0.0
  %v351 = vsel %vm287, %v92, 0.0
  %v352 = vsel %vm288, %v93, 0.0
  %v353 = vsel %vm289, %v94, 0.0
  %v354 = vsel %vm290, %v95, 0.0
  %v355 = vsel %vm291, %v96, 0.0
  %v356 = vsel %vm292, %v97, 0.0
  %v357 = vsel %vm293, %v98, 0.0
  %v358 = vsel %vm294, %v99, 0.0
  %v359 = vsel %vm295, %v100, 0.0
  %v360 = vsel %vm296, %v101, 0.0
  %v361 = vsel %vm297, %v102, 0.0
  %v362 = vsel %vm298, %v103, 0.0
  %v363 = vsel %vm299, %v104, 0.0
  %v364 = vsel %vm300, %v105, 0.0
  %v365 = vsel %vm301, %v106, 0.0
  %v366 = vsel %vm302, %v107, 0.0
  %v367 = vsel %vm303, %v108, 0.0
  %v368 = vsel %vm304, %v109, 0.0
  %v369 = vsel %vm305, %v110, 0.0
  %v370 = vsel %vm306, %v111, 0.0
  %v371 = vsel %vm307, %v112, 0.0
  %v372 = vsel %vm308, %v113, 0.0
  %v373 = vsel %vm309, %v114, 0.0
  %v374 = vsel %vm310, %v115, 0.0
  %v375 = vsel %vm311, %v116, 0.0
  %v376 = vsel %vm312, %v117, 0.0
  %v377 = vsel %vm313, %v118, 0.0
  %v378 = vsel %vm314, %v119, 0.0
  %v379 = vsel %vm315, %v120, 0.0
  %v380 = vsel %vm316, %v121, 0.0
  %v381 = vsel %vm317, %v122, 0.0
  %v382 = vsel %vm318, %v123, 0.0
  %v383 = vsel %vm319, %v124, 0.0
  %v384 = vsel %vm320, %v125, 0.0
  %v385 = vsel %vm321, %v126, 0.0
  %v386 = vsel %vm322, %v127, 0.0
  %v387 = vsel %vm323, %v128, 0.0
  %v388 = vsel %vm324, %v129, 0.0
  %v389 = vsel %vm325, %v130, 0.0
  %v390 = vsel %vm326, %v131, 0.0
  %v391 = vsel %vm327, %v132, 0.0
  %v392 = vsel %vm328, %v133, 0.0
  %v393 = vsel %vm329, %v134, 0.0
  %v394 = vsel %vm330, %v135, 0.0
  %v395 = vsel %vm331, %v136, 0.0
  %v396 = vsel %vm332, %v137, 0.0
  %v397 = vsel %vm333, %v138, 0.0
  %v398 = vsel %vm334, %v139, 0.0
  %v399 = vsel %vm335, %v140, 0.0
  %v400 = vsel %vm336, %v141, 0.0
  %v401 = vsel %vm337, %v142, 0.0
  %v402 = vsel %vm338, %v143, 0.0
  %v403 = vsel %vm339, %v144, 0.0
  %v404 = vsel %vm340, %v145, 0.0
  %v405 = vsel %vm341, %v146, 0.0
  %v406 = vsel %vm342, %v147, 0.0
  %v407 = vsel %vm343, %v148, 0.0
  %v408 = vsel %vm344, %v149, 0.0
  %v409 = vsel %vm345, %v150, 0.0
  %v410 = vsel %vm346, %v151, 0.0
  %v411 = vsel %vm347, %v152, 0.0
  %v412 = vsel %vm348, %v153, 0.0
  %v413 = vadd.f32 %v349, %v350
  %v414 = vadd.f32 %v413, %v351
  %v415 = vadd.f32 %v414, %v352
  %v416 = vadd.f32 %v415, %v353
  %v417 = vadd.f32 %v416, %v354
  %v418 = vadd.f32 %v417, %v355
  %v419 = vadd.f32 %v418, %v356
  %v420 = vadd.f32 %v419, %v357
  %v421 = vadd.f32 %v420, %v358
  %v422 = vadd.f32 %v421, %v359
  %v423 = vadd.f32 %v422, %v360
  %v424 = vadd.f32 %v423, %v361
  %v425 = vadd.f32 %v424, %v362
  %v426 = vadd.f32 %v425, %v363
  %v427 = vadd.f32 %v426, %v364
  %v428 = vadd.f32 %v427, %v365
  %v429 = vadd.f32 %v428, %v366
  %v430 = vadd.f32 %v429, %v367
  %v431 = vadd.f32 %v430, %v368
  %v432 = vadd.f32 %v431, %v369
  %v433 = vadd.f32 %v432, %v370
  %v434 = vadd.f32 %v433, %v371
  %v435 = vadd.f32 %v434, %v372
  %v436 = vadd.f32 %v435, %v373
  %v437 = vadd.f32 %v436, %v374
  %v438 = vadd.f32 %v437, %v375
  %v439 = vadd.f32 %v438, %v376
  %v440 = vadd.f32 %v439, %v377
  %v441 = vadd.f32 %v440, %v378
  %v442 = vadd.f32 %v441, %v379
  %v443 = vadd.f32 %v442, %v380
  %v444 = vadd.f32 %v443, %v381
  %v445 = vadd.f32 %v444, %v382
  %v446 = vadd.f32 %v445, %v383
  %v447 = vadd.f32 %v446, %v384
  %v448 = vadd.f32 %v447, %v385
  %v449 = vadd.f32 %v448, %v386
  %v450 = vadd.f32 %v449, %v387
  %v451 = vadd.f32 %v450, %v388
  %v452 = vadd.f32 %v451, %v389
  %v453 = vadd.f32 %v452, %v390
  %v454 = vadd.f32 %v453, %v391
  %v455 = vadd.f32 %v454, %v392
  %v456 = vadd.f32 %v455, %v393
  %v457 = vadd.f32 %v456, %v394
  %v458 = vadd.f32 %v457, %v395
  %v459 = vadd.f32 %v458, %v396
  %v460 = vadd.f32 %v459, %v397
  %v461 = vadd.f32 %v460, %v398
  %v462 = vadd.f32 %v461, %v399
  %v463 = vadd.f32 %v462, %v400
  %v464 = vadd.f32 %v463, %v401
  %v465 = vadd.f32 %v464, %v402
  %v466 = vadd.f32 %v465, %v403
  %v467 = vadd.f32 %v466, %v404
  %v468 = vadd.f32 %v467, %v405
  %v469 = vadd.f32 %v468, %v406
  %v470 = vadd.f32 %v469, %v407
  %v471 = vadd.f32 %v470, %v408
  %v472 = vadd.f32 %v471, %v409
  %v473 = vadd.f32 %v472, %v410
  %v474 = vadd.f32 %v473, %v411
  %v475 = vadd.f32 %v474, %v412
  %v476 = vrot.slane %v475, 4
  %v477 = vadd.f32 %v475, %v476
  %v478 = vrot.slane %v477, 2
  %v479 = vadd.f32 %v477, %v478
  %v480 = vrot.slane %v479, 1
  %v481 = vadd.f32 %v479, %v480
  %v482 = vmul.f32 %v349, %v349
  %v483 = vmul.f32 %v350, %v350
  %v484 = vmul.f32 %v351, %v351
  %v485 = vmul.f32 %v352, %v352
  %v486 = vmul.f32 %v353, %v353
  %v487 = vmul.f32 %v354, %v354
  %v488 = vmul.f32 %v355, %v355
  %v489 = vmul.f32 %v356, %v356
  %v490 = vmul.f32 %v357, %v357
  %v491 = vmul.f32 %v358, %v358
  %v492 = vmul.f32 %v359, %v359
  %v493 = vmul.f32 %v360, %v360
  %v494 = vmul.f32 %v361, %v361
  %v495 = vmul.f32 %v362, %v362
  %v496 = vmul.f32 %v363, %v363
  %v497 = vmul.f32 %v364, %v364
  %v498 = vmul.f32 %v365, %v365
  %v499 = vmul.f32 %v366, %v366
  %v500 = vmul.f32 %v367, %v367
  %v501 = vmul.f32 %v368, %v368
  %v502 = vmul.f32 %v369, %v369
  %v503 = vmul.f32 %v370, %v370
  %v504 = vmul.f32 %v371, %v371
  %v505 = vmul.f32 %v372, %v372
  %v506 = vmul.f32 %v373, %v373
  %v507 = vmul.f32 %v374, %v374
  %v508 = vmul.f32 %v375, %v375
  %v509 = vmul.f32 %v376, %v376
  %v510 = vmul.f32 %v377, %v377
  %v511 = vmul.f32 %v378, %v378
  %v512 = vmul.f32 %v379, %v379
  %v513 = vmul.f32 %v380, %v380
  %v514 = vmul.f32 %v381, %v381
  %v515 = vmul.f32 %v382, %v382
  %v516 = vmul.f32 %v383, %v383
  %v517 = vmul.f32 %v384, %v384
  %v518 = vmul.f32 %v385, %v385
  %v519 = vmul.f32 %v386, %v386
  %v520 = vmul.f32 %v387, %v387
  %v521 = vmul.f32 %v388, %v388
  %v522 = vmul.f32 %v389, %v389
  %v523 = vmul.f32 %v390, %v390
  %v524 = vmul.f32 %v391, %v391
  %v525 = vmul.f32 %v392, %v392
  %v526 = vmul.f32 %v393, %v393
  %v527 = vmul.f32 %v394, %v394
  %v528 = vmul.f32 %v395, %v395
  %v529 = vmul.f32 %v396, %v396
  %v530 = vmul.f32 %v397, %v397
  %v531 = vmul.f32 %v398, %v398
  %v532 = vmul.f32 %v399, %v399
  %v533 = vmul.f32 %v400, %v400
  %v534 = vmul.f32 %v401, %v401
  %v535 = vmul.f32 %v402, %v402
  %v536 = vmul.f32 %v403, %v403
  %v537 = vmul.f32 %v404, %v404
  %v538 = vmul.f32 %v405, %v405
  %v539 = vmul.f32 %v406, %v406
  %v540 = vmul.f32 %v407, %v407
  %v541 = vmul.f32 %v408, %v408
  %v542 = vmul.f32 %v409, %v409
  %v543 = vmul.f32 %v410, %v410
  %v544 = vmul.f32 %v411, %v411
  %v545 = vmul.f32 %v412, %v412
  %v546 = vadd.f32 %v482, %v483
  %v547 = vadd.f32 %v546, %v484
  %v548 = vadd.f32 %v547, %v485
  %v549 = vadd.f32 %v548, %v486
  %v550 = vadd.f32 %v549, %v487
  %v551 = vadd.f32 %v550, %v488
  %v552 = vadd.f32 %v551, %v489
  %v553 = vadd.f32 %v552, %v490
  %v554 = vadd.f32 %v553, %v491
  %v555 = vadd.f32 %v554, %v492
  %v556 = vadd.f32 %v555, %v493
  %v557 = vadd.f32 %v556, %v494
  %v558 = vadd.f32 %v557, %v495
  %v559 = vadd.f32 %v558, %v496
  %v560 = vadd.f32 %v559, %v497
  %v561 = vadd.f32 %v560, %v498
  %v562 = vadd.f32 %v561, %v499
  %v563 = vadd.f32 %v562, %v500
  %v564 = vadd.f32 %v563, %v501
  %v565 = vadd.f32 %v564, %v502
  %v566 = vadd.f32 %v565, %v503
  %v567 = vadd.f32 %v566, %v504
  %v568 = vadd.f32 %v567, %v505
  %v569 = vadd.f32 %v568, %v506
  %v570 = vadd.f32 %v569, %v507
  %v571 = vadd.f32 %v570, %v508
  %v572 = vadd.f32 %v571, %v509
  %v573 = vadd.f32 %v572, %v510
  %v574 = vadd.f32 %v573, %v511
  %v575 = vadd.f32 %v574, %v512
  %v576 = vadd.f32 %v575, %v513
  %v577 = vadd.f32 %v576, %v514
  %v578 = vadd.f32 %v577, %v515
  %v579 = vadd.f32 %v578, %v516
  %v580 = vadd.f32 %v579, %v517
  %v581 = vadd.f32 %v580, %v518
  %v582 = vadd.f32 %v581, %v519
  %v583 = vadd.f32 %v582, %v520
  %v584 = vadd.f32 %v583, %v521
  %v585 = vadd.f32 %v584, %v522
  %v586 = vadd.f32 %v585, %v523
  %v587 = vadd.f32 %v586, %v524
  %v588 = vadd.f32 %v587, %v525
  %v589 = vadd.f32 %v588, %v526
  %v590 = vadd.f32 %v589, %v527
  %v591 = vadd.f32 %v590, %v528
  %v592 = vadd.f32 %v591, %v529
  %v593 = vadd.f32 %v592, %v530
  %v594 = vadd.f32 %v593, %v531
  %v595 = vadd.f32 %v594, %v532
  %v596 = vadd.f32 %v595, %v533
  %v597 = vadd.f32 %v596, %v534
  %v598 = vadd.f32 %v597, %v535
  %v599 = vadd.f32 %v598, %v536
  %v600 = vadd.f32 %v599, %v537
  %v601 = vadd.f32 %v600, %v538
  %v602 = vadd.f32 %v601, %v539
  %v603 = vadd.f32 %v602, %v540
  %v604 = vadd.f32 %v603, %v541
  %v605 = vadd.f32 %v604, %v542
  %v606 = vadd.f32 %v605, %v543
  %v607 = vadd.f32 %v606, %v544
  %v608 = vadd.f32 %v607, %v545
  %v609 = vrot.slane %v608, 4
  %v610 = vadd.f32 %v608, %v609
  %v611 = vrot.slane %v610, 2
  %v612 = vadd.f32 %v610, %v611
  %v613 = vrot.slane %v612, 1
  %v614 = vadd.f32 %v612, %v613
  %v615 = vld [vmem:[%s2] sm:$0xff]
  %v616 = vadd.f32 %v615, %v481
  %617 = vst [vmem:[%s2] sm:$0xff] %v616
  %v618 = vld [vmem:[%s3] sm:$0xff]
  %v619 = vadd.f32 %v618, %v614
  %620 = vst [vmem:[%s3] sm:$0xff] %v619
  // Predicated region
  $region14: #{generator_forward.21} parent=0 // pred_check
    _
  $region15: #{generator_forward.21} parent=0 // pred_check_branch
    %622 = sbr.rel (0) target = $region17
  $region16: #{generator_forward.21} parent=0 // pred_region
    _
  $region17: #{generator_forward.21} parent=0 // pred_fallthru
    _
  // Predicated region
  $region18: #{generator_forward.21} parent=0 // pred_check
    _
  $region19: #{generator_forward.21} parent=0 // pred_check_branch
    %624 = sbr.rel (0) target = $region21
  $region20: #{generator_forward.21} parent=0 // pred_region
    _
  $region21: #{generator_forward.21} parent=0 // pred_fallthru
    _
  // Predicated region
  $region22: #{generator_forward.21} parent=0 // pred_check
    _
  $region23: #{generator_forward.21} parent=0 // pred_check_branch
    %626 = sbr.rel (0) target = $region25
  $region24: #{generator_forward.21} parent=0 // pred_region
    _
  $region25: #{generator_forward.21} parent=0 // pred_fallthru
    _
  // Predicated region
  $region26: #{generator_forward.21} parent=0 // pred_check
    _
  $region27: #{generator_forward.21} parent=0 // pred_check_branch
    %628 = sbr.rel (0) target = $region29
  $region28: #{generator_forward.21} parent=0 // pred_region
    _
  $region29: #{generator_forward.21} parent=0 // pred_fallthru
    _

// kernel: generator_forward.23
$region0: #{generator_forward.23}
  #allocation0 [shape = 'u32[]', space=smem, size = 0x4, offset = 0x4, fixed_abs, tag = 'smem constant byte address 0x4 - core index']
  #allocation1 [shape = 'u32[144,128]{1,0:T(1,128)}', space=vmem, size = 0x12000, scoped, tag = 'internal scratch']
  %s0 = inlined_call_operand.vmem [shape: bf16[512,128], index: 0, kind: input, shape index: {}]
  %s1 = inlined_call_operand.vmem [shape: bf16[128,1024], index: 1, kind: input, shape index: {}]
  %s2 = inlined_call_operand.vmem [shape: f32[512,1024], index: 2, kind: output, shape index: {}]
  %s3 = sld [smem:[#allocation0]]
  $region83: #{generator_forward.23} parent=0
    _
  %s5 = ssub.s32 1, %s3
  %s6 = scalar_select 0, %s5, %s3
  $region1: #{generator_forward.23} parent=0
    #allocation2 [shape = 'u8[262144]{0}', space=vmem, size = 0x40000, scoped, tag = 'input window, operand 1']
    #allocation3 [shape = 'u8[1048576]{0}', space=vmem, size = 0x100000, scoped, tag = 'output window, operand 0']
    loop: start=0, step=1, limit=6
    $region2: #{generator_forward.23} parent=1 // loop_pre_header
      _
    $region3: #{generator_forward.23} parent=1 // loop_header
      %s8 = sphi 0, %s12
      %p9 = scmp.ge.s32.totalorder %s8, 6
      %s15 = sphi 0, %s27
      %s16 = sphi 0, %s23
      %s17 = sphi 0, %s15
      %s18 = sphi 0, %s16
      %s19 = sphi 0, %s17
      %s20 = sphi 0, %s18
      %s30 = sphi 0, %s32
      %s33 = sphi 0, %s30
      %s34 = sphi 0, %s33
      %s50 = sphi 0, %s34
      %s56 = sphi 0, %s58
      %s59 = sphi 0, %s56
      %s60 = sphi 0, %s59
      %s76 = sphi 0, %s60
      %s84 = sphi 0, %s86
      %s87 = sphi 0, %s84
      %s88 = sphi 0, %s87
      %s104 = sphi 0, %s88
    $region4: #{generator_forward.23} parent=1 // loop_header_branch
      %11 = sbr.rel (%p9) target = $region8
    $region5: #{generator_forward.23} parent=1 // loop_body
      %s13 = ssub.s32 %s8, 1
      %s14 = ssub.s32 %s8, 2
      %s21 = sadd.s32 1, %s16
      %p22 = scmp.ge.s32.totalorder %s21, 2
      %s23 = scalar_select %p22, 0, %s21
      %s24 = sadd.s32 1, %s15
      %s25 = scalar_select %p22, %s24, %s15
      %p26 = scmp.ge.s32.totalorder %s25, 2
      %s27 = scalar_select %p26, 0, %s25
      %s28 = ssub.s32 %s15, %s27
      %p29 = scmp.eq.s32.totalorder %s28, 0
      %s31 = sadd.s32 %s30, 1
      %s32 = scalar_select %p29, %s30, %s31
      %p35 = pneg %p29
      %p36 = scmp.eq.s32.totalorder %s8, 3
      %p37 = por %p35, %p36
      %p38 = scmp.ne.s32.totalorder %s30, %s33
      %p39 = scmp.eq.s32.totalorder %s8, 0
      %p40 = por %p38, %p39
      %p41 = scmp.ne.s32.totalorder %s30, %s33
      %p42 = scmp.eq.s32.totalorder %s13, 3
      %p43 = por %p41, %p42
      %p44 = scmp.ne.s32.totalorder %s33, %s34
      %p45 = scmp.eq.s32.totalorder %s13, 0
      %p46 = por %p44, %p45
      %p47 = scmp.ne.s32.totalorder %s33, %s34
      %p48 = scmp.eq.s32.totalorder %s14, 3
      %p49 = por %p47, %p48
      %p51 = scmp.ne.s32.totalorder %s34, %s50
      %p52 = scmp.eq.s32.totalorder %s14, 0
      %p53 = por %p51, %p52
      %s54 = ssub.s32 %s16, %s23
      %p55 = scmp.eq.s32.totalorder %s54, 0
      %s57 = sadd.s32 %s56, 1
      %s58 = scalar_select %p55, %s56, %s57
      %p61 = pneg %p55
      %p62 = scmp.eq.s32.totalorder %s8, 3
      %p63 = por %p61, %p62
      %p64 = scmp.ne.s32.totalorder %s56, %s59
      %p65 = scmp.eq.s32.totalorder %s8, 0
      %p66 = por %p64, %p65
      %p67 = scmp.ne.s32.totalorder %s56, %s59
      %p68 = scmp.eq.s32.totalorder %s13, 3
      %p69 = por %p67, %p68
      %p70 = scmp.ne.s32.totalorder %s59, %s60
      %p71 = scmp.eq.s32.totalorder %s13, 0
      %p72 = por %p70, %p71
      %p73 = scmp.ne.s32.totalorder %s59, %s60
      %p74 = scmp.eq.s32.totalorder %s14, 3
      %p75 = por %p73, %p74
      %p77 = scmp.ne.s32.totalorder %s60, %s76
      %p78 = scmp.eq.s32.totalorder %s14, 0
      %p79 = por %p77, %p78
      %s80 = ssub.s32 %s15, %s27
      %s81 = ssub.s32 %s16, %s23
      %s82 = sor.u32 %s80, %s81
      %p83 = scmp.eq.s32.totalorder %s82, 0
      %s85 = sadd.s32 %s84, 1
      %s86 = scalar_select %p83, %s84, %s85
      %p89 = pneg %p83
      %p90 = scmp.eq.s32.totalorder %s8, 3
      %p91 = por %p89, %p90
      %p92 = scmp.ne.s32.totalorder %s84, %s87
      %p93 = scmp.eq.s32.totalorder %s8, 0
      %p94 = por %p92, %p93
      %p95 = scmp.ne.s32.totalorder %s84, %s87
      %p96 = scmp.eq.s32.totalorder %s13, 3
      %p97 = por %p95, %p96
      %p98 = scmp.ne.s32.totalorder %s87, %s88
      %p99 = scmp.eq.s32.totalorder %s13, 0
      %p100 = por %p98, %p99
      %p101 = scmp.ne.s32.totalorder %s87, %s88
      %p102 = scmp.eq.s32.totalorder %s14, 3
      %p103 = por %p101, %p102
      %p105 = scmp.ne.s32.totalorder %s88, %s104
      %p106 = scmp.eq.s32.totalorder %s14, 0
      %p107 = por %p105, %p106
      %p108 = scmp.le.s32.totalorder 1, %s8
      %p109 = scmp.lt.s32.totalorder %s8, 5
      %p110 = pnand %p108, %p109
      %p111 = pneg %p110
      // Predicated region
      $region9: #{generator_forward.23} parent=5 // pred_check
        _
      $region10: #{generator_forward.23} parent=5 // pred_check_branch
        %113 = sbr.rel (%p110) target = $region12
      $region11: #{generator_forward.23} parent=5 // pred_region
        %s114 = ssub.s32 %s8, 1
      $region12: #{generator_forward.23} parent=5 // pred_fallthru
        _
      %p115 = scmp.lt.s32.totalorder %s8, 4
      // Predicated region
      $region13: #{generator_forward.23} parent=5 // pred_check
        %p116 = pneg %p115
      $region14: #{generator_forward.23} parent=5 // pred_check_branch
        %118 = sbr.rel (%p116) target = $region16
      $region15: #{generator_forward.23} parent=5 // pred_region
        // Predicated region
        $region17: #{generator_forward.23} parent=15 // pred_check
          %p119 = pneg %p40
        $region18: #{generator_forward.23} parent=15 // pred_check_branch
          %121 = sbr.rel (%p119) target = $region20
        $region19: #{generator_forward.23} parent=15 // pred_region
          %s122 = smul.u32 32, %s15
          %p123 = scmp.lt.s32.totalorder %s122, 63
          %s124 = scalar_select %p123, %s122, 63
          %s125 = smul.addr %s124, 4
          %s126 = scalar_lea.vmem %s0, %s125
          %s127 = smul.u32 32, %s15
        $region20: #{generator_forward.23} parent=15 // pred_fallthru
          _
        // Predicated region
        $region21: #{generator_forward.23} parent=15 // pred_check
          %p128 = pneg %p66
        $region22: #{generator_forward.23} parent=15 // pred_check_branch
          %130 = sbr.rel (%p128) target = $region24
        $region23: #{generator_forward.23} parent=15 // pred_region
          %s131 = sand.u32 %s56, 1
          %s132 = sand.u32 %s56, 1
          %s133 = smul.addr %s132, 256
          %s134 = scalar_lea.vmem [#allocation2], %s133
          %s135 = smul.u32 4, %s16
          %s136 = smul.addr %s135, 4
          %s137 = scalar_lea.vmem %s1, %s136
          // Predicated region
          $region25: #{generator_forward.23} parent=23 // pred_check
            _
          $region26: #{generator_forward.23} parent=23 // pred_check_branch
            %139 = sbr.rel (0) target = $region28
          $region27: #{generator_forward.23} parent=23 // pred_region
            // Predicated region
            $region29: #{generator_forward.23} parent=27 // pred_check
              _
            $region30: #{generator_forward.23} parent=27 // pred_check_branch
              %141 = sbr.rel (0) target = $region32
            $region31: #{generator_forward.23} parent=27 // pred_region
              loop: start=0, step=1, limit=1
              $region33: #{generator_forward.23} parent=31 // loop_pre_header
                _
              $region34: #{generator_forward.23} parent=31 // loop_header
                %s143 = sphi 0, %s147
                %p144 = scmp.ge.s32.totalorder %s143, 1
                %s148 = sphi %s137, %s137
                %s149 = sphi %s134, %s134
              $region35: #{generator_forward.23} parent=31 // loop_header_branch
                %146 = sbr.rel (%p144) target = $region39
              $region36: #{generator_forward.23} parent=31 // loop_body
                %v150 = vld [vmem:[%s148] sm:$0xff]
                %151 = vst [vmem:[%s149] sm:$0xff] %v150
                %v152 = vld [vmem:[%s148 + $0x8] sm:$0xff]
                %153 = vst [vmem:[%s149 + $0x8] sm:$0xff] %v152
                %v154 = vld [vmem:[%s148 + $0x20] sm:$0xff]
                %155 = vst [vmem:[%s149 + $0x10] sm:$0xff] %v154
                %v156 = vld [vmem:[%s148 + $0x28] sm:$0xff]
                %157 = vst [vmem:[%s149 + $0x18] sm:$0xff] %v156
                %v158 = vld [vmem:[%s148 + $0x40] sm:$0xff]
                %159 = vst [vmem:[%s149 + $0x20] sm:$0xff] %v158
                %v160 = vld [vmem:[%s148 + $0x48] sm:$0xff]
                %161 = vst [vmem:[%s149 + $0x28] sm:$0xff] %v160
                %v162 = vld [vmem:[%s148 + $0x60] sm:$0xff]
                %163 = vst [vmem:[%s149 + $0x30] sm:$0xff] %v162
                %v164 = vld [vmem:[%s148 + $0x68] sm:$0xff]
                %165 = vst [vmem:[%s149 + $0x38] sm:$0xff] %v164
                %v166 = vld [vmem:[%s148 + $0x80] sm:$0xff]
                %167 = vst [vmem:[%s149 + $0x40] sm:$0xff] %v166
                %v168 = vld [vmem:[%s148 + $0x88] sm:$0xff]
                %169 = vst [vmem:[%s149 + $0x48] sm:$0xff] %v168
                %v170 = vld [vmem:[%s148 + $0xa0] sm:$0xff]
                %171 = vst [vmem:[%s149 + $0x50] sm:$0xff] %v170
                %v172 = vld [vmem:[%s148 + $0xa8] sm:$0xff]
                %173 = vst [vmem:[%s149 + $0x58] sm:$0xff] %v172
                %v174 = vld [vmem:[%s148 + $0xc0] sm:$0xff]
                %175 = vst [vmem:[%s149 + $0x60] sm:$0xff] %v174
                %v176 = vld [vmem:[%s148 + $0xc8] sm:$0xff]
                %177 = vst [vmem:[%s149 + $0x68] sm:$0xff] %v176
                %v178 = vld [vmem:[%s148 + $0xe0] sm:$0xff]
                %179 = vst [vmem:[%s149 + $0x70] sm:$0xff] %v178
                %v180 = vld [vmem:[%s148 + $0xe8] sm:$0xff]
                %181 = vst [vmem:[%s149 + $0x78] sm:$0xff] %v180
                %v182 = vld [vmem:[%s148 + $0x100] sm:$0xff]
                %183 = vst [vmem:[%s149 + $0x80] sm:$0xff] %v182
                %v184 = vld [vmem:[%s148 + $0x108] sm:$0xff]
                %185 = vst [vmem:[%s149 + $0x88] sm:$0xff] %v184
                %v186 = vld [vmem:[%s148 + $0x120] sm:$0xff]
                %187 = vst [vmem:[%s149 + $0x90] sm:$0xff] %v186
                %v188 = vld [vmem:[%s148 + $0x128] sm:$0xff]
                %189 = vst [vmem:[%s149 + $0x98] sm:$0xff] %v188
                %v190 = vld [vmem:[%s148 + $0x140] sm:$0xff]
                %191 = vst [vmem:[%s149 + $0xa0] sm:$0xff] %v190
                %v192 = vld [vmem:[%s148 + $0x148] sm:$0xff]
                %193 = vst [vmem:[%s149 + $0xa8] sm:$0xff] %v192
                %v194 = vld [vmem:[%s148 + $0x160] sm:$0xff]
                %195 = vst [vmem:[%s149 + $0xb0] sm:$0xff] %v194
                %v196 = vld [vmem:[%s148 + $0x168] sm:$0xff]
                %197 = vst [vmem:[%s149 + $0xb8] sm:$0xff] %v196
                %v198 = vld [vmem:[%s148 + $0x180] sm:$0xff]
                %199 = vst [vmem:[%s149 + $0xc0] sm:$0xff] %v198
                %v200 = vld [vmem:[%s148 + $0x188] sm:$0xff]
                %201 = vst [vmem:[%s149 + $0xc8] sm:$0xff] %v200
                %v202 = vld [vmem:[%s148 + $0x1a0] sm:$0xff]
                %203 = vst [vmem:[%s149 + $0xd0] sm:$0xff] %v202
                %v204 = vld [vmem:[%s148 + $0x1a8] sm:$0xff]
                %205 = vst [vmem:[%s149 + $0xd8] sm:$0xff] %v204
                %v206 = vld [vmem:[%s148 + $0x1c0] sm:$0xff]
                %207 = vst [vmem:[%s149 + $0xe0] sm:$0xff] %v206
                %v208 = vld [vmem:[%s148 + $0x1c8] sm:$0xff]
                %209 = vst [vmem:[%s149 + $0xe8] sm:$0xff] %v208
                %v210 = vld [vmem:[%s148 + $0x1e0] sm:$0xff]
                %211 = vst [vmem:[%s149 + $0xf0] sm:$0xff] %v210
                %v212 = vld [vmem:[%s148 + $0x1e8] sm:$0xff]
                %213 = vst [vmem:[%s149 + $0xf8] sm:$0xff] %v212
              $region37: #{generator_forward.23} parent=31 // loop_footer
                %s147 = sadd.s32 1, %s143
              $region38: #{generator_forward.23} parent=31 // loop_footer_branch
                %142 = sbr.rel target = $region34
              $region39: #{generator_forward.23} parent=31 // loop_exit
                _
            $region32: #{generator_forward.23} parent=27 // pred_fallthru
              _
            // Predicated region
            $region40: #{generator_forward.23} parent=27 // pred_check
              _
            $region41: #{generator_forward.23} parent=27 // pred_check_branch
              %215 = sbr.rel target = $region43
            $region42: #{generator_forward.23} parent=27 // pred_region
              _
            $region43: #{generator_forward.23} parent=27 // pred_fallthru
              _
          $region28: #{generator_forward.23} parent=23 // pred_fallthru
            _
          %216 = vnop
        $region24: #{generator_forward.23} parent=15 // pred_fallthru
          _
      $region16: #{generator_forward.23} parent=5 // pred_fallthru
        _
      %p217 = scmp.le.s32.totalorder 1, %s8
      %p218 = scmp.lt.s32.totalorder %s8, 5
      %p219 = pnand %p217, %p218
      %p220 = pneg %p219
      // Predicated region
      $region44: #{generator_forward.23} parent=5 // pred_check
        _
      $region45: #{generator_forward.23} parent=5 // pred_check_branch
        %222 = sbr.rel (%p219) target = $region47
      $region46: #{generator_forward.23} parent=5 // pred_region
        %s223 = ssub.s32 %s8, 1
        %s224 = sand.u32 %s59, 1
        %s225 = sand.u32 %s59, 1
        %s226 = smul.addr %s225, 256
        %s227 = scalar_lea.vmem [#allocation2], %s226
        // Predicated region
        $region48: #{generator_forward.23} parent=46 // pred_check
          %p228 = pneg %p72
        $region49: #{generator_forward.23} parent=46 // pred_check_branch
          %230 = sbr.rel (%p228) target = $region51
        $region50: #{generator_forward.23} parent=46 // pred_region
          _
        $region51: #{generator_forward.23} parent=46 // pred_fallthru
          _
        %s231 = smul.u32 32, %s17
        %p232 = scmp.lt.s32.totalorder %s231, 63
        %s233 = scalar_select %p232, %s231, 63
        %s234 = smul.addr %s233, 4
        %s235 = scalar_lea.vmem %s0, %s234
        %p236 = pneg %p46
        %p237 = pneg %p43
        %s238 = sand.u32 %s59, 1
        %s239 = sand.u32 %s59, 1
        %s240 = smul.addr %s239, 256
        %s241 = scalar_lea.vmem [#allocation2], %s240
        %p242 = pneg %p72
        %p243 = pneg %p69
        %p244 = pneg %p100
        %p245 = pneg %p97
        %s246 = sand.u32 %s87, 1
        %s247 = sand.u32 %s87, 1
        %s248 = smul.addr %s247, 1024
        %s249 = scalar_lea.vmem [#allocation3], %s248
        %s250 = smul.u32 32, %s17
        %p251 = scmp.lt.s32.totalorder %s250, 63
        %s252 = scalar_select %p251, %s250, 63
        %s253 = smul.addr %s252, 4
        %s254 = scalar_lea.vmem %s0, %s253
        %s255 = smul.u32 32, %s17
        %s256 = smul.u32 4, %s18
        %s257 = smul.u32 32, %s17
        %s258 = smul.u32 4, %s18
        %v260 = vld [vmem:[%s254] sm:$0xf]
        %v261 = vld [vmem:[%s254 + $0x4] sm:$0xf]
        %v262 = vld [vmem:[%s254 + $0x8] sm:$0xf]
        %v263 = vld [vmem:[%s254 + $0xc] sm:$0xf]
        %v264 = vld [vmem:[%s254 + $0x10] sm:$0xf]
        %v265 = vld [vmem:[%s254 + $0x14] sm:$0xf]
        %v266 = vld [vmem:[%s254 + $0x18] sm:$0xf]
        %v267 = vld [vmem:[%s254 + $0x1c] sm:$0xf]
        %v268 = vld [vmem:[%s254 + $0x20] sm:$0xf]
        %v269 = vld [vmem:[%s254 + $0x24] sm:$0xf]
        %v270 = vld [vmem:[%s254 + $0x28] sm:$0xf]
        %v271 = vld [vmem:[%s254 + $0x2c] sm:$0xf]
        %v272 = vld [vmem:[%s254 + $0x30] sm:$0xf]
        %v273 = vld [vmem:[%s254 + $0x34] sm:$0xf]
        %v274 = vld [vmem:[%s254 + $0x38] sm:$0xf]
        %v275 = vld [vmem:[%s254 + $0x3c] sm:$0xf]
        %v276 = vld [vmem:[%s254 + $0x40] sm:$0xf]
        %v277 = vld [vmem:[%s254 + $0x44] sm:$0xf]
        %v278 = vld [vmem:[%s254 + $0x48] sm:$0xf]
        %v279 = vld [vmem:[%s254 + $0x4c] sm:$0xf]
        %v280 = vld [vmem:[%s254 + $0x50] sm:$0xf]
        %v281 = vld [vmem:[%s254 + $0x54] sm:$0xf]
        %v282 = vld [vmem:[%s254 + $0x58] sm:$0xf]
        %v283 = vld [vmem:[%s254 + $0x5c] sm:$0xf]
        %v284 = vld [vmem:[%s254 + $0x60] sm:$0xf]
        %v285 = vld [vmem:[%s254 + $0x64] sm:$0xf]
        %v286 = vld [vmem:[%s254 + $0x68] sm:$0xf]
        %v287 = vld [vmem:[%s254 + $0x6c] sm:$0xf]
        %v288 = vld [vmem:[%s254 + $0x70] sm:$0xf]
        %v289 = vld [vmem:[%s254 + $0x74] sm:$0xf]
        %v290 = vld [vmem:[%s254 + $0x78] sm:$0xf]
        %v291 = vld [vmem:[%s254 + $0x7c] sm:$0xf]
        %v292 = vld [vmem:[%s227] sm:$0xff]
        %v293 = vld [vmem:[%s227 + $0x8] sm:$0xff]
        %v294 = vld [vmem:[%s227 + $0x10] sm:$0xff]
        %v295 = vld [vmem:[%s227 + $0x18] sm:$0xff]
        %v296 = vld [vmem:[%s227 + $0x20] sm:$0xff]
        %v297 = vld [vmem:[%s227 + $0x28] sm:$0xff]
        %v298 = vld [vmem:[%s227 + $0x30] sm:$0xff]
        %v299 = vld [vmem:[%s227 + $0x38] sm:$0xff]
        %v300 = vld [vmem:[%s227 + $0x40] sm:$0xff]
        %v301 = vld [vmem:[%s227 + $0x48] sm:$0xff]
        %v302 = vld [vmem:[%s227 + $0x50] sm:$0xff]
        %v303 = vld [vmem:[%s227 + $0x58] sm:$0xff]
        %v304 = vld [vmem:[%s227 + $0x60] sm:$0xff]
        %v305 = vld [vmem:[%s227 + $0x68] sm:$0xff]
        %v306 = vld [vmem:[%s227 + $0x70] sm:$0xff]
        %v307 = vld [vmem:[%s227 + $0x78] sm:$0xff]
        %v308 = vld [vmem:[%s227 + $0x80] sm:$0xff]
        %v309 = vld [vmem:[%s227 + $0x88] sm:$0xff]
        %v310 = vld [vmem:[%s227 + $0x90] sm:$0xff]
        %v311 = vld [vmem:[%s227 + $0x98] sm:$0xff]
        %v312 = vld [vmem:[%s227 + $0xa0] sm:$0xff]
        %v313 = vld [vmem:[%s227 + $0xa8] sm:$0xff]
        %v314 = vld [vmem:[%s227 + $0xb0] sm:$0xff]
        %v315 = vld [vmem:[%s227 + $0xb8] sm:$0xff]
        %v316 = vld [vmem:[%s227 + $0xc0] sm:$0xff]
        %v317 = vld [vmem:[%s227 + $0xc8] sm:$0xff]
        %v318 = vld [vmem:[%s227 + $0xd0] sm:$0xff]
        %v319 = vld [vmem:[%s227 + $0xd8] sm:$0xff]
        %v320 = vld [vmem:[%s227 + $0xe0] sm:$0xff]
        %v321 = vld [vmem:[%s227 + $0xe8] sm:$0xff]
        %v322 = vld [vmem:[%s227 + $0xf0] sm:$0xff]
        %v323 = vld [vmem:[%s227 + $0xf8] sm:$0xff]
        %v356 = vunpack.c.l.b16 %v260
        %v357 = vunpack.c.l.b16 %v261
        %v358 = vunpack.c.l.b16 %v262
        %v359 = vunpack.c.l.b16 %v263
        %v360 = vunpack.c.l.b16 %v264
        %v361 = vunpack.c.l.b16 %v265
        %v362 = vunpack.c.l.b16 %v266
        %v363 = vunpack.c.l.b16 %v267
        %v364 = vunpack.c.l.b16 %v268
        %v365 = vunpack.c.l.b16 %v269
        %v366 = vunpack.c.l.b16 %v270
        %v367 = vunpack.c.l.b16 %v271
        %v368 = vunpack.c.l.b16 %v272
        %v369 = vunpack.c.l.b16 %v273
        %v370 = vunpack.c.l.b16 %v274
        %v371 = vunpack.c.l.b16 %v275
        %v372 = vunpack.c.l.b16 %v276
        %v373 = vunpack.c.l.b16 %v277
        %v374 = vunpack.c.l.b16 %v278
        %v375 = vunpack.c.l.b16 %v279
        %v376 = vunpack.c.l.b16 %v280
        %v377 = vunpack.c.l.b16 %v281
        %v378 = vunpack.c.l.b16 %v282
        %v379 = vunpack.c.l.b16 %v283
        %v380 = vunpack.c.l.b16 %v284
        %v381 = vunpack.c.l.b16 %v285
        %v382 = vunpack.c.l.b16 %v286
        %v383 = vunpack.c.l.b16 %v287
        %v384 = vunpack.c.l.b16 %v288
        %v385 = vunpack.c.l.b16 %v289
        %v386 = vunpack.c.l.b16 %v290
        %v387 = vunpack.c.l.b16 %v291
        %v388 = vpack.c.b16 %v357, %v356
        %v389 = vpack.c.b16 %v359, %v358
        %v390 = vpack.c.b16 %v361, %v360
        %v391 = vpack.c.b16 %v363, %v362
        %v392 = vpack.c.b16 %v365, %v364
        %v393 = vpack.c.b16 %v367, %v366
        %v394 = vpack.c.b16 %v369, %v368
        %v395 = vpack.c.b16 %v371, %v370
        %v396 = vpack.c.b16 %v373, %v372
        %v397 = vpack.c.b16 %v375, %v374
        %v398 = vpack.c.b16 %v377, %v376
        %v399 = vpack.c.b16 %v379, %v378
        %v400 = vpack.c.b16 %v381, %v380
        %v401 = vpack.c.b16 %v383, %v382
        %v402 = vpack.c.b16 %v385, %v384
        %v403 = vpack.c.b16 %v387, %v386
        %v452 = vunpack.c.l.b16 %v292
        %v453 = vunpack.c.h.b16 %v292
        %v454 = vunpack.c.l.b16 %v293
        %v455 = vunpack.c.h.b16 %v293
        %v456 = vunpack.c.l.b16 %v294
        %v457 = vunpack.c.h.b16 %v294
        %v458 = vunpack.c.l.b16 %v295
        %v459 = vunpack.c.h.b16 %v295
        %v460 = vunpack.c.l.b16 %v296
        %v461 = vunpack.c.h.b16 %v296
        %v462 = vunpack.c.l.b16 %v297
        %v463 = vunpack.c.h.b16 %v297
        %v464 = vunpack.c.l.b16 %v298
        %v465 = vunpack.c.h.b16 %v298
        %v466 = vunpack.c.l.b16 %v299
        %v467 = vunpack.c.h.b16 %v299
        %v468 = vunpack.c.l.b16 %v300
        %v469 = vunpack.c.h.b16 %v300
        %v470 = vunpack.c.l.b16 %v301
        %v471 = vunpack.c.h.b16 %v301
        %v472 = vunpack.c.l.b16 %v302
        %v473 = vunpack.c.h.b16 %v302
        %v474 = vunpack.c.l.b16 %v303
        %v475 = vunpack.c.h.b16 %v303
        %v476 = vunpack.c.l.b16 %v304
        %v477 = vunpack.c.h.b16 %v304
        %v478 = vunpack.c.l.b16 %v305
        %v479 = vunpack.c.h.b16 %v305
        %v480 = vunpack.c.l.b16 %v306
        %v481 = vunpack.c.h.b16 %v306
        %v482 = vunpack.c.l.b16 %v307
        %v483 = vunpack.c.h.b16 %v307
        %v484 = vunpack.c.l.b16 %v308
        %v485 = vunpack.c.h.b16 %v308
        %v486 = vunpack.c.l.b16 %v309
        %v487 = vunpack.c.h.b16 %v309
        %v488 = vunpack.c.l.b16 %v310
        %v489 = vunpack.c.h.b16 %v310
        %v490 = vunpack.c.l.b16 %v311
        %v491 = vunpack.c.h.b16 %v311
        %v492 = vunpack.c.l.b16 %v312
        %v493 = vunpack.c.h.b16 %v312
        %v494 = vunpack.c.l.b16 %v313
        %v495 = vunpack.c.h.b16 %v313
        %v496 = vunpack.c.l.b16 %v314
        %v497 = vunpack.c.h.b16 %v314
        %v498 = vunpack.c.l.b16 %v315
        %v499 = vunpack.c.h.b16 %v315
        %v500 = vunpack.c.l.b16 %v316
        %v501 = vunpack.c.h.b16 %v316
        %v502 = vunpack.c.l.b16 %v317
        %v503 = vunpack.c.h.b16 %v317
        %v504 = vunpack.c.l.b16 %v318
        %v505 = vunpack.c.h.b16 %v318
        %v506 = vunpack.c.l.b16 %v319
        %v507 = vunpack.c.h.b16 %v319
        %v508 = vunpack.c.l.b16 %v320
        %v509 = vunpack.c.h.b16 %v320
        %v510 = vunpack.c.l.b16 %v321
        %v511 = vunpack.c.h.b16 %v321
        %v512 = vunpack.c.l.b16 %v322
        %v513 = vunpack.c.h.b16 %v322
        %v514 = vunpack.c.l.b16 %v323
        %v515 = vunpack.c.h.b16 %v323
        %v516 = vpack.c.b16 %v456, %v452
        %v517 = vpack.c.b16 %v457, %v453
        %v518 = vpack.c.b16 %v458, %v454
        %v519 = vpack.c.b16 %v459, %v455
        %v520 = vpack.c.b16 %v464, %v460
        %v521 = vpack.c.b16 %v465, %v461
        %v522 = vpack.c.b16 %v466, %v462
        %v523 = vpack.c.b16 %v467, %v463
        %v524 = vpack.c.b16 %v472, %v468
        %v525 = vpack.c.b16 %v473, %v469
        %v526 = vpack.c.b16 %v474, %v470
        %v527 = vpack.c.b16 %v475, %v471
        %v528 = vpack.c.b16 %v480, %v476
        %v529 = vpack.c.b16 %v481, %v477
        %v530 = vpack.c.b16 %v482, %v478
        %v531 = vpack.c.b16 %v483, %v479
        %v532 = vpack.c.b16 %v488, %v484
        %v533 = vpack.c.b16 %v489, %v485
        %v534 = vpack.c.b16 %v490, %v486
        %v535 = vpack.c.b16 %v491, %v487
        %v536 = vpack.c.b16 %v496, %v492
        %v537 = vpack.c.b16 %v497, %v493
        %v538 = vpack.c.b16 %v498, %v494
        %v539 = vpack.c.b16 %v499, %v495
        %v540 = vpack.c.b16 %v504, %v500
        %v541 = vpack.c.b16 %v505, %v501
        %v542 = vpack.c.b16 %v506, %v502
        %v543 = vpack.c.b16 %v507, %v503
        %v544 = vpack.c.b16 %v512, %v508
        %v545 = vpack.c.b16 %v513, %v509
        %v546 = vpack.c.b16 %v514, %v510
        %v547 = vpack.c.b16 %v515, %v511
        %580 = vmatprep.subr.bf16.mxu0 %v545
        %581 = vmatpush1.bf16.msra.mxu0 %v544
        %582 = vmatprep.subr.bf16.mxu0 %v541
        %583 = vmatpush1.bf16.msra.mxu0 %v540
        %584 = vmatprep.subr.bf16.mxu0 %v537
        %585 = vmatpush1.bf16.msra.mxu0 %v536
        %586 = vmatprep.subr.bf16.mxu0 %v533
        %587 = vmatpush1.bf16.msra.mxu0 %v532
        %588 = vmatprep.subr.bf16.mxu0 %v529
        %589 = vmatpush1.bf16.msra.mxu0 %v528
        %590 = vmatprep.subr.bf16.mxu0 %v525
        %591 = vmatpush1.bf16.msra.mxu0 %v524
        %592 = vmatprep.subr.bf16.mxu0 %v521
        %593 = vmatpush1.bf16.msra.mxu0 %v520
        %594 = vmatprep.subr.bf16.mxu0 %v517
        %595 = vmatpush1.bf16.msra.mxu0 %v516
        %596 = vmatprep.subr.bf16.mxu0 0
        %597 = vmatpush2.bf16.msra.mxu0 0
        %598 = vmatprep.subr.bf16.mxu0 0
        %599 = vmatpush2.bf16.msra.mxu0 0
        %600 = vmatprep.subr.bf16.mxu0 0
        %601 = vmatpush2.bf16.msra.mxu0 0
        %602 = vmatprep.subr.bf16.mxu0 0
        %603 = vmatpush2.bf16.msra.mxu0 0
        %604 = vmatprep.subr.bf16.mxu0 0
        %605 = vmatpush2.bf16.msra.mxu0 0
        %606 = vmatprep.subr.bf16.mxu0 0
        %607 = vmatpush2.bf16.msra.mxu0 0
        %608 = vmatprep.subr.bf16.mxu0 0
        %609 = vmatpush2.bf16.msra.mxu0 0
        %610 = vmatprep.subr.bf16.mxu0 0
        %611 = vmatpush2.bf16.msra.mxu0 0
        %612 = vmatprep.mubr.bf16.mxu0 0
        %613 = vmatmul.mubr.bf16.gmra.mxu0 %v388
        %v614 = vpop.f32.mrf.mxu0
        %v615 = vadd.f32 0.0, %v614
        %v616 = vpop.f32.mrf.mxu0
        %v617 = vadd.f32 0.0, %v616
        %v618 = vpop.f32.mrf.mxu0
        %v619 = vadd.f32 0.0, %v618
        %v620 = vpop.f32.mrf.mxu0
        %v621 = vadd.f32 0.0, %v620
        %622 = vmatprep.mubr.bf16.mxu0 0
        %623 = vmatmul.mubr.bf16.gmra.mxu0 %v389
        %v624 = vpop.f32.mrf.mxu0
        %v625 = vadd.f32 0.0, %v624
        %v626 = vpop.f32.mrf.mxu0
        %v627 = vadd.f32 0.0, %v626
        %v628 = vpop.f32.mrf.mxu0
        %v629 = vadd.f32 0.0, %v628
        %v630 = vpop.f32.mrf.mxu0
        %v631 = vadd.f32 0.0, %v630
        %632 = vmatprep.mubr.bf16.mxu0 0
        %633 = vmatmul.mubr.bf16.gmra.mxu0 %v390
        %v634 = vpop.f32.mrf.mxu0
        %v635 = vadd.f32 0.0, %v634
        %v636 = vpop.f32.mrf.mxu0
        %v637 = vadd.f32 0.0, %v636
        %v638 = vpop.f32.mrf.mxu0
        %v639 = vadd.f32 0.0, %v638
        %v640 = vpop.f32.mrf.mxu0
        %v641 = vadd.f32 0.0, %v640
        %642 = vmatprep.mubr.bf16.mxu0 0
        %643 = vmatmul.mubr.bf16.gmra.mxu0 %v391
        %v644 = vpop.f32.mrf.mxu0
        %v645 = vadd.f32 0.0, %v644
        %v646 = vpop.f32.mrf.mxu0
        %v647 = vadd.f32 0.0, %v646
        %v648 = vpop.f32.mrf.mxu0
        %v649 = vadd.f32 0.0, %v648
        %v650 = vpop.f32.mrf.mxu0
        %v651 = vadd.f32 0.0, %v650
        %652 = vmatprep.mubr.bf16.mxu0 0
        %653 = vmatmul.mubr.bf16.gmra.mxu0 %v392
        %v654 = vpop.f32.mrf.mxu0
        %v655 = vadd.f32 0.0, %v654
        %v656 = vpop.f32.mrf.mxu0
        %v657 = vadd.f32 0.0, %v656
        %v658 = vpop.f32.mrf.mxu0
        %v659 = vadd.f32 0.0, %v658
        %v660 = vpop.f32.mrf.mxu0
        %v661 = vadd.f32 0.0, %v660
        %662 = vmatprep.mubr.bf16.mxu0 0
        %663 = vmatmul.mubr.bf16.gmra.mxu0 %v393
        %v664 = vpop.f32.mrf.mxu0
        %v665 = vadd.f32 0.0, %v664
        %v666 = vpop.f32.mrf.mxu0
        %v667 = vadd.f32 0.0, %v666
        %v668 = vpop.f32.mrf.mxu0
        %v669 = vadd.f32 0.0, %v668
        %v670 = vpop.f32.mrf.mxu0
        %v671 = vadd.f32 0.0, %v670
        %672 = vmatprep.mubr.bf16.mxu0 0
        %673 = vmatmul.mubr.bf16.gmra.mxu0 %v394
        %v674 = vpop.f32.mrf.mxu0
        %v675 = vadd.f32 0.0, %v674
        %v676 = vpop.f32.mrf.mxu0
        %v677 = vadd.f32 0.0, %v676
        %v678 = vpop.f32.mrf.mxu0
        %v679 = vadd.f32 0.0, %v678
        %v680 = vpop.f32.mrf.mxu0
        %v681 = vadd.f32 0.0, %v680
        %682 = vmatprep.mubr.bf16.mxu0 0
        %683 = vmatmul.mubr.bf16.gmra.mxu0 %v395
        %v684 = vpop.f32.mrf.mxu0
        %v685 = vadd.f32 0.0, %v684
        %v686 = vpop.f32.mrf.mxu0
        %v687 = vadd.f32 0.0, %v686
        %v688 = vpop.f32.mrf.mxu0
        %v689 = vadd.f32 0.0, %v688
        %v690 = vpop.f32.mrf.mxu0
        %v691 = vadd.f32 0.0, %v690
        %692 = vmatprep.mubr.bf16.mxu0 0
        %693 = vmatmul.mubr.bf16.gmra.mxu0 %v396
        %v694 = vpop.f32.mrf.mxu0
        %v695 = vadd.f32 0.0, %v694
        %v696 = vpop.f32.mrf.mxu0
        %v697 = vadd.f32 0.0, %v696
        %v698 = vpop.f32.mrf.mxu0
        %v699 = vadd.f32 0.0, %v698
        %v700 = vpop.f32.mrf.mxu0
        %v701 = vadd.f32 0.0, %v700
        %702 = vmatprep.mubr.bf16.mxu0 0
        %703 = vmatmul.mubr.bf16.gmra.mxu0 %v397
        %v704 = vpop.f32.mrf.mxu0
        %v705 = vadd.f32 0.0, %v704
        %v706 = vpop.f32.mrf.mxu0
        %v707 = vadd.f32 0.0, %v706
        %v708 = vpop.f32.mrf.mxu0
        %v709 = vadd.f32 0.0, %v708
        %v710 = vpop.f32.mrf.mxu0
        %v711 = vadd.f32 0.0, %v710
        %712 = vmatprep.mubr.bf16.mxu0 0
        %713 = vmatmul.mubr.bf16.gmra.mxu0 %v398
        %v714 = vpop.f32.mrf.mxu0
        %v715 = vadd.f32 0.0, %v714
        %v716 = vpop.f32.mrf.mxu0
        %v717 = vadd.f32 0.0, %v716
        %v718 = vpop.f32.mrf.mxu0
        %v719 = vadd.f32 0.0, %v718
        %v720 = vpop.f32.mrf.mxu0
        %v721 = vadd.f32 0.0, %v720
        %722 = vmatprep.mubr.bf16.mxu0 0
        %723 = vmatmul.mubr.bf16.gmra.mxu0 %v399
        %v724 = vpop.f32.mrf.mxu0
        %v725 = vadd.f32 0.0, %v724
        %v726 = vpop.f32.mrf.mxu0
        %v727 = vadd.f32 0.0, %v726
        %v728 = vpop.f32.mrf.mxu0
        %v729 = vadd.f32 0.0, %v728
        %v730 = vpop.f32.mrf.mxu0
        %v731 = vadd.f32 0.0, %v730
        %732 = vmatprep.mubr.bf16.mxu0 0
        %733 = vmatmul.mubr.bf16.gmra.mxu0 %v400
        %v734 = vpop.f32.mrf.mxu0
        %v735 = vadd.f32 0.0, %v734
        %v736 = vpop.f32.mrf.mxu0
        %v737 = vadd.f32 0.0, %v736
        %v738 = vpop.f32.mrf.mxu0
        %v739 = vadd.f32 0.0, %v738
        %v740 = vpop.f32.mrf.mxu0
        %v741 = vadd.f32 0.0, %v740
        %742 = vmatprep.mubr.bf16.mxu0 0
        %743 = vmatmul.mubr.bf16.gmra.mxu0 %v401
        %v744 = vpop.f32.mrf.mxu0
        %v745 = vadd.f32 0.0, %v744
        %v746 = vpop.f32.mrf.mxu0
        %v747 = vadd.f32 0.0, %v746
        %v748 = vpop.f32.mrf.mxu0
        %v749 = vadd.f32 0.0, %v748
        %v750 = vpop.f32.mrf.mxu0
        %v751 = vadd.f32 0.0, %v750
        %752 = vmatprep.mubr.bf16.mxu0 0
        %753 = vmatmul.mubr.bf16.gmra.mxu0 %v402
        %v754 = vpop.f32.mrf.mxu0
        %v755 = vadd.f32 0.0, %v754
        %v756 = vpop.f32.mrf.mxu0
        %v757 = vadd.f32 0.0, %v756
        %v758 = vpop.f32.mrf.mxu0
        %v759 = vadd.f32 0.0, %v758
        %v760 = vpop.f32.mrf.mxu0
        %v761 = vadd.f32 0.0, %v760
        %762 = vmatprep.mubr.bf16.mxu0 0
        %763 = vmatmul.mubr.bf16.gmra.mxu0 %v403
        %v764 = vpop.f32.mrf.mxu0
        %v765 = vadd.f32 0.0, %v764
        %v766 = vpop.f32.mrf.mxu0
        %v767 = vadd.f32 0.0, %v766
        %v768 = vpop.f32.mrf.mxu0
        %v769 = vadd.f32 0.0, %v768
        %v770 = vpop.f32.mrf.mxu0
        %v771 = vadd.f32 0.0, %v770
        %772 = vdwg.mxu0
        %773 = vmatprep.subr.bf16.mxu0 %v547
        %774 = vmatpush1.bf16.msra.mxu0 %v546
        %775 = vmatprep.subr.bf16.mxu0 %v543
        %776 = vmatpush1.bf16.msra.mxu0 %v542
        %777 = vmatprep.subr.bf16.mxu0 %v539
        %778 = vmatpush1.bf16.msra.mxu0 %v538
        %779 = vmatprep.subr.bf16.mxu0 %v535
        %780 = vmatpush1.bf16.msra.mxu0 %v534
        %781 = vmatprep.subr.bf16.mxu0 %v531
        %782 = vmatpush1.bf16.msra.mxu0 %v530
        %783 = vmatprep.subr.bf16.mxu0 %v527
        %784 = vmatpush1.bf16.msra.mxu0 %v526
        %785 = vmatprep.subr.bf16.mxu0 %v523
        %786 = vmatpush1.bf16.msra.mxu0 %v522
        %787 = vmatprep.subr.bf16.mxu0 %v519
        %788 = vmatpush1.bf16.msra.mxu0 %v518
        %789 = vmatprep.subr.bf16.mxu0 0
        %790 = vmatpush2.bf16.msra.mxu0 0
        %791 = vmatprep.subr.bf16.mxu0 0
        %792 = vmatpush2.bf16.msra.mxu0 0
        %793 = vmatprep.subr.bf16.mxu0 0
        %794 = vmatpush2.bf16.msra.mxu0 0
        %795 = vmatprep.subr.bf16.mxu0 0
        %796 = vmatpush2.bf16.msra.mxu0 0
        %797 = vmatprep.subr.bf16.mxu0 0
        %798 = vmatpush2.bf16.msra.mxu0 0
        %799 = vmatprep.subr.bf16.mxu0 0
        %800 = vmatpush2.bf16.msra.mxu0 0
        %801 = vmatprep.subr.bf16.mxu0 0
        %802 = vmatpush2.bf16.msra.mxu0 0
        %803 = vmatprep.subr.bf16.mxu0 0
        %804 = vmatpush2.bf16.msra.mxu0 0
        %805 = vmatprep.mubr.bf16.mxu0 0
        %806 = vmatmul.mubr.bf16.gmra.mxu0 %v388
        %v807 = vpop.f32.mrf.mxu0
        %v808 = vadd.f32 0.0, %v807
        %v809 = vpop.f32.mrf.mxu0
        %v810 = vadd.f32 0.0, %v809
        %v811 = vpop.f32.mrf.mxu0
        %v812 = vadd.f32 0.0, %v811
        %v813 = vpop.f32.mrf.mxu0
        %v814 = vadd.f32 0.0, %v813
        %815 = vmatprep.mubr.bf16.mxu0 0
        %816 = vmatmul.mubr.bf16.gmra.mxu0 %v389
        %v817 = vpop.f32.mrf.mxu0
        %v818 = vadd.f32 0.0, %v817
        %v819 = vpop.f32.mrf.mxu0
        %v820 = vadd.f32 0.0, %v819
        %v821 = vpop.f32.mrf.mxu0
        %v822 = vadd.f32 0.0, %v821
        %v823 = vpop.f32.mrf.mxu0
        %v824 = vadd.f32 0.0, %v823
        %825 = vmatprep.mubr.bf16.mxu0 0
        %826 = vmatmul.mubr.bf16.gmra.mxu0 %v390
        %v827 = vpop.f32.mrf.mxu0
        %v828 = vadd.f32 0.0, %v827
        %v829 = vpop.f32.mrf.mxu0
        %v830 = vadd.f32 0.0, %v829
        %v831 = vpop.f32.mrf.mxu0
        %v832 = vadd.f32 0.0, %v831
        %v833 = vpop.f32.mrf.mxu0
        %v834 = vadd.f32 0.0, %v833
        %835 = vmatprep.mubr.bf16.mxu0 0
        %836 = vmatmul.mubr.bf16.gmra.mxu0 %v391
        %v837 = vpop.f32.mrf.mxu0
        %v838 = vadd.f32 0.0, %v837
        %v839 = vpop.f32.mrf.mxu0
        %v840 = vadd.f32 0.0, %v839
        %v841 = vpop.f32.mrf.mxu0
        %v842 = vadd.f32 0.0, %v841
        %v843 = vpop.f32.mrf.mxu0
        %v844 = vadd.f32 0.0, %v843
        %845 = vmatprep.mubr.bf16.mxu0 0
        %846 = vmatmul.mubr.bf16.gmra.mxu0 %v392
        %v847 = vpop.f32.mrf.mxu0
        %v848 = vadd.f32 0.0, %v847
        %v849 = vpop.f32.mrf.mxu0
        %v850 = vadd.f32 0.0, %v849
        %v851 = vpop.f32.mrf.mxu0
        %v852 = vadd.f32 0.0, %v851
        %v853 = vpop.f32.mrf.mxu0
        %v854 = vadd.f32 0.0, %v853
        %855 = vmatprep.mubr.bf16.mxu0 0
        %856 = vmatmul.mubr.bf16.gmra.mxu0 %v393
        %v857 = vpop.f32.mrf.mxu0
        %v858 = vadd.f32 0.0, %v857
        %v859 = vpop.f32.mrf.mxu0
        %v860 = vadd.f32 0.0, %v859
        %v861 = vpop.f32.mrf.mxu0
        %v862 = vadd.f32 0.0, %v861
        %v863 = vpop.f32.mrf.mxu0
        %v864 = vadd.f32 0.0, %v863
        %865 = vmatprep.mubr.bf16.mxu0 0
        %866 = vmatmul.mubr.bf16.gmra.mxu0 %v394
        %v867 = vpop.f32.mrf.mxu0
        %v868 = vadd.f32 0.0, %v867
        %v869 = vpop.f32.mrf.mxu0
        %v870 = vadd.f32 0.0, %v869
        %v871 = vpop.f32.mrf.mxu0
        %v872 = vadd.f32 0.0, %v871
        %v873 = vpop.f32.mrf.mxu0
        %v874 = vadd.f32 0.0, %v873
        %875 = vmatprep.mubr.bf16.mxu0 0
        %876 = vmatmul.mubr.bf16.gmra.mxu0 %v395
        %v877 = vpop.f32.mrf.mxu0
        %v878 = vadd.f32 0.0, %v877
        %v879 = vpop.f32.mrf.mxu0
        %v880 = vadd.f32 0.0, %v879
        %v881 = vpop.f32.mrf.mxu0
        %v882 = vadd.f32 0.0, %v881
        %v883 = vpop.f32.mrf.mxu0
        %v884 = vadd.f32 0.0, %v883
        %885 = vmatprep.mubr.bf16.mxu0 0
        %886 = vmatmul.mubr.bf16.gmra.mxu0 %v396
        %v887 = vpop.f32.mrf.mxu0
        %v888 = vadd.f32 0.0, %v887
        %v889 = vpop.f32.mrf.mxu0
        %v890 = vadd.f32 0.0, %v889
        %v891 = vpop.f32.mrf.mxu0
        %v892 = vadd.f32 0.0, %v891
        %v893 = vpop.f32.mrf.mxu0
        %v894 = vadd.f32 0.0, %v893
        %895 = vmatprep.mubr.bf16.mxu0 0
        %896 = vmatmul.mubr.bf16.gmra.mxu0 %v397
        %v897 = vpop.f32.mrf.mxu0
        %v898 = vadd.f32 0.0, %v897
        %v899 = vpop.f32.mrf.mxu0
        %v900 = vadd.f32 0.0, %v899
        %v901 = vpop.f32.mrf.mxu0
        %v902 = vadd.f32 0.0, %v901
        %v903 = vpop.f32.mrf.mxu0
        %v904 = vadd.f32 0.0, %v903
        %905 = vmatprep.mubr.bf16.mxu0 0
        %906 = vmatmul.mubr.bf16.gmra.mxu0 %v398
        %v907 = vpop.f32.mrf.mxu0
        %v908 = vadd.f32 0.0, %v907
        %v909 = vpop.f32.mrf.mxu0
        %v910 = vadd.f32 0.0, %v909
        %v911 = vpop.f32.mrf.mxu0
        %v912 = vadd.f32 0.0, %v911
        %v913 = vpop.f32.mrf.mxu0
        %v914 = vadd.f32 0.0, %v913
        %915 = vmatprep.mubr.bf16.mxu0 0
        %916 = vmatmul.mubr.bf16.gmra.mxu0 %v399
        %v917 = vpop.f32.mrf.mxu0
        %v918 = vadd.f32 0.0, %v917
        %v919 = vpop.f32.mrf.mxu0
        %v920 = vadd.f32 0.0, %v919
        %v921 = vpop.f32.mrf.mxu0
        %v922 = vadd.f32 0.0, %v921
        %v923 = vpop.f32.mrf.mxu0
        %v924 = vadd.f32 0.0, %v923
        %925 = vmatprep.mubr.bf16.mxu0 0
        %926 = vmatmul.mubr.bf16.gmra.mxu0 %v400
        %v927 = vpop.f32.mrf.mxu0
        %v928 = vadd.f32 0.0, %v927
        %v929 = vpop.f32.mrf.mxu0
        %v930 = vadd.f32 0.0, %v929
        %v931 = vpop.f32.mrf.mxu0
        %v932 = vadd.f32 0.0, %v931
        %v933 = vpop.f32.mrf.mxu0
        %v934 = vadd.f32 0.0, %v933
        %935 = vmatprep.mubr.bf16.mxu0 0
        %936 = vmatmul.mubr.bf16.gmra.mxu0 %v401
        %v937 = vpop.f32.mrf.mxu0
        %v938 = vadd.f32 0.0, %v937
        %v939 = vpop.f32.mrf.mxu0
        %v940 = vadd.f32 0.0, %v939
        %v941 = vpop.f32.mrf.mxu0
        %v942 = vadd.f32 0.0, %v941
        %v943 = vpop.f32.mrf.mxu0
        %v944 = vadd.f32 0.0, %v943
        %945 = vmatprep.mubr.bf16.mxu0 0
        %946 = vmatmul.mubr.bf16.gmra.mxu0 %v402
        %v947 = vpop.f32.mrf.mxu0
        %v948 = vadd.f32 0.0, %v947
        %v949 = vpop.f32.mrf.mxu0
        %v950 = vadd.f32 0.0, %v949
        %v951 = vpop.f32.mrf.mxu0
        %v952 = vadd.f32 0.0, %v951
        %v953 = vpop.f32.mrf.mxu0
        %v954 = vadd.f32 0.0, %v953
        %955 = vmatprep.mubr.bf16.mxu0 0
        %956 = vmatmul.mubr.bf16.gmra.mxu0 %v403
        %v957 = vpop.f32.mrf.mxu0
        %v958 = vadd.f32 0.0, %v957
        %v959 = vpop.f32.mrf.mxu0
        %v960 = vadd.f32 0.0, %v959
        %v961 = vpop.f32.mrf.mxu0
        %v962 = vadd.f32 0.0, %v961
        %v963 = vpop.f32.mrf.mxu0
        %v964 = vadd.f32 0.0, %v963
        %965 = vdwg.mxu0
        %966 = vst [vmem:[%s249] sm:$0xff] %v615
        %967 = vst [vmem:[%s249 + $0x8] sm:$0xff] %v617
        %968 = vst [vmem:[%s249 + $0x10] sm:$0xff] %v808
        %969 = vst [vmem:[%s249 + $0x18] sm:$0xff] %v810
        %970 = vst [vmem:[%s249 + $0x20] sm:$0xff] %v619
        %971 = vst [vmem:[%s249 + $0x28] sm:$0xff] %v621
        %972 = vst [vmem:[%s249 + $0x30] sm:$0xff] %v812
        %973 = vst [vmem:[%s249 + $0x38] sm:$0xff] %v814
        %974 = vst [vmem:[%s249 + $0x40] sm:$0xff] %v625
        %975 = vst [vmem:[%s249 + $0x48] sm:$0xff] %v627
        %976 = vst [vmem:[%s249 + $0x50] sm:$0xff] %v818
        %977 = vst [vmem:[%s249 + $0x58] sm:$0xff] %v820
        %978 = vst [vmem:[%s249 + $0x60] sm:$0xff] %v629
        %979 = vst [vmem:[%s249 + $0x68] sm:$0xff] %v631
        %980 = vst [vmem:[%s249 + $0x70] sm:$0xff] %v822
        %981 = vst [vmem:[%s249 + $0x78] sm:$0xff] %v824
        %982 = vst [vmem:[%s249 + $0x80] sm:$0xff] %v635
        %983 = vst [vmem:[%s249 + $0x88] sm:$0xff] %v637
        %984 = vst [vmem:[%s249 + $0x90] sm:$0xff] %v828
        %985 = vst [vmem:[%s249 + $0x98] sm:$0xff] %v830
        %986 = vst [vmem:[%s249 + $0xa0] sm:$0xff] %v639
        %987 = vst [vmem:[%s249 + $0xa8] sm:$0xff] %v641
        %988 = vst [vmem:[%s249 + $0xb0] sm:$0xff] %v832
        %989 = vst [vmem:[%s249 + $0xb8] sm:$0xff] %v834
        %990 = vst [vmem:[%s249 + $0xc0] sm:$0xff] %v645
        %991 = vst [vmem:[%s249 + $0xc8] sm:$0xff] %v647
        %992 = vst [vmem:[%s249 + $0xd0] sm:$0xff] %v838
        %993 = vst [vmem:[%s249 + $0xd8] sm:$0xff] %v840
        %994 = vst [vmem:[%s249 + $0xe0] sm:$0xff] %v649
        %995 = vst [vmem:[%s249 + $0xe8] sm:$0xff] %v651
        %996 = vst [vmem:[%s249 + $0xf0] sm:$0xff] %v842
        %997 = vst [vmem:[%s249 + $0xf8] sm:$0xff] %v844
        %998 = vst [vmem:[%s249 + $0x100] sm:$0xff] %v655
        %999 = vst [vmem:[%s249 + $0x108] sm:$0xff] %v657
        %1000 = vst [vmem:[%s249 + $0x110] sm:$0xff] %v848
        %1001 = vst [vmem:[%s249 + $0x118] sm:$0xff] %v850
        %1002 = vst [vmem:[%s249 + $0x120] sm:$0xff] %v659
        %1003 = vst [vmem:[%s249 + $0x128] sm:$0xff] %v661
        %1004 = vst [vmem:[%s249 + $0x130] sm:$0xff] %v852
        %1005 = vst [vmem:[%s249 + $0x138] sm:$0xff] %v854
        %1006 = vst [vmem:[%s249 + $0x140] sm:$0xff] %v665
        %1007 = vst [vmem:[%s249 + $0x148] sm:$0xff] %v667
        %1008 = vst [vmem:[%s249 + $0x150] sm:$0xff] %v858
        %1009 = vst [vmem:[%s249 + $0x158] sm:$0xff] %v860
        %1010 = vst [vmem:[%s249 + $0x160] sm:$0xff] %v669
        %1011 = vst [vmem:[%s249 + $0x168] sm:$0xff] %v671
        %1012 = vst [vmem:[%s249 + $0x170] sm:$0xff] %v862
        %1013 = vst [vmem:[%s249 + $0x178] sm:$0xff] %v864
        %1014 = vst [vmem:[%s249 + $0x180] sm:$0xff] %v675
        %1015 = vst [vmem:[%s249 + $0x188] sm:$0xff] %v677
        %1016 = vst [vmem:[%s249 + $0x190] sm:$0xff] %v868
        %1017 = vst [vmem:[%s249 + $0x198] sm:$0xff] %v870
        %1018 = vst [vmem:[%s249 + $0x1a0] sm:$0xff] %v679
        %1019 = vst [vmem:[%s249 + $0x1a8] sm:$0xff] %v681
        %1020 = vst [vmem:[%s249 + $0x1b0] sm:$0xff] %v872
        %1021 = vst [vmem:[%s249 + $0x1b8] sm:$0xff] %v874
        %1022 = vst [vmem:[%s249 + $0x1c0] sm:$0xff] %v685
        %1023 = vst [vmem:[%s249 + $0x1c8] sm:$0xff] %v687
        %1024 = vst [vmem:[%s249 + $0x1d0] sm:$0xff] %v878
        %1025 = vst [vmem:[%s249 + $0x1d8] sm:$0xff] %v880
        %1026 = vst [vmem:[%s249 + $0x1e0] sm:$0xff] %v689
        %1027 = vst [vmem:[%s249 + $0x1e8] sm:$0xff] %v691
        %1028 = vst [vmem:[%s249 + $0x1f0] sm:$0xff] %v882
        %1029 = vst [vmem:[%s249 + $0x1f8] sm:$0xff] %v884
        %1030 = vst [vmem:[%s249 + $0x200] sm:$0xff] %v695
        %1031 = vst [vmem:[%s249 + $0x208] sm:$0xff] %v697
        %1032 = vst [vmem:[%s249 + $0x210] sm:$0xff] %v888
        %1033 = vst [vmem:[%s249 + $0x218] sm:$0xff] %v890
        %1034 = vst [vmem:[%s249 + $0x220] sm:$0xff] %v699
        %1035 = vst [vmem:[%s249 + $0x228] sm:$0xff] %v701
        %1036 = vst [vmem:[%s249 + $0x230] sm:$0xff] %v892
        %1037 = vst [vmem:[%s249 + $0x238] sm:$0xff] %v894
        %1038 = vst [vmem:[%s249 + $0x240] sm:$0xff] %v705
        %1039 = vst [vmem:[%s249 + $0x248] sm:$0xff] %v707
        %1040 = vst [vmem:[%s249 + $0x250] sm:$0xff] %v898
        %1041 = vst [vmem:[%s249 + $0x258] sm:$0xff] %v900
        %1042 = vst [vmem:[%s249 + $0x260] sm:$0xff] %v709
        %1043 = vst [vmem:[%s249 + $0x268] sm:$0xff] %v711
        %1044 = vst [vmem:[%s249 + $0x270] sm:$0xff] %v902
        %1045 = vst [vmem:[%s249 + $0x278] sm:$0xff] %v904
        %1046 = vst [vmem:[%s249 + $0x280] sm:$0xff] %v715
        %1047 = vst [vmem:[%s249 + $0x288] sm:$0xff] %v717
        %1048 = vst [vmem:[%s249 + $0x290] sm:$0xff] %v908
        %1049 = vst [vmem:[%s249 + $0x298] sm:$0xff] %v910
        %1050 = vst [vmem:[%s249 + $0x2a0] sm:$0xff] %v719
        %1051 = vst [vmem:[%s249 + $0x2a8] sm:$0xff] %v721
        %1052 = vst [vmem:[%s249 + $0x2b0] sm:$0xff] %v912
        %1053 = vst [vmem:[%s249 + $0x2b8] sm:$0xff] %v914
        %1054 = vst [vmem:[%s249 + $0x2c0] sm:$0xff] %v725
        %1055 = vst [vmem:[%s249 + $0x2c8] sm:$0xff] %v727
        %1056 = vst [vmem:[%s249 + $0x2d0] sm:$0xff] %v918
        %1057 = vst [vmem:[%s249 + $0x2d8] sm:$0xff] %v920
        %1058 = vst [vmem:[%s249 + $0x2e0] sm:$0xff] %v729
        %1059 = vst [vmem:[%s249 + $0x2e8] sm:$0xff] %v731
        %1060 = vst [vmem:[%s249 + $0x2f0] sm:$0xff] %v922
        %1061 = vst [vmem:[%s249 + $0x2f8] sm:$0xff] %v924
        %1062 = vst [vmem:[%s249 + $0x300] sm:$0xff] %v735
        %1063 = vst [vmem:[%s249 + $0x308] sm:$0xff] %v737
        %1064 = vst [vmem:[%s249 + $0x310] sm:$0xff] %v928
        %1065 = vst [vmem:[%s249 + $0x318] sm:$0xff] %v930
        %1066 = vst [vmem:[%s249 + $0x320] sm:$0xff] %v739
        %1067 = vst [vmem:[%s249 + $0x328] sm:$0xff] %v741
        %1068 = vst [vmem:[%s249 + $0x330] sm:$0xff] %v932
        %1069 = vst [vmem:[%s249 + $0x338] sm:$0xff] %v934
        %1070 = vst [vmem:[%s249 + $0x340] sm:$0xff] %v745
        %1071 = vst [vmem:[%s249 + $0x348] sm:$0xff] %v747
        %1072 = vst [vmem:[%s249 + $0x350] sm:$0xff] %v938
        %1073 = vst [vmem:[%s249 + $0x358] sm:$0xff] %v940
        %1074 = vst [vmem:[%s249 + $0x360] sm:$0xff] %v749
        %1075 = vst [vmem:[%s249 + $0x368] sm:$0xff] %v751
        %1076 = vst [vmem:[%s249 + $0x370] sm:$0xff] %v942
        %1077 = vst [vmem:[%s249 + $0x378] sm:$0xff] %v944
        %1078 = vst [vmem:[%s249 + $0x380] sm:$0xff] %v755
        %1079 = vst [vmem:[%s249 + $0x388] sm:$0xff] %v757
        %1080 = vst [vmem:[%s249 + $0x390] sm:$0xff] %v948
        %1081 = vst [vmem:[%s249 + $0x398] sm:$0xff] %v950
        %1082 = vst [vmem:[%s249 + $0x3a0] sm:$0xff] %v759
        %1083 = vst [vmem:[%s249 + $0x3a8] sm:$0xff] %v761
        %1084 = vst [vmem:[%s249 + $0x3b0] sm:$0xff] %v952
        %1085 = vst [vmem:[%s249 + $0x3b8] sm:$0xff] %v954
        %1086 = vst [vmem:[%s249 + $0x3c0] sm:$0xff] %v765
        %1087 = vst [vmem:[%s249 + $0x3c8] sm:$0xff] %v767
        %1088 = vst [vmem:[%s249 + $0x3d0] sm:$0xff] %v958
        %1089 = vst [vmem:[%s249 + $0x3d8] sm:$0xff] %v960
        %1090 = vst [vmem:[%s249 + $0x3e0] sm:$0xff] %v769
        %1091 = vst [vmem:[%s249 + $0x3e8] sm:$0xff] %v771
        %1092 = vst [vmem:[%s249 + $0x3f0] sm:$0xff] %v962
        %1093 = vst [vmem:[%s249 + $0x3f8] sm:$0xff] %v964
        %s1094 = sand.u32 %s87, 1
        %s1095 = sand.u32 %s87, 1
        %s1096 = smul.addr %s1095, 1024
        %s1097 = scalar_lea.vmem [#allocation3], %s1096
        // Predicated region
        $region52: #{generator_forward.23} parent=46 // pred_check
          %p1098 = pneg %p97
        $region53: #{generator_forward.23} parent=46 // pred_check_branch
          %1100 = sbr.rel (%p1098) target = $region55
        $region54: #{generator_forward.23} parent=46 // pred_region
          %s1101 = smul.u32 32, %s17
          %s1102 = smul.u32 4, %s18
          %s1103 = smul.addr %s1101, 8
          %s1104 = sadd.s32 %s1102, %s1103
          %s1105 = smul.addr %s1104, 8
          %s1106 = scalar_lea.vmem %s2, %s1105
          // Predicated region
          $region56: #{generator_forward.23} parent=54 // pred_check
            _
          $region57: #{generator_forward.23} parent=54 // pred_check_branch
            %1108 = sbr.rel (0) target = $region59
          $region58: #{generator_forward.23} parent=54 // pred_region
            // Predicated region
            $region60: #{generator_forward.23} parent=58 // pred_check
              _
            $region61: #{generator_forward.23} parent=58 // pred_check_branch
              %1110 = sbr.rel (0) target = $region63
            $region62: #{generator_forward.23} parent=58 // pred_region
              loop: start=0, step=1, limit=1
              $region64: #{generator_forward.23} parent=62 // loop_pre_header
                _
              $region65: #{generator_forward.23} parent=62 // loop_header
                %s1112 = sphi 0, %s1116
                %p1113 = scmp.ge.s32.totalorder %s1112, 1
                %s1117 = sphi %s1097, %s1097
                %s1118 = sphi %s1106, %s1106
              $region66: #{generator_forward.23} parent=62 // loop_header_branch
                %1115 = sbr.rel (%p1113) target = $region70
              $region67: #{generator_forward.23} parent=62 // loop_body
                %v1119 = vld [vmem:[%s1117] sm:$0xff]
                %1120 = vst [vmem:[%s1118] sm:$0xff] %v1119
                %v1121 = vld [vmem:[%s1117 + $0x8] sm:$0xff]
                %1122 = vst [vmem:[%s1118 + $0x8] sm:$0xff] %v1121
                %v1123 = vld [vmem:[%s1117 + $0x10] sm:$0xff]
                %1124 = vst [vmem:[%s1118 + $0x10] sm:$0xff] %v1123
                %v1125 = vld [vmem:[%s1117 + $0x18] sm:$0xff]
                %1126 = vst [vmem:[%s1118 + $0x18] sm:$0xff] %v1125
                %v1127 = vld [vmem:[%s1117 + $0x20] sm:$0xff]
                %1128 = vst [vmem:[%s1118 + $0x40] sm:$0xff] %v1127
                %v1129 = vld [vmem:[%s1117 + $0x28] sm:$0xff]
                %1130 = vst [vmem:[%s1118 + $0x48] sm:$0xff] %v1129
                %v1131 = vld [vmem:[%s1117 + $0x30] sm:$0xff]
                %1132 = vst [vmem:[%s1118 + $0x50] sm:$0xff] %v1131
                %v1133 = vld [vmem:[%s1117 + $0x38] sm:$0xff]
                %1134 = vst [vmem:[%s1118 + $0x58] sm:$0xff] %v1133
                %v1135 = vld [vmem:[%s1117 + $0x40] sm:$0xff]
                %1136 = vst [vmem:[%s1118 + $0x80] sm:$0xff] %v1135
                %v1137 = vld [vmem:[%s1117 + $0x48] sm:$0xff]
                %1138 = vst [vmem:[%s1118 + $0x88] sm:$0xff] %v1137
                %v1139 = vld [vmem:[%s1117 + $0x50] sm:$0xff]
                %1140 = vst [vmem:[%s1118 + $0x90] sm:$0xff] %v1139
                %v1141 = vld [vmem:[%s1117 + $0x58] sm:$0xff]
                %1142 = vst [vmem:[%s1118 + $0x98] sm:$0xff] %v1141
                %v1143 = vld [vmem:[%s1117 + $0x60] sm:$0xff]
                %1144 = vst [vmem:[%s1118 + $0xc0] sm:$0xff] %v1143
                %v1145 = vld [vmem:[%s1117 + $0x68] sm:$0xff]
                %1146 = vst [vmem:[%s1118 + $0xc8] sm:$0xff] %v1145
                %v1147 = vld [vmem:[%s1117 + $0x70] sm:$0xff]
                %1148 = vst [vmem:[%s1118 + $0xd0] sm:$0xff] %v1147
                %v1149 = vld [vmem:[%s1117 + $0x78] sm:$0xff]
                %1150 = vst [vmem:[%s1118 + $0xd8] sm:$0xff] %v1149
                %v1151 = vld [vmem:[%s1117 + $0x80] sm:$0xff]
                %1152 = vst [vmem:[%s1118 + $0x100] sm:$0xff] %v1151
                %v1153 = vld [vmem:[%s1117 + $0x88] sm:$0xff]
                %1154 = vst [vmem:[%s1118 + $0x108] sm:$0xff] %v1153
                %v1155 = vld [vmem:[%s1117 + $0x90] sm:$0xff]
                %1156 = vst [vmem:[%s1118 + $0x110] sm:$0xff] %v1155
                %v1157 = vld [vmem:[%s1117 + $0x98] sm:$0xff]
                %1158 = vst [vmem:[%s1118 + $0x118] sm:$0xff] %v1157
                %v1159 = vld [vmem:[%s1117 + $0xa0] sm:$0xff]
                %1160 = vst [vmem:[%s1118 + $0x140] sm:$0xff] %v1159
                %v1161 = vld [vmem:[%s1117 + $0xa8] sm:$0xff]
                %1162 = vst [vmem:[%s1118 + $0x148] sm:$0xff] %v1161
                %v1163 = vld [vmem:[%s1117 + $0xb0] sm:$0xff]
                %1164 = vst [vmem:[%s1118 + $0x150] sm:$0xff] %v1163
                %v1165 = vld [vmem:[%s1117 + $0xb8] sm:$0xff]
                %1166 = vst [vmem:[%s1118 + $0x158] sm:$0xff] %v1165
                %v1167 = vld [vmem:[%s1117 + $0xc0] sm:$0xff]
                %1168 = vst [vmem:[%s1118 + $0x180] sm:$0xff] %v1167
                %v1169 = vld [vmem:[%s1117 + $0xc8] sm:$0xff]
                %1170 = vst [vmem:[%s1118 + $0x188] sm:$0xff] %v1169
                %v1171 = vld [vmem:[%s1117 + $0xd0] sm:$0xff]
                %1172 = vst [vmem:[%s1118 + $0x190] sm:$0xff] %v1171
                %v1173 = vld [vmem:[%s1117 + $0xd8] sm:$0xff]
                %1174 = vst [vmem:[%s1118 + $0x198] sm:$0xff] %v1173
                %v1175 = vld [vmem:[%s1117 + $0xe0] sm:$0xff]
                %1176 = vst [vmem:[%s1118 + $0x1c0] sm:$0xff] %v1175
                %v1177 = vld [vmem:[%s1117 + $0xe8] sm:$0xff]
                %1178 = vst [vmem:[%s1118 + $0x1c8] sm:$0xff] %v1177
                %v1179 = vld [vmem:[%s1117 + $0xf0] sm:$0xff]
                %1180 = vst [vmem:[%s1118 + $0x1d0] sm:$0xff] %v1179
                %v1181 = vld [vmem:[%s1117 + $0xf8] sm:$0xff]
                %1182 = vst [vmem:[%s1118 + $0x1d8] sm:$0xff] %v1181
                %v1183 = vld [vmem:[%s1117 + $0x100] sm:$0xff]
                %1184 = vst [vmem:[%s1118 + $0x200] sm:$0xff] %v1183
                %v1185 = vld [vmem:[%s1117 + $0x108] sm:$0xff]
                %1186 = vst [vmem:[%s1118 + $0x208] sm:$0xff] %v1185
                %v1187 = vld [vmem:[%s1117 + $0x110] sm:$0xff]
                %1188 = vst [vmem:[%s1118 + $0x210] sm:$0xff] %v1187
                %v1189 = vld [vmem:[%s1117 + $0x118] sm:$0xff]
                %1190 = vst [vmem:[%s1118 + $0x218] sm:$0xff] %v1189
                %v1191 = vld [vmem:[%s1117 + $0x120] sm:$0xff]
                %1192 = vst [vmem:[%s1118 + $0x240] sm:$0xff] %v1191
                %v1193 = vld [vmem:[%s1117 + $0x128] sm:$0xff]
                %1194 = vst [vmem:[%s1118 + $0x248] sm:$0xff] %v1193
                %v1195 = vld [vmem:[%s1117 + $0x130] sm:$0xff]
                %1196 = vst [vmem:[%s1118 + $0x250] sm:$0xff] %v1195
                %v1197 = vld [vmem:[%s1117 + $0x138] sm:$0xff]
                %1198 = vst [vmem:[%s1118 + $0x258] sm:$0xff] %v1197
                %v1199 = vld [vmem:[%s1117 + $0x140] sm:$0xff]
                %1200 = vst [vmem:[%s1118 + $0x280] sm:$0xff] %v1199
                %v1201 = vld [vmem:[%s1117 + $0x148] sm:$0xff]
                %1202 = vst [vmem:[%s1118 + $0x288] sm:$0xff] %v1201
                %v1203 = vld [vmem:[%s1117 + $0x150] sm:$0xff]
                %1204 = vst [vmem:[%s1118 + $0x290] sm:$0xff] %v1203
                %v1205 = vld [vmem:[%s1117 + $0x158] sm:$0xff]
                %1206 = vst [vmem:[%s1118 + $0x298] sm:$0xff] %v1205
                %v1207 = vld [vmem:[%s1117 + $0x160] sm:$0xff]
                %1208 = vst [vmem:[%s1118 + $0x2c0] sm:$0xff] %v1207
                %v1209 = vld [vmem:[%s1117 + $0x168] sm:$0xff]
                %1210 = vst [vmem:[%s1118 + $0x2c8] sm:$0xff] %v1209
                %v1211 = vld [vmem:[%s1117 + $0x170] sm:$0xff]
                %1212 = vst [vmem:[%s1118 + $0x2d0] sm:$0xff] %v1211
                %v1213 = vld [vmem:[%s1117 + $0x178] sm:$0xff]
                %1214 = vst [vmem:[%s1118 + $0x2d8] sm:$0xff] %v1213
                %v1215 = vld [vmem:[%s1117 + $0x180] sm:$0xff]
                %1216 = vst [vmem:[%s1118 + $0x300] sm:$0xff] %v1215
                %v1217 = vld [vmem:[%s1117 + $0x188] sm:$0xff]
                %1218 = vst [vmem:[%s1118 + $0x308] sm:$0xff] %v1217
                %v1219 = vld [vmem:[%s1117 + $0x190] sm:$0xff]
                %1220 = vst [vmem:[%s1118 + $0x310] sm:$0xff] %v1219
                %v1221 = vld [vmem:[%s1117 + $0x198] sm:$0xff]
                %1222 = vst [vmem:[%s1118 + $0x318] sm:$0xff] %v1221
                %v1223 = vld [vmem:[%s1117 + $0x1a0] sm:$0xff]
                %1224 = vst [vmem:[%s1118 + $0x340] sm:$0xff] %v1223
                %v1225 = vld [vmem:[%s1117 + $0x1a8] sm:$0xff]
                %1226 = vst [vmem:[%s1118 + $0x348] sm:$0xff] %v1225
                %v1227 = vld [vmem:[%s1117 + $0x1b0] sm:$0xff]
                %1228 = vst [vmem:[%s1118 + $0x350] sm:$0xff] %v1227
                %v1229 = vld [vmem:[%s1117 + $0x1b8] sm:$0xff]
                %1230 = vst [vmem:[%s1118 + $0x358] sm:$0xff] %v1229
                %v1231 = vld [vmem:[%s1117 + $0x1c0] sm:$0xff]
                %1232 = vst [vmem:[%s1118 + $0x380] sm:$0xff] %v1231
                %v1233 = vld [vmem:[%s1117 + $0x1c8] sm:$0xff]
                %1234 = vst [vmem:[%s1118 + $0x388] sm:$0xff] %v1233
                %v1235 = vld [vmem:[%s1117 + $0x1d0] sm:$0xff]
                %1236 = vst [vmem:[%s1118 + $0x390] sm:$0xff] %v1235
                %v1237 = vld [vmem:[%s1117 + $0x1d8] sm:$0xff]
                %1238 = vst [vmem:[%s1118 + $0x398] sm:$0xff] %v1237
                %v1239 = vld [vmem:[%s1117 + $0x1e0] sm:$0xff]
                %1240 = vst [vmem:[%s1118 + $0x3c0] sm:$0xff] %v1239
                %v1241 = vld [vmem:[%s1117 + $0x1e8] sm:$0xff]
                %1242 = vst [vmem:[%s1118 + $0x3c8] sm:$0xff] %v1241
                %v1243 = vld [vmem:[%s1117 + $0x1f0] sm:$0xff]
                %1244 = vst [vmem:[%s1118 + $0x3d0] sm:$0xff] %v1243
                %v1245 = vld [vmem:[%s1117 + $0x1f8] sm:$0xff]
                %1246 = vst [vmem:[%s1118 + $0x3d8] sm:$0xff] %v1245
                %v1247 = vld [vmem:[%s1117 + $0x200] sm:$0xff]
                %1248 = vst [vmem:[%s1118 + $0x400] sm:$0xff] %v1247
                %v1249 = vld [vmem:[%s1117 + $0x208] sm:$0xff]
                %1250 = vst [vmem:[%s1118 + $0x408] sm:$0xff] %v1249
                %v1251 = vld [vmem:[%s1117 + $0x210] sm:$0xff]
                %1252 = vst [vmem:[%s1118 + $0x410] sm:$0xff] %v1251
                %v1253 = vld [vmem:[%s1117 + $0x218] sm:$0xff]
                %1254 = vst [vmem:[%s1118 + $0x418] sm:$0xff] %v1253
                %v1255 = vld [vmem:[%s1117 + $0x220] sm:$0xff]
                %1256 = vst [vmem:[%s1118 + $0x440] sm:$0xff] %v1255
                %v1257 = vld [vmem:[%s1117 + $0x228] sm:$0xff]
                %1258 = vst [vmem:[%s1118 + $0x448] sm:$0xff] %v1257
                %v1259 = vld [vmem:[%s1117 + $0x230] sm:$0xff]
                %1260 = vst [vmem:[%s1118 + $0x450] sm:$0xff] %v1259
                %v1261 = vld [vmem:[%s1117 + $0x238] sm:$0xff]
                %1262 = vst [vmem:[%s1118 + $0x458] sm:$0xff] %v1261
                %v1263 = vld [vmem:[%s1117 + $0x240] sm:$0xff]
                %1264 = vst [vmem:[%s1118 + $0x480] sm:$0xff] %v1263
                %v1265 = vld [vmem:[%s1117 + $0x248] sm:$0xff]
                %1266 = vst [vmem:[%s1118 + $0x488] sm:$0xff] %v1265
                %v1267 = vld [vmem:[%s1117 + $0x250] sm:$0xff]
                %1268 = vst [vmem:[%s1118 + $0x490] sm:$0xff] %v1267
                %v1269 = vld [vmem:[%s1117 + $0x258] sm:$0xff]
                %1270 = vst [vmem:[%s1118 + $0x498] sm:$0xff] %v1269
                %v1271 = vld [vmem:[%s1117 + $0x260] sm:$0xff]
                %1272 = vst [vmem:[%s1118 + $0x4c0] sm:$0xff] %v1271
                %v1273 = vld [vmem:[%s1117 + $0x268] sm:$0xff]
                %1274 = vst [vmem:[%s1118 + $0x4c8] sm:$0xff] %v1273
                %v1275 = vld [vmem:[%s1117 + $0x270] sm:$0xff]
                %1276 = vst [vmem:[%s1118 + $0x4d0] sm:$0xff] %v1275
                %v1277 = vld [vmem:[%s1117 + $0x278] sm:$0xff]
                %1278 = vst [vmem:[%s1118 + $0x4d8] sm:$0xff] %v1277
                %v1279 = vld [vmem:[%s1117 + $0x280] sm:$0xff]
                %1280 = vst [vmem:[%s1118 + $0x500] sm:$0xff] %v1279
                %v1281 = vld [vmem:[%s1117 + $0x288] sm:$0xff]
                %1282 = vst [vmem:[%s1118 + $0x508] sm:$0xff] %v1281
                %v1283 = vld [vmem:[%s1117 + $0x290] sm:$0xff]
                %1284 = vst [vmem:[%s1118 + $0x510] sm:$0xff] %v1283
                %v1285 = vld [vmem:[%s1117 + $0x298] sm:$0xff]
                %1286 = vst [vmem:[%s1118 + $0x518] sm:$0xff] %v1285
                %v1287 = vld [vmem:[%s1117 + $0x2a0] sm:$0xff]
                %1288 = vst [vmem:[%s1118 + $0x540] sm:$0xff] %v1287
                %v1289 = vld [vmem:[%s1117 + $0x2a8] sm:$0xff]
                %1290 = vst [vmem:[%s1118 + $0x548] sm:$0xff] %v1289
                %v1291 = vld [vmem:[%s1117 + $0x2b0] sm:$0xff]
                %1292 = vst [vmem:[%s1118 + $0x550] sm:$0xff] %v1291
                %v1293 = vld [vmem:[%s1117 + $0x2b8] sm:$0xff]
                %1294 = vst [vmem:[%s1118 + $0x558] sm:$0xff] %v1293
                %v1295 = vld [vmem:[%s1117 + $0x2c0] sm:$0xff]
                %1296 = vst [vmem:[%s1118 + $0x580] sm:$0xff] %v1295
                %v1297 = vld [vmem:[%s1117 + $0x2c8] sm:$0xff]
                %1298 = vst [vmem:[%s1118 + $0x588] sm:$0xff] %v1297
                %v1299 = vld [vmem:[%s1117 + $0x2d0] sm:$0xff]
                %1300 = vst [vmem:[%s1118 + $0x590] sm:$0xff] %v1299
                %v1301 = vld [vmem:[%s1117 + $0x2d8] sm:$0xff]
                %1302 = vst [vmem:[%s1118 + $0x598] sm:$0xff] %v1301
                %v1303 = vld [vmem:[%s1117 + $0x2e0] sm:$0xff]
                %1304 = vst [vmem:[%s1118 + $0x5c0] sm:$0xff] %v1303
                %v1305 = vld [vmem:[%s1117 + $0x2e8] sm:$0xff]
                %1306 = vst [vmem:[%s1118 + $0x5c8] sm:$0xff] %v1305
                %v1307 = vld [vmem:[%s1117 + $0x2f0] sm:$0xff]
                %1308 = vst [vmem:[%s1118 + $0x5d0] sm:$0xff] %v1307
                %v1309 = vld [vmem:[%s1117 + $0x2f8] sm:$0xff]
                %1310 = vst [vmem:[%s1118 + $0x5d8] sm:$0xff] %v1309
                %v1311 = vld [vmem:[%s1117 + $0x300] sm:$0xff]
                %1312 = vst [vmem:[%s1118 + $0x600] sm:$0xff] %v1311
                %v1313 = vld [vmem:[%s1117 + $0x308] sm:$0xff]
                %1314 = vst [vmem:[%s1118 + $0x608] sm:$0xff] %v1313
                %v1315 = vld [vmem:[%s1117 + $0x310] sm:$0xff]
                %1316 = vst [vmem:[%s1118 + $0x610] sm:$0xff] %v1315
                %v1317 = vld [vmem:[%s1117 + $0x318] sm:$0xff]
                %1318 = vst [vmem:[%s1118 + $0x618] sm:$0xff] %v1317
                %v1319 = vld [vmem:[%s1117 + $0x320] sm:$0xff]
                %1320 = vst [vmem:[%s1118 + $0x640] sm:$0xff] %v1319
                %v1321 = vld [vmem:[%s1117 + $0x328] sm:$0xff]
                %1322 = vst [vmem:[%s1118 + $0x648] sm:$0xff] %v1321
                %v1323 = vld [vmem:[%s1117 + $0x330] sm:$0xff]
                %1324 = vst [vmem:[%s1118 + $0x650] sm:$0xff] %v1323
                %v1325 = vld [vmem:[%s1117 + $0x338] sm:$0xff]
                %1326 = vst [vmem:[%s1118 + $0x658] sm:$0xff] %v1325
                %v1327 = vld [vmem:[%s1117 + $0x340] sm:$0xff]
                %1328 = vst [vmem:[%s1118 + $0x680] sm:$0xff] %v1327
                %v1329 = vld [vmem:[%s1117 + $0x348] sm:$0xff]
                %1330 = vst [vmem:[%s1118 + $0x688] sm:$0xff] %v1329
                %v1331 = vld [vmem:[%s1117 + $0x350] sm:$0xff]
                %1332 = vst [vmem:[%s1118 + $0x690] sm:$0xff] %v1331
                %v1333 = vld [vmem:[%s1117 + $0x358] sm:$0xff]
                %1334 = vst [vmem:[%s1118 + $0x698] sm:$0xff] %v1333
                %v1335 = vld [vmem:[%s1117 + $0x360] sm:$0xff]
                %1336 = vst [vmem:[%s1118 + $0x6c0] sm:$0xff] %v1335
                %v1337 = vld [vmem:[%s1117 + $0x368] sm:$0xff]
                %1338 = vst [vmem:[%s1118 + $0x6c8] sm:$0xff] %v1337
                %v1339 = vld [vmem:[%s1117 + $0x370] sm:$0xff]
                %1340 = vst [vmem:[%s1118 + $0x6d0] sm:$0xff] %v1339
                %v1341 = vld [vmem:[%s1117 + $0x378] sm:$0xff]
                %1342 = vst [vmem:[%s1118 + $0x6d8] sm:$0xff] %v1341
                %v1343 = vld [vmem:[%s1117 + $0x380] sm:$0xff]
                %1344 = vst [vmem:[%s1118 + $0x700] sm:$0xff] %v1343
                %v1345 = vld [vmem:[%s1117 + $0x388] sm:$0xff]
                %1346 = vst [vmem:[%s1118 + $0x708] sm:$0xff] %v1345
                %v1347 = vld [vmem:[%s1117 + $0x390] sm:$0xff]
                %1348 = vst [vmem:[%s1118 + $0x710] sm:$0xff] %v1347
                %v1349 = vld [vmem:[%s1117 + $0x398] sm:$0xff]
                %1350 = vst [vmem:[%s1118 + $0x718] sm:$0xff] %v1349
                %v1351 = vld [vmem:[%s1117 + $0x3a0] sm:$0xff]
                %1352 = vst [vmem:[%s1118 + $0x740] sm:$0xff] %v1351
                %v1353 = vld [vmem:[%s1117 + $0x3a8] sm:$0xff]
                %1354 = vst [vmem:[%s1118 + $0x748] sm:$0xff] %v1353
                %v1355 = vld [vmem:[%s1117 + $0x3b0] sm:$0xff]
                %1356 = vst [vmem:[%s1118 + $0x750] sm:$0xff] %v1355
                %v1357 = vld [vmem:[%s1117 + $0x3b8] sm:$0xff]
                %1358 = vst [vmem:[%s1118 + $0x758] sm:$0xff] %v1357
                %v1359 = vld [vmem:[%s1117 + $0x3c0] sm:$0xff]
                %1360 = vst [vmem:[%s1118 + $0x780] sm:$0xff] %v1359
                %v1361 = vld [vmem:[%s1117 + $0x3c8] sm:$0xff]
                %1362 = vst [vmem:[%s1118 + $0x788] sm:$0xff] %v1361
                %v1363 = vld [vmem:[%s1117 + $0x3d0] sm:$0xff]
                %1364 = vst [vmem:[%s1118 + $0x790] sm:$0xff] %v1363
                %v1365 = vld [vmem:[%s1117 + $0x3d8] sm:$0xff]
                %1366 = vst [vmem:[%s1118 + $0x798] sm:$0xff] %v1365
                %v1367 = vld [vmem:[%s1117 + $0x3e0] sm:$0xff]
                %1368 = vst [vmem:[%s1118 + $0x7c0] sm:$0xff] %v1367
                %v1369 = vld [vmem:[%s1117 + $0x3e8] sm:$0xff]
                %1370 = vst [vmem:[%s1118 + $0x7c8] sm:$0xff] %v1369
                %v1371 = vld [vmem:[%s1117 + $0x3f0] sm:$0xff]
                %1372 = vst [vmem:[%s1118 + $0x7d0] sm:$0xff] %v1371
                %v1373 = vld [vmem:[%s1117 + $0x3f8] sm:$0xff]
                %1374 = vst [vmem:[%s1118 + $0x7d8] sm:$0xff] %v1373
              $region68: #{generator_forward.23} parent=62 // loop_footer
                %s1116 = sadd.s32 1, %s1112
              $region69: #{generator_forward.23} parent=62 // loop_footer_branch
                %1111 = sbr.rel target = $region65
              $region70: #{generator_forward.23} parent=62 // loop_exit
                _
            $region63: #{generator_forward.23} parent=58 // pred_fallthru
              _
            // Predicated region
            $region71: #{generator_forward.23} parent=58 // pred_check
              _
            $region72: #{generator_forward.23} parent=58 // pred_check_branch
              %1376 = sbr.rel target = $region74
            $region73: #{generator_forward.23} parent=58 // pred_region
              _
            $region74: #{generator_forward.23} parent=58 // pred_fallthru
              _
          $region59: #{generator_forward.23} parent=54 // pred_fallthru
            _
          %1377 = vnop
        $region55: #{generator_forward.23} parent=46 // pred_fallthru
          _
      $region47: #{generator_forward.23} parent=5 // pred_fallthru
        _
      %p1378 = scmp.le.s32.totalorder 2, %s8
      // Predicated region
      $region75: #{generator_forward.23} parent=5 // pred_check
        %p1379 = pneg %p1378
      $region76: #{generator_forward.23} parent=5 // pred_check_branch
        %1381 = sbr.rel (%p1379) target = $region78
      $region77: #{generator_forward.23} parent=5 // pred_region
        %s1382 = ssub.s32 %s8, 2
        // Predicated region
        $region79: #{generator_forward.23} parent=77 // pred_check
          %p1383 = pneg %p103
        $region80: #{generator_forward.23} parent=77 // pred_check_branch
          %1385 = sbr.rel (%p1383) target = $region82
        $region81: #{generator_forward.23} parent=77 // pred_region
          %s1386 = sand.u32 %s88, 1
          %s1387 = sand.u32 %s88, 1
          %s1388 = smul.addr %s1387, 1024
          %s1389 = scalar_lea.vmem [#allocation3], %s1388
        $region82: #{generator_forward.23} parent=77 // pred_fallthru
          _
      $region78: #{generator_forward.23} parent=5 // pred_fallthru
        _
    $region6: #{generator_forward.23} parent=1 // loop_footer
      %s12 = sadd.s32 1, %s8
    $region7: #{generator_forward.23} parent=1 // loop_footer_branch
      %7 = sbr.rel target = $region3
    $region8: #{generator_forward.23} parent=1 // loop_exit
      _

// kernel: generator_forward.24
$region0: #{generator_forward.24}
  #allocation0 [shape = 'u32[]', space=smem, size = 0x4, offset = 0x4, fixed_abs, tag = 'smem constant byte address 0x4 - core index']
  #allocation1 [shape = 'u32[144,128]{1,0:T(1,128)}', space=vmem, size = 0x12000, scoped, tag = 'internal scratch']
  %s0 = inlined_call_operand.vmem [shape: f32[2048,128], index: 0, kind: input, shape index: {}]
  %s1 = inlined_call_operand.vmem [shape: f32[1,128], index: 1, kind: input, shape index: {}]
  %s2 = inlined_call_operand.vmem [shape: f32[8,128], index: 2, kind: output, shape index: {0}]
  %s3 = inlined_call_operand.vmem [shape: f32[8,128], index: 3, kind: output, shape index: {1}]
  %4 = xla_tuple %s2, %s3
  %s5 = sld [smem:[#allocation0]]
  $region53: #{generator_forward.24} parent=0
    _
  %s7 = ssub.s32 1, %s5
  %s8 = scalar_select 0, %s7, %s5
  loop: start=0, step=1, limit=6
  $region2: #{generator_forward.24} parent=0 // loop_pre_header
    _
  $region3: #{generator_forward.24} parent=0 // loop_header
    %s10 = sphi 0, %s14
    %p11 = scmp.ge.s32.totalorder %s10, 6
    %s20 = sphi 0, %s22
    %s23 = sphi 0, %s20
    %s24 = sphi 0, %s23
    %s40 = sphi 0, %s24
    %s44 = sphi 0, %s44
    %s46 = sphi 0, %s44
    %s47 = sphi 0, %s46
    %s61 = sphi 0, %s47
    %s65 = sphi 0, %s65
    %s67 = sphi 0, %s65
    %s68 = sphi 0, %s67
    %s82 = sphi 0, %s68
    %s86 = sphi 0, %s86
    %s88 = sphi 0, %s86
    %s89 = sphi 0, %s88
    %s103 = sphi 0, %s89
  $region4: #{generator_forward.24} parent=0 // loop_header_branch
    %13 = sbr.rel (%p11) target = $region8
  $region5: #{generator_forward.24} parent=0 // loop_body
    %s15 = ssub.s32 %s10, 1
    %s16 = ssub.s32 %s10, 2
    %s17 = sadd.s32 %s10, 1
    %s18 = ssub.s32 %s10, %s17
    %p19 = scmp.eq.s32.totalorder %s18, 0
    %s21 = sadd.s32 %s20, 1
    %s22 = scalar_select %p19, %s20, %s21
    %p25 = pneg %p19
    %p26 = scmp.eq.s32.totalorder %s10, 3
    %p27 = por %p25, %p26
    %p28 = scmp.ne.s32.totalorder %s20, %s23
    %p29 = scmp.eq.s32.totalorder %s10, 0
    %p30 = por %p28, %p29
    %p31 = scmp.ne.s32.totalorder %s20, %s23
    %p32 = scmp.eq.s32.totalorder %s15, 3
    %p33 = por %p31, %p32
    %p34 = scmp.ne.s32.totalorder %s23, %s24
    %p35 = scmp.eq.s32.totalorder %s15, 0
    %p36 = por %p34, %p35
    %p37 = scmp.ne.s32.totalorder %s23, %s24
    %p38 = scmp.eq.s32.totalorder %s16, 3
    %p39 = por %p37, %p38
    %p41 = scmp.ne.s32.totalorder %s24, %s40
    %p42 = scmp.eq.s32.totalorder %s16, 0
    %p43 = por %p41, %p42
    %s45 = sadd.s32 %s44, 1
    %p48 = scmp.eq.s32.totalorder %s10, 3
    %p49 = scmp.ne.s32.totalorder %s44, %s46
    %p50 = scmp.eq.s32.totalorder %s10, 0
    %p51 = por %p49, %p50
    %p52 = scmp.ne.s32.totalorder %s44, %s46
    %p53 = scmp.eq.s32.totalorder %s15, 3
    %p54 = por %p52, %p53
    %p55 = scmp.ne.s32.totalorder %s46, %s47
    %p56 = scmp.eq.s32.totalorder %s15, 0
    %p57 = por %p55, %p56
    %p58 = scmp.ne.s32.totalorder %s46, %s47
    %p59 = scmp.eq.s32.totalorder %s16, 3
    %p60 = por %p58, %p59
    %p62 = scmp.ne.s32.totalorder %s47, %s61
    %p63 = scmp.eq.s32.totalorder %s16, 0
    %p64 = por %p62, %p63
    %s66 = sadd.s32 %s65, 1
    %p69 = scmp.eq.s32.totalorder %s10, 3
    %p70 = scmp.ne.s32.totalorder %s65, %s67
    %p71 = scmp.eq.s32.totalorder %s10, 0
    %p72 = por %p70, %p71
    %p73 = scmp.ne.s32.totalorder %s65, %s67
    %p74 = scmp.eq.s32.totalorder %s15, 3
    %p75 = por %p73, %p74
    %p76 = scmp.ne.s32.totalorder %s67, %s68
    %p77 = scmp.eq.s32.totalorder %s15, 0
    %p78 = por %p76, %p77
    %p79 = scmp.ne.s32.totalorder %s67, %s68
    %p80 = scmp.eq.s32.totalorder %s16, 3
    %p81 = por %p79, %p80
    %p83 = scmp.ne.s32.totalorder %s68, %s82
    %p84 = scmp.eq.s32.totalorder %s16, 0
    %p85 = por %p83, %p84
    %s87 = sadd.s32 %s86, 1
    %p90 = scmp.eq.s32.totalorder %s10, 3
    %p91 = scmp.ne.s32.totalorder %s86, %s88
    %p92 = scmp.eq.s32.totalorder %s10, 0
    %p93 = por %p91, %p92
    %p94 = scmp.ne.s32.totalorder %s86, %s88
    %p95 = scmp.eq.s32.totalorder %s15, 3
    %p96 = por %p94, %p95
    %p97 = scmp.ne.s32.totalorder %s88, %s89
    %p98 = scmp.eq.s32.totalorder %s15, 0
    %p99 = por %p97, %p98
    %p100 = scmp.ne.s32.totalorder %s88, %s89
    %p101 = scmp.eq.s32.totalorder %s16, 3
    %p102 = por %p100, %p101
    %p104 = scmp.ne.s32.totalorder %s89, %s103
    %p105 = scmp.eq.s32.totalorder %s16, 0
    %p106 = por %p104, %p105
    %p107 = scmp.le.s32.totalorder 1, %s10
    %p108 = scmp.lt.s32.totalorder %s10, 5
    %p109 = pnand %p107, %p108
    %p110 = pneg %p109
    // Predicated region
    $region9: #{generator_forward.24} parent=5 // pred_check
      _
    $region10: #{generator_forward.24} parent=5 // pred_check_branch
      %112 = sbr.rel (%p109) target = $region12
    $region11: #{generator_forward.24} parent=5 // pred_region
      %s113 = ssub.s32 %s10, 1
      // Predicated region
      $region13: #{generator_forward.24} parent=11 // pred_check
        %p114 = pneg %p57
      $region14: #{generator_forward.24} parent=11 // pred_check_branch
        %116 = sbr.rel (%p114) target = $region16
      $region15: #{generator_forward.24} parent=11 // pred_region
        _
      $region16: #{generator_forward.24} parent=11 // pred_fallthru
        _
    $region12: #{generator_forward.24} parent=5 // pred_fallthru
      _
    %p117 = scmp.lt.s32.totalorder %s10, 4
    // Predicated region
    $region17: #{generator_forward.24} parent=5 // pred_check
      %p118 = pneg %p117
    $region18: #{generator_forward.24} parent=5 // pred_check_branch
      %120 = sbr.rel (%p118) target = $region20
    $region19: #{generator_forward.24} parent=5 // pred_region
      // Predicated region
      $region21: #{generator_forward.24} parent=19 // pred_check
        %p121 = pneg %p30
      $region22: #{generator_forward.24} parent=19 // pred_check_branch
        %123 = sbr.rel (%p121) target = $region24
      $region23: #{generator_forward.24} parent=19 // pred_region
        %s124 = smul.u32 64, %s10
        %p125 = scmp.lt.s32.totalorder %s124, 255
        %s126 = scalar_select %p125, %s124, 255
        %s127 = smul.addr %s126, 8
        %s128 = scalar_lea.vmem %s0, %s127
        %s129 = smul.u32 64, %s10
      $region24: #{generator_forward.24} parent=19 // pred_fallthru
        _
    $region20: #{generator_forward.24} parent=5 // pred_fallthru
      _
    %p130 = scmp.le.s32.totalorder 1, %s10
    %p131 = scmp.lt.s32.totalorder %s10, 5
    %p132 = pnand %p130, %p131
    %p133 = pneg %p132
    // Predicated region
    $region25: #{generator_forward.24} parent=5 // pred_check
      _
    $region26: #{generator_forward.24} parent=5 // pred_check_branch
      %135 = sbr.rel (%p132) target = $region28
    $region27: #{generator_forward.24} parent=5 // pred_region
      %s136 = ssub.s32 %s10, 1
      %s137 = smul.u32 64, %s15
      %p138 = scmp.lt.s32.totalorder %s137, 255
      %s139 = scalar_select %p138, %s137, 255
      %s140 = smul.addr %s139, 8
      %s141 = scalar_lea.vmem %s0, %s140
      %p142 = pneg %p36
      %p143 = pneg %p33
      %p144 = pneg %p57
      %p145 = pneg %p54
      %p146 = pneg %p78
      %p147 = pneg %p75
      %p148 = pneg %p99
      %p149 = pneg %p96
      %s150 = smul.u32 64, %s15
      %p151 = scmp.lt.s32.totalorder %s150, 255
      %s152 = scalar_select %p151, %s150, 255
      %s153 = smul.addr %s152, 8
      %s154 = scalar_lea.vmem %s0, %s153
      %s155 = smul.u32 64, %s15
      %p156 = scmp.eq.s32.totalorder %s15, 0
      // Predicated region
      $region29: #{generator_forward.24} parent=27 // pred_check
        %p157 = pneg %p156
      $region30: #{generator_forward.24} parent=27 // pred_check_branch
        %159 = sbr.rel (%p157) target = $region32
      $region31: #{generator_forward.24} parent=27 // pred_region
        %160 = vst [vmem:[%s2] sm:$0xff] 0.0
        %161 = vst [vmem:[%s3] sm:$0xff] 0.0
      $region32: #{generator_forward.24} parent=27 // pred_fallthru
        _
      %v162 = vld [vmem:[%s154] sm:$0xff]
      %v163 = vld [vmem:[%s154 + $0x8] sm:$0xff]
      %v164 = vld [vmem:[%s154 + $0x10] sm:$0xff]
      %v165 = vld [vmem:[%s154 + $0x18] sm:$0xff]
      %v166 = vld [vmem:[%s154 + $0x20] sm:$0xff]
      %v167 = vld [vmem:[%s154 + $0x28] sm:$0xff]
      %v168 = vld [vmem:[%s154 + $0x30] sm:$0xff]
      %v169 = vld [vmem:[%s154 + $0x38] sm:$0xff]
      %v170 = vld [vmem:[%s154 + $0x40] sm:$0xff]
      %v171 = vld [vmem:[%s154 + $0x48] sm:$0xff]
      %v172 = vld [vmem:[%s154 + $0x50] sm:$0xff]
      %v173 = vld [vmem:[%s154 + $0x58] sm:$0xff]
      %v174 = vld [vmem:[%s154 + $0x60] sm:$0xff]
      %v175 = vld [vmem:[%s154 + $0x68] sm:$0xff]
      %v176 = vld [vmem:[%s154 + $0x70] sm:$0xff]
      %v177 = vld [vmem:[%s154 + $0x78] sm:$0xff]
      %v178 = vld [vmem:[%s154 + $0x80] sm:$0xff]
      %v179 = vld [vmem:[%s154 + $0x88] sm:$0xff]
      %v180 = vld [vmem:[%s154 + $0x90] sm:$0xff]
      %v181 = vld [vmem:[%s154 + $0x98] sm:$0xff]
      %v182 = vld [vmem:[%s154 + $0xa0] sm:$0xff]
      %v183 = vld [vmem:[%s154 + $0xa8] sm:$0xff]
      %v184 = vld [vmem:[%s154 + $0xb0] sm:$0xff]
      %v185 = vld [vmem:[%s154 + $0xb8] sm:$0xff]
      %v186 = vld [vmem:[%s154 + $0xc0] sm:$0xff]
      %v187 = vld [vmem:[%s154 + $0xc8] sm:$0xff]
      %v188 = vld [vmem:[%s154 + $0xd0] sm:$0xff]
      %v189 = vld [vmem:[%s154 + $0xd8] sm:$0xff]
      %v190 = vld [vmem:[%s154 + $0xe0] sm:$0xff]
      %v191 = vld [vmem:[%s154 + $0xe8] sm:$0xff]
      %v192 = vld [vmem:[%s154 + $0xf0] sm:$0xff]
      %v193 = vld [vmem:[%s154 + $0xf8] sm:$0xff]
      %v194 = vld [vmem:[%s154 + $0x100] sm:$0xff]
      %v195 = vld [vmem:[%s154 + $0x108] sm:$0xff]
      %v196 = vld [vmem:[%s154 + $0x110] sm:$0xff]
      %v197 = vld [vmem:[%s154 + $0x118] sm:$0xff]
      %v198 = vld [vmem:[%s154 + $0x120] sm:$0xff]
      %v199 = vld [vmem:[%s154 + $0x128] sm:$0xff]
      %v200 = vld [vmem:[%s154 + $0x130] sm:$0xff]
      %v201 = vld [vmem:[%s154 + $0x138] sm:$0xff]
      %v202 = vld [vmem:[%s154 + $0x140] sm:$0xff]
      %v203 = vld [vmem:[%s154 + $0x148] sm:$0xff]
      %v204 = vld [vmem:[%s154 + $0x150] sm:$0xff]
      %v205 = vld [vmem:[%s154 + $0x158] sm:$0xff]
      %v206 = vld [vmem:[%s154 + $0x160] sm:$0xff]
      %v207 = vld [vmem:[%s154 + $0x168] sm:$0xff]
      %v208 = vld [vmem:[%s154 + $0x170] sm:$0xff]
      %v209 = vld [vmem:[%s154 + $0x178] sm:$0xff]
      %v210 = vld [vmem:[%s154 + $0x180] sm:$0xff]
      %v211 = vld [vmem:[%s154 + $0x188] sm:$0xff]
      %v212 = vld [vmem:[%s154 + $0x190] sm:$0xff]
      %v213 = vld [vmem:[%s154 + $0x198] sm:$0xff]
      %v214 = vld [vmem:[%s154 + $0x1a0] sm:$0xff]
      %v215 = vld [vmem:[%s154 + $0x1a8] sm:$0xff]
      %v216 = vld [vmem:[%s154 + $0x1b0] sm:$0xff]
      %v217 = vld [vmem:[%s154 + $0x1b8] sm:$0xff]
      %v218 = vld [vmem:[%s154 + $0x1c0] sm:$0xff]
      %v219 = vld [vmem:[%s154 + $0x1c8] sm:$0xff]
      %v220 = vld [vmem:[%s154 + $0x1d0] sm:$0xff]
      %v221 = vld [vmem:[%s154 + $0x1d8] sm:$0xff]
      %v222 = vld [vmem:[%s154 + $0x1e0] sm:$0xff]
      %v223 = vld [vmem:[%s154 + $0x1e8] sm:$0xff]
      %v224 = vld [vmem:[%s154 + $0x1f0] sm:$0xff]
      %v225 = vld [vmem:[%s154 + $0x1f8] sm:$0xff]
      %v226 = vld [vmem:[%s1] sm:$0x1]
      %v228 = vlaneseq
      %v229 = vshrl.u32 %v228, 7
      %v230 = vsub.s32 0, %v229
      %v231 = vrot.slane %v226, %v230
      %v233 = vadd.f32 %v162, %v231
      %v234 = vadd.f32 %v163, %v231
      %v235 = vadd.f32 %v164, %v231
      %v236 = vadd.f32 %v165, %v231
      %v237 = vadd.f32 %v166, %v231
      %v238 = vadd.f32 %v167, %v231
      %v239 = vadd.f32 %v168, %v231
      %v240 = vadd.f32 %v169, %v231
      %v241 = vadd.f32 %v170, %v231
      %v242 = vadd.f32 %v171, %v231
      %v243 = vadd.f32 %v172, %v231
      %v244 = vadd.f32 %v173, %v231
      %v245 = vadd.f32 %v174, %v231
      %v246 = vadd.f32 %v175, %v231
      %v247 = vadd.f32 %v176, %v231
      %v248 = vadd.f32 %v177, %v231
      %v249 = vadd.f32 %v178, %v231
      %v250 = vadd.f32 %v179, %v231
      %v251 = vadd.f32 %v180, %v231
      %v252 = vadd.f32 %v181, %v231
      %v253 = vadd.f32 %v182, %v231
      %v254 = vadd.f32 %v183, %v231
      %v255 = vadd.f32 %v184, %v231
      %v256 = vadd.f32 %v185, %v231
      %v257 = vadd.f32 %v186, %v231
      %v258 = vadd.f32 %v187, %v231
      %v259 = vadd.f32 %v188, %v231
      %v260 = vadd.f32 %v189, %v231
      %v261 = vadd.f32 %v190, %v231
      %v262 = vadd.f32 %v191, %v231
      %v263 = vadd.f32 %v192, %v231
      %v264 = vadd.f32 %v193, %v231
      %v265 = vadd.f32 %v194, %v231
      %v266 = vadd.f32 %v195, %v231
      %v267 = vadd.f32 %v196, %v231
      %v268 = vadd.f32 %v197, %v231
      %v269 = vadd.f32 %v198, %v231
      %v270 = vadd.f32 %v199, %v231
      %v271 = vadd.f32 %v200, %v231
      %v272 = vadd.f32 %v201, %v231
      %v273 = vadd.f32 %v202, %v231
      %v274 = vadd.f32 %v203, %v231
      %v275 = vadd.f32 %v204, %v231
      %v276 = vadd.f32 %v205, %v231
      %v277 = vadd.f32 %v206, %v231
      %v278 = vadd.f32 %v207, %v231
      %v279 = vadd.f32 %v208, %v231
      %v280 = vadd.f32 %v209, %v231
      %v281 = vadd.f32 %v210, %v231
      %v282 = vadd.f32 %v211, %v231
      %v283 = vadd.f32 %v212, %v231
      %v284 = vadd.f32 %v213, %v231
      %v285 = vadd.f32 %v214, %v231
      %v286 = vadd.f32 %v215, %v231
      %v287 = vadd.f32 %v216, %v231
      %v288 = vadd.f32 %v217, %v231
      %v289 = vadd.f32 %v218, %v231
      %v290 = vadd.f32 %v219, %v231
      %v291 = vadd.f32 %v220, %v231
      %v292 = vadd.f32 %v221, %v231
      %v293 = vadd.f32 %v222, %v231
      %v294 = vadd.f32 %v223, %v231
      %v295 = vadd.f32 %v224, %v231
      %v296 = vadd.f32 %v225, %v231
      %s297 = smul.u32 %s15, 512
      %v298 = vlaneseq
      %v299 = vshrl.u32 %v298, 7
      %v300 = vadd.s32 %v299, 8
      %v301 = vadd.s32 %v299, 16
      %v302 = vadd.s32 %v299, 24
      %v303 = vadd.s32 %v299, 32
      %v304 = vadd.s32 %v299, 40
      %v305 = vadd.s32 %v299, 48
      %v306 = vadd.s32 %v299, 56
      %v307 = vadd.s32 %v299, 64
      %v308 = vadd.s32 %v299, 72
      %v309 = vadd.s32 %v299, 80
      %v310 = vadd.s32 %v299, 88
      %v311 = vadd.s32 %v299, 96
      %v312 = vadd.s32 %v299, 104
      %v313 = vadd.s32 %v299, 112
      %v314 = vadd.s32 %v299, 120
      %v315 = vadd.s32 %v299, 128
      %v316 = vadd.s32 %v299, 136
      %v317 = vadd.s32 %v299, 144
      %v318 = vadd.s32 %v299, 152
      %v319 = vadd.s32 %v299, 160
      %v320 = vadd.s32 %v299, 168
      %v321 = vadd.s32 %v299, 176
      %v322 = vadd.s32 %v299, 184
      %v323 = vadd.s32 %v299, 192
      %v324 = vadd.s32 %v299, 200
      %v325 = vadd.s32 %v299, 208
      %v326 = vadd.s32 %v299, 216
      %v327 = vadd.s32 %v299, 224
      %v328 = vadd.s32 %v299, 232
      %v329 = vadd.s32 %v299, 240
      %v330 = vadd.s32 %v299, 248
      %v331 = vadd.s32 %v299, 256
      %v332 = vadd.s32 %v299, 264
      %v333 = vadd.s32 %v299, 272
      %v334 = vadd.s32 %v299, 280
      %v335 = vadd.s32 %v299, 288
      %v336 = vadd.s32 %v299, 296
      %v337 = vadd.s32 %v299, 304
      %v338 = vadd.s32 %v299, 312
      %v339 = vadd.s32 %v299, 320
      %v340 = vadd.s32 %v299, 328
      %v341 = vadd.s32 %v299, 336
      %v342 = vadd.s32 %v299, 344
      %v343 = vadd.s32 %v299, 352
      %v344 = vadd.s32 %v299, 360
      %v345 = vadd.s32 %v299, 368
      %v346 = vadd.s32 %v299, 376
      %v347 = vadd.s32 %v299, 384
      %v348 = vadd.s32 %v299, 392
      %v349 = vadd.s32 %v299, 400
      %v350 = vadd.s32 %v299, 408
      %v351 = vadd.s32 %v299, 416
      %v352 = vadd.s32 %v299, 424
      %v353 = vadd.s32 %v299, 432
      %v354 = vadd.s32 %v299, 440
      %v355 = vadd.s32 %v299, 448
      %v356 = vadd.s32 %v299, 456
      %v357 = vadd.s32 %v299, 464
      %v358 = vadd.s32 %v299, 472
      %v359 = vadd.s32 %v299, 480
      %v360 = vadd.s32 %v299, 488
      %v361 = vadd.s32 %v299, 496
      %v362 = vadd.s32 %v299, 504
      %v363 = vstv %s297
      %v364 = vadd.s32 %v363, %v299
      %v365 = vadd.s32 %v363, %v300
      %v366 = vadd.s32 %v363, %v301
      %v367 = vadd.s32 %v363, %v302
      %v368 = vadd.s32 %v363, %v303
      %v369 = vadd.s32 %v363, %v304
      %v370 = vadd.s32 %v363, %v305
      %v371 = vadd.s32 %v363, %v306
      %v372 = vadd.s32 %v363, %v307
      %v373 = vadd.s32 %v363, %v308
      %v374 = vadd.s32 %v363, %v309
      %v375 = vadd.s32 %v363, %v310
      %v376 = vadd.s32 %v363, %v311
      %v377 = vadd.s32 %v363, %v312
      %v378 = vadd.s32 %v363, %v313
      %v379 = vadd.s32 %v363, %v314
      %v380 = vadd.s32 %v363, %v315
      %v381 = vadd.s32 %v363, %v316
      %v382 = vadd.s32 %v363, %v317
      %v383 = vadd.s32 %v363, %v318
      %v384 = vadd.s32 %v363, %v319
      %v385 = vadd.s32 %v363, %v320
      %v386 = vadd.s32 %v363, %v321
      %v387 = vadd.s32 %v363, %v322
      %v388 = vadd.s32 %v363, %v323
      %v389 = vadd.s32 %v363, %v324
      %v390 = vadd.s32 %v363, %v325
      %v391 = vadd.s32 %v363, %v326
      %v392 = vadd.s32 %v363, %v327
      %v393 = vadd.s32 %v363, %v328
      %v394 = vadd.s32 %v363, %v329
      %v395 = vadd.s32 %v363, %v330
      %v396 = vadd.s32 %v363, %v331
      %v397 = vadd.s32 %v363, %v332
      %v398 = vadd.s32 %v363, %v333
      %v399 = vadd.s32 %v363, %v334
      %v400 = vadd.s32 %v363, %v335
      %v401 = vadd.s32 %v363, %v336
      %v402 = vadd.s32 %v363, %v337
      %v403 = vadd.s32 %v363, %v338
      %v404 = vadd.s32 %v363, %v339
      %v405 = vadd.s32 %v363, %v340
      %v406 = vadd.s32 %v363, %v341
      %v407 = vadd.s32 %v363, %v342
      %v408 = vadd.s32 %v363, %v343
      %v409 = vadd.s32 %v363, %v344
      %v410 = vadd.s32 %v363, %v345
      %v411 = vadd.s32 %v363, %v346
      %v412 = vadd.s32 %v363, %v347
      %v413 = vadd.s32 %v363, %v348
      %v414 = vadd.s32 %v363, %v349
      %v415 = vadd.s32 %v363, %v350
      %v416 = vadd.s32 %v363, %v351
      %v417 = vadd.s32 %v363, %v352
      %v418 = vadd.s32 %v363, %v353
      %v419 = vadd.s32 %v363, %v354
      %v420 = vadd.s32 %v363, %v355
      %v421 = vadd.s32 %v363, %v356
      %v422 = vadd.s32 %v363, %v357
      %v423 = vadd.s32 %v363, %v358
      %v424 = vadd.s32 %v363, %v359
      %v425 = vadd.s32 %v363, %v360
      %v426 = vadd.s32 %v363, %v361
      %v427 = vadd.s32 %v363, %v362
      %vm428 = vcmp.lt.s32.totalorder %v364, 2048
      %vm429 = vcmp.lt.s32.totalorder %v365, 2048
      %vm430 = vcmp.lt.s32.totalorder %v366, 2048
      %vm431 = vcmp.lt.s32.totalorder %v367, 2048
      %vm432 = vcmp.lt.s32.totalorder %v368, 2048
      %vm433 = vcmp.lt.s32.totalorder %v369, 2048
      %vm434 = vcmp.lt.s32.totalorder %v370, 2048
      %vm435 = vcmp.lt.s32.totalorder %v371, 2048
      %vm436 = vcmp.lt.s32.totalorder %v372, 2048
      %vm437 = vcmp.lt.s32.totalorder %v373, 2048
      %vm438 = vcmp.lt.s32.totalorder %v374, 2048
      %vm439 = vcmp.lt.s32.totalorder %v375, 2048
      %vm440 = vcmp.lt.s32.totalorder %v376, 2048
      %vm441 = vcmp.lt.s32.totalorder %v377, 2048
      %vm442 = vcmp.lt.s32.totalorder %v378, 2048
      %vm443 = vcmp.lt.s32.totalorder %v379, 2048
      %vm444 = vcmp.lt.s32.totalorder %v380, 2048
      %vm445 = vcmp.lt.s32.totalorder %v381, 2048
      %vm446 = vcmp.lt.s32.totalorder %v382, 2048
      %vm447 = vcmp.lt.s32.totalorder %v383, 2048
      %vm448 = vcmp.lt.s32.totalorder %v384, 2048
      %vm449 = vcmp.lt.s32.totalorder %v385, 2048
      %vm450 = vcmp.lt.s32.totalorder %v386, 2048
      %vm451 = vcmp.lt.s32.totalorder %v387, 2048
      %vm452 = vcmp.lt.s32.totalorder %v388, 2048
      %vm453 = vcmp.lt.s32.totalorder %v389, 2048
      %vm454 = vcmp.lt.s32.totalorder %v390, 2048
      %vm455 = vcmp.lt.s32.totalorder %v391, 2048
      %vm456 = vcmp.lt.s32.totalorder %v392, 2048
      %vm457 = vcmp.lt.s32.totalorder %v393, 2048
      %vm458 = vcmp.lt.s32.totalorder %v394, 2048
      %vm459 = vcmp.lt.s32.totalorder %v395, 2048
      %vm460 = vcmp.lt.s32.totalorder %v396, 2048
      %vm461 = vcmp.lt.s32.totalorder %v397, 2048
      %vm462 = vcmp.lt.s32.totalorder %v398, 2048
      %vm463 = vcmp.lt.s32.totalorder %v399, 2048
      %vm464 = vcmp.lt.s32.totalorder %v400, 2048
      %vm465 = vcmp.lt.s32.totalorder %v401, 2048
      %vm466 = vcmp.lt.s32.totalorder %v402, 2048
      %vm467 = vcmp.lt.s32.totalorder %v403, 2048
      %vm468 = vcmp.lt.s32.totalorder %v404, 2048
      %vm469 = vcmp.lt.s32.totalorder %v405, 2048
      %vm470 = vcmp.lt.s32.totalorder %v406, 2048
      %vm471 = vcmp.lt.s32.totalorder %v407, 2048
      %vm472 = vcmp.lt.s32.totalorder %v408, 2048
      %vm473 = vcmp.lt.s32.totalorder %v409, 2048
      %vm474 = vcmp.lt.s32.totalorder %v410, 2048
      %vm475 = vcmp.lt.s32.totalorder %v411, 2048
      %vm476 = vcmp.lt.s32.totalorder %v412, 2048
      %vm477 = vcmp.lt.s32.totalorder %v413, 2048
      %vm478 = vcmp.lt.s32.totalorder %v414, 2048
      %vm479 = vcmp.lt.s32.totalorder %v415, 2048
      %vm480 = vcmp.lt.s32.totalorder %v416, 2048
      %vm481 = vcmp.lt.s32.totalorder %v417, 2048
      %vm482 = vcmp.lt.s32.totalorder %v418, 2048
      %vm483 = vcmp.lt.s32.totalorder %v419, 2048
      %vm484 = vcmp.lt.s32.totalorder %v420, 2048
      %vm485 = vcmp.lt.s32.totalorder %v421, 2048
      %vm486 = vcmp.lt.s32.totalorder %v422, 2048
      %vm487 = vcmp.lt.s32.totalorder %v423, 2048
      %vm488 = vcmp.lt.s32.totalorder %v424, 2048
      %vm489 = vcmp.lt.s32.totalorder %v425, 2048
      %vm490 = vcmp.lt.s32.totalorder %v426, 2048
      %vm491 = vcmp.lt.s32.totalorder %v427, 2048
      %v492 = vsel %vm428, %v233, 0.0
      %v493 = vsel %vm429, %v234, 0.0
      %v494 = vsel %vm430, %v235, 0.0
      %v495 = vsel %vm431, %v236, 0.0
      %v496 = vsel %vm432, %v237, 0.0
      %v497 = vsel %vm433, %v238, 0.0
      %v498 = vsel %vm434, %v239, 0.0
      %v499 = vsel %vm435, %v240, 0.0
      %v500 = vsel %vm436, %v241, 0.0
      %v501 = vsel %vm437, %v242, 0.0
      %v502 = vsel %vm438, %v243, 0.0
      %v503 = vsel %vm439, %v244, 0.0
      %v504 = vsel %vm440, %v245, 0.0
      %v505 = vsel %vm441, %v246, 0.0
      %v506 = vsel %vm442, %v247, 0.0
      %v507 = vsel %vm443, %v248, 0.0
      %v508 = vsel %vm444, %v249, 0.0
      %v509 = vsel %vm445, %v250, 0.0
      %v510 = vsel %vm446, %v251, 0.0
      %v511 = vsel %vm447, %v252, 0.0
      %v512 = vsel %vm448, %v253, 0.0
      %v513 = vsel %vm449, %v254, 0.0
      %v514 = vsel %vm450, %v255, 0.0
      %v515 = vsel %vm451, %v256, 0.0
      %v516 = vsel %vm452, %v257, 0.0
      %v517 = vsel %vm453, %v258, 0.0
      %v518 = vsel %vm454, %v259, 0.0
      %v519 = vsel %vm455, %v260, 0.0
      %v520 = vsel %vm456, %v261, 0.0
      %v521 = vsel %vm457, %v262, 0.0
      %v522 = vsel %vm458, %v263, 0.0
      %v523 = vsel %vm459, %v264, 0.0
      %v524 = vsel %vm460, %v265, 0.0
      %v525 = vsel %vm461, %v266, 0.0
      %v526 = vsel %vm462, %v267, 0.0
      %v527 = vsel %vm463, %v268, 0.0
      %v528 = vsel %vm464, %v269, 0.0
      %v529 = vsel %vm465, %v270, 0.0
      %v530 = vsel %vm466, %v271, 0.0
      %v531 = vsel %vm467, %v272, 0.0
      %v532 = vsel %vm468, %v273, 0.0
      %v533 = vsel %vm469, %v274, 0.0
      %v534 = vsel %vm470, %v275, 0.0
      %v535 = vsel %vm471, %v276, 0.0
      %v536 = vsel %vm472, %v277, 0.0
      %v537 = vsel %vm473, %v278, 0.0
      %v538 = vsel %vm474, %v279, 0.0
      %v539 = vsel %vm475, %v280, 0.0
      %v540 = vsel %vm476, %v281, 0.0
      %v541 = vsel %vm477, %v282, 0.0
      %v542 = vsel %vm478, %v283, 0.0
      %v543 = vsel %vm479, %v284, 0.0
      %v544 = vsel %vm480, %v285, 0.0
      %v545 = vsel %vm481, %v286, 0.0
      %v546 = vsel %vm482, %v287, 0.0
      %v547 = vsel %vm483, %v288, 0.0
      %v548 = vsel %vm484, %v289, 0.0
      %v549 = vsel %vm485, %v290, 0.0
      %v550 = vsel %vm486, %v291, 0.0
      %v551 = vsel %vm487, %v292, 0.0
      %v552 = vsel %vm488, %v293, 0.0
      %v553 = vsel %vm489, %v294, 0.0
      %v554 = vsel %vm490, %v295, 0.0
      %v555 = vsel %vm491, %v296, 0.0
      %v556 = vadd.f32 %v492, %v493
      %v557 = vadd.f32 %v556, %v494
      %v558 = vadd.f32 %v557, %v495
      %v559 = vadd.f32 %v558, %v496
      %v560 = vadd.f32 %v559, %v497
      %v561 = vadd.f32 %v560, %v498
      %v562 = vadd.f32 %v561, %v499
      %v563 = vadd.f32 %v562, %v500
      %v564 = vadd.f32 %v563, %v501
      %v565 = vadd.f32 %v564, %v502
      %v566 = vadd.f32 %v565, %v503
      %v567 = vadd.f32 %v566, %v504
      %v568 = vadd.f32 %v567, %v505
      %v569 = vadd.f32 %v568, %v506
      %v570 = vadd.f32 %v569, %v507
      %v571 = vadd.f32 %v570, %v508
      %v572 = vadd.f32 %v571, %v509
      %v573 = vadd.f32 %v572, %v510
      %v574 = vadd.f32 %v573, %v511
      %v575 = vadd.f32 %v574, %v512
      %v576 = vadd.f32 %v575, %v513
      %v577 = vadd.f32 %v576, %v514
      %v578 = vadd.f32 %v577, %v515
      %v579 = vadd.f32 %v578, %v516
      %v580 = vadd.f32 %v579, %v517
      %v581 = vadd.f32 %v580, %v518
      %v582 = vadd.f32 %v581, %v519
      %v583 = vadd.f32 %v582, %v520
      %v584 = vadd.f32 %v583, %v521
      %v585 = vadd.f32 %v584, %v522
      %v586 = vadd.f32 %v585, %v523
      %v587 = vadd.f32 %v586, %v524
      %v588 = vadd.f32 %v587, %v525
      %v589 = vadd.f32 %v588, %v526
      %v590 = vadd.f32 %v589, %v527
      %v591 = vadd.f32 %v590, %v528
      %v592 = vadd.f32 %v591, %v529
      %v593 = vadd.f32 %v592, %v530
      %v594 = vadd.f32 %v593, %v531
      %v595 = vadd.f32 %v594, %v532
      %v596 = vadd.f32 %v595, %v533
      %v597 = vadd.f32 %v596, %v534
      %v598 = vadd.f32 %v597, %v535
      %v599 = vadd.f32 %v598, %v536
      %v600 = vadd.f32 %v599, %v537
      %v601 = vadd.f32 %v600, %v538
      %v602 = vadd.f32 %v601, %v539
      %v603 = vadd.f32 %v602, %v540
      %v604 = vadd.f32 %v603, %v541
      %v605 = vadd.f32 %v604, %v542
      %v606 = vadd.f32 %v605, %v543
      %v607 = vadd.f32 %v606, %v544
      %v608 = vadd.f32 %v607, %v545
      %v609 = vadd.f32 %v608, %v546
      %v610 = vadd.f32 %v609, %v547
      %v611 = vadd.f32 %v610, %v548
      %v612 = vadd.f32 %v611, %v549
      %v613 = vadd.f32 %v612, %v550
      %v614 = vadd.f32 %v613, %v551
      %v615 = vadd.f32 %v614, %v552
      %v616 = vadd.f32 %v615, %v553
      %v617 = vadd.f32 %v616, %v554
      %v618 = vadd.f32 %v617, %v555
      %v619 = vrot.slane %v618, 4
      %v620 = vadd.f32 %v618, %v619
      %v621 = vrot.slane %v620, 2
      %v622 = vadd.f32 %v620, %v621
      %v623 = vrot.slane %v622, 1
      %v624 = vadd.f32 %v622, %v623
      %v625 = vmul.f32 %v492, %v492
      %v626 = vmul.f32 %v493, %v493
      %v627 = vmul.f32 %v494, %v494
      %v628 = vmul.f32 %v495, %v495
      %v629 = vmul.f32 %v496, %v496
      %v630 = vmul.f32 %v497, %v497
      %v631 = vmul.f32 %v498, %v498
      %v632 = vmul.f32 %v499, %v499
      %v633 = vmul.f32 %v500, %v500
      %v634 = vmul.f32 %v501, %v501
      %v635 = vmul.f32 %v502, %v502
      %v636 = vmul.f32 %v503, %v503
      %v637 = vmul.f32 %v504, %v504
      %v638 = vmul.f32 %v505, %v505
      %v639 = vmul.f32 %v506, %v506
      %v640 = vmul.f32 %v507, %v507
      %v641 = vmul.f32 %v508, %v508
      %v642 = vmul.f32 %v509, %v509
      %v643 = vmul.f32 %v510, %v510
      %v644 = vmul.f32 %v511, %v511
      %v645 = vmul.f32 %v512, %v512
      %v646 = vmul.f32 %v513, %v513
      %v647 = vmul.f32 %v514, %v514
      %v648 = vmul.f32 %v515, %v515
      %v649 = vmul.f32 %v516, %v516
      %v650 = vmul.f32 %v517, %v517
      %v651 = vmul.f32 %v518, %v518
      %v652 = vmul.f32 %v519, %v519
      %v653 = vmul.f32 %v520, %v520
      %v654 = vmul.f32 %v521, %v521
      %v655 = vmul.f32 %v522, %v522
      %v656 = vmul.f32 %v523, %v523
      %v657 = vmul.f32 %v524, %v524
      %v658 = vmul.f32 %v525, %v525
      %v659 = vmul.f32 %v526, %v526
      %v660 = vmul.f32 %v527, %v527
      %v661 = vmul.f32 %v528, %v528
      %v662 = vmul.f32 %v529, %v529
      %v663 = vmul.f32 %v530, %v530
      %v664 = vmul.f32 %v531, %v531
      %v665 = vmul.f32 %v532, %v532
      %v666 = vmul.f32 %v533, %v533
      %v667 = vmul.f32 %v534, %v534
      %v668 = vmul.f32 %v535, %v535
      %v669 = vmul.f32 %v536, %v536
      %v670 = vmul.f32 %v537, %v537
      %v671 = vmul.f32 %v538, %v538
      %v672 = vmul.f32 %v539, %v539
      %v673 = vmul.f32 %v540, %v540
      %v674 = vmul.f32 %v541, %v541
      %v675 = vmul.f32 %v542, %v542
      %v676 = vmul.f32 %v543, %v543
      %v677 = vmul.f32 %v544, %v544
      %v678 = vmul.f32 %v545, %v545
      %v679 = vmul.f32 %v546, %v546
      %v680 = vmul.f32 %v547, %v547
      %v681 = vmul.f32 %v548, %v548
      %v682 = vmul.f32 %v549, %v549
      %v683 = vmul.f32 %v550, %v550
      %v684 = vmul.f32 %v551, %v551
      %v685 = vmul.f32 %v552, %v552
      %v686 = vmul.f32 %v553, %v553
      %v687 = vmul.f32 %v554, %v554
      %v688 = vmul.f32 %v555, %v555
      %v689 = vadd.f32 %v625, %v626
      %v690 = vadd.f32 %v689, %v627
      %v691 = vadd.f32 %v690, %v628
      %v692 = vadd.f32 %v691, %v629
      %v693 = vadd.f32 %v692, %v630
      %v694 = vadd.f32 %v693, %v631
      %v695 = vadd.f32 %v694, %v632
      %v696 = vadd.f32 %v695, %v633
      %v697 = vadd.f32 %v696, %v634
      %v698 = vadd.f32 %v697, %v635
      %v699 = vadd.f32 %v698, %v636
      %v700 = vadd.f32 %v699, %v637
      %v701 = vadd.f32 %v700, %v638
      %v702 = vadd.f32 %v701, %v639
      %v703 = vadd.f32 %v702, %v640
      %v704 = vadd.f32 %v703, %v641
      %v705 = vadd.f32 %v704, %v642
      %v706 = vadd.f32 %v705, %v643
      %v707 = vadd.f32 %v706, %v644
      %v708 = vadd.f32 %v707, %v645
      %v709 = vadd.f32 %v708, %v646
      %v710 = vadd.f32 %v709, %v647
      %v711 = vadd.f32 %v710, %v648
      %v712 = vadd.f32 %v711, %v649
      %v713 = vadd.f32 %v712, %v650
      %v714 = vadd.f32 %v713, %v651
      %v715 = vadd.f32 %v714, %v652
      %v716 = vadd.f32 %v715, %v653
      %v717 = vadd.f32 %v716, %v654
      %v718 = vadd.f32 %v717, %v655
      %v719 = vadd.f32 %v718, %v656
      %v720 = vadd.f32 %v719, %v657
      %v721 = vadd.f32 %v720, %v658
      %v722 = vadd.f32 %v721, %v659
      %v723 = vadd.f32 %v722, %v660
      %v724 = vadd.f32 %v723, %v661
      %v725 = vadd.f32 %v724, %v662
      %v726 = vadd.f32 %v725, %v663
      %v727 = vadd.f32 %v726, %v664
      %v728 = vadd.f32 %v727, %v665
      %v729 = vadd.f32 %v728, %v666
      %v730 = vadd.f32 %v729, %v667
      %v731 = vadd.f32 %v730, %v668
      %v732 = vadd.f32 %v731, %v669
      %v733 = vadd.f32 %v732, %v670
      %v734 = vadd.f32 %v733, %v671
      %v735 = vadd.f32 %v734, %v672
      %v736 = vadd.f32 %v735, %v673
      %v737 = vadd.f32 %v736, %v674
      %v738 = vadd.f32 %v737, %v675
      %v739 = vadd.f32 %v738, %v676
      %v740 = vadd.f32 %v739, %v677
      %v741 = vadd.f32 %v740, %v678
      %v742 = vadd.f32 %v741, %v679
      %v743 = vadd.f32 %v742, %v680
      %v744 = vadd.f32 %v743, %v681
      %v745 = vadd.f32 %v744, %v682
      %v746 = vadd.f32 %v745, %v683
      %v747 = vadd.f32 %v746, %v684
      %v748 = vadd.f32 %v747, %v685
      %v749 = vadd.f32 %v748, %v686
      %v750 = vadd.f32 %v749, %v687
      %v751 = vadd.f32 %v750, %v688
      %v752 = vrot.slane %v751, 4
      %v753 = vadd.f32 %v751, %v752
      %v754 = vrot.slane %v753, 2
      %v755 = vadd.f32 %v753, %v754
      %v756 = vrot.slane %v755, 1
      %v757 = vadd.f32 %v755, %v756
      %v758 = vld [vmem:[%s2] sm:$0xff]
      %v759 = vadd.f32 %v758, %v624
      %760 = vst [vmem:[%s2] sm:$0xff] %v759
      %v761 = vld [vmem:[%s3] sm:$0xff]
      %v762 = vadd.f32 %v761, %v757
      %763 = vst [vmem:[%s3] sm:$0xff] %v762
      // Predicated region
      $region33: #{generator_forward.24} parent=27 // pred_check
        %p764 = pneg %p75
      $region34: #{generator_forward.24} parent=27 // pred_check_branch
        %766 = sbr.rel (%p764) target = $region36
      $region35: #{generator_forward.24} parent=27 // pred_region
        _
      $region36: #{generator_forward.24} parent=27 // pred_fallthru
        _
      // Predicated region
      $region37: #{generator_forward.24} parent=27 // pred_check
        %p767 = pneg %p96
      $region38: #{generator_forward.24} parent=27 // pred_check_branch
        %769 = sbr.rel (%p767) target = $region40
      $region39: #{generator_forward.24} parent=27 // pred_region
        _
      $region40: #{generator_forward.24} parent=27 // pred_fallthru
        _
      // Predicated region
      $region41: #{generator_forward.24} parent=27 // pred_check
        %p770 = pneg %p75
      $region42: #{generator_forward.24} parent=27 // pred_check_branch
        %772 = sbr.rel (%p770) target = $region44
      $region43: #{generator_forward.24} parent=27 // pred_region
        _
      $region44: #{generator_forward.24} parent=27 // pred_fallthru
        _
      // Predicated region
      $region45: #{generator_forward.24} parent=27 // pred_check
        %p773 = pneg %p96
      $region46: #{generator_forward.24} parent=27 // pred_check_branch
        %775 = sbr.rel (%p773) target = $region48
      $region47: #{generator_forward.24} parent=27 // pred_region
        _
      $region48: #{generator_forward.24} parent=27 // pred_fallthru
        _
    $region28: #{generator_forward.24} parent=5 // pred_fallthru
      _
    %p776 = scmp.le.s32.totalorder 2, %s10
    // Predicated region
    $region49: #{generator_forward.24} parent=5 // pred_check
      %p777 = pneg %p776
    $region50: #{generator_forward.24} parent=5 // pred_check_branch
      %779 = sbr.rel (%p777) target = $region52
    $region51: #{generator_forward.24} parent=5 // pred_region
      %s780 = ssub.s32 %s10, 2
    $region52: #{generator_forward.24} parent=5 // pred_fallthru
      _
  $region6: #{generator_forward.24} parent=0 // loop_footer
    %s14 = sadd.s32 1, %s10
  $region7: #{generator_forward.24} parent=0 // loop_footer_branch
    %9 = sbr.rel target = $region3
  $region8: #{generator_forward.24} parent=0 // loop_exit
    _

// kernel: generator_forward.25
$region0: #{generator_forward.25}
  #allocation0 [shape = 'u32[]', space=smem, size = 0x4, offset = 0x4, fixed_abs, tag = 'smem constant byte address 0x4 - core index']
  #allocation1 [shape = 'u32[144,128]{1,0:T(1,128)}', space=vmem, size = 0x12000, scoped, tag = 'internal scratch']
  %s0 = inlined_call_operand.vmem [shape: f32[2048,128], index: 0, kind: input, shape index: {}]
  %s1 = inlined_call_operand.vmem [shape: f32[1,128], index: 1, kind: input, shape index: {}]
  %s2 = inlined_call_operand.vmem [shape: f32[1,128], index: 2, kind: input, shape index: {}]
  %s3 = inlined_call_operand.vmem [shape: f32[1,128], index: 3, kind: input, shape index: {}]
  %s4 = inlined_call_operand.vmem [shape: f32[8,128], index: 4, kind: input, shape index: {}]
  %s5 = inlined_call_operand.vmem [shape: f32[8,128], index: 5, kind: input, shape index: {}]
  %s6 = inlined_call_operand.vmem [shape: f32[2048,128], index: 6, kind: output, shape index: {}]
  %s7 = sld [smem:[#allocation0]]
  $region57: #{generator_forward.25} parent=0
    _
  %s9 = ssub.s32 1, %s7
  %s10 = scalar_select 0, %s9, %s7
  loop: start=0, step=1, limit=6
  $region2: #{generator_forward.25} parent=0 // loop_pre_header
    _
  $region3: #{generator_forward.25} parent=0 // loop_header
    %s12 = sphi 0, %s16
    %p13 = scmp.ge.s32.totalorder %s12, 6
    %s22 = sphi 0, %s24
    %s25 = sphi 0, %s22
    %s26 = sphi 0, %s25
    %s42 = sphi 0, %s26
    %s46 = sphi 0, %s46
    %s48 = sphi 0, %s46
    %s49 = sphi 0, %s48
    %s63 = sphi 0, %s49
    %s67 = sphi 0, %s67
    %s69 = sphi 0, %s67
    %s70 = sphi 0, %s69
    %s84 = sphi 0, %s70
    %s88 = sphi 0, %s88
    %s90 = sphi 0, %s88
    %s91 = sphi 0, %s90
    %s105 = sphi 0, %s91
    %s109 = sphi 0, %s109
    %s111 = sphi 0, %s109
    %s112 = sphi 0, %s111
    %s126 = sphi 0, %s112
    %s130 = sphi 0, %s130
    %s132 = sphi 0, %s130
    %s133 = sphi 0, %s132
    %s147 = sphi 0, %s133
    %s153 = sphi 0, %s155
    %s156 = sphi 0, %s153
    %s157 = sphi 0, %s156
    %s173 = sphi 0, %s157
  $region4: #{generator_forward.25} parent=0 // loop_header_branch
    %15 = sbr.rel (%p13) target = $region8
  $region5: #{generator_forward.25} parent=0 // loop_body
    %s17 = ssub.s32 %s12, 1
    %s18 = ssub.s32 %s12, 2
    %s19 = sadd.s32 %s12, 1
    %s20 = ssub.s32 %s12, %s19
    %p21 = scmp.eq.s32.totalorder %s20, 0
    %s23 = sadd.s32 %s22, 1
    %s24 = scalar_select %p21, %s22, %s23
    %p27 = pneg %p21
    %p28 = scmp.eq.s32.totalorder %s12, 3
    %p29 = por %p27, %p28
    %p30 = scmp.ne.s32.totalorder %s22, %s25
    %p31 = scmp.eq.s32.totalorder %s12, 0
    %p32 = por %p30, %p31
    %p33 = scmp.ne.s32.totalorder %s22, %s25
    %p34 = scmp.eq.s32.totalorder %s17, 3
    %p35 = por %p33, %p34
    %p36 = scmp.ne.s32.totalorder %s25, %s26
    %p37 = scmp.eq.s32.totalorder %s17, 0
    %p38 = por %p36, %p37
    %p39 = scmp.ne.s32.totalorder %s25, %s26
    %p40 = scmp.eq.s32.totalorder %s18, 3
    %p41 = por %p39, %p40
    %p43 = scmp.ne.s32.totalorder %s26, %s42
    %p44 = scmp.eq.s32.totalorder %s18, 0
    %p45 = por %p43, %p44
    %s47 = sadd.s32 %s46, 1
    %p50 = scmp.eq.s32.totalorder %s12, 3
    %p51 = scmp.ne.s32.totalorder %s46, %s48
    %p52 = scmp.eq.s32.totalorder %s12, 0
    %p53 = por %p51, %p52
    %p54 = scmp.ne.s32.totalorder %s46, %s48
    %p55 = scmp.eq.s32.totalorder %s17, 3
    %p56 = por %p54, %p55
    %p57 = scmp.ne.s32.totalorder %s48, %s49
    %p58 = scmp.eq.s32.totalorder %s17, 0
    %p59 = por %p57, %p58
    %p60 = scmp.ne.s32.totalorder %s48, %s49
    %p61 = scmp.eq.s32.totalorder %s18, 3
    %p62 = por %p60, %p61
    %p64 = scmp.ne.s32.totalorder %s49, %s63
    %p65 = scmp.eq.s32.totalorder %s18, 0
    %p66 = por %p64, %p65
    %s68 = sadd.s32 %s67, 1
    %p71 = scmp.eq.s32.totalorder %s12, 3
    %p72 = scmp.ne.s32.totalorder %s67, %s69
    %p73 = scmp.eq.s32.totalorder %s12, 0
    %p74 = por %p72, %p73
    %p75 = scmp.ne.s32.totalorder %s67, %s69
    %p76 = scmp.eq.s32.totalorder %s17, 3
    %p77 = por %p75, %p76
    %p78 = scmp.ne.s32.totalorder %s69, %s70
    %p79 = scmp.eq.s32.totalorder %s17, 0
    %p80 = por %p78, %p79
    %p81 = scmp.ne.s32.totalorder %s69, %s70
    %p82 = scmp.eq.s32.totalorder %s18, 3
    %p83 = por %p81, %p82
    %p85 = scmp.ne.s32.totalorder %s70, %s84
    %p86 = scmp.eq.s32.totalorder %s18, 0
    %p87 = por %p85, %p86
    %s89 = sadd.s32 %s88, 1
    %p92 = scmp.eq.s32.totalorder %s12, 3
    %p93 = scmp.ne.s32.totalorder %s88, %s90
    %p94 = scmp.eq.s32.totalorder %s12, 0
    %p95 = por %p93, %p94
    %p96 = scmp.ne.s32.totalorder %s88, %s90
    %p97 = scmp.eq.s32.totalorder %s17, 3
    %p98 = por %p96, %p97
    %p99 = scmp.ne.s32.totalorder %s90, %s91
    %p100 = scmp.eq.s32.totalorder %s17, 0
    %p101 = por %p99, %p100
    %p102 = scmp.ne.s32.totalorder %s90, %s91
    %p103 = scmp.eq.s32.totalorder %s18, 3
    %p104 = por %p102, %p103
    %p106 = scmp.ne.s32.totalorder %s91, %s105
    %p107 = scmp.eq.s32.totalorder %s18, 0
    %p108 = por %p106, %p107
    %s110 = sadd.s32 %s109, 1
    %p113 = scmp.eq.s32.totalorder %s12, 3
    %p114 = scmp.ne.s32.totalorder %s109, %s111
    %p115 = scmp.eq.s32.totalorder %s12, 0
    %p116 = por %p114, %p115
    %p117 = scmp.ne.s32.totalorder %s109, %s111
    %p118 = scmp.eq.s32.totalorder %s17, 3
    %p119 = por %p117, %p118
    %p120 = scmp.ne.s32.totalorder %s111, %s112
    %p121 = scmp.eq.s32.totalorder %s17, 0
    %p122 = por %p120, %p121
    %p123 = scmp.ne.s32.totalorder %s111, %s112
    %p124 = scmp.eq.s32.totalorder %s18, 3
    %p125 = por %p123, %p124
    %p127 = scmp.ne.s32.totalorder %s112, %s126
    %p128 = scmp.eq.s32.totalorder %s18, 0
    %p129 = por %p127, %p128
    %s131 = sadd.s32 %s130, 1
    %p134 = scmp.eq.s32.totalorder %s12, 3
    %p135 = scmp.ne.s32.totalorder %s130, %s132
    %p136 = scmp.eq.s32.totalorder %s12, 0
    %p137 = por %p135, %p136
    %p138 = scmp.ne.s32.totalorder %s130, %s132
    %p139 = scmp.eq.s32.totalorder %s17, 3
    %p140 = por %p138, %p139
    %p141 = scmp.ne.s32.totalorder %s132, %s133
    %p142 = scmp.eq.s32.totalorder %s17, 0
    %p143 = por %p141, %p142
    %p144 = scmp.ne.s32.totalorder %s132, %s133
    %p145 = scmp.eq.s32.totalorder %s18, 3
    %p146 = por %p144, %p145
    %p148 = scmp.ne.s32.totalorder %s133, %s147
    %p149 = scmp.eq.s32.totalorder %s18, 0
    %p150 = por %p148, %p149
    %s151 = ssub.s32 %s12, %s19
    %p152 = scmp.eq.s32.totalorder %s151, 0
    %s154 = sadd.s32 %s153, 1
    %s155 = scalar_select %p152, %s153, %s154
    %p158 = pneg %p152
    %p159 = scmp.eq.s32.totalorder %s12, 3
    %p160 = por %p158, %p159
    %p161 = scmp.ne.s32.totalorder %s153, %s156
    %p162 = scmp.eq.s32.totalorder %s12, 0
    %p163 = por %p161, %p162
    %p164 = scmp.ne.s32.totalorder %s153, %s156
    %p165 = scmp.eq.s32.totalorder %s17, 3
    %p166 = por %p164, %p165
    %p167 = scmp.ne.s32.totalorder %s156, %s157
    %p168 = scmp.eq.s32.totalorder %s17, 0
    %p169 = por %p167, %p168
    %p170 = scmp.ne.s32.totalorder %s156, %s157
    %p171 = scmp.eq.s32.totalorder %s18, 3
    %p172 = por %p170, %p171
    %p174 = scmp.ne.s32.totalorder %s157, %s173
    %p175 = scmp.eq.s32.totalorder %s18, 0
    %p176 = por %p174, %p175
    %p177 = scmp.le.s32.totalorder 1, %s12
    %p178 = scmp.lt.s32.totalorder %s12, 5
    %p179 = pnand %p177, %p178
    %p180 = pneg %p179
    // Predicated region
    $region9: #{generator_forward.25} parent=5 // pred_check
      _
    $region10: #{generator_forward.25} parent=5 // pred_check_branch
      %182 = sbr.rel (%p179) target = $region12
    $region11: #{generator_forward.25} parent=5 // pred_region
      %s183 = ssub.s32 %s12, 1
      // Predicated region
      $region13: #{generator_forward.25} parent=11 // pred_check
        %p184 = pneg %p59
      $region14: #{generator_forward.25} parent=11 // pred_check_branch
        %186 = sbr.rel (%p184) target = $region16
      $region15: #{generator_forward.25} parent=11 // pred_region
        _
      $region16: #{generator_forward.25} parent=11 // pred_fallthru
        _
      // Predicated region
      $region17: #{generator_forward.25} parent=11 // pred_check
        %p187 = pneg %p80
      $region18: #{generator_forward.25} parent=11 // pred_check_branch
        %189 = sbr.rel (%p187) target = $region20
      $region19: #{generator_forward.25} parent=11 // pred_region
        _
      $region20: #{generator_forward.25} parent=11 // pred_fallthru
        _
      // Predicated region
      $region21: #{generator_forward.25} parent=11 // pred_check
        %p190 = pneg %p101
      $region22: #{generator_forward.25} parent=11 // pred_check_branch
        %192 = sbr.rel (%p190) target = $region24
      $region23: #{generator_forward.25} parent=11 // pred_region
        _
      $region24: #{generator_forward.25} parent=11 // pred_fallthru
        _
      // Predicated region
      $region25: #{generator_forward.25} parent=11 // pred_check
        %p193 = pneg %p122
      $region26: #{generator_forward.25} parent=11 // pred_check_branch
        %195 = sbr.rel (%p193) target = $region28
      $region27: #{generator_forward.25} parent=11 // pred_region
        _
      $region28: #{generator_forward.25} parent=11 // pred_fallthru
        _
      // Predicated region
      $region29: #{generator_forward.25} parent=11 // pred_check
        %p196 = pneg %p143
      $region30: #{generator_forward.25} parent=11 // pred_check_branch
        %198 = sbr.rel (%p196) target = $region32
      $region31: #{generator_forward.25} parent=11 // pred_region
        _
      $region32: #{generator_forward.25} parent=11 // pred_fallthru
        _
    $region12: #{generator_forward.25} parent=5 // pred_fallthru
      _
    %p199 = scmp.lt.s32.totalorder %s12, 4
    // Predicated region
    $region33: #{generator_forward.25} parent=5 // pred_check
      %p200 = pneg %p199
    $region34: #{generator_forward.25} parent=5 // pred_check_branch
      %202 = sbr.rel (%p200) target = $region36
    $region35: #{generator_forward.25} parent=5 // pred_region
      // Predicated region
      $region37: #{generator_forward.25} parent=35 // pred_check
        %p203 = pneg %p32
      $region38: #{generator_forward.25} parent=35 // pred_check_branch
        %205 = sbr.rel (%p203) target = $region40
      $region39: #{generator_forward.25} parent=35 // pred_region
        %s206 = smul.u32 64, %s12
        %p207 = scmp.lt.s32.totalorder %s206, 255
        %s208 = scalar_select %p207, %s206, 255
        %s209 = smul.addr %s208, 8
        %s210 = scalar_lea.vmem %s0, %s209
        %s211 = smul.u32 64, %s12
      $region40: #{generator_forward.25} parent=35 // pred_fallthru
        _
    $region36: #{generator_forward.25} parent=5 // pred_fallthru
      _
    %p212 = scmp.le.s32.totalorder 1, %s12
    %p213 = scmp.lt.s32.totalorder %s12, 5
    %p214 = pnand %p212, %p213
    %p215 = pneg %p214
    // Predicated region
    $region41: #{generator_forward.25} parent=5 // pred_check
      _
    $region42: #{generator_forward.25} parent=5 // pred_check_branch
      %217 = sbr.rel (%p214) target = $region44
    $region43: #{generator_forward.25} parent=5 // pred_region
      %s218 = ssub.s32 %s12, 1
      %s219 = smul.u32 64, %s17
      %p220 = scmp.lt.s32.totalorder %s219, 255
      %s221 = scalar_select %p220, %s219, 255
      %s222 = smul.addr %s221, 8
      %s223 = scalar_lea.vmem %s0, %s222
      %p224 = pneg %p38
      %p225 = pneg %p35
      %p226 = pneg %p59
      %p227 = pneg %p56
      %p228 = pneg %p80
      %p229 = pneg %p77
      %p230 = pneg %p101
      %p231 = pneg %p98
      %p232 = pneg %p122
      %p233 = pneg %p119
      %p234 = pneg %p143
      %p235 = pneg %p140
      %p236 = pneg %p169
      %p237 = pneg %p166
      %s238 = smul.u32 64, %s17
      %p239 = scmp.lt.s32.totalorder %s238, 255
      %s240 = scalar_select %p239, %s238, 255
      %s241 = smul.addr %s240, 8
      %s242 = scalar_lea.vmem %s6, %s241
      %s243 = smul.u32 64, %s17
      %p244 = scmp.lt.s32.totalorder %s243, 255
      %s245 = scalar_select %p244, %s243, 255
      %s246 = smul.addr %s245, 8
      %s247 = scalar_lea.vmem %s0, %s246
      %s248 = smul.u32 64, %s17
      %s249 = smul.u32 64, %s17
      %p250 = scmp.lt.s32.totalorder %s249, 255
      %s251 = scalar_select %p250, %s249, 255
      %s252 = smul.addr %s251, 8
      %s253 = scalar_lea.vmem %s6, %s252
      %s254 = smul.u32 64, %s17
      %v255 = vld [vmem:[%s4] sm:$0x1]
      %v256 = vmul.f32 %v255, 0.00048828125
      %v257 = vld [vmem:[%s5] sm:$0x1]
      %v258 = vmul.f32 %v257, 0.00048828125
      %v259 = vmul.f32 %v256, %v256
      %v260 = vsub.f32 %v258, %v259
      %v261 = vadd.f32 %v260, 1e-05
      %v262 = vrsqrt.pop %v261
      %v263 = vld [vmem:[%s247] sm:$0xff]
      %v264 = vld [vmem:[%s247 + $0x8] sm:$0xff]
      %v265 = vld [vmem:[%s247 + $0x10] sm:$0xff]
      %v266 = vld [vmem:[%s247 + $0x18] sm:$0xff]
      %v267 = vld [vmem:[%s247 + $0x20] sm:$0xff]
      %v268 = vld [vmem:[%s247 + $0x28] sm:$0xff]
      %v269 = vld [vmem:[%s247 + $0x30] sm:$0xff]
      %v270 = vld [vmem:[%s247 + $0x38] sm:$0xff]
      %v271 = vld [vmem:[%s247 + $0x40] sm:$0xff]
      %v272 = vld [vmem:[%s247 + $0x48] sm:$0xff]
      %v273 = vld [vmem:[%s247 + $0x50] sm:$0xff]
      %v274 = vld [vmem:[%s247 + $0x58] sm:$0xff]
      %v275 = vld [vmem:[%s247 + $0x60] sm:$0xff]
      %v276 = vld [vmem:[%s247 + $0x68] sm:$0xff]
      %v277 = vld [vmem:[%s247 + $0x70] sm:$0xff]
      %v278 = vld [vmem:[%s247 + $0x78] sm:$0xff]
      %v279 = vld [vmem:[%s247 + $0x80] sm:$0xff]
      %v280 = vld [vmem:[%s247 + $0x88] sm:$0xff]
      %v281 = vld [vmem:[%s247 + $0x90] sm:$0xff]
      %v282 = vld [vmem:[%s247 + $0x98] sm:$0xff]
      %v283 = vld [vmem:[%s247 + $0xa0] sm:$0xff]
      %v284 = vld [vmem:[%s247 + $0xa8] sm:$0xff]
      %v285 = vld [vmem:[%s247 + $0xb0] sm:$0xff]
      %v286 = vld [vmem:[%s247 + $0xb8] sm:$0xff]
      %v287 = vld [vmem:[%s247 + $0xc0] sm:$0xff]
      %v288 = vld [vmem:[%s247 + $0xc8] sm:$0xff]
      %v289 = vld [vmem:[%s247 + $0xd0] sm:$0xff]
      %v290 = vld [vmem:[%s247 + $0xd8] sm:$0xff]
      %v291 = vld [vmem:[%s247 + $0xe0] sm:$0xff]
      %v292 = vld [vmem:[%s247 + $0xe8] sm:$0xff]
      %v293 = vld [vmem:[%s247 + $0xf0] sm:$0xff]
      %v294 = vld [vmem:[%s247 + $0xf8] sm:$0xff]
      %v295 = vld [vmem:[%s247 + $0x100] sm:$0xff]
      %v296 = vld [vmem:[%s247 + $0x108] sm:$0xff]
      %v297 = vld [vmem:[%s247 + $0x110] sm:$0xff]
      %v298 = vld [vmem:[%s247 + $0x118] sm:$0xff]
      %v299 = vld [vmem:[%s247 + $0x120] sm:$0xff]
      %v300 = vld [vmem:[%s247 + $0x128] sm:$0xff]
      %v301 = vld [vmem:[%s247 + $0x130] sm:$0xff]
      %v302 = vld [vmem:[%s247 + $0x138] sm:$0xff]
      %v303 = vld [vmem:[%s247 + $0x140] sm:$0xff]
      %v304 = vld [vmem:[%s247 + $0x148] sm:$0xff]
      %v305 = vld [vmem:[%s247 + $0x150] sm:$0xff]
      %v306 = vld [vmem:[%s247 + $0x158] sm:$0xff]
      %v307 = vld [vmem:[%s247 + $0x160] sm:$0xff]
      %v308 = vld [vmem:[%s247 + $0x168] sm:$0xff]
      %v309 = vld [vmem:[%s247 + $0x170] sm:$0xff]
      %v310 = vld [vmem:[%s247 + $0x178] sm:$0xff]
      %v311 = vld [vmem:[%s247 + $0x180] sm:$0xff]
      %v312 = vld [vmem:[%s247 + $0x188] sm:$0xff]
      %v313 = vld [vmem:[%s247 + $0x190] sm:$0xff]
      %v314 = vld [vmem:[%s247 + $0x198] sm:$0xff]
      %v315 = vld [vmem:[%s247 + $0x1a0] sm:$0xff]
      %v316 = vld [vmem:[%s247 + $0x1a8] sm:$0xff]
      %v317 = vld [vmem:[%s247 + $0x1b0] sm:$0xff]
      %v318 = vld [vmem:[%s247 + $0x1b8] sm:$0xff]
      %v319 = vld [vmem:[%s247 + $0x1c0] sm:$0xff]
      %v320 = vld [vmem:[%s247 + $0x1c8] sm:$0xff]
      %v321 = vld [vmem:[%s247 + $0x1d0] sm:$0xff]
      %v322 = vld [vmem:[%s247 + $0x1d8] sm:$0xff]
      %v323 = vld [vmem:[%s247 + $0x1e0] sm:$0xff]
      %v324 = vld [vmem:[%s247 + $0x1e8] sm:$0xff]
      %v325 = vld [vmem:[%s247 + $0x1f0] sm:$0xff]
      %v326 = vld [vmem:[%s247 + $0x1f8] sm:$0xff]
      %v327 = vld [vmem:[%s1] sm:$0x1]
      %v329 = vlaneseq
      %v330 = vshrl.u32 %v329, 7
      %v331 = vsub.s32 0, %v330
      %v332 = vrot.slane %v327, %v331
      %v334 = vadd.f32 %v263, %v332
      %v335 = vadd.f32 %v264, %v332
      %v336 = vadd.f32 %v265, %v332
      %v337 = vadd.f32 %v266, %v332
      %v338 = vadd.f32 %v267, %v332
      %v339 = vadd.f32 %v268, %v332
      %v340 = vadd.f32 %v269, %v332
      %v341 = vadd.f32 %v270, %v332
      %v342 = vadd.f32 %v271, %v332
      %v343 = vadd.f32 %v272, %v332
      %v344 = vadd.f32 %v273, %v332
      %v345 = vadd.f32 %v274, %v332
      %v346 = vadd.f32 %v275, %v332
      %v347 = vadd.f32 %v276, %v332
      %v348 = vadd.f32 %v277, %v332
      %v349 = vadd.f32 %v278, %v332
      %v350 = vadd.f32 %v279, %v332
      %v351 = vadd.f32 %v280, %v332
      %v352 = vadd.f32 %v281, %v332
      %v353 = vadd.f32 %v282, %v332
      %v354 = vadd.f32 %v283, %v332
      %v355 = vadd.f32 %v284, %v332
      %v356 = vadd.f32 %v285, %v332
      %v357 = vadd.f32 %v286, %v332
      %v358 = vadd.f32 %v287, %v332
      %v359 = vadd.f32 %v288, %v332
      %v360 = vadd.f32 %v289, %v332
      %v361 = vadd.f32 %v290, %v332
      %v362 = vadd.f32 %v291, %v332
      %v363 = vadd.f32 %v292, %v332
      %v364 = vadd.f32 %v293, %v332
      %v365 = vadd.f32 %v294, %v332
      %v366 = vadd.f32 %v295, %v332
      %v367 = vadd.f32 %v296, %v332
      %v368 = vadd.f32 %v297, %v332
      %v369 = vadd.f32 %v298, %v332
      %v370 = vadd.f32 %v299, %v332
      %v371 = vadd.f32 %v300, %v332
      %v372 = vadd.f32 %v301, %v332
      %v373 = vadd.f32 %v302, %v332
      %v374 = vadd.f32 %v303, %v332
      %v375 = vadd.f32 %v304, %v332
      %v376 = vadd.f32 %v305, %v332
      %v377 = vadd.f32 %v306, %v332
      %v378 = vadd.f32 %v307, %v332
      %v379 = vadd.f32 %v308, %v332
      %v380 = vadd.f32 %v309, %v332
      %v381 = vadd.f32 %v310, %v332
      %v382 = vadd.f32 %v311, %v332
      %v383 = vadd.f32 %v312, %v332
      %v384 = vadd.f32 %v313, %v332
      %v385 = vadd.f32 %v314, %v332
      %v386 = vadd.f32 %v315, %v332
      %v387 = vadd.f32 %v316, %v332
      %v388 = vadd.f32 %v317, %v332
      %v389 = vadd.f32 %v318, %v332
      %v390 = vadd.f32 %v319, %v332
      %v391 = vadd.f32 %v320, %v332
      %v392 = vadd.f32 %v321, %v332
      %v393 = vadd.f32 %v322, %v332
      %v394 = vadd.f32 %v323, %v332
      %v395 = vadd.f32 %v324, %v332
      %v396 = vadd.f32 %v325, %v332
      %v397 = vadd.f32 %v326, %v332
      %v398 = vlaneseq
      %v399 = vshrl.u32 %v398, 7
      %v400 = vsub.s32 0, %v399
      %v401 = vrot.slane %v256, %v400
      %v402 = vsub.f32 %v334, %v401
      %v403 = vsub.f32 %v335, %v401
      %v404 = vsub.f32 %v336, %v401
      %v405 = vsub.f32 %v337, %v401
      %v406 = vsub.f32 %v338, %v401
      %v407 = vsub.f32 %v339, %v401
      %v408 = vsub.f32 %v340, %v401
      %v409 = vsub.f32 %v341, %v401
      %v410 = vsub.f32 %v342, %v401
      %v411 = vsub.f32 %v343, %v401
      %v412 = vsub.f32 %v344, %v401
      %v413 = vsub.f32 %v345, %v401
      %v414 = vsub.f32 %v346, %v401
      %v415 = vsub.f32 %v347, %v401
      %v416 = vsub.f32 %v348, %v401
      %v417 = vsub.f32 %v349, %v401
      %v418 = vsub.f32 %v350, %v401
      %v419 = vsub.f32 %v351, %v401
      %v420 = vsub.f32 %v352, %v401
      %v421 = vsub.f32 %v353, %v401
      %v422 = vsub.f32 %v354, %v401
      %v423 = vsub.f32 %v355, %v401
      %v424 = vsub.f32 %v356, %v401
      %v425 = vsub.f32 %v357, %v401
      %v426 = vsub.f32 %v358, %v401
      %v427 = vsub.f32 %v359, %v401
      %v428 = vsub.f32 %v360, %v401
      %v429 = vsub.f32 %v361, %v401
      %v430 = vsub.f32 %v362, %v401
      %v431 = vsub.f32 %v363, %v401
      %v432 = vsub.f32 %v364, %v401
      %v433 = vsub.f32 %v365, %v401
      %v434 = vsub.f32 %v366, %v401
      %v435 = vsub.f32 %v367, %v401
      %v436 = vsub.f32 %v368, %v401
      %v437 = vsub.f32 %v369, %v401
      %v438 = vsub.f32 %v370, %v401
      %v439 = vsub.f32 %v371, %v401
      %v440 = vsub.f32 %v372, %v401
      %v441 = vsub.f32 %v373, %v401
      %v442 = vsub.f32 %v374, %v401
      %v443 = vsub.f32 %v375, %v401
      %v444 = vsub.f32 %v376, %v401
      %v445 = vsub.f32 %v377, %v401
      %v446 = vsub.f32 %v378, %v401
      %v447 = vsub.f32 %v379, %v401
      %v448 = vsub.f32 %v380, %v401
      %v449 = vsub.f32 %v381, %v401
      %v450 = vsub.f32 %v382, %v401
      %v451 = vsub.f32 %v383, %v401
      %v452 = vsub.f32 %v384, %v401
      %v453 = vsub.f32 %v385, %v401
      %v454 = vsub.f32 %v386, %v401
      %v455 = vsub.f32 %v387, %v401
      %v456 = vsub.f32 %v388, %v401
      %v457 = vsub.f32 %v389, %v401
      %v458 = vsub.f32 %v390, %v401
      %v459 = vsub.f32 %v391, %v401
      %v460 = vsub.f32 %v392, %v401
      %v461 = vsub.f32 %v393, %v401
      %v462 = vsub.f32 %v394, %v401
      %v463 = vsub.f32 %v395, %v401
      %v464 = vsub.f32 %v396, %v401
      %v465 = vsub.f32 %v397, %v401
      %v466 = vld [vmem:[%s2] sm:$0x1]
      %v467 = vmul.f32 %v262, %v466
      %v468 = vlaneseq
      %v469 = vshrl.u32 %v468, 7
      %v470 = vsub.s32 0, %v469
      %v471 = vrot.slane %v467, %v470
      %v472 = vmul.f32 %v402, %v471
      %v473 = vmul.f32 %v403, %v471
      %v474 = vmul.f32 %v404, %v471
      %v475 = vmul.f32 %v405, %v471
      %v476 = vmul.f32 %v406, %v471
      %v477 = vmul.f32 %v407, %v471
      %v478 = vmul.f32 %v408, %v471
      %v479 = vmul.f32 %v409, %v471
      %v480 = vmul.f32 %v410, %v471
      %v481 = vmul.f32 %v411, %v471
      %v482 = vmul.f32 %v412, %v471
      %v483 = vmul.f32 %v413, %v471
      %v484 = vmul.f32 %v414, %v471
      %v485 = vmul.f32 %v415, %v471
      %v486 = vmul.f32 %v416, %v471
      %v487 = vmul.f32 %v417, %v471
      %v488 = vmul.f32 %v418, %v471
      %v489 = vmul.f32 %v419, %v471
      %v490 = vmul.f32 %v420, %v471
      %v491 = vmul.f32 %v421, %v471
      %v492 = vmul.f32 %v422, %v471
      %v493 = vmul.f32 %v423, %v471
      %v494 = vmul.f32 %v424, %v471
      %v495 = vmul.f32 %v425, %v471
      %v496 = vmul.f32 %v426, %v471
      %v497 = vmul.f32 %v427, %v471
      %v498 = vmul.f32 %v428, %v471
      %v499 = vmul.f32 %v429, %v471
      %v500 = vmul.f32 %v430, %v471
      %v501 = vmul.f32 %v431, %v471
      %v502 = vmul.f32 %v432, %v471
      %v503 = vmul.f32 %v433, %v471
      %v504 = vmul.f32 %v434, %v471
      %v505 = vmul.f32 %v435, %v471
      %v506 = vmul.f32 %v436, %v471
      %v507 = vmul.f32 %v437, %v471
      %v508 = vmul.f32 %v438, %v471
      %v509 = vmul.f32 %v439, %v471
      %v510 = vmul.f32 %v440, %v471
      %v511 = vmul.f32 %v441, %v471
      %v512 = vmul.f32 %v442, %v471
      %v513 = vmul.f32 %v443, %v471
      %v514 = vmul.f32 %v444, %v471
      %v515 = vmul.f32 %v445, %v471
      %v516 = vmul.f32 %v446, %v471
      %v517 = vmul.f32 %v447, %v471
      %v518 = vmul.f32 %v448, %v471
      %v519 = vmul.f32 %v449, %v471
      %v520 = vmul.f32 %v450, %v471
      %v521 = vmul.f32 %v451, %v471
      %v522 = vmul.f32 %v452, %v471
      %v523 = vmul.f32 %v453, %v471
      %v524 = vmul.f32 %v454, %v471
      %v525 = vmul.f32 %v455, %v471
      %v526 = vmul.f32 %v456, %v471
      %v527 = vmul.f32 %v457, %v471
      %v528 = vmul.f32 %v458, %v471
      %v529 = vmul.f32 %v459, %v471
      %v530 = vmul.f32 %v460, %v471
      %v531 = vmul.f32 %v461, %v471
      %v532 = vmul.f32 %v462, %v471
      %v533 = vmul.f32 %v463, %v471
      %v534 = vmul.f32 %v464, %v471
      %v535 = vmul.f32 %v465, %v471
      %v536 = vld [vmem:[%s3] sm:$0x1]
      %v538 = vlaneseq
      %v539 = vshrl.u32 %v538, 7
      %v540 = vsub.s32 0, %v539
      %v541 = vrot.slane %v536, %v540
      %v543 = vadd.f32 %v472, %v541
      %v544 = vadd.f32 %v473, %v541
      %v545 = vadd.f32 %v474, %v541
      %v546 = vadd.f32 %v475, %v541
      %v547 = vadd.f32 %v476, %v541
      %v548 = vadd.f32 %v477, %v541
      %v549 = vadd.f32 %v478, %v541
      %v550 = vadd.f32 %v479, %v541
      %v551 = vadd.f32 %v480, %v541
      %v552 = vadd.f32 %v481, %v541
      %v553 = vadd.f32 %v482, %v541
      %v554 = vadd.f32 %v483, %v541
      %v555 = vadd.f32 %v484, %v541
      %v556 = vadd.f32 %v485, %v541
      %v557 = vadd.f32 %v486, %v541
      %v558 = vadd.f32 %v487, %v541
      %v559 = vadd.f32 %v488, %v541
      %v560 = vadd.f32 %v489, %v541
      %v561 = vadd.f32 %v490, %v541
      %v562 = vadd.f32 %v491, %v541
      %v563 = vadd.f32 %v492, %v541
      %v564 = vadd.f32 %v493, %v541
      %v565 = vadd.f32 %v494, %v541
      %v566 = vadd.f32 %v495, %v541
      %v567 = vadd.f32 %v496, %v541
      %v568 = vadd.f32 %v497, %v541
      %v569 = vadd.f32 %v498, %v541
      %v570 = vadd.f32 %v499, %v541
      %v571 = vadd.f32 %v500, %v541
      %v572 = vadd.f32 %v501, %v541
      %v573 = vadd.f32 %v502, %v541
      %v574 = vadd.f32 %v503, %v541
      %v575 = vadd.f32 %v504, %v541
      %v576 = vadd.f32 %v505, %v541
      %v577 = vadd.f32 %v506, %v541
      %v578 = vadd.f32 %v507, %v541
      %v579 = vadd.f32 %v508, %v541
      %v580 = vadd.f32 %v509, %v541
      %v581 = vadd.f32 %v510, %v541
      %v582 = vadd.f32 %v511, %v541
      %v583 = vadd.f32 %v512, %v541
      %v584 = vadd.f32 %v513, %v541
      %v585 = vadd.f32 %v514, %v541
      %v586 = vadd.f32 %v515, %v541
      %v587 = vadd.f32 %v516, %v541
      %v588 = vadd.f32 %v517, %v541
      %v589 = vadd.f32 %v518, %v541
      %v590 = vadd.f32 %v519, %v541
      %v591 = vadd.f32 %v520, %v541
      %v592 = vadd.f32 %v521, %v541
      %v593 = vadd.f32 %v522, %v541
      %v594 = vadd.f32 %v523, %v541
      %v595 = vadd.f32 %v524, %v541
      %v596 = vadd.f32 %v525, %v541
      %v597 = vadd.f32 %v526, %v541
      %v598 = vadd.f32 %v527, %v541
      %v599 = vadd.f32 %v528, %v541
      %v600 = vadd.f32 %v529, %v541
      %v601 = vadd.f32 %v530, %v541
      %v602 = vadd.f32 %v531, %v541
      %v603 = vadd.f32 %v532, %v541
      %v604 = vadd.f32 %v533, %v541
      %v605 = vadd.f32 %v534, %v541
      %v606 = vadd.f32 %v535, %v541
      %v607 = vmax.f32 %v543, 0.0
      %v608 = vmax.f32 %v544, 0.0
      %v609 = vmax.f32 %v545, 0.0
      %v610 = vmax.f32 %v546, 0.0
      %v611 = vmax.f32 %v547, 0.0
      %v612 = vmax.f32 %v548, 0.0
      %v613 = vmax.f32 %v549, 0.0
      %v614 = vmax.f32 %v550, 0.0
      %v615 = vmax.f32 %v551, 0.0
      %v616 = vmax.f32 %v552, 0.0
      %v617 = vmax.f32 %v553, 0.0
      %v618 = vmax.f32 %v554, 0.0
      %v619 = vmax.f32 %v555, 0.0
      %v620 = vmax.f32 %v556, 0.0
      %v621 = vmax.f32 %v557, 0.0
      %v622 = vmax.f32 %v558, 0.0
      %v623 = vmax.f32 %v559, 0.0
      %v624 = vmax.f32 %v560, 0.0
      %v625 = vmax.f32 %v561, 0.0
      %v626 = vmax.f32 %v562, 0.0
      %v627 = vmax.f32 %v563, 0.0
      %v628 = vmax.f32 %v564, 0.0
      %v629 = vmax.f32 %v565, 0.0
      %v630 = vmax.f32 %v566, 0.0
      %v631 = vmax.f32 %v567, 0.0
      %v632 = vmax.f32 %v568, 0.0
      %v633 = vmax.f32 %v569, 0.0
      %v634 = vmax.f32 %v570, 0.0
      %v635 = vmax.f32 %v571, 0.0
      %v636 = vmax.f32 %v572, 0.0
      %v637 = vmax.f32 %v573, 0.0
      %v638 = vmax.f32 %v574, 0.0
      %v639 = vmax.f32 %v575, 0.0
      %v640 = vmax.f32 %v576, 0.0
      %v641 = vmax.f32 %v577, 0.0
      %v642 = vmax.f32 %v578, 0.0
      %v643 = vmax.f32 %v579, 0.0
      %v644 = vmax.f32 %v580, 0.0
      %v645 = vmax.f32 %v581, 0.0
      %v646 = vmax.f32 %v582, 0.0
      %v647 = vmax.f32 %v583, 0.0
      %v648 = vmax.f32 %v584, 0.0
      %v649 = vmax.f32 %v585, 0.0
      %v650 = vmax.f32 %v586, 0.0
      %v651 = vmax.f32 %v587, 0.0
      %v652 = vmax.f32 %v588, 0.0
      %v653 = vmax.f32 %v589, 0.0
      %v654 = vmax.f32 %v590, 0.0
      %v655 = vmax.f32 %v591, 0.0
      %v656 = vmax.f32 %v592, 0.0
      %v657 = vmax.f32 %v593, 0.0
      %v658 = vmax.f32 %v594, 0.0
      %v659 = vmax.f32 %v595, 0.0
      %v660 = vmax.f32 %v596, 0.0
      %v661 = vmax.f32 %v597, 0.0
      %v662 = vmax.f32 %v598, 0.0
      %v663 = vmax.f32 %v599, 0.0
      %v664 = vmax.f32 %v600, 0.0
      %v665 = vmax.f32 %v601, 0.0
      %v666 = vmax.f32 %v602, 0.0
      %v667 = vmax.f32 %v603, 0.0
      %v668 = vmax.f32 %v604, 0.0
      %v669 = vmax.f32 %v605, 0.0
      %v670 = vmax.f32 %v606, 0.0
      %671 = vst [vmem:[%s253] sm:$0xff] %v607
      %672 = vst [vmem:[%s253 + $0x8] sm:$0xff] %v608
      %673 = vst [vmem:[%s253 + $0x10] sm:$0xff] %v609
      %674 = vst [vmem:[%s253 + $0x18] sm:$0xff] %v610
      %675 = vst [vmem:[%s253 + $0x20] sm:$0xff] %v611
      %676 = vst [vmem:[%s253 + $0x28] sm:$0xff] %v612
      %677 = vst [vmem:[%s253 + $0x30] sm:$0xff] %v613
      %678 = vst [vmem:[%s253 + $0x38] sm:$0xff] %v614
      %679 = vst [vmem:[%s253 + $0x40] sm:$0xff] %v615
      %680 = vst [vmem:[%s253 + $0x48] sm:$0xff] %v616
      %681 = vst [vmem:[%s253 + $0x50] sm:$0xff] %v617
      %682 = vst [vmem:[%s253 + $0x58] sm:$0xff] %v618
      %683 = vst [vmem:[%s253 + $0x60] sm:$0xff] %v619
      %684 = vst [vmem:[%s253 + $0x68] sm:$0xff] %v620
      %685 = vst [vmem:[%s253 + $0x70] sm:$0xff] %v621
      %686 = vst [vmem:[%s253 + $0x78] sm:$0xff] %v622
      %687 = vst [vmem:[%s253 + $0x80] sm:$0xff] %v623
      %688 = vst [vmem:[%s253 + $0x88] sm:$0xff] %v624
      %689 = vst [vmem:[%s253 + $0x90] sm:$0xff] %v625
      %690 = vst [vmem:[%s253 + $0x98] sm:$0xff] %v626
      %691 = vst [vmem:[%s253 + $0xa0] sm:$0xff] %v627
      %692 = vst [vmem:[%s253 + $0xa8] sm:$0xff] %v628
      %693 = vst [vmem:[%s253 + $0xb0] sm:$0xff] %v629
      %694 = vst [vmem:[%s253 + $0xb8] sm:$0xff] %v630
      %695 = vst [vmem:[%s253 + $0xc0] sm:$0xff] %v631
      %696 = vst [vmem:[%s253 + $0xc8] sm:$0xff] %v632
      %697 = vst [vmem:[%s253 + $0xd0] sm:$0xff] %v633
      %698 = vst [vmem:[%s253 + $0xd8] sm:$0xff] %v634
      %699 = vst [vmem:[%s253 + $0xe0] sm:$0xff] %v635
      %700 = vst [vmem:[%s253 + $0xe8] sm:$0xff] %v636
      %701 = vst [vmem:[%s253 + $0xf0] sm:$0xff] %v637
      %702 = vst [vmem:[%s253 + $0xf8] sm:$0xff] %v638
      %703 = vst [vmem:[%s253 + $0x100] sm:$0xff] %v639
      %704 = vst [vmem:[%s253 + $0x108] sm:$0xff] %v640
      %705 = vst [vmem:[%s253 + $0x110] sm:$0xff] %v641
      %706 = vst [vmem:[%s253 + $0x118] sm:$0xff] %v642
      %707 = vst [vmem:[%s253 + $0x120] sm:$0xff] %v643
      %708 = vst [vmem:[%s253 + $0x128] sm:$0xff] %v644
      %709 = vst [vmem:[%s253 + $0x130] sm:$0xff] %v645
      %710 = vst [vmem:[%s253 + $0x138] sm:$0xff] %v646
      %711 = vst [vmem:[%s253 + $0x140] sm:$0xff] %v647
      %712 = vst [vmem:[%s253 + $0x148] sm:$0xff] %v648
      %713 = vst [vmem:[%s253 + $0x150] sm:$0xff] %v649
      %714 = vst [vmem:[%s253 + $0x158] sm:$0xff] %v650
      %715 = vst [vmem:[%s253 + $0x160] sm:$0xff] %v651
      %716 = vst [vmem:[%s253 + $0x168] sm:$0xff] %v652
      %717 = vst [vmem:[%s253 + $0x170] sm:$0xff] %v653
      %718 = vst [vmem:[%s253 + $0x178] sm:$0xff] %v654
      %719 = vst [vmem:[%s253 + $0x180] sm:$0xff] %v655
      %720 = vst [vmem:[%s253 + $0x188] sm:$0xff] %v656
      %721 = vst [vmem:[%s253 + $0x190] sm:$0xff] %v657
      %722 = vst [vmem:[%s253 + $0x198] sm:$0xff] %v658
      %723 = vst [vmem:[%s253 + $0x1a0] sm:$0xff] %v659
      %724 = vst [vmem:[%s253 + $0x1a8] sm:$0xff] %v660
      %725 = vst [vmem:[%s253 + $0x1b0] sm:$0xff] %v661
      %726 = vst [vmem:[%s253 + $0x1b8] sm:$0xff] %v662
      %727 = vst [vmem:[%s253 + $0x1c0] sm:$0xff] %v663
      %728 = vst [vmem:[%s253 + $0x1c8] sm:$0xff] %v664
      %729 = vst [vmem:[%s253 + $0x1d0] sm:$0xff] %v665
      %730 = vst [vmem:[%s253 + $0x1d8] sm:$0xff] %v666
      %731 = vst [vmem:[%s253 + $0x1e0] sm:$0xff] %v667
      %732 = vst [vmem:[%s253 + $0x1e8] sm:$0xff] %v668
      %733 = vst [vmem:[%s253 + $0x1f0] sm:$0xff] %v669
      %734 = vst [vmem:[%s253 + $0x1f8] sm:$0xff] %v670
      %s735 = smul.u32 64, %s17
      %p736 = scmp.lt.s32.totalorder %s735, 255
      %s737 = scalar_select %p736, %s735, 255
      %s738 = smul.addr %s737, 8
      %s739 = scalar_lea.vmem %s6, %s738
      // Predicated region
      $region45: #{generator_forward.25} parent=43 // pred_check
        %p740 = pneg %p166
      $region46: #{generator_forward.25} parent=43 // pred_check_branch
        %742 = sbr.rel (%p740) target = $region48
      $region47: #{generator_forward.25} parent=43 // pred_region
        %s743 = smul.u32 64, %s17
      $region48: #{generator_forward.25} parent=43 // pred_fallthru
        _
    $region44: #{generator_forward.25} parent=5 // pred_fallthru
      _
    %p744 = scmp.le.s32.totalorder 2, %s12
    // Predicated region
    $region49: #{generator_forward.25} parent=5 // pred_check
      %p745 = pneg %p744
    $region50: #{generator_forward.25} parent=5 // pred_check_branch
      %747 = sbr.rel (%p745) target = $region52
    $region51: #{generator_forward.25} parent=5 // pred_region
      %s748 = ssub.s32 %s12, 2
      // Predicated region
      $region53: #{generator_forward.25} parent=51 // pred_check
        %p749 = pneg %p172
      $region54: #{generator_forward.25} parent=51 // pred_check_branch
        %751 = sbr.rel (%p749) target = $region56
      $region55: #{generator_forward.25} parent=51 // pred_region
        %s752 = smul.u32 64, %s18
        %p753 = scmp.lt.s32.totalorder %s752, 255
        %s754 = scalar_select %p753, %s752, 255
        %s755 = smul.addr %s754, 8
        %s756 = scalar_lea.vmem %s6, %s755
      $region56: #{generator_forward.25} parent=51 // pred_fallthru
        _
    $region52: #{generator_forward.25} parent=5 // pred_fallthru
      _
  $region6: #{generator_forward.25} parent=0 // loop_footer
    %s16 = sadd.s32 1, %s12
  $region7: #{generator_forward.25} parent=0 // loop_footer_branch
    %11 = sbr.rel target = $region3
  $region8: #{generator_forward.25} parent=0 // loop_exit
    _

// kernel: generator_forward.26
$region0: #{generator_forward.26}
  #allocation0 [shape = 'u32[]', space=smem, size = 0x4, offset = 0x4, fixed_abs, tag = 'smem constant byte address 0x4 - core index']
  #allocation1 [shape = 'u32[144,128]{1,0:T(1,128)}', space=vmem, size = 0x12000, scoped, tag = 'internal scratch']
  %s0 = inlined_call_operand.vmem [shape: bf16[2048,128], index: 0, kind: input, shape index: {}]
  %s1 = inlined_call_operand.vmem [shape: bf16[128,128], index: 1, kind: input, shape index: {}]
  %s2 = inlined_call_operand.vmem [shape: f32[2048,128], index: 2, kind: output, shape index: {}]
  %s3 = sld [smem:[#allocation0]]
  $region41: #{generator_forward.26} parent=0
    _
  %s5 = ssub.s32 1, %s3
  %s6 = scalar_select 0, %s5, %s3
  loop: start=0, step=1, limit=10
  $region2: #{generator_forward.26} parent=0 // loop_pre_header
    _
  $region3: #{generator_forward.26} parent=0 // loop_header
    %s8 = sphi 0, %s12
    %p9 = scmp.ge.s32.totalorder %s8, 10
    %s15 = sphi 0, %s27
    %s16 = sphi 0, %s23
    %s17 = sphi 0, %s15
    %s18 = sphi 0, %s16
    %s19 = sphi 0, %s17
    %s20 = sphi 0, %s18
    %s30 = sphi 0, %s32
    %s33 = sphi 0, %s30
    %s34 = sphi 0, %s33
    %s50 = sphi 0, %s34
    %s56 = sphi 0, %s58
    %s59 = sphi 0, %s56
    %s60 = sphi 0, %s59
    %s76 = sphi 0, %s60
    %s84 = sphi 0, %s86
    %s87 = sphi 0, %s84
    %s88 = sphi 0, %s87
    %s104 = sphi 0, %s88
  $region4: #{generator_forward.26} parent=0 // loop_header_branch
    %11 = sbr.rel (%p9) target = $region8
  $region5: #{generator_forward.26} parent=0 // loop_body
    %s13 = ssub.s32 %s8, 1
    %s14 = ssub.s32 %s8, 2
    %s21 = sadd.s32 1, %s16
    %p22 = scmp.ge.s32.totalorder %s21, 1
    %s23 = scalar_select %p22, 0, %s21
    %s24 = sadd.s32 1, %s15
    %s25 = scalar_select %p22, %s24, %s15
    %p26 = scmp.ge.s32.totalorder %s25, 8
    %s27 = scalar_select %p26, 0, %s25
    %s28 = ssub.s32 %s15, %s27
    %p29 = scmp.eq.s32.totalorder %s28, 0
    %s31 = sadd.s32 %s30, 1
    %s32 = scalar_select %p29, %s30, %s31
    %p35 = pneg %p29
    %p36 = scmp.eq.s32.totalorder %s8, 7
    %p37 = por %p35, %p36
    %p38 = scmp.ne.s32.totalorder %s30, %s33
    %p39 = scmp.eq.s32.totalorder %s8, 0
    %p40 = por %p38, %p39
    %p41 = scmp.ne.s32.totalorder %s30, %s33
    %p42 = scmp.eq.s32.totalorder %s13, 7
    %p43 = por %p41, %p42
    %p44 = scmp.ne.s32.totalorder %s33, %s34
    %p45 = scmp.eq.s32.totalorder %s13, 0
    %p46 = por %p44, %p45
    %p47 = scmp.ne.s32.totalorder %s33, %s34
    %p48 = scmp.eq.s32.totalorder %s14, 7
    %p49 = por %p47, %p48
    %p51 = scmp.ne.s32.totalorder %s34, %s50
    %p52 = scmp.eq.s32.totalorder %s14, 0
    %p53 = por %p51, %p52
    %s54 = ssub.s32 %s16, %s23
    %p55 = scmp.eq.s32.totalorder %s54, 0
    %s57 = sadd.s32 %s56, 1
    %s58 = scalar_select %p55, %s56, %s57
    %p61 = pneg %p55
    %p62 = scmp.eq.s32.totalorder %s8, 7
    %p63 = por %p61, %p62
    %p64 = scmp.ne.s32.totalorder %s56, %s59
    %p65 = scmp.eq.s32.totalorder %s8, 0
    %p66 = por %p64, %p65
    %p67 = scmp.ne.s32.totalorder %s56, %s59
    %p68 = scmp.eq.s32.totalorder %s13, 7
    %p69 = por %p67, %p68
    %p70 = scmp.ne.s32.totalorder %s59, %s60
    %p71 = scmp.eq.s32.totalorder %s13, 0
    %p72 = por %p70, %p71
    %p73 = scmp.ne.s32.totalorder %s59, %s60
    %p74 = scmp.eq.s32.totalorder %s14, 7
    %p75 = por %p73, %p74
    %p77 = scmp.ne.s32.totalorder %s60, %s76
    %p78 = scmp.eq.s32.totalorder %s14, 0
    %p79 = por %p77, %p78
    %s80 = ssub.s32 %s15, %s27
    %s81 = ssub.s32 %s16, %s23
    %s82 = sor.u32 %s80, %s81
    %p83 = scmp.eq.s32.totalorder %s82, 0
    %s85 = sadd.s32 %s84, 1
    %s86 = scalar_select %p83, %s84, %s85
    %p89 = pneg %p83
    %p90 = scmp.eq.s32.totalorder %s8, 7
    %p91 = por %p89, %p90
    %p92 = scmp.ne.s32.totalorder %s84, %s87
    %p93 = scmp.eq.s32.totalorder %s8, 0
    %p94 = por %p92, %p93
    %p95 = scmp.ne.s32.totalorder %s84, %s87
    %p96 = scmp.eq.s32.totalorder %s13, 7
    %p97 = por %p95, %p96
    %p98 = scmp.ne.s32.totalorder %s87, %s88
    %p99 = scmp.eq.s32.totalorder %s13, 0
    %p100 = por %p98, %p99
    %p101 = scmp.ne.s32.totalorder %s87, %s88
    %p102 = scmp.eq.s32.totalorder %s14, 7
    %p103 = por %p101, %p102
    %p105 = scmp.ne.s32.totalorder %s88, %s104
    %p106 = scmp.eq.s32.totalorder %s14, 0
    %p107 = por %p105, %p106
    %p108 = scmp.le.s32.totalorder 1, %s8
    %p109 = scmp.lt.s32.totalorder %s8, 9
    %p110 = pnand %p108, %p109
    %p111 = pneg %p110
    // Predicated region
    $region9: #{generator_forward.26} parent=5 // pred_check
      _
    $region10: #{generator_forward.26} parent=5 // pred_check_branch
      %113 = sbr.rel (%p110) target = $region12
    $region11: #{generator_forward.26} parent=5 // pred_region
      %s114 = ssub.s32 %s8, 1
      // Predicated region
      $region13: #{generator_forward.26} parent=11 // pred_check
        %p115 = pneg %p72
      $region14: #{generator_forward.26} parent=11 // pred_check_branch
        %117 = sbr.rel (%p115) target = $region16
      $region15: #{generator_forward.26} parent=11 // pred_region
        %p118 = scmp.lt.s32.totalorder %s18, 0
        %s119 = scalar_select %p118, %s18, 0
        %s120 = smul.addr %s119, 4
        %s121 = scalar_lea.vmem %s1, %s120
      $region16: #{generator_forward.26} parent=11 // pred_fallthru
        _
    $region12: #{generator_forward.26} parent=5 // pred_fallthru
      _
    %p122 = scmp.lt.s32.totalorder %s8, 8
    // Predicated region
    $region17: #{generator_forward.26} parent=5 // pred_check
      %p123 = pneg %p122
    $region18: #{generator_forward.26} parent=5 // pred_check_branch
      %125 = sbr.rel (%p123) target = $region20
    $region19: #{generator_forward.26} parent=5 // pred_region
      // Predicated region
      $region21: #{generator_forward.26} parent=19 // pred_check
        %p126 = pneg %p40
      $region22: #{generator_forward.26} parent=19 // pred_check_branch
        %128 = sbr.rel (%p126) target = $region24
      $region23: #{generator_forward.26} parent=19 // pred_region
        %s129 = smul.u32 32, %s15
        %p130 = scmp.lt.s32.totalorder %s129, 255
        %s131 = scalar_select %p130, %s129, 255
        %s132 = smul.addr %s131, 4
        %s133 = scalar_lea.vmem %s0, %s132
        %s134 = smul.u32 32, %s15
      $region24: #{generator_forward.26} parent=19 // pred_fallthru
        _
    $region20: #{generator_forward.26} parent=5 // pred_fallthru
      _
    %p135 = scmp.le.s32.totalorder 1, %s8
    %p136 = scmp.lt.s32.totalorder %s8, 9
    %p137 = pnand %p135, %p136
    %p138 = pneg %p137
    // Predicated region
    $region25: #{generator_forward.26} parent=5 // pred_check
      _
    $region26: #{generator_forward.26} parent=5 // pred_check_branch
      %140 = sbr.rel (%p137) target = $region28
    $region27: #{generator_forward.26} parent=5 // pred_region
      %s141 = ssub.s32 %s8, 1
      %s142 = smul.u32 32, %s17
      %p143 = scmp.lt.s32.totalorder %s142, 255
      %s144 = scalar_select %p143, %s142, 255
      %s145 = smul.addr %s144, 4
      %s146 = scalar_lea.vmem %s0, %s145
      %p147 = pneg %p46
      %p148 = pneg %p43
      %p149 = scmp.lt.s32.totalorder %s18, 0
      %s150 = scalar_select %p149, %s18, 0
      %s151 = smul.addr %s150, 4
      %s152 = scalar_lea.vmem %s1, %s151
      %p153 = pneg %p72
      %p154 = pneg %p69
      %p155 = pneg %p100
      %p156 = pneg %p97
      %s157 = smul.u32 32, %s17
      %p158 = scmp.lt.s32.totalorder %s157, 255
      %s159 = scalar_select %p158, %s157, 255
      %p160 = scmp.lt.s32.totalorder %s18, 0
      %s161 = scalar_select %p160, %s18, 0
      %s162 = sadd.s32 %s161, %s159
      %s163 = smul.addr %s162, 8
      %s164 = scalar_lea.vmem %s2, %s163
      %s165 = smul.u32 32, %s17
      %p166 = scmp.lt.s32.totalorder %s165, 255
      %s167 = scalar_select %p166, %s165, 255
      %s168 = smul.addr %s167, 4
      %s169 = scalar_lea.vmem %s0, %s168
      %s170 = smul.u32 32, %s17
      %p171 = scmp.lt.s32.totalorder %s18, 0
      %s172 = scalar_select %p171, %s18, 0
      %s173 = smul.addr %s172, 4
      %s174 = scalar_lea.vmem %s1, %s173
      %s175 = smul.u32 32, %s17
      %p176 = scmp.lt.s32.totalorder %s175, 255
      %s177 = scalar_select %p176, %s175, 255
      %p178 = scmp.lt.s32.totalorder %s18, 0
      %s179 = scalar_select %p178, %s18, 0
      %s180 = sadd.s32 %s179, %s177
      %s181 = smul.addr %s180, 8
      %s182 = scalar_lea.vmem %s2, %s181
      %s183 = smul.u32 32, %s17
      %v185 = vld [vmem:[%s169] sm:$0xf]
      %v186 = vld [vmem:[%s169 + $0x4] sm:$0xf]
      %v187 = vld [vmem:[%s169 + $0x8] sm:$0xf]
      %v188 = vld [vmem:[%s169 + $0xc] sm:$0xf]
      %v189 = vld [vmem:[%s169 + $0x10] sm:$0xf]
      %v190 = vld [vmem:[%s169 + $0x14] sm:$0xf]
      %v191 = vld [vmem:[%s169 + $0x18] sm:$0xf]
      %v192 = vld [vmem:[%s169 + $0x1c] sm:$0xf]
      %v193 = vld [vmem:[%s169 + $0x20] sm:$0xf]
      %v194 = vld [vmem:[%s169 + $0x24] sm:$0xf]
      %v195 = vld [vmem:[%s169 + $0x28] sm:$0xf]
      %v196 = vld [vmem:[%s169 + $0x2c] sm:$0xf]
      %v197 = vld [vmem:[%s169 + $0x30] sm:$0xf]
      %v198 = vld [vmem:[%s169 + $0x34] sm:$0xf]
      %v199 = vld [vmem:[%s169 + $0x38] sm:$0xf]
      %v200 = vld [vmem:[%s169 + $0x3c] sm:$0xf]
      %v201 = vld [vmem:[%s169 + $0x40] sm:$0xf]
      %v202 = vld [vmem:[%s169 + $0x44] sm:$0xf]
      %v203 = vld [vmem:[%s169 + $0x48] sm:$0xf]
      %v204 = vld [vmem:[%s169 + $0x4c] sm:$0xf]
      %v205 = vld [vmem:[%s169 + $0x50] sm:$0xf]
      %v206 = vld [vmem:[%s169 + $0x54] sm:$0xf]
      %v207 = vld [vmem:[%s169 + $0x58] sm:$0xf]
      %v208 = vld [vmem:[%s169 + $0x5c] sm:$0xf]
      %v209 = vld [vmem:[%s169 + $0x60] sm:$0xf]
      %v210 = vld [vmem:[%s169 + $0x64] sm:$0xf]
      %v211 = vld [vmem:[%s169 + $0x68] sm:$0xf]
      %v212 = vld [vmem:[%s169 + $0x6c] sm:$0xf]
      %v213 = vld [vmem:[%s169 + $0x70] sm:$0xf]
      %v214 = vld [vmem:[%s169 + $0x74] sm:$0xf]
      %v215 = vld [vmem:[%s169 + $0x78] sm:$0xf]
      %v216 = vld [vmem:[%s169 + $0x7c] sm:$0xf]
      %v217 = vld [vmem:[%s174] sm:$0xf]
      %v218 = vld [vmem:[%s174 + $0x4] sm:$0xf]
      %v219 = vld [vmem:[%s174 + $0x8] sm:$0xf]
      %v220 = vld [vmem:[%s174 + $0xc] sm:$0xf]
      %v221 = vld [vmem:[%s174 + $0x10] sm:$0xf]
      %v222 = vld [vmem:[%s174 + $0x14] sm:$0xf]
      %v223 = vld [vmem:[%s174 + $0x18] sm:$0xf]
      %v224 = vld [vmem:[%s174 + $0x1c] sm:$0xf]
      %v225 = vld [vmem:[%s174 + $0x20] sm:$0xf]
      %v226 = vld [vmem:[%s174 + $0x24] sm:$0xf]
      %v227 = vld [vmem:[%s174 + $0x28] sm:$0xf]
      %v228 = vld [vmem:[%s174 + $0x2c] sm:$0xf]
      %v229 = vld [vmem:[%s174 + $0x30] sm:$0xf]
      %v230 = vld [vmem:[%s174 + $0x34] sm:$0xf]
      %v231 = vld [vmem:[%s174 + $0x38] sm:$0xf]
      %v232 = vld [vmem:[%s174 + $0x3c] sm:$0xf]
      %v265 = vunpack.c.l.b16 %v185
      %v266 = vunpack.c.l.b16 %v186
      %v267 = vunpack.c.l.b16 %v187
      %v268 = vunpack.c.l.b16 %v188
      %v269 = vunpack.c.l.b16 %v189
      %v270 = vunpack.c.l.b16 %v190
      %v271 = vunpack.c.l.b16 %v191
      %v272 = vunpack.c.l.b16 %v192
      %v273 = vunpack.c.l.b16 %v193
      %v274 = vunpack.c.l.b16 %v194
      %v275 = vunpack.c.l.b16 %v195
      %v276 = vunpack.c.l.b16 %v196
      %v277 = vunpack.c.l.b16 %v197
      %v278 = vunpack.c.l.b16 %v198
      %v279 = vunpack.c.l.b16 %v199
      %v280 = vunpack.c.l.b16 %v200
      %v281 = vunpack.c.l.b16 %v201
      %v282 = vunpack.c.l.b16 %v202
      %v283 = vunpack.c.l.b16 %v203
      %v284 = vunpack.c.l.b16 %v204
      %v285 = vunpack.c.l.b16 %v205
      %v286 = vunpack.c.l.b16 %v206
      %v287 = vunpack.c.l.b16 %v207
      %v288 = vunpack.c.l.b16 %v208
      %v289 = vunpack.c.l.b16 %v209
      %v290 = vunpack.c.l.b16 %v210
      %v291 = vunpack.c.l.b16 %v211
      %v292 = vunpack.c.l.b16 %v212
      %v293 = vunpack.c.l.b16 %v213
      %v294 = vunpack.c.l.b16 %v214
      %v295 = vunpack.c.l.b16 %v215
      %v296 = vunpack.c.l.b16 %v216
      %v297 = vpack.c.b16 %v266, %v265
      %v298 = vpack.c.b16 %v268, %v267
      %v299 = vpack.c.b16 %v270, %v269
      %v300 = vpack.c.b16 %v272, %v271
      %v301 = vpack.c.b16 %v274, %v273
      %v302 = vpack.c.b16 %v276, %v275
      %v303 = vpack.c.b16 %v278, %v277
      %v304 = vpack.c.b16 %v280, %v279
      %v305 = vpack.c.b16 %v282, %v281
      %v306 = vpack.c.b16 %v284, %v283
      %v307 = vpack.c.b16 %v286, %v285
      %v308 = vpack.c.b16 %v288, %v287
      %v309 = vpack.c.b16 %v290, %v289
      %v310 = vpack.c.b16 %v292, %v291
      %v311 = vpack.c.b16 %v294, %v293
      %v312 = vpack.c.b16 %v296, %v295
      %v345 = vunpack.c.l.b16 %v217
      %v346 = vunpack.c.l.b16 %v218
      %v347 = vunpack.c.l.b16 %v219
      %v348 = vunpack.c.l.b16 %v220
      %v349 = vunpack.c.l.b16 %v221
      %v350 = vunpack.c.l.b16 %v222
      %v351 = vunpack.c.l.b16 %v223
      %v352 = vunpack.c.l.b16 %v224
      %v353 = vunpack.c.l.b16 %v225
      %v354 = vunpack.c.l.b16 %v226
      %v355 = vunpack.c.l.b16 %v227
      %v356 = vunpack.c.l.b16 %v228
      %v357 = vunpack.c.l.b16 %v229
      %v358 = vunpack.c.l.b16 %v230
      %v359 = vunpack.c.l.b16 %v231
      %v360 = vunpack.c.l.b16 %v232
      %v361 = vpack.c.b16 %v346, %v345
      %v362 = vpack.c.b16 %v348, %v347
      %v363 = vpack.c.b16 %v350, %v349
      %v364 = vpack.c.b16 %v352, %v351
      %v365 = vpack.c.b16 %v354, %v353
      %v366 = vpack.c.b16 %v356, %v355
      %v367 = vpack.c.b16 %v358, %v357
      %v368 = vpack.c.b16 %v360, %v359
      %377 = vmatprep.subr.bf16.mxu0 0
      %378 = vmatpush1.bf16.msra.mxu0 %v368
      %379 = vmatprep.subr.bf16.mxu0 0
      %380 = vmatpush1.bf16.msra.mxu0 %v367
      %381 = vmatprep.subr.bf16.mxu0 0
      %382 = vmatpush1.bf16.msra.mxu0 %v366
      %383 = vmatprep.subr.bf16.mxu0 0
      %384 = vmatpush1.bf16.msra.mxu0 %v365
      %385 = vmatprep.subr.bf16.mxu0 0
      %386 = vmatpush1.bf16.msra.mxu0 %v364
      %387 = vmatprep.subr.bf16.mxu0 0
      %388 = vmatpush1.bf16.msra.mxu0 %v363
      %389 = vmatprep.subr.bf16.mxu0 0
      %390 = vmatpush1.bf16.msra.mxu0 %v362
      %391 = vmatprep.subr.bf16.mxu0 0
      %392 = vmatpush1.bf16.msra.mxu0 %v361
      %393 = vmatprep.subr.bf16.mxu0 0
      %394 = vmatpush2.bf16.msra.mxu0 0
      %395 = vmatprep.subr.bf16.mxu0 0
      %396 = vmatpush2.bf16.msra.mxu0 0
      %397 = vmatprep.subr.bf16.mxu0 0
      %398 = vmatpush2.bf16.msra.mxu0 0
      %399 = vmatprep.subr.bf16.mxu0 0
      %400 = vmatpush2.bf16.msra.mxu0 0
      %401 = vmatprep.subr.bf16.mxu0 0
      %402 = vmatpush2.bf16.msra.mxu0 0
      %403 = vmatprep.subr.bf16.mxu0 0
      %404 = vmatpush2.bf16.msra.mxu0 0
      %405 = vmatprep.subr.bf16.mxu0 0
      %406 = vmatpush2.bf16.msra.mxu0 0
      %407 = vmatprep.subr.bf16.mxu0 0
      %408 = vmatpush2.bf16.msra.mxu0 0
      %409 = vmatprep.mubr.bf16.mxu0 0
      %410 = vmatmul.mubr.bf16.gmra.mxu0 %v297
      %v411 = vpop.f32.mrf.mxu0
      %v412 = vadd.f32 0.0, %v411
      %v413 = vpop.f32.mrf.mxu0
      %v414 = vpop.f32.mrf.mxu0
      %v415 = vadd.f32 0.0, %v414
      %v416 = vpop.f32.mrf.mxu0
      %417 = vmatprep.mubr.bf16.mxu0 0
      %418 = vmatmul.mubr.bf16.gmra.mxu0 %v298
      %v419 = vpop.f32.mrf.mxu0
      %v420 = vadd.f32 0.0, %v419
      %v421 = vpop.f32.mrf.mxu0
      %v422 = vpop.f32.mrf.mxu0
      %v423 = vadd.f32 0.0, %v422
      %v424 = vpop.f32.mrf.mxu0
      %425 = vmatprep.mubr.bf16.mxu0 0
      %426 = vmatmul.mubr.bf16.gmra.mxu0 %v299
      %v427 = vpop.f32.mrf.mxu0
      %v428 = vadd.f32 0.0, %v427
      %v429 = vpop.f32.mrf.mxu0
      %v430 = vpop.f32.mrf.mxu0
      %v431 = vadd.f32 0.0, %v430
      %v432 = vpop.f32.mrf.mxu0
      %433 = vmatprep.mubr.bf16.mxu0 0
      %434 = vmatmul.mubr.bf16.gmra.mxu0 %v300
      %v435 = vpop.f32.mrf.mxu0
      %v436 = vadd.f32 0.0, %v435
      %v437 = vpop.f32.mrf.mxu0
      %v438 = vpop.f32.mrf.mxu0
      %v439 = vadd.f32 0.0, %v438
      %v440 = vpop.f32.mrf.mxu0
      %441 = vmatprep.mubr.bf16.mxu0 0
      %442 = vmatmul.mubr.bf16.gmra.mxu0 %v301
      %v443 = vpop.f32.mrf.mxu0
      %v444 = vadd.f32 0.0, %v443
      %v445 = vpop.f32.mrf.mxu0
      %v446 = vpop.f32.mrf.mxu0
      %v447 = vadd.f32 0.0, %v446
      %v448 = vpop.f32.mrf.mxu0
      %449 = vmatprep.mubr.bf16.mxu0 0
      %450 = vmatmul.mubr.bf16.gmra.mxu0 %v302
      %v451 = vpop.f32.mrf.mxu0
      %v452 = vadd.f32 0.0, %v451
      %v453 = vpop.f32.mrf.mxu0
      %v454 = vpop.f32.mrf.mxu0
      %v455 = vadd.f32 0.0, %v454
      %v456 = vpop.f32.mrf.mxu0
      %457 = vmatprep.mubr.bf16.mxu0 0
      %458 = vmatmul.mubr.bf16.gmra.mxu0 %v303
      %v459 = vpop.f32.mrf.mxu0
      %v460 = vadd.f32 0.0, %v459
      %v461 = vpop.f32.mrf.mxu0
      %v462 = vpop.f32.mrf.mxu0
      %v463 = vadd.f32 0.0, %v462
      %v464 = vpop.f32.mrf.mxu0
      %465 = vmatprep.mubr.bf16.mxu0 0
      %466 = vmatmul.mubr.bf16.gmra.mxu0 %v304
      %v467 = vpop.f32.mrf.mxu0
      %v468 = vadd.f32 0.0, %v467
      %v469 = vpop.f32.mrf.mxu0
      %v470 = vpop.f32.mrf.mxu0
      %v471 = vadd.f32 0.0, %v470
      %v472 = vpop.f32.mrf.mxu0
      %473 = vmatprep.mubr.bf16.mxu0 0
      %474 = vmatmul.mubr.bf16.gmra.mxu0 %v305
      %v475 = vpop.f32.mrf.mxu0
      %v476 = vadd.f32 0.0, %v475
      %v477 = vpop.f32.mrf.mxu0
      %v478 = vpop.f32.mrf.mxu0
      %v479 = vadd.f32 0.0, %v478
      %v480 = vpop.f32.mrf.mxu0
      %481 = vmatprep.mubr.bf16.mxu0 0
      %482 = vmatmul.mubr.bf16.gmra.mxu0 %v306
      %v483 = vpop.f32.mrf.mxu0
      %v484 = vadd.f32 0.0, %v483
      %v485 = vpop.f32.mrf.mxu0
      %v486 = vpop.f32.mrf.mxu0
      %v487 = vadd.f32 0.0, %v486
      %v488 = vpop.f32.mrf.mxu0
      %489 = vmatprep.mubr.bf16.mxu0 0
      %490 = vmatmul.mubr.bf16.gmra.mxu0 %v307
      %v491 = vpop.f32.mrf.mxu0
      %v492 = vadd.f32 0.0, %v491
      %v493 = vpop.f32.mrf.mxu0
      %v494 = vpop.f32.mrf.mxu0
      %v495 = vadd.f32 0.0, %v494
      %v496 = vpop.f32.mrf.mxu0
      %497 = vmatprep.mubr.bf16.mxu0 0
      %498 = vmatmul.mubr.bf16.gmra.mxu0 %v308
      %v499 = vpop.f32.mrf.mxu0
      %v500 = vadd.f32 0.0, %v499
      %v501 = vpop.f32.mrf.mxu0
      %v502 = vpop.f32.mrf.mxu0
      %v503 = vadd.f32 0.0, %v502
      %v504 = vpop.f32.mrf.mxu0
      %505 = vmatprep.mubr.bf16.mxu0 0
      %506 = vmatmul.mubr.bf16.gmra.mxu0 %v309
      %v507 = vpop.f32.mrf.mxu0
      %v508 = vadd.f32 0.0, %v507
      %v509 = vpop.f32.mrf.mxu0
      %v510 = vpop.f32.mrf.mxu0
      %v511 = vadd.f32 0.0, %v510
      %v512 = vpop.f32.mrf.mxu0
      %513 = vmatprep.mubr.bf16.mxu0 0
      %514 = vmatmul.mubr.bf16.gmra.mxu0 %v310
      %v515 = vpop.f32.mrf.mxu0
      %v516 = vadd.f32 0.0, %v515
      %v517 = vpop.f32.mrf.mxu0
      %v518 = vpop.f32.mrf.mxu0
      %v519 = vadd.f32 0.0, %v518
      %v520 = vpop.f32.mrf.mxu0
      %521 = vmatprep.mubr.bf16.mxu0 0
      %522 = vmatmul.mubr.bf16.gmra.mxu0 %v311
      %v523 = vpop.f32.mrf.mxu0
      %v524 = vadd.f32 0.0, %v523
      %v525 = vpop.f32.mrf.mxu0
      %v526 = vpop.f32.mrf.mxu0
      %v527 = vadd.f32 0.0, %v526
      %v528 = vpop.f32.mrf.mxu0
      %529 = vmatprep.mubr.bf16.mxu0 0
      %530 = vmatmul.mubr.bf16.gmra.mxu0 %v312
      %v531 = vpop.f32.mrf.mxu0
      %v532 = vadd.f32 0.0, %v531
      %v533 = vpop.f32.mrf.mxu0
      %v534 = vpop.f32.mrf.mxu0
      %v535 = vadd.f32 0.0, %v534
      %v536 = vpop.f32.mrf.mxu0
      %537 = vdwg.mxu0
      %538 = vst [vmem:[%s182] sm:$0xff] %v412
      %539 = vst [vmem:[%s182 + $0x8] sm:$0xff] %v415
      %540 = vst [vmem:[%s182 + $0x10] sm:$0xff] %v420
      %541 = vst [vmem:[%s182 + $0x18] sm:$0xff] %v423
      %542 = vst [vmem:[%s182 + $0x20] sm:$0xff] %v428
      %543 = vst [vmem:[%s182 + $0x28] sm:$0xff] %v431
      %544 = vst [vmem:[%s182 + $0x30] sm:$0xff] %v436
      %545 = vst [vmem:[%s182 + $0x38] sm:$0xff] %v439
      %546 = vst [vmem:[%s182 + $0x40] sm:$0xff] %v444
      %547 = vst [vmem:[%s182 + $0x48] sm:$0xff] %v447
      %548 = vst [vmem:[%s182 + $0x50] sm:$0xff] %v452
      %549 = vst [vmem:[%s182 + $0x58] sm:$0xff] %v455
      %550 = vst [vmem:[%s182 + $0x60] sm:$0xff] %v460
      %551 = vst [vmem:[%s182 + $0x68] sm:$0xff] %v463
      %552 = vst [vmem:[%s182 + $0x70] sm:$0xff] %v468
      %553 = vst [vmem:[%s182 + $0x78] sm:$0xff] %v471
      %554 = vst [vmem:[%s182 + $0x80] sm:$0xff] %v476
      %555 = vst [vmem:[%s182 + $0x88] sm:$0xff] %v479
      %556 = vst [vmem:[%s182 + $0x90] sm:$0xff] %v484
      %557 = vst [vmem:[%s182 + $0x98] sm:$0xff] %v487
      %558 = vst [vmem:[%s182 + $0xa0] sm:$0xff] %v492
      %559 = vst [vmem:[%s182 + $0xa8] sm:$0xff] %v495
      %560 = vst [vmem:[%s182 + $0xb0] sm:$0xff] %v500
      %561 = vst [vmem:[%s182 + $0xb8] sm:$0xff] %v503
      %562 = vst [vmem:[%s182 + $0xc0] sm:$0xff] %v508
      %563 = vst [vmem:[%s182 + $0xc8] sm:$0xff] %v511
      %564 = vst [vmem:[%s182 + $0xd0] sm:$0xff] %v516
      %565 = vst [vmem:[%s182 + $0xd8] sm:$0xff] %v519
      %566 = vst [vmem:[%s182 + $0xe0] sm:$0xff] %v524
      %567 = vst [vmem:[%s182 + $0xe8] sm:$0xff] %v527
      %568 = vst [vmem:[%s182 + $0xf0] sm:$0xff] %v532
      %569 = vst [vmem:[%s182 + $0xf8] sm:$0xff] %v535
      %s570 = smul.u32 32, %s17
      %p571 = scmp.lt.s32.totalorder %s570, 255
      %s572 = scalar_select %p571, %s570, 255
      %p573 = scmp.lt.s32.totalorder %s18, 0
      %s574 = scalar_select %p573, %s18, 0
      %s575 = sadd.s32 %s574, %s572
      %s576 = smul.addr %s575, 8
      %s577 = scalar_lea.vmem %s2, %s576
      // Predicated region
      $region29: #{generator_forward.26} parent=27 // pred_check
        %p578 = pneg %p97
      $region30: #{generator_forward.26} parent=27 // pred_check_branch
        %580 = sbr.rel (%p578) target = $region32
      $region31: #{generator_forward.26} parent=27 // pred_region
        %s581 = smul.u32 32, %s17
      $region32: #{generator_forward.26} parent=27 // pred_fallthru
        _
    $region28: #{generator_forward.26} parent=5 // pred_fallthru
      _
    %p582 = scmp.le.s32.totalorder 2, %s8
    // Predicated region
    $region33: #{generator_forward.26} parent=5 // pred_check
      %p583 = pneg %p582
    $region34: #{generator_forward.26} parent=5 // pred_check_branch
      %585 = sbr.rel (%p583) target = $region36
    $region35: #{generator_forward.26} parent=5 // pred_region
      %s586 = ssub.s32 %s8, 2
      // Predicated region
      $region37: #{generator_forward.26} parent=35 // pred_check
        %p587 = pneg %p103
      $region38: #{generator_forward.26} parent=35 // pred_check_branch
        %589 = sbr.rel (%p587) target = $region40
      $region39: #{generator_forward.26} parent=35 // pred_region
        %s590 = smul.u32 32, %s19
        %p591 = scmp.lt.s32.totalorder %s590, 255
        %s592 = scalar_select %p591, %s590, 255
        %p593 = scmp.lt.s32.totalorder %s20, 0
        %s594 = scalar_select %p593, %s20, 0
        %s595 = sadd.s32 %s594, %s592
        %s596 = smul.addr %s595, 8
        %s597 = scalar_lea.vmem %s2, %s596
      $region40: #{generator_forward.26} parent=35 // pred_fallthru
        _
    $region36: #{generator_forward.26} parent=5 // pred_fallthru
      _
  $region6: #{generator_forward.26} parent=0 // loop_footer
    %s12 = sadd.s32 1, %s8
  $region7: #{generator_forward.26} parent=0 // loop_footer_branch
    %7 = sbr.rel target = $region3
  $region8: #{generator_forward.26} parent=0 // loop_exit
    _

// kernel: generator_forward.27
$region0: #{generator_forward.27}
  #allocation0 [shape = 'u32[]', space=smem, size = 0x4, offset = 0x4, fixed_abs, tag = 'smem constant byte address 0x4 - core index']
  #allocation1 [shape = 'u32[144,128]{1,0:T(1,128)}', space=vmem, size = 0x12000, scoped, tag = 'internal scratch']
  %s0 = inlined_call_operand.vmem [shape: f32[8192,128], index: 0, kind: input, shape index: {}]
  %s1 = inlined_call_operand.vmem [shape: f32[1,128], index: 1, kind: input, shape index: {}]
  %s2 = inlined_call_operand.vmem [shape: f32[8192,128], index: 2, kind: output, shape index: {}]
  %s3 = sld [smem:[#allocation0]]
  $region41: #{generator_forward.27} parent=0
    _
  %s5 = ssub.s32 1, %s3
  %s6 = scalar_select 0, %s5, %s3
  loop: start=0, step=1, limit=18
  $region2: #{generator_forward.27} parent=0 // loop_pre_header
    _
  $region3: #{generator_forward.27} parent=0 // loop_header
    %s8 = sphi 0, %s12
    %p9 = scmp.ge.s32.totalorder %s8, 18
    %s18 = sphi 0, %s20
    %s21 = sphi 0, %s18
    %s22 = sphi 0, %s21
    %s38 = sphi 0, %s22
    %s42 = sphi 0, %s42
    %s44 = sphi 0, %s42
    %s45 = sphi 0, %s44
    %s59 = sphi 0, %s45
    %s65 = sphi 0, %s67
    %s68 = sphi 0, %s65
    %s69 = sphi 0, %s68
    %s85 = sphi 0, %s69
  $region4: #{generator_forward.27} parent=0 // loop_header_branch
    %11 = sbr.rel (%p9) target = $region8
  $region5: #{generator_forward.27} parent=0 // loop_body
    %s13 = ssub.s32 %s8, 1
    %s14 = ssub.s32 %s8, 2
    %s15 = sadd.s32 %s8, 1
    %s16 = ssub.s32 %s8, %s15
    %p17 = scmp.eq.s32.totalorder %s16, 0
    %s19 = sadd.s32 %s18, 1
    %s20 = scalar_select %p17, %s18, %s19
    %p23 = pneg %p17
    %p24 = scmp.eq.s32.totalorder %s8, 15
    %p25 = por %p23, %p24
    %p26 = scmp.ne.s32.totalorder %s18, %s21
    %p27 = scmp.eq.s32.totalorder %s8, 0
    %p28 = por %p26, %p27
    %p29 = scmp.ne.s32.totalorder %s18, %s21
    %p30 = scmp.eq.s32.totalorder %s13, 15
    %p31 = por %p29, %p30
    %p32 = scmp.ne.s32.totalorder %s21, %s22
    %p33 = scmp.eq.s32.totalorder %s13, 0
    %p34 = por %p32, %p33
    %p35 = scmp.ne.s32.totalorder %s21, %s22
    %p36 = scmp.eq.s32.totalorder %s14, 15
    %p37 = por %p35, %p36
    %p39 = scmp.ne.s32.totalorder %s22, %s38
    %p40 = scmp.eq.s32.totalorder %s14, 0
    %p41 = por %p39, %p40
    %s43 = sadd.s32 %s42, 1
    %p46 = scmp.eq.s32.totalorder %s8, 15
    %p47 = scmp.ne.s32.totalorder %s42, %s44
    %p48 = scmp.eq.s32.totalorder %s8, 0
    %p49 = por %p47, %p48
    %p50 = scmp.ne.s32.totalorder %s42, %s44
    %p51 = scmp.eq.s32.totalorder %s13, 15
    %p52 = por %p50, %p51
    %p53 = scmp.ne.s32.totalorder %s44, %s45
    %p54 = scmp.eq.s32.totalorder %s13, 0
    %p55 = por %p53, %p54
    %p56 = scmp.ne.s32.totalorder %s44, %s45
    %p57 = scmp.eq.s32.totalorder %s14, 15
    %p58 = por %p56, %p57
    %p60 = scmp.ne.s32.totalorder %s45, %s59
    %p61 = scmp.eq.s32.totalorder %s14, 0
    %p62 = por %p60, %p61
    %s63 = ssub.s32 %s8, %s15
    %p64 = scmp.eq.s32.totalorder %s63, 0
    %s66 = sadd.s32 %s65, 1
    %s67 = scalar_select %p64, %s65, %s66
    %p70 = pneg %p64
    %p71 = scmp.eq.s32.totalorder %s8, 15
    %p72 = por %p70, %p71
    %p73 = scmp.ne.s32.totalorder %s65, %s68
    %p74 = scmp.eq.s32.totalorder %s8, 0
    %p75 = por %p73, %p74
    %p76 = scmp.ne.s32.totalorder %s65, %s68
    %p77 = scmp.eq.s32.totalorder %s13, 15
    %p78 = por %p76, %p77
    %p79 = scmp.ne.s32.totalorder %s68, %s69
    %p80 = scmp.eq.s32.totalorder %s13, 0
    %p81 = por %p79, %p80
    %p82 = scmp.ne.s32.totalorder %s68, %s69
    %p83 = scmp.eq.s32.totalorder %s14, 15
    %p84 = por %p82, %p83
    %p86 = scmp.ne.s32.totalorder %s69, %s85
    %p87 = scmp.eq.s32.totalorder %s14, 0
    %p88 = por %p86, %p87
    %p89 = scmp.le.s32.totalorder 1, %s8
    %p90 = scmp.lt.s32.totalorder %s8, 17
    %p91 = pnand %p89, %p90
    %p92 = pneg %p91
    // Predicated region
    $region9: #{generator_forward.27} parent=5 // pred_check
      _
    $region10: #{generator_forward.27} parent=5 // pred_check_branch
      %94 = sbr.rel (%p91) target = $region12
    $region11: #{generator_forward.27} parent=5 // pred_region
      %s95 = ssub.s32 %s8, 1
      // Predicated region
      $region13: #{generator_forward.27} parent=11 // pred_check
        %p96 = pneg %p55
      $region14: #{generator_forward.27} parent=11 // pred_check_branch
        %98 = sbr.rel (%p96) target = $region16
      $region15: #{generator_forward.27} parent=11 // pred_region
        _
      $region16: #{generator_forward.27} parent=11 // pred_fallthru
        _
    $region12: #{generator_forward.27} parent=5 // pred_fallthru
      _
    %p99 = scmp.lt.s32.totalorder %s8, 16
    // Predicated region
    $region17: #{generator_forward.27} parent=5 // pred_check
      %p100 = pneg %p99
    $region18: #{generator_forward.27} parent=5 // pred_check_branch
      %102 = sbr.rel (%p100) target = $region20
    $region19: #{generator_forward.27} parent=5 // pred_region
      // Predicated region
      $region21: #{generator_forward.27} parent=19 // pred_check
        %p103 = pneg %p28
      $region22: #{generator_forward.27} parent=19 // pred_check_branch
        %105 = sbr.rel (%p103) target = $region24
      $region23: #{generator_forward.27} parent=19 // pred_region
        %s106 = smul.u32 64, %s8
        %p107 = scmp.lt.s32.totalorder %s106, 1023
        %s108 = scalar_select %p107, %s106, 1023
        %s109 = smul.addr %s108, 8
        %s110 = scalar_lea.vmem %s0, %s109
        %s111 = smul.u32 64, %s8
      $region24: #{generator_forward.27} parent=19 // pred_fallthru
        _
    $region20: #{generator_forward.27} parent=5 // pred_fallthru
      _
    %p112 = scmp.le.s32.totalorder 1, %s8
    %p113 = scmp.lt.s32.totalorder %s8, 17
    %p114 = pnand %p112, %p113
    %p115 = pneg %p114
    // Predicated region
    $region25: #{generator_forward.27} parent=5 // pred_check
      _
    $region26: #{generator_forward.27} parent=5 // pred_check_branch
      %117 = sbr.rel (%p114) target = $region28
    $region27: #{generator_forward.27} parent=5 // pred_region
      %s118 = ssub.s32 %s8, 1
      %s119 = smul.u32 64, %s13
      %p120 = scmp.lt.s32.totalorder %s119, 1023
      %s121 = scalar_select %p120, %s119, 1023
      %s122 = smul.addr %s121, 8
      %s123 = scalar_lea.vmem %s0, %s122
      %p124 = pneg %p34
      %p125 = pneg %p31
      %p126 = pneg %p55
      %p127 = pneg %p52
      %p128 = pneg %p81
      %p129 = pneg %p78
      %s130 = smul.u32 64, %s13
      %p131 = scmp.lt.s32.totalorder %s130, 1023
      %s132 = scalar_select %p131, %s130, 1023
      %s133 = smul.addr %s132, 8
      %s134 = scalar_lea.vmem %s2, %s133
      %s135 = smul.u32 64, %s13
      %p136 = scmp.lt.s32.totalorder %s135, 1023
      %s137 = scalar_select %p136, %s135, 1023
      %s138 = smul.addr %s137, 8
      %s139 = scalar_lea.vmem %s0, %s138
      %s140 = smul.u32 64, %s13
      %s141 = smul.u32 64, %s13
      %p142 = scmp.lt.s32.totalorder %s141, 1023
      %s143 = scalar_select %p142, %s141, 1023
      %s144 = smul.addr %s143, 8
      %s145 = scalar_lea.vmem %s2, %s144
      %s146 = smul.u32 64, %s13
      %v147 = vld [vmem:[%s139] sm:$0xff]
      %v148 = vld [vmem:[%s139 + $0x8] sm:$0xff]
      %v149 = vld [vmem:[%s139 + $0x10] sm:$0xff]
      %v150 = vld [vmem:[%s139 + $0x18] sm:$0xff]
      %v151 = vld [vmem:[%s139 + $0x20] sm:$0xff]
      %v152 = vld [vmem:[%s139 + $0x28] sm:$0xff]
      %v153 = vld [vmem:[%s139 + $0x30] sm:$0xff]
      %v154 = vld [vmem:[%s139 + $0x38] sm:$0xff]
      %v155 = vld [vmem:[%s139 + $0x40] sm:$0xff]
      %v156 = vld [vmem:[%s139 + $0x48] sm:$0xff]
      %v157 = vld [vmem:[%s139 + $0x50] sm:$0xff]
      %v158 = vld [vmem:[%s139 + $0x58] sm:$0xff]
      %v159 = vld [vmem:[%s139 + $0x60] sm:$0xff]
      %v160 = vld [vmem:[%s139 + $0x68] sm:$0xff]
      %v161 = vld [vmem:[%s139 + $0x70] sm:$0xff]
      %v162 = vld [vmem:[%s139 + $0x78] sm:$0xff]
      %v163 = vld [vmem:[%s139 + $0x80] sm:$0xff]
      %v164 = vld [vmem:[%s139 + $0x88] sm:$0xff]
      %v165 = vld [vmem:[%s139 + $0x90] sm:$0xff]
      %v166 = vld [vmem:[%s139 + $0x98] sm:$0xff]
      %v167 = vld [vmem:[%s139 + $0xa0] sm:$0xff]
      %v168 = vld [vmem:[%s139 + $0xa8] sm:$0xff]
      %v169 = vld [vmem:[%s139 + $0xb0] sm:$0xff]
      %v170 = vld [vmem:[%s139 + $0xb8] sm:$0xff]
      %v171 = vld [vmem:[%s139 + $0xc0] sm:$0xff]
      %v172 = vld [vmem:[%s139 + $0xc8] sm:$0xff]
      %v173 = vld [vmem:[%s139 + $0xd0] sm:$0xff]
      %v174 = vld [vmem:[%s139 + $0xd8] sm:$0xff]
      %v175 = vld [vmem:[%s139 + $0xe0] sm:$0xff]
      %v176 = vld [vmem:[%s139 + $0xe8] sm:$0xff]
      %v177 = vld [vmem:[%s139 + $0xf0] sm:$0xff]
      %v178 = vld [vmem:[%s139 + $0xf8] sm:$0xff]
      %v179 = vld [vmem:[%s139 + $0x100] sm:$0xff]
      %v180 = vld [vmem:[%s139 + $0x108] sm:$0xff]
      %v181 = vld [vmem:[%s139 + $0x110] sm:$0xff]
      %v182 = vld [vmem:[%s139 + $0x118] sm:$0xff]
      %v183 = vld [vmem:[%s139 + $0x120] sm:$0xff]
      %v184 = vld [vmem:[%s139 + $0x128] sm:$0xff]
      %v185 = vld [vmem:[%s139 + $0x130] sm:$0xff]
      %v186 = vld [vmem:[%s139 + $0x138] sm:$0xff]
      %v187 = vld [vmem:[%s139 + $0x140] sm:$0xff]
      %v188 = vld [vmem:[%s139 + $0x148] sm:$0xff]
      %v189 = vld [vmem:[%s139 + $0x150] sm:$0xff]
      %v190 = vld [vmem:[%s139 + $0x158] sm:$0xff]
      %v191 = vld [vmem:[%s139 + $0x160] sm:$0xff]
      %v192 = vld [vmem:[%s139 + $0x168] sm:$0xff]
      %v193 = vld [vmem:[%s139 + $0x170] sm:$0xff]
      %v194 = vld [vmem:[%s139 + $0x178] sm:$0xff]
      %v195 = vld [vmem:[%s139 + $0x180] sm:$0xff]
      %v196 = vld [vmem:[%s139 + $0x188] sm:$0xff]
      %v197 = vld [vmem:[%s139 + $0x190] sm:$0xff]
      %v198 = vld [vmem:[%s139 + $0x198] sm:$0xff]
      %v199 = vld [vmem:[%s139 + $0x1a0] sm:$0xff]
      %v200 = vld [vmem:[%s139 + $0x1a8] sm:$0xff]
      %v201 = vld [vmem:[%s139 + $0x1b0] sm:$0xff]
      %v202 = vld [vmem:[%s139 + $0x1b8] sm:$0xff]
      %v203 = vld [vmem:[%s139 + $0x1c0] sm:$0xff]
      %v204 = vld [vmem:[%s139 + $0x1c8] sm:$0xff]
      %v205 = vld [vmem:[%s139 + $0x1d0] sm:$0xff]
      %v206 = vld [vmem:[%s139 + $0x1d8] sm:$0xff]
      %v207 = vld [vmem:[%s139 + $0x1e0] sm:$0xff]
      %v208 = vld [vmem:[%s139 + $0x1e8] sm:$0xff]
      %v209 = vld [vmem:[%s139 + $0x1f0] sm:$0xff]
      %v210 = vld [vmem:[%s139 + $0x1f8] sm:$0xff]
      %v211 = vld [vmem:[%s1] sm:$0x1]
      %v213 = vlaneseq
      %v214 = vshrl.u32 %v213, 7
      %v215 = vsub.s32 0, %v214
      %v216 = vrot.slane %v211, %v215
      %v218 = vadd.f32 %v147, %v216
      %v219 = vadd.f32 %v148, %v216
      %v220 = vadd.f32 %v149, %v216
      %v221 = vadd.f32 %v150, %v216
      %v222 = vadd.f32 %v151, %v216
      %v223 = vadd.f32 %v152, %v216
      %v224 = vadd.f32 %v153, %v216
      %v225 = vadd.f32 %v154, %v216
      %v226 = vadd.f32 %v155, %v216
      %v227 = vadd.f32 %v156, %v216
      %v228 = vadd.f32 %v157, %v216
      %v229 = vadd.f32 %v158, %v216
      %v230 = vadd.f32 %v159, %v216
      %v231 = vadd.f32 %v160, %v216
      %v232 = vadd.f32 %v161, %v216
      %v233 = vadd.f32 %v162, %v216
      %v234 = vadd.f32 %v163, %v216
      %v235 = vadd.f32 %v164, %v216
      %v236 = vadd.f32 %v165, %v216
      %v237 = vadd.f32 %v166, %v216
      %v238 = vadd.f32 %v167, %v216
      %v239 = vadd.f32 %v168, %v216
      %v240 = vadd.f32 %v169, %v216
      %v241 = vadd.f32 %v170, %v216
      %v242 = vadd.f32 %v171, %v216
      %v243 = vadd.f32 %v172, %v216
      %v244 = vadd.f32 %v173, %v216
      %v245 = vadd.f32 %v174, %v216
      %v246 = vadd.f32 %v175, %v216
      %v247 = vadd.f32 %v176, %v216
      %v248 = vadd.f32 %v177, %v216
      %v249 = vadd.f32 %v178, %v216
      %v250 = vadd.f32 %v179, %v216
      %v251 = vadd.f32 %v180, %v216
      %v252 = vadd.f32 %v181, %v216
      %v253 = vadd.f32 %v182, %v216
      %v254 = vadd.f32 %v183, %v216
      %v255 = vadd.f32 %v184, %v216
      %v256 = vadd.f32 %v185, %v216
      %v257 = vadd.f32 %v186, %v216
      %v258 = vadd.f32 %v187, %v216
      %v259 = vadd.f32 %v188, %v216
      %v260 = vadd.f32 %v189, %v216
      %v261 = vadd.f32 %v190, %v216
      %v262 = vadd.f32 %v191, %v216
      %v263 = vadd.f32 %v192, %v216
      %v264 = vadd.f32 %v193, %v216
      %v265 = vadd.f32 %v194, %v216
      %v266 = vadd.f32 %v195, %v216
      %v267 = vadd.f32 %v196, %v216
      %v268 = vadd.f32 %v197, %v216
      %v269 = vadd.f32 %v198, %v216
      %v270 = vadd.f32 %v199, %v216
      %v271 = vadd.f32 %v200, %v216
      %v272 = vadd.f32 %v201, %v216
      %v273 = vadd.f32 %v202, %v216
      %v274 = vadd.f32 %v203, %v216
      %v275 = vadd.f32 %v204, %v216
      %v276 = vadd.f32 %v205, %v216
      %v277 = vadd.f32 %v206, %v216
      %v278 = vadd.f32 %v207, %v216
      %v279 = vadd.f32 %v208, %v216
      %v280 = vadd.f32 %v209, %v216
      %v281 = vadd.f32 %v210, %v216
      %v282 = vtanh.pop %v218
      %v283 = vtanh.pop %v219
      %v284 = vtanh.pop %v220
      %v285 = vtanh.pop %v221
      %v286 = vtanh.pop %v222
      %v287 = vtanh.pop %v223
      %v288 = vtanh.pop %v224
      %v289 = vtanh.pop %v225
      %v290 = vtanh.pop %v226
      %v291 = vtanh.pop %v227
      %v292 = vtanh.pop %v228
      %v293 = vtanh.pop %v229
      %v294 = vtanh.pop %v230
      %v295 = vtanh.pop %v231
      %v296 = vtanh.pop %v232
      %v297 = vtanh.pop %v233
      %v298 = vtanh.pop %v234
      %v299 = vtanh.pop %v235
      %v300 = vtanh.pop %v236
      %v301 = vtanh.pop %v237
      %v302 = vtanh.pop %v238
      %v303 = vtanh.pop %v239
      %v304 = vtanh.pop %v240
      %v305 = vtanh.pop %v241
      %v306 = vtanh.pop %v242
      %v307 = vtanh.pop %v243
      %v308 = vtanh.pop %v244
      %v309 = vtanh.pop %v245
      %v310 = vtanh.pop %v246
      %v311 = vtanh.pop %v247
      %v312 = vtanh.pop %v248
      %v313 = vtanh.pop %v249
      %v314 = vtanh.pop %v250
      %v315 = vtanh.pop %v251
      %v316 = vtanh.pop %v252
      %v317 = vtanh.pop %v253
      %v318 = vtanh.pop %v254
      %v319 = vtanh.pop %v255
      %v320 = vtanh.pop %v256
      %v321 = vtanh.pop %v257
      %v322 = vtanh.pop %v258
      %v323 = vtanh.pop %v259
      %v324 = vtanh.pop %v260
      %v325 = vtanh.pop %v261
      %v326 = vtanh.pop %v262
      %v327 = vtanh.pop %v263
      %v328 = vtanh.pop %v264
      %v329 = vtanh.pop %v265
      %v330 = vtanh.pop %v266
      %v331 = vtanh.pop %v267
      %v332 = vtanh.pop %v268
      %v333 = vtanh.pop %v269
      %v334 = vtanh.pop %v270
      %v335 = vtanh.pop %v271
      %v336 = vtanh.pop %v272
      %v337 = vtanh.pop %v273
      %v338 = vtanh.pop %v274
      %v339 = vtanh.pop %v275
      %v340 = vtanh.pop %v276
      %v341 = vtanh.pop %v277
      %v342 = vtanh.pop %v278
      %v343 = vtanh.pop %v279
      %v344 = vtanh.pop %v280
      %v345 = vtanh.pop %v281
      %346 = vst [vmem:[%s145] sm:$0xff] %v282
      %347 = vst [vmem:[%s145 + $0x8] sm:$0xff] %v283
      %348 = vst [vmem:[%s145 + $0x10] sm:$0xff] %v284
      %349 = vst [vmem:[%s145 + $0x18] sm:$0xff] %v285
      %350 = vst [vmem:[%s145 + $0x20] sm:$0xff] %v286
      %351 = vst [vmem:[%s145 + $0x28] sm:$0xff] %v287
      %352 = vst [vmem:[%s145 + $0x30] sm:$0xff] %v288
      %353 = vst [vmem:[%s145 + $0x38] sm:$0xff] %v289
      %354 = vst [vmem:[%s145 + $0x40] sm:$0xff] %v290
      %355 = vst [vmem:[%s145 + $0x48] sm:$0xff] %v291
      %356 = vst [vmem:[%s145 + $0x50] sm:$0xff] %v292
      %357 = vst [vmem:[%s145 + $0x58] sm:$0xff] %v293
      %358 = vst [vmem:[%s145 + $0x60] sm:$0xff] %v294
      %359 = vst [vmem:[%s145 + $0x68] sm:$0xff] %v295
      %360 = vst [vmem:[%s145 + $0x70] sm:$0xff] %v296
      %361 = vst [vmem:[%s145 + $0x78] sm:$0xff] %v297
      %362 = vst [vmem:[%s145 + $0x80] sm:$0xff] %v298
      %363 = vst [vmem:[%s145 + $0x88] sm:$0xff] %v299
      %364 = vst [vmem:[%s145 + $0x90] sm:$0xff] %v300
      %365 = vst [vmem:[%s145 + $0x98] sm:$0xff] %v301
      %366 = vst [vmem:[%s145 + $0xa0] sm:$0xff] %v302
      %367 = vst [vmem:[%s145 + $0xa8] sm:$0xff] %v303
      %368 = vst [vmem:[%s145 + $0xb0] sm:$0xff] %v304
      %369 = vst [vmem:[%s145 + $0xb8] sm:$0xff] %v305
      %370 = vst [vmem:[%s145 + $0xc0] sm:$0xff] %v306
      %371 = vst [vmem:[%s145 + $0xc8] sm:$0xff] %v307
      %372 = vst [vmem:[%s145 + $0xd0] sm:$0xff] %v308
      %373 = vst [vmem:[%s145 + $0xd8] sm:$0xff] %v309
      %374 = vst [vmem:[%s145 + $0xe0] sm:$0xff] %v310
      %375 = vst [vmem:[%s145 + $0xe8] sm:$0xff] %v311
      %376 = vst [vmem:[%s145 + $0xf0] sm:$0xff] %v312
      %377 = vst [vmem:[%s145 + $0xf8] sm:$0xff] %v313
      %378 = vst [vmem:[%s145 + $0x100] sm:$0xff] %v314
      %379 = vst [vmem:[%s145 + $0x108] sm:$0xff] %v315
      %380 = vst [vmem:[%s145 + $0x110] sm:$0xff] %v316
      %381 = vst [vmem:[%s145 + $0x118] sm:$0xff] %v317
      %382 = vst [vmem:[%s145 + $0x120] sm:$0xff] %v318
      %383 = vst [vmem:[%s145 + $0x128] sm:$0xff] %v319
      %384 = vst [vmem:[%s145 + $0x130] sm:$0xff] %v320
      %385 = vst [vmem:[%s145 + $0x138] sm:$0xff] %v321
      %386 = vst [vmem:[%s145 + $0x140] sm:$0xff] %v322
      %387 = vst [vmem:[%s145 + $0x148] sm:$0xff] %v323
      %388 = vst [vmem:[%s145 + $0x150] sm:$0xff] %v324
      %389 = vst [vmem:[%s145 + $0x158] sm:$0xff] %v325
      %390 = vst [vmem:[%s145 + $0x160] sm:$0xff] %v326
      %391 = vst [vmem:[%s145 + $0x168] sm:$0xff] %v327
      %392 = vst [vmem:[%s145 + $0x170] sm:$0xff] %v328
      %393 = vst [vmem:[%s145 + $0x178] sm:$0xff] %v329
      %394 = vst [vmem:[%s145 + $0x180] sm:$0xff] %v330
      %395 = vst [vmem:[%s145 + $0x188] sm:$0xff] %v331
      %396 = vst [vmem:[%s145 + $0x190] sm:$0xff] %v332
      %397 = vst [vmem:[%s145 + $0x198] sm:$0xff] %v333
      %398 = vst [vmem:[%s145 + $0x1a0] sm:$0xff] %v334
      %399 = vst [vmem:[%s145 + $0x1a8] sm:$0xff] %v335
      %400 = vst [vmem:[%s145 + $0x1b0] sm:$0xff] %v336
      %401 = vst [vmem:[%s145 + $0x1b8] sm:$0xff] %v337
      %402 = vst [vmem:[%s145 + $0x1c0] sm:$0xff] %v338
      %403 = vst [vmem:[%s145 + $0x1c8] sm:$0xff] %v339
      %404 = vst [vmem:[%s145 + $0x1d0] sm:$0xff] %v340
      %405 = vst [vmem:[%s145 + $0x1d8] sm:$0xff] %v341
      %406 = vst [vmem:[%s145 + $0x1e0] sm:$0xff] %v342
      %407 = vst [vmem:[%s145 + $0x1e8] sm:$0xff] %v343
      %408 = vst [vmem:[%s145 + $0x1f0] sm:$0xff] %v344
      %409 = vst [vmem:[%s145 + $0x1f8] sm:$0xff] %v345
      %s410 = smul.u32 64, %s13
      %p411 = scmp.lt.s32.totalorder %s410, 1023
      %s412 = scalar_select %p411, %s410, 1023
      %s413 = smul.addr %s412, 8
      %s414 = scalar_lea.vmem %s2, %s413
      // Predicated region
      $region29: #{generator_forward.27} parent=27 // pred_check
        %p415 = pneg %p78
      $region30: #{generator_forward.27} parent=27 // pred_check_branch
        %417 = sbr.rel (%p415) target = $region32
      $region31: #{generator_forward.27} parent=27 // pred_region
        %s418 = smul.u32 64, %s13
      $region32: #{generator_forward.27} parent=27 // pred_fallthru
        _
    $region28: #{generator_forward.27} parent=5 // pred_fallthru
      _
    %p419 = scmp.le.s32.totalorder 2, %s8
    // Predicated region
    $region33: #{generator_forward.27} parent=5 // pred_check
      %p420 = pneg %p419
    $region34: #{generator_forward.27} parent=5 // pred_check_branch
      %422 = sbr.rel (%p420) target = $region36
    $region35: #{generator_forward.27} parent=5 // pred_region
      %s423 = ssub.s32 %s8, 2
      // Predicated region
      $region37: #{generator_forward.27} parent=35 // pred_check
        %p424 = pneg %p84
      $region38: #{generator_forward.27} parent=35 // pred_check_branch
        %426 = sbr.rel (%p424) target = $region40
      $region39: #{generator_forward.27} parent=35 // pred_region
        %s427 = smul.u32 64, %s14
        %p428 = scmp.lt.s32.totalorder %s427, 1023
        %s429 = scalar_select %p428, %s427, 1023
        %s430 = smul.addr %s429, 8
        %s431 = scalar_lea.vmem %s2, %s430
      $region40: #{generator_forward.27} parent=35 // pred_fallthru
        _
    $region36: #{generator_forward.27} parent=5 // pred_fallthru
      _
  $region6: #{generator_forward.27} parent=0 // loop_footer
    %s12 = sadd.s32 1, %s8
  $region7: #{generator_forward.27} parent=0 // loop_footer_branch
    %7 = sbr.rel target = $region3
  $region8: #{generator_forward.27} parent=0 // loop_exit
    _

</llo_original>
